<compile_context>
chip_gen: v7x
topology: tpu7x:2x2x1
jax: 0.10.0
libtpu: 0.0.40
codegen_flags: <defaults>
</compile_context>

<pallas_src>
import numpy as np
import jax
import jax.numpy as jnp
from jax.experimental import pallas as pl
from jax.experimental.pallas import tpu as pltpu


def bilinear_matrix(n_in, n_out):
    """1-D bilinear interpolation matrix (n_out, n_in), align_corners=True."""
    U = np.zeros((n_out, n_in), np.float32)
    if n_out == 1 or n_in == 1:
        U[:, 0] = 1.0
        return U
    scale = (n_in - 1) / (n_out - 1)
    idx = np.arange(n_out)
    src = idx * scale
    p0 = np.clip(np.floor(src).astype(np.int64), 0, n_in - 1)
    p1 = np.clip(p0 + 1, 0, n_in - 1)
    frac = (src - p0).astype(np.float32)
    U[idx, p0] += 1.0 - frac
    U[idx, p1] += frac
    return U


def _bilinear_taps(n_in, n_out):
    """Per output row: (src0, weight0, src1, weight1), align_corners=True (static)."""
    if n_out == 1 or n_in == 1:
        return [(0, 1.0, 0, 0.0)] * n_out
    taps = []
    scale = (n_in - 1) / (n_out - 1)
    for i in range(n_out):
        src = i * scale
        p0 = min(int(np.floor(src)), n_in - 1)
        p1 = min(p0 + 1, n_in - 1)
        f = float(src - p0)
        taps.append((p0, 1.0 - f, p1, f))
    return taps


def make_kernel(N, Cin, Cout, Hin, Win, Hout, Wout, h_taps, pad):
    hwo = Hout * Wout
    L = N * hwo
    offsets = [(dy, dx) for dy in (-1, 0, 1) for dx in (-1, 0, 1)]

    def kernel(x_ref, uwT_ref, w9_ref, bias_ref, mask_ref, alpha_ref,
               o_ref, t1_ref, u_ref):
        # x_ref   : (Hin*N*Cin, Win)   bf16, rows ordered (hi, n, c)
        # uwT_ref : (Win, Wout)        bf16, separable W-axis bilinear matrix
        # w9_ref  : (9, Cout, Cin)     bf16, conv taps in (dy, dx) order
        # bias_ref: (Cout, 1)          f32
        # mask_ref: (9, 1, N*hwo)      bf16 {0,1} boundary masks per tap
        # alpha_ref: (1,)              f32, PReLU slope in SMEM
        # o_ref   : (N, Cout, hwo)     lane-dense output
        # t1_ref  : (Hin, N, Cin, Wout) f32 scratch (W-upsampled rows)
        # u_ref   : (Cin, 2*pad + N*hwo) f32 scratch (lane-flat, border-padded upsample)

        # ---- 1) W-axis bilinear upsample: ONE bf16 MXU matmul, batch folded into M ----
        t1 = jnp.dot(x_ref[...], uwT_ref[...],
                     preferred_element_type=jnp.float32)        # (Hin*N*Cin, Wout) f32
        t1_ref[...] = t1.reshape(Hin, N, Cin, Wout)              # leading-dim split only

        # ---- 2) H-axis bilinear upsample on the VPU ----
        # Each output row is a 2-tap static-weight blend of two input rows (align_corners
        # x2 taps are compile-time constants).  Rows are written straight into the
        # lane-flattened padded scratch: the sublane->lane relayout happens via plain
        # static (Cin, Wout) loads/stores, never via an in-kernel minor-dim reshape.
        u_ref[:, :pad] = jnp.zeros((Cin, pad), jnp.float32)       # zero only the pads
        u_ref[:, pad + L:] = jnp.zeros((Cin, pad), jnp.float32)
        for n in range(N):
            for ho in range(Hout):
                p0, w0, p1, w1 = h_taps[ho]
                row = t1_ref[p0, n] * w0                          # (Cin, Wout) f32
                if w1 != 0.0:
                    row = row + t1_ref[p1, n] * w1
                s = pad + n * hwo + ho * Wout
                u_ref[:, s:s + Wout] = row

        # ---- 3) 3x3 conv (padding=1): 9 accumulating bf16 MXU dots + bias + PReLU ----
        acc = None
        for t, (dy, dx) in enumerate(offsets):
            off = dy * Wout + dx
            # The tap shift is folded into a static windowed load from the padded scratch.
            win = u_ref[:, pad + off: pad + off + L]              # (Cin, L) f32
            if off == 0:
                tap = win.astype(jnp.bfloat16)
            else:
                tap = (win * mask_ref[t]).astype(jnp.bfloat16)    # zero outside the image
            d = jnp.dot(w9_ref[t], tap, preferred_element_type=jnp.float32)
            acc = d if acc is None else acc + d                   # (Cout, L) f32

        out = acc + bias_ref[...]                                 # (Cout, 1) broadcast
        alpha = alpha_ref[0]
        out = jnp.where(out > 0, out, alpha * out)                # PReLU (single alpha)
        for n in range(N):                                        # lane-dense 1024-wide stores
            o_ref[n] = out[:, n * hwo:(n + 1) * hwo].astype(o_ref.dtype)

    return kernel


def psp_upsample(x, w, b, alpha):
    """x: (N, Cin, Hin, Win) NCHW; w: (3, 3, Cout, Cin); b: (Cout,); alpha: scalar."""
    N, Cin, Hin, Win = x.shape
    Cout = w.shape[2]
    Hout, Wout = 2 * Hin, 2 * Win
    hwo = Hout * Wout
    L = N * hwo
    pad = 128                       # >= Wout + 1; 128 keeps the centre window vreg-aligned

    # --- host-side constants (all tiny; the old O((Hin*Win)^2) kron matrix is gone) ---
    uwT = jnp.asarray(bilinear_matrix(Win, Wout).T, jnp.bfloat16)     # (Win, Wout)
    h_taps = _bilinear_taps(Hin, Hout)                                # static per-row blends

    # {0,1} boundary masks for the 9 conv taps on the flattened (n, ho, wo) lane axis.
    dyx = [(dy, dx) for dy in (-1, 0, 1) for dx in (-1, 0, 1)]
    ho_i = np.arange(hwo) // Wout
    wo_i = np.arange(hwo) % Wout
    masks_np = np.zeros((9, hwo), np.float32)
    for t, (dy, dx) in enumerate(dyx):
        masks_np[t] = ((ho_i + dy >= 0) & (ho_i + dy < Hout) &
                       (wo_i + dx >= 0) & (wo_i + dx < Wout))
    masks = jnp.asarray(np.tile(masks_np, (1, N)).reshape(9, 1, L), jnp.bfloat16)

    # --- lane/MXU friendly operands (free layout plumbing in the wrapper) ---
    x2d = x.transpose(2, 0, 1, 3).reshape(Hin * N * Cin, Win).astype(jnp.bfloat16)
    w9 = w.reshape(9, Cout, Cin).astype(jnp.bfloat16)                 # (dy, dx)-major taps
    bias = b.reshape(Cout, 1).astype(jnp.float32)
    alpha1 = jnp.asarray(alpha, jnp.float32).reshape(1)

    kernel = make_kernel(N, Cin, Cout, Hin, Win, Hout, Wout, h_taps, pad)

    out_flat = pl.pallas_call(
        kernel,
        out_shape=jax.ShapeDtypeStruct((N, Cout, hwo), x.dtype),
        grid_spec=pltpu.PrefetchScalarGridSpec(
            num_scalar_prefetch=0,
            grid=(1,),          # batch folded into matmul M / lane dims -> single step
            in_specs=[
                pl.BlockSpec((Hin * N * Cin, Win), lambda i: (0, 0)),
                pl.BlockSpec((Win, Wout), lambda i: (0, 0)),
                pl.BlockSpec((9, Cout, Cin), lambda i: (0, 0, 0)),
                pl.BlockSpec((Cout, 1), lambda i: (0, 0)),
                pl.BlockSpec((9, 1, L), lambda i: (0, 0, 0)),
                pl.BlockSpec(memory_space=pltpu.MemorySpace.SMEM),    # PReLU alpha
            ],
            out_specs=pl.BlockSpec((N, Cout, hwo), lambda i: (0, 0, 0)),
            scratch_shapes=[
                pltpu.VMEM((Hin, N, Cin, Wout), jnp.float32),         # W-upsampled rows
                pltpu.VMEM((Cin, L + 2 * pad), jnp.float32),          # padded, lane-flat u
            ],
        ),
        compiler_params=pltpu.CompilerParams(
            dimension_semantics=("arbitrary",)),
    )(x2d, uwT, w9, bias, masks, alpha1)

    # Lane-dense kernel output -> NCHW (free reshape in the wrapper).
    return out_flat.reshape(N, Cout, Hout, Wout)


def reference(x, w, b, alpha):
    """Pure-JAX f32 reference of the PyTorch forward (for sanity checking)."""
    N, Cin, Hin, Win = x.shape
    uh = jnp.asarray(bilinear_matrix(Hin, 2 * Hin))
    uw = jnp.asarray(bilinear_matrix(Win, 2 * Win))
    up = jnp.einsum('ip,ncpq,jq->ncij', uh, x, uw)
    w_oihw = jnp.transpose(w, (2, 3, 0, 1))          # (Cout, Cin, 3, 3)
    out = jax.lax.conv_general_dilated(
        up, w_oihw, window_strides=(1, 1), padding=((1, 1), (1, 1)),
        dimension_numbers=('NCHW', 'OIHW', 'NCHW'))
    out = out + b[None, :, None, None]
    return jnp.where(out > 0, out, alpha * out)


if __name__ == "__main__":
    N, Cin, Cout, Hin, Win = 2, 4, 8, 16, 16

    key = jax.random.PRNGKey(0)
    kx, kw, kb = jax.random.split(key, 3)
    x = jax.random.normal(kx, (N, Cin, Hin, Win), jnp.float32)
    # Conv2d(Cin, Cout, 3, padding=1) parameters in (kh, kw, O, I) layout.
    w = jax.random.normal(kw, (3, 3, Cout, Cin), jnp.float32) * 0.1
    b = jax.random.normal(kb, (Cout,), jnp.float32) * 0.1
    alpha = 0.25                                      # PReLU default init

    out = psp_upsample(x, w, b, alpha)
    out = jax.block_until_ready(out)

    ref = reference(x, w, b, alpha)
    assert out.shape == (N, Cout, 2 * Hin, 2 * Win)
    # bf16 MXU operands with f32 accumulation -> standard bf16 comparison tolerance.
    assert jnp.allclose(out, ref, atol=2e-2, rtol=2e-2), "mismatch vs reference"
    print("KERNEL_OK")
</pallas_src>

<mosaic_0001>
module attributes {stable_mosaic.version = 11 : i64} {
  func.func @kernel(%arg0: i32, %arg1: memref<128x16xbf16, #tpu.memory_space<vmem>>, %arg2: memref<16x32xbf16, #tpu.memory_space<vmem>>, %arg3: memref<9x8x4xbf16, #tpu.memory_space<vmem>>, %arg4: memref<8x1xf32, #tpu.memory_space<vmem>>, %arg5: memref<9x1x2048xbf16, #tpu.memory_space<vmem>>, %arg6: memref<1xf32, #tpu.memory_space<smem>>, %arg7: memref<2x8x1024xf32, #tpu.memory_space<vmem>>, %arg8: memref<16x2x4x32xf32, #tpu.memory_space<vmem>>, %arg9: memref<4x2304xf32, #tpu.memory_space<vmem>>) attributes {dimension_semantics = [#tpu.dimension_semantics<arbitrary>], iteration_bounds = array<i64: 1>, scalar_prefetch = 0 : i64, scratch_operands = 2 : i64, tpu.core_type = #tpu.core_type<tc>, window_params = [{pipeline_mode = #tpu.pipeline_mode<synchronous>, transform_indices = @transform_0, window_bounds = array<i64: 128, 16>}, {pipeline_mode = #tpu.pipeline_mode<synchronous>, transform_indices = @transform_1, window_bounds = array<i64: 16, 32>}, {pipeline_mode = #tpu.pipeline_mode<synchronous>, transform_indices = @transform_2, window_bounds = array<i64: 9, 8, 4>}, {pipeline_mode = #tpu.pipeline_mode<synchronous>, transform_indices = @transform_3, window_bounds = array<i64: 8, 1>}, {pipeline_mode = #tpu.pipeline_mode<synchronous>, transform_indices = @transform_4, window_bounds = array<i64: 9, 1, 2048>}, {transform_indices = @transform_5, window_bounds = array<i64: 1>}, {pipeline_mode = #tpu.pipeline_mode<synchronous>, transform_indices = @transform_6, window_bounds = array<i64: 2, 8, 1024>}]} {
    %c0 = arith.constant 0 : index
    %c0_0 = arith.constant 0 : index
    %0 = vector.load %arg1[%c0, %c0_0] : memref<128x16xbf16, #tpu.memory_space<vmem>>, vector<128x16xbf16>
    %c0_1 = arith.constant 0 : index
    %c0_2 = arith.constant 0 : index
    %1 = vector.load %arg2[%c0_1, %c0_2] : memref<16x32xbf16, #tpu.memory_space<vmem>>, vector<16x32xbf16>
    %cst = arith.constant dense<0.000000e+00> : vector<128x32xf32>
    %2 = tpu.matmul %0, %1, %cst {dimension_numbers = #tpu.dot_dimension_numbers<[1], [0], [0], [1], [0, 0, 1, 1], [], []>} : vector<128x16xbf16>, vector<16x32xbf16>, vector<128x32xf32> -> vector<128x32xf32>
    %3 = vector.shape_cast %2 : vector<128x32xf32> to vector<16x2x4x32xf32>
    %c0_3 = arith.constant 0 : index
    %c0_4 = arith.constant 0 : index
    %c0_5 = arith.constant 0 : index
    %c0_6 = arith.constant 0 : index
    %4 = vector.load %arg8[%c0_3, %c0_4, %c0_5, %c0_6] : memref<16x2x4x32xf32, #tpu.memory_space<vmem>>, vector<16x2x4x32xf32>
    tpu.vector_store %arg8[%c0_3, %c0_4, %c0_5, %c0_6], %3 {strides = array<i32>} : memref<16x2x4x32xf32, #tpu.memory_space<vmem>>, vector<16x2x4x32xf32>,
    %cst_7 = arith.constant 0.000000e+00 : f32
    %5 = vector.broadcast %cst_7 : f32 to vector<4x128xf32>
    %c0_8 = arith.constant 0 : index
    %c0_9 = arith.constant 0 : index
    %6 = vector.load %arg9[%c0_8, %c0_9] : memref<4x2304xf32, #tpu.memory_space<vmem>>, vector<4x128xf32>
    tpu.vector_store %arg9[%c0_8, %c0_9], %5 {strides = array<i32>} : memref<4x2304xf32, #tpu.memory_space<vmem>>, vector<4x128xf32>,
    %cst_10 = arith.constant 0.000000e+00 : f32
    %7 = vector.broadcast %cst_10 : f32 to vector<4x128xf32>
    %c0_11 = arith.constant 0 : index
    %c2176 = arith.constant 2176 : index
    %8 = vector.load %arg9[%c0_11, %c2176] : memref<4x2304xf32, #tpu.memory_space<vmem>>, vector<4x128xf32>
    tpu.vector_store %arg9[%c0_11, %c2176], %7 {strides = array<i32>} : memref<4x2304xf32, #tpu.memory_space<vmem>>, vector<4x128xf32>,
    %c0_12 = arith.constant 0 : index
    %c0_13 = arith.constant 0 : index
    %c0_14 = arith.constant 0 : index
    %c0_15 = arith.constant 0 : index
    %9 = vector.load %arg8[%c0_12, %c0_13, %c0_14, %c0_15] : memref<16x2x4x32xf32, #tpu.memory_space<vmem>>, vector<1x1x4x32xf32>
    %10 = vector.shape_cast %9 : vector<1x1x4x32xf32> to vector<4x32xf32>
    %cst_16 = arith.constant 1.000000e+00 : f32
    %11 = vector.broadcast %cst_16 : f32 to vector<4x32xf32>
    %12 = arith.mulf %10, %11 : vector<4x32xf32>
    %c0_17 = arith.constant 0 : index
    %c128 = arith.constant 128 : index
    %13 = vector.load %arg9[%c0_17, %c128] : memref<4x2304xf32, #tpu.memory_space<vmem>>, vector<4x32xf32>
    tpu.vector_store %arg9[%c0_17, %c128], %12 {strides = array<i32>} : memref<4x2304xf32, #tpu.memory_space<vmem>>, vector<4x32xf32>,
    %c0_18 = arith.constant 0 : index
    %c0_19 = arith.constant 0 : index
    %c0_20 = arith.constant 0 : index
    %c0_21 = arith.constant 0 : index
    %14 = vector.load %arg8[%c0_18, %c0_19, %c0_20, %c0_21] : memref<16x2x4x32xf32, #tpu.memory_space<vmem>>, vector<1x1x4x32xf32>
    %15 = vector.shape_cast %14 : vector<1x1x4x32xf32> to vector<4x32xf32>
    %cst_22 = arith.constant 5.161290e-01 : f32
    %16 = vector.broadcast %cst_22 : f32 to vector<4x32xf32>
    %17 = arith.mulf %15, %16 : vector<4x32xf32>
    %c1 = arith.constant 1 : index
    %c0_23 = arith.constant 0 : index
    %c0_24 = arith.constant 0 : index
    %c0_25 = arith.constant 0 : index
    %18 = vector.load %arg8[%c1, %c0_23, %c0_24, %c0_25] : memref<16x2x4x32xf32, #tpu.memory_space<vmem>>, vector<1x1x4x32xf32>
    %19 = vector.shape_cast %18 : vector<1x1x4x32xf32> to vector<4x32xf32>
    %cst_26 = arith.constant 0.483870953 : f32
    %20 = vector.broadcast %cst_26 : f32 to vector<4x32xf32>
    %21 = arith.mulf %19, %20 : vector<4x32xf32>
    %22 = arith.addf %17, %21 : vector<4x32xf32>
    %c0_27 = arith.constant 0 : index
    %c160 = arith.constant 160 : index
    %23 = vector.load %arg9[%c0_27, %c160] : memref<4x2304xf32, #tpu.memory_space<vmem>>, vector<4x32xf32>
    tpu.vector_store %arg9[%c0_27, %c160], %22 {strides = array<i32>} : memref<4x2304xf32, #tpu.memory_space<vmem>>, vector<4x32xf32>,
    %c0_28 = arith.constant 0 : index
    %c0_29 = arith.constant 0 : index
    %c0_30 = arith.constant 0 : index
    %c0_31 = arith.constant 0 : index
    %24 = vector.load %arg8[%c0_28, %c0_29, %c0_30, %c0_31] : memref<16x2x4x32xf32, #tpu.memory_space<vmem>>, vector<1x1x4x32xf32>
    %25 = vector.shape_cast %24 : vector<1x1x4x32xf32> to vector<4x32xf32>
    %cst_32 = arith.constant 0.0322580636 : f32
    %26 = vector.broadcast %cst_32 : f32 to vector<4x32xf32>
    %27 = arith.mulf %25, %26 : vector<4x32xf32>
    %c1_33 = arith.constant 1 : index
    %c0_34 = arith.constant 0 : index
    %c0_35 = arith.constant 0 : index
    %c0_36 = arith.constant 0 : index
    %28 = vector.load %arg8[%c1_33, %c0_34, %c0_35, %c0_36] : memref<16x2x4x32xf32, #tpu.memory_space<vmem>>, vector<1x1x4x32xf32>
    %29 = vector.shape_cast %28 : vector<1x1x4x32xf32> to vector<4x32xf32>
    %cst_37 = arith.constant 0.967741906 : f32
    %30 = vector.broadcast %cst_37 : f32 to vector<4x32xf32>
    %31 = arith.mulf %29, %30 : vector<4x32xf32>
    %32 = arith.addf %27, %31 : vector<4x32xf32>
    %c0_38 = arith.constant 0 : index
    %c192 = arith.constant 192 : index
    %33 = vector.load %arg9[%c0_38, %c192] : memref<4x2304xf32, #tpu.memory_space<vmem>>, vector<4x32xf32>
    tpu.vector_store %arg9[%c0_38, %c192], %32 {strides = array<i32>} : memref<4x2304xf32, #tpu.memory_space<vmem>>, vector<4x32xf32>,
    %c1_39 = arith.constant 1 : index
    %c0_40 = arith.constant 0 : index
    %c0_41 = arith.constant 0 : index
    %c0_42 = arith.constant 0 : index
    %34 = vector.load %arg8[%c1_39, %c0_40, %c0_41, %c0_42] : memref<16x2x4x32xf32, #tpu.memory_space<vmem>>, vector<1x1x4x32xf32>
    %35 = vector.shape_cast %34 : vector<1x1x4x32xf32> to vector<4x32xf32>
    %cst_43 = arith.constant 0.54838711 : f32
    %36 = vector.broadcast %cst_43 : f32 to vector<4x32xf32>
    %37 = arith.mulf %35, %36 : vector<4x32xf32>
    %c2 = arith.constant 2 : index
    %c0_44 = arith.constant 0 : index
    %c0_45 = arith.constant 0 : index
    %c0_46 = arith.constant 0 : index
    %38 = vector.load %arg8[%c2, %c0_44, %c0_45, %c0_46] : memref<16x2x4x32xf32, #tpu.memory_space<vmem>>, vector<1x1x4x32xf32>
    %39 = vector.shape_cast %38 : vector<1x1x4x32xf32> to vector<4x32xf32>
    %cst_47 = arith.constant 0.45161289 : f32
    %40 = vector.broadcast %cst_47 : f32 to vector<4x32xf32>
    %41 = arith.mulf %39, %40 : vector<4x32xf32>
    %42 = arith.addf %37, %41 : vector<4x32xf32>
    %c0_48 = arith.constant 0 : index
    %c224 = arith.constant 224 : index
    %43 = vector.load %arg9[%c0_48, %c224] : memref<4x2304xf32, #tpu.memory_space<vmem>>, vector<4x32xf32>
    tpu.vector_store %arg9[%c0_48, %c224], %42 {strides = array<i32>} : memref<4x2304xf32, #tpu.memory_space<vmem>>, vector<4x32xf32>,
    %c1_49 = arith.constant 1 : index
    %c0_50 = arith.constant 0 : index
    %c0_51 = arith.constant 0 : index
    %c0_52 = arith.constant 0 : index
    %44 = vector.load %arg8[%c1_49, %c0_50, %c0_51, %c0_52] : memref<16x2x4x32xf32, #tpu.memory_space<vmem>>, vector<1x1x4x32xf32>
    %45 = vector.shape_cast %44 : vector<1x1x4x32xf32> to vector<4x32xf32>
    %cst_53 = arith.constant 0.0645161271 : f32
    %46 = vector.broadcast %cst_53 : f32 to vector<4x32xf32>
    %47 = arith.mulf %45, %46 : vector<4x32xf32>
    %c2_54 = arith.constant 2 : index
    %c0_55 = arith.constant 0 : index
    %c0_56 = arith.constant 0 : index
    %c0_57 = arith.constant 0 : index
    %48 = vector.load %arg8[%c2_54, %c0_55, %c0_56, %c0_57] : memref<16x2x4x32xf32, #tpu.memory_space<vmem>>, vector<1x1x4x32xf32>
    %49 = vector.shape_cast %48 : vector<1x1x4x32xf32> to vector<4x32xf32>
    %cst_58 = arith.constant 0.935483872 : f32
    %50 = vector.broadcast %cst_58 : f32 to vector<4x32xf32>
    %51 = arith.mulf %49, %50 : vector<4x32xf32>
    %52 = arith.addf %47, %51 : vector<4x32xf32>
    %c0_59 = arith.constant 0 : index
    %c256 = arith.constant 256 : index
    %53 = vector.load %arg9[%c0_59, %c256] : memref<4x2304xf32, #tpu.memory_space<vmem>>, vector<4x32xf32>
    tpu.vector_store %arg9[%c0_59, %c256], %52 {strides = array<i32>} : memref<4x2304xf32, #tpu.memory_space<vmem>>, vector<4x32xf32>,
    %c2_60 = arith.constant 2 : index
    %c0_61 = arith.constant 0 : index
    %c0_62 = arith.constant 0 : index
    %c0_63 = arith.constant 0 : index
    %54 = vector.load %arg8[%c2_60, %c0_61, %c0_62, %c0_63] : memref<16x2x4x32xf32, #tpu.memory_space<vmem>>, vector<1x1x4x32xf32>
    %55 = vector.shape_cast %54 : vector<1x1x4x32xf32> to vector<4x32xf32>
    %cst_64 = arith.constant 0.580645144 : f32
    %56 = vector.broadcast %cst_64 : f32 to vector<4x32xf32>
    %57 = arith.mulf %55, %56 : vector<4x32xf32>
    %c3 = arith.constant 3 : index
    %c0_65 = arith.constant 0 : index
    %c0_66 = arith.constant 0 : index
    %c0_67 = arith.constant 0 : index
    %58 = vector.load %arg8[%c3, %c0_65, %c0_66, %c0_67] : memref<16x2x4x32xf32, #tpu.memory_space<vmem>>, vector<1x1x4x32xf32>
    %59 = vector.shape_cast %58 : vector<1x1x4x32xf32> to vector<4x32xf32>
    %cst_68 = arith.constant 0.419354826 : f32
    %60 = vector.broadcast %cst_68 : f32 to vector<4x32xf32>
    %61 = arith.mulf %59, %60 : vector<4x32xf32>
    %62 = arith.addf %57, %61 : vector<4x32xf32>
    %c0_69 = arith.constant 0 : index
    %c288 = arith.constant 288 : index
    %63 = vector.load %arg9[%c0_69, %c288] : memref<4x2304xf32, #tpu.memory_space<vmem>>, vector<4x32xf32>
    tpu.vector_store %arg9[%c0_69, %c288], %62 {strides = array<i32>} : memref<4x2304xf32, #tpu.memory_space<vmem>>, vector<4x32xf32>,
    %c2_70 = arith.constant 2 : index
    %c0_71 = arith.constant 0 : index
    %c0_72 = arith.constant 0 : index
    %c0_73 = arith.constant 0 : index
    %64 = vector.load %arg8[%c2_70, %c0_71, %c0_72, %c0_73] : memref<16x2x4x32xf32, #tpu.memory_space<vmem>>, vector<1x1x4x32xf32>
    %65 = vector.shape_cast %64 : vector<1x1x4x32xf32> to vector<4x32xf32>
    %cst_74 = arith.constant 0.0967741906 : f32
    %66 = vector.broadcast %cst_74 : f32 to vector<4x32xf32>
    %67 = arith.mulf %65, %66 : vector<4x32xf32>
    %c3_75 = arith.constant 3 : index
    %c0_76 = arith.constant 0 : index
    %c0_77 = arith.constant 0 : index
    %c0_78 = arith.constant 0 : index
    %68 = vector.load %arg8[%c3_75, %c0_76, %c0_77, %c0_78] : memref<16x2x4x32xf32, #tpu.memory_space<vmem>>, vector<1x1x4x32xf32>
    %69 = vector.shape_cast %68 : vector<1x1x4x32xf32> to vector<4x32xf32>
    %cst_79 = arith.constant 0.903225779 : f32
    %70 = vector.broadcast %cst_79 : f32 to vector<4x32xf32>
    %71 = arith.mulf %69, %70 : vector<4x32xf32>
    %72 = arith.addf %67, %71 : vector<4x32xf32>
    %c0_80 = arith.constant 0 : index
    %c320 = arith.constant 320 : index
    %73 = vector.load %arg9[%c0_80, %c320] : memref<4x2304xf32, #tpu.memory_space<vmem>>, vector<4x32xf32>
    tpu.vector_store %arg9[%c0_80, %c320], %72 {strides = array<i32>} : memref<4x2304xf32, #tpu.memory_space<vmem>>, vector<4x32xf32>,
    %c3_81 = arith.constant 3 : index
    %c0_82 = arith.constant 0 : index
    %c0_83 = arith.constant 0 : index
    %c0_84 = arith.constant 0 : index
    %74 = vector.load %arg8[%c3_81, %c0_82, %c0_83, %c0_84] : memref<16x2x4x32xf32, #tpu.memory_space<vmem>>, vector<1x1x4x32xf32>
    %75 = vector.shape_cast %74 : vector<1x1x4x32xf32> to vector<4x32xf32>
    %cst_85 = arith.constant 0.612903237 : f32
    %76 = vector.broadcast %cst_85 : f32 to vector<4x32xf32>
    %77 = arith.mulf %75, %76 : vector<4x32xf32>
    %c4 = arith.constant 4 : index
    %c0_86 = arith.constant 0 : index
    %c0_87 = arith.constant 0 : index
    %c0_88 = arith.constant 0 : index
    %78 = vector.load %arg8[%c4, %c0_86, %c0_87, %c0_88] : memref<16x2x4x32xf32, #tpu.memory_space<vmem>>, vector<1x1x4x32xf32>
    %79 = vector.shape_cast %78 : vector<1x1x4x32xf32> to vector<4x32xf32>
    %cst_89 = arith.constant 0.387096763 : f32
    %80 = vector.broadcast %cst_89 : f32 to vector<4x32xf32>
    %81 = arith.mulf %79, %80 : vector<4x32xf32>
    %82 = arith.addf %77, %81 : vector<4x32xf32>
    %c0_90 = arith.constant 0 : index
    %c352 = arith.constant 352 : index
    %83 = vector.load %arg9[%c0_90, %c352] : memref<4x2304xf32, #tpu.memory_space<vmem>>, vector<4x32xf32>
    tpu.vector_store %arg9[%c0_90, %c352], %82 {strides = array<i32>} : memref<4x2304xf32, #tpu.memory_space<vmem>>, vector<4x32xf32>,
    %c3_91 = arith.constant 3 : index
    %c0_92 = arith.constant 0 : index
    %c0_93 = arith.constant 0 : index
    %c0_94 = arith.constant 0 : index
    %84 = vector.load %arg8[%c3_91, %c0_92, %c0_93, %c0_94] : memref<16x2x4x32xf32, #tpu.memory_space<vmem>>, vector<1x1x4x32xf32>
    %85 = vector.shape_cast %84 : vector<1x1x4x32xf32> to vector<4x32xf32>
    %cst_95 = arith.constant 0.129032254 : f32
    %86 = vector.broadcast %cst_95 : f32 to vector<4x32xf32>
    %87 = arith.mulf %85, %86 : vector<4x32xf32>
    %c4_96 = arith.constant 4 : index
    %c0_97 = arith.constant 0 : index
    %c0_98 = arith.constant 0 : index
    %c0_99 = arith.constant 0 : index
    %88 = vector.load %arg8[%c4_96, %c0_97, %c0_98, %c0_99] : memref<16x2x4x32xf32, #tpu.memory_space<vmem>>, vector<1x1x4x32xf32>
    %89 = vector.shape_cast %88 : vector<1x1x4x32xf32> to vector<4x32xf32>
    %cst_100 = arith.constant 0.870967745 : f32
    %90 = vector.broadcast %cst_100 : f32 to vector<4x32xf32>
    %91 = arith.mulf %89, %90 : vector<4x32xf32>
    %92 = arith.addf %87, %91 : vector<4x32xf32>
    %c0_101 = arith.constant 0 : index
    %c384 = arith.constant 384 : index
    %93 = vector.load %arg9[%c0_101, %c384] : memref<4x2304xf32, #tpu.memory_space<vmem>>, vector<4x32xf32>
    tpu.vector_store %arg9[%c0_101, %c384], %92 {strides = array<i32>} : memref<4x2304xf32, #tpu.memory_space<vmem>>, vector<4x32xf32>,
    %c4_102 = arith.constant 4 : index
    %c0_103 = arith.constant 0 : index
    %c0_104 = arith.constant 0 : index
    %c0_105 = arith.constant 0 : index
    %94 = vector.load %arg8[%c4_102, %c0_103, %c0_104, %c0_105] : memref<16x2x4x32xf32, #tpu.memory_space<vmem>>, vector<1x1x4x32xf32>
    %95 = vector.shape_cast %94 : vector<1x1x4x32xf32> to vector<4x32xf32>
    %cst_106 = arith.constant 0.645161271 : f32
    %96 = vector.broadcast %cst_106 : f32 to vector<4x32xf32>
    %97 = arith.mulf %95, %96 : vector<4x32xf32>
    %c5 = arith.constant 5 : index
    %c0_107 = arith.constant 0 : index
    %c0_108 = arith.constant 0 : index
    %c0_109 = arith.constant 0 : index
    %98 = vector.load %arg8[%c5, %c0_107, %c0_108, %c0_109] : memref<16x2x4x32xf32, #tpu.memory_space<vmem>>, vector<1x1x4x32xf32>
    %99 = vector.shape_cast %98 : vector<1x1x4x32xf32> to vector<4x32xf32>
    %cst_110 = arith.constant 0.354838699 : f32
    %100 = vector.broadcast %cst_110 : f32 to vector<4x32xf32>
    %101 = arith.mulf %99, %100 : vector<4x32xf32>
    %102 = arith.addf %97, %101 : vector<4x32xf32>
    %c0_111 = arith.constant 0 : index
    %c416 = arith.constant 416 : index
    %103 = vector.load %arg9[%c0_111, %c416] : memref<4x2304xf32, #tpu.memory_space<vmem>>, vector<4x32xf32>
    tpu.vector_store %arg9[%c0_111, %c416], %102 {strides = array<i32>} : memref<4x2304xf32, #tpu.memory_space<vmem>>, vector<4x32xf32>,
    %c4_112 = arith.constant 4 : index
    %c0_113 = arith.constant 0 : index
    %c0_114 = arith.constant 0 : index
    %c0_115 = arith.constant 0 : index
    %104 = vector.load %arg8[%c4_112, %c0_113, %c0_114, %c0_115] : memref<16x2x4x32xf32, #tpu.memory_space<vmem>>, vector<1x1x4x32xf32>
    %105 = vector.shape_cast %104 : vector<1x1x4x32xf32> to vector<4x32xf32>
    %cst_116 = arith.constant 0.161290318 : f32
    %106 = vector.broadcast %cst_116 : f32 to vector<4x32xf32>
    %107 = arith.mulf %105, %106 : vector<4x32xf32>
    %c5_117 = arith.constant 5 : index
    %c0_118 = arith.constant 0 : index
    %c0_119 = arith.constant 0 : index
    %c0_120 = arith.constant 0 : index
    %108 = vector.load %arg8[%c5_117, %c0_118, %c0_119, %c0_120] : memref<16x2x4x32xf32, #tpu.memory_space<vmem>>, vector<1x1x4x32xf32>
    %109 = vector.shape_cast %108 : vector<1x1x4x32xf32> to vector<4x32xf32>
    %cst_121 = arith.constant 0.838709652 : f32
    %110 = vector.broadcast %cst_121 : f32 to vector<4x32xf32>
    %111 = arith.mulf %109, %110 : vector<4x32xf32>
    %112 = arith.addf %107, %111 : vector<4x32xf32>
    %c0_122 = arith.constant 0 : index
    %c448 = arith.constant 448 : index
    %113 = vector.load %arg9[%c0_122, %c448] : memref<4x2304xf32, #tpu.memory_space<vmem>>, vector<4x32xf32>
    tpu.vector_store %arg9[%c0_122, %c448], %112 {strides = array<i32>} : memref<4x2304xf32, #tpu.memory_space<vmem>>, vector<4x32xf32>,
    %c5_123 = arith.constant 5 : index
    %c0_124 = arith.constant 0 : index
    %c0_125 = arith.constant 0 : index
    %c0_126 = arith.constant 0 : index
    %114 = vector.load %arg8[%c5_123, %c0_124, %c0_125, %c0_126] : memref<16x2x4x32xf32, #tpu.memory_space<vmem>>, vector<1x1x4x32xf32>
    %115 = vector.shape_cast %114 : vector<1x1x4x32xf32> to vector<4x32xf32>
    %cst_127 = arith.constant 0.677419364 : f32
    %116 = vector.broadcast %cst_127 : f32 to vector<4x32xf32>
    %117 = arith.mulf %115, %116 : vector<4x32xf32>
    %c6 = arith.constant 6 : index
    %c0_128 = arith.constant 0 : index
    %c0_129 = arith.constant 0 : index
    %c0_130 = arith.constant 0 : index
    %118 = vector.load %arg8[%c6, %c0_128, %c0_129, %c0_130] : memref<16x2x4x32xf32, #tpu.memory_space<vmem>>, vector<1x1x4x32xf32>
    %119 = vector.shape_cast %118 : vector<1x1x4x32xf32> to vector<4x32xf32>
    %cst_131 = arith.constant 0.322580636 : f32
    %120 = vector.broadcast %cst_131 : f32 to vector<4x32xf32>
    %121 = arith.mulf %119, %120 : vector<4x32xf32>
    %122 = arith.addf %117, %121 : vector<4x32xf32>
    %c0_132 = arith.constant 0 : index
    %c480 = arith.constant 480 : index
    %123 = vector.load %arg9[%c0_132, %c480] : memref<4x2304xf32, #tpu.memory_space<vmem>>, vector<4x32xf32>
    tpu.vector_store %arg9[%c0_132, %c480], %122 {strides = array<i32>} : memref<4x2304xf32, #tpu.memory_space<vmem>>, vector<4x32xf32>,
    %c5_133 = arith.constant 5 : index
    %c0_134 = arith.constant 0 : index
    %c0_135 = arith.constant 0 : index
    %c0_136 = arith.constant 0 : index
    %124 = vector.load %arg8[%c5_133, %c0_134, %c0_135, %c0_136] : memref<16x2x4x32xf32, #tpu.memory_space<vmem>>, vector<1x1x4x32xf32>
    %125 = vector.shape_cast %124 : vector<1x1x4x32xf32> to vector<4x32xf32>
    %cst_137 = arith.constant 0.193548381 : f32
    %126 = vector.broadcast %cst_137 : f32 to vector<4x32xf32>
    %127 = arith.mulf %125, %126 : vector<4x32xf32>
    %c6_138 = arith.constant 6 : index
    %c0_139 = arith.constant 0 : index
    %c0_140 = arith.constant 0 : index
    %c0_141 = arith.constant 0 : index
    %128 = vector.load %arg8[%c6_138, %c0_139, %c0_140, %c0_141] : memref<16x2x4x32xf32, #tpu.memory_space<vmem>>, vector<1x1x4x32xf32>
    %129 = vector.shape_cast %128 : vector<1x1x4x32xf32> to vector<4x32xf32>
    %cst_142 = arith.constant 0.806451618 : f32
    %130 = vector.broadcast %cst_142 : f32 to vector<4x32xf32>
    %131 = arith.mulf %129, %130 : vector<4x32xf32>
    %132 = arith.addf %127, %131 : vector<4x32xf32>
    %c0_143 = arith.constant 0 : index
    %c512 = arith.constant 512 : index
    %133 = vector.load %arg9[%c0_143, %c512] : memref<4x2304xf32, #tpu.memory_space<vmem>>, vector<4x32xf32>
    tpu.vector_store %arg9[%c0_143, %c512], %132 {strides = array<i32>} : memref<4x2304xf32, #tpu.memory_space<vmem>>, vector<4x32xf32>,
    %c6_144 = arith.constant 6 : index
    %c0_145 = arith.constant 0 : index
    %c0_146 = arith.constant 0 : index
    %c0_147 = arith.constant 0 : index
    %134 = vector.load %arg8[%c6_144, %c0_145, %c0_146, %c0_147] : memref<16x2x4x32xf32, #tpu.memory_space<vmem>>, vector<1x1x4x32xf32>
    %135 = vector.shape_cast %134 : vector<1x1x4x32xf32> to vector<4x32xf32>
    %cst_148 = arith.constant 0.709677398 : f32
    %136 = vector.broadcast %cst_148 : f32 to vector<4x32xf32>
    %137 = arith.mulf %135, %136 : vector<4x32xf32>
    %c7 = arith.constant 7 : index
    %c0_149 = arith.constant 0 : index
    %c0_150 = arith.constant 0 : index
    %c0_151 = arith.constant 0 : index
    %138 = vector.load %arg8[%c7, %c0_149, %c0_150, %c0_151] : memref<16x2x4x32xf32, #tpu.memory_space<vmem>>, vector<1x1x4x32xf32>
    %139 = vector.shape_cast %138 : vector<1x1x4x32xf32> to vector<4x32xf32>
    %cst_152 = arith.constant 0.290322572 : f32
    %140 = vector.broadcast %cst_152 : f32 to vector<4x32xf32>
    %141 = arith.mulf %139, %140 : vector<4x32xf32>
    %142 = arith.addf %137, %141 : vector<4x32xf32>
    %c0_153 = arith.constant 0 : index
    %c544 = arith.constant 544 : index
    %143 = vector.load %arg9[%c0_153, %c544] : memref<4x2304xf32, #tpu.memory_space<vmem>>, vector<4x32xf32>
    tpu.vector_store %arg9[%c0_153, %c544], %142 {strides = array<i32>} : memref<4x2304xf32, #tpu.memory_space<vmem>>, vector<4x32xf32>,
    %c6_154 = arith.constant 6 : index
    %c0_155 = arith.constant 0 : index
    %c0_156 = arith.constant 0 : index
    %c0_157 = arith.constant 0 : index
    %144 = vector.load %arg8[%c6_154, %c0_155, %c0_156, %c0_157] : memref<16x2x4x32xf32, #tpu.memory_space<vmem>>, vector<1x1x4x32xf32>
    %145 = vector.shape_cast %144 : vector<1x1x4x32xf32> to vector<4x32xf32>
    %cst_158 = arith.constant 0.225806445 : f32
    %146 = vector.broadcast %cst_158 : f32 to vector<4x32xf32>
    %147 = arith.mulf %145, %146 : vector<4x32xf32>
    %c7_159 = arith.constant 7 : index
    %c0_160 = arith.constant 0 : index
    %c0_161 = arith.constant 0 : index
    %c0_162 = arith.constant 0 : index
    %148 = vector.load %arg8[%c7_159, %c0_160, %c0_161, %c0_162] : memref<16x2x4x32xf32, #tpu.memory_space<vmem>>, vector<1x1x4x32xf32>
    %149 = vector.shape_cast %148 : vector<1x1x4x32xf32> to vector<4x32xf32>
    %cst_163 = arith.constant 0.774193525 : f32
    %150 = vector.broadcast %cst_163 : f32 to vector<4x32xf32>
    %151 = arith.mulf %149, %150 : vector<4x32xf32>
    %152 = arith.addf %147, %151 : vector<4x32xf32>
    %c0_164 = arith.constant 0 : index
    %c576 = arith.constant 576 : index
    %153 = vector.load %arg9[%c0_164, %c576] : memref<4x2304xf32, #tpu.memory_space<vmem>>, vector<4x32xf32>
    tpu.vector_store %arg9[%c0_164, %c576], %152 {strides = array<i32>} : memref<4x2304xf32, #tpu.memory_space<vmem>>, vector<4x32xf32>,
    %c7_165 = arith.constant 7 : index
    %c0_166 = arith.constant 0 : index
    %c0_167 = arith.constant 0 : index
    %c0_168 = arith.constant 0 : index
    %154 = vector.load %arg8[%c7_165, %c0_166, %c0_167, %c0_168] : memref<16x2x4x32xf32, #tpu.memory_space<vmem>>, vector<1x1x4x32xf32>
    %155 = vector.shape_cast %154 : vector<1x1x4x32xf32> to vector<4x32xf32>
    %cst_169 = arith.constant 0.741935492 : f32
    %156 = vector.broadcast %cst_169 : f32 to vector<4x32xf32>
    %157 = arith.mulf %155, %156 : vector<4x32xf32>
    %c8 = arith.constant 8 : index
    %c0_170 = arith.constant 0 : index
    %c0_171 = arith.constant 0 : index
    %c0_172 = arith.constant 0 : index
    %158 = vector.load %arg8[%c8, %c0_170, %c0_171, %c0_172] : memref<16x2x4x32xf32, #tpu.memory_space<vmem>>, vector<1x1x4x32xf32>
    %159 = vector.shape_cast %158 : vector<1x1x4x32xf32> to vector<4x32xf32>
    %cst_173 = arith.constant 0.258064508 : f32
    %160 = vector.broadcast %cst_173 : f32 to vector<4x32xf32>
    %161 = arith.mulf %159, %160 : vector<4x32xf32>
    %162 = arith.addf %157, %161 : vector<4x32xf32>
    %c0_174 = arith.constant 0 : index
    %c608 = arith.constant 608 : index
    %163 = vector.load %arg9[%c0_174, %c608] : memref<4x2304xf32, #tpu.memory_space<vmem>>, vector<4x32xf32>
    tpu.vector_store %arg9[%c0_174, %c608], %162 {strides = array<i32>} : memref<4x2304xf32, #tpu.memory_space<vmem>>, vector<4x32xf32>,
    %c7_175 = arith.constant 7 : index
    %c0_176 = arith.constant 0 : index
    %c0_177 = arith.constant 0 : index
    %c0_178 = arith.constant 0 : index
    %164 = vector.load %arg8[%c7_175, %c0_176, %c0_177, %c0_178] : memref<16x2x4x32xf32, #tpu.memory_space<vmem>>, vector<1x1x4x32xf32>
    %165 = vector.shape_cast %164 : vector<1x1x4x32xf32> to vector<4x32xf32>
    %cst_179 = arith.constant 0.258064508 : f32
    %166 = vector.broadcast %cst_179 : f32 to vector<4x32xf32>
    %167 = arith.mulf %165, %166 : vector<4x32xf32>
    %c8_180 = arith.constant 8 : index
    %c0_181 = arith.constant 0 : index
    %c0_182 = arith.constant 0 : index
    %c0_183 = arith.constant 0 : index
    %168 = vector.load %arg8[%c8_180, %c0_181, %c0_182, %c0_183] : memref<16x2x4x32xf32, #tpu.memory_space<vmem>>, vector<1x1x4x32xf32>
    %169 = vector.shape_cast %168 : vector<1x1x4x32xf32> to vector<4x32xf32>
    %cst_184 = arith.constant 0.741935492 : f32
    %170 = vector.broadcast %cst_184 : f32 to vector<4x32xf32>
    %171 = arith.mulf %169, %170 : vector<4x32xf32>
    %172 = arith.addf %167, %171 : vector<4x32xf32>
    %c0_185 = arith.constant 0 : index
    %c640 = arith.constant 640 : index
    %173 = vector.load %arg9[%c0_185, %c640] : memref<4x2304xf32, #tpu.memory_space<vmem>>, vector<4x32xf32>
    tpu.vector_store %arg9[%c0_185, %c640], %172 {strides = array<i32>} : memref<4x2304xf32, #tpu.memory_space<vmem>>, vector<4x32xf32>,
    %c8_186 = arith.constant 8 : index
    %c0_187 = arith.constant 0 : index
    %c0_188 = arith.constant 0 : index
    %c0_189 = arith.constant 0 : index
    %174 = vector.load %arg8[%c8_186, %c0_187, %c0_188, %c0_189] : memref<16x2x4x32xf32, #tpu.memory_space<vmem>>, vector<1x1x4x32xf32>
    %175 = vector.shape_cast %174 : vector<1x1x4x32xf32> to vector<4x32xf32>
    %cst_190 = arith.constant 0.774193525 : f32
    %176 = vector.broadcast %cst_190 : f32 to vector<4x32xf32>
    %177 = arith.mulf %175, %176 : vector<4x32xf32>
    %c9 = arith.constant 9 : index
    %c0_191 = arith.constant 0 : index
    %c0_192 = arith.constant 0 : index
    %c0_193 = arith.constant 0 : index
    %178 = vector.load %arg8[%c9, %c0_191, %c0_192, %c0_193] : memref<16x2x4x32xf32, #tpu.memory_space<vmem>>, vector<1x1x4x32xf32>
    %179 = vector.shape_cast %178 : vector<1x1x4x32xf32> to vector<4x32xf32>
    %cst_194 = arith.constant 0.225806445 : f32
    %180 = vector.broadcast %cst_194 : f32 to vector<4x32xf32>
    %181 = arith.mulf %179, %180 : vector<4x32xf32>
    %182 = arith.addf %177, %181 : vector<4x32xf32>
    %c0_195 = arith.constant 0 : index
    %c672 = arith.constant 672 : index
    %183 = vector.load %arg9[%c0_195, %c672] : memref<4x2304xf32, #tpu.memory_space<vmem>>, vector<4x32xf32>
    tpu.vector_store %arg9[%c0_195, %c672], %182 {strides = array<i32>} : memref<4x2304xf32, #tpu.memory_space<vmem>>, vector<4x32xf32>,
    %c8_196 = arith.constant 8 : index
    %c0_197 = arith.constant 0 : index
    %c0_198 = arith.constant 0 : index
    %c0_199 = arith.constant 0 : index
    %184 = vector.load %arg8[%c8_196, %c0_197, %c0_198, %c0_199] : memref<16x2x4x32xf32, #tpu.memory_space<vmem>>, vector<1x1x4x32xf32>
    %185 = vector.shape_cast %184 : vector<1x1x4x32xf32> to vector<4x32xf32>
    %cst_200 = arith.constant 0.290322572 : f32
    %186 = vector.broadcast %cst_200 : f32 to vector<4x32xf32>
    %187 = arith.mulf %185, %186 : vector<4x32xf32>
    %c9_201 = arith.constant 9 : index
    %c0_202 = arith.constant 0 : index
    %c0_203 = arith.constant 0 : index
    %c0_204 = arith.constant 0 : index
    %188 = vector.load %arg8[%c9_201, %c0_202, %c0_203, %c0_204] : memref<16x2x4x32xf32, #tpu.memory_space<vmem>>, vector<1x1x4x32xf32>
    %189 = vector.shape_cast %188 : vector<1x1x4x32xf32> to vector<4x32xf32>
    %cst_205 = arith.constant 0.709677398 : f32
    %190 = vector.broadcast %cst_205 : f32 to vector<4x32xf32>
    %191 = arith.mulf %189, %190 : vector<4x32xf32>
    %192 = arith.addf %187, %191 : vector<4x32xf32>
    %c0_206 = arith.constant 0 : index
    %c704 = arith.constant 704 : index
    %193 = vector.load %arg9[%c0_206, %c704] : memref<4x2304xf32, #tpu.memory_space<vmem>>, vector<4x32xf32>
    tpu.vector_store %arg9[%c0_206, %c704], %192 {strides = array<i32>} : memref<4x2304xf32, #tpu.memory_space<vmem>>, vector<4x32xf32>,
    %c9_207 = arith.constant 9 : index
    %c0_208 = arith.constant 0 : index
    %c0_209 = arith.constant 0 : index
    %c0_210 = arith.constant 0 : index
    %194 = vector.load %arg8[%c9_207, %c0_208, %c0_209, %c0_210] : memref<16x2x4x32xf32, #tpu.memory_space<vmem>>, vector<1x1x4x32xf32>
    %195 = vector.shape_cast %194 : vector<1x1x4x32xf32> to vector<4x32xf32>
    %cst_211 = arith.constant 0.806451618 : f32
    %196 = vector.broadcast %cst_211 : f32 to vector<4x32xf32>
    %197 = arith.mulf %195, %196 : vector<4x32xf32>
    %c10 = arith.constant 10 : index
    %c0_212 = arith.constant 0 : index
    %c0_213 = arith.constant 0 : index
    %c0_214 = arith.constant 0 : index
    %198 = vector.load %arg8[%c10, %c0_212, %c0_213, %c0_214] : memref<16x2x4x32xf32, #tpu.memory_space<vmem>>, vector<1x1x4x32xf32>
    %199 = vector.shape_cast %198 : vector<1x1x4x32xf32> to vector<4x32xf32>
    %cst_215 = arith.constant 0.193548381 : f32
    %200 = vector.broadcast %cst_215 : f32 to vector<4x32xf32>
    %201 = arith.mulf %199, %200 : vector<4x32xf32>
    %202 = arith.addf %197, %201 : vector<4x32xf32>
    %c0_216 = arith.constant 0 : index
    %c736 = arith.constant 736 : index
    %203 = vector.load %arg9[%c0_216, %c736] : memref<4x2304xf32, #tpu.memory_space<vmem>>, vector<4x32xf32>
    tpu.vector_store %arg9[%c0_216, %c736], %202 {strides = array<i32>} : memref<4x2304xf32, #tpu.memory_space<vmem>>, vector<4x32xf32>,
    %c9_217 = arith.constant 9 : index
    %c0_218 = arith.constant 0 : index
    %c0_219 = arith.constant 0 : index
    %c0_220 = arith.constant 0 : index
    %204 = vector.load %arg8[%c9_217, %c0_218, %c0_219, %c0_220] : memref<16x2x4x32xf32, #tpu.memory_space<vmem>>, vector<1x1x4x32xf32>
    %205 = vector.shape_cast %204 : vector<1x1x4x32xf32> to vector<4x32xf32>
    %cst_221 = arith.constant 0.322580636 : f32
    %206 = vector.broadcast %cst_221 : f32 to vector<4x32xf32>
    %207 = arith.mulf %205, %206 : vector<4x32xf32>
    %c10_222 = arith.constant 10 : index
    %c0_223 = arith.constant 0 : index
    %c0_224 = arith.constant 0 : index
    %c0_225 = arith.constant 0 : index
    %208 = vector.load %arg8[%c10_222, %c0_223, %c0_224, %c0_225] : memref<16x2x4x32xf32, #tpu.memory_space<vmem>>, vector<1x1x4x32xf32>
    %209 = vector.shape_cast %208 : vector<1x1x4x32xf32> to vector<4x32xf32>
    %cst_226 = arith.constant 0.677419364 : f32
    %210 = vector.broadcast %cst_226 : f32 to vector<4x32xf32>
    %211 = arith.mulf %209, %210 : vector<4x32xf32>
    %212 = arith.addf %207, %211 : vector<4x32xf32>
    %c0_227 = arith.constant 0 : index
    %c768 = arith.constant 768 : index
    %213 = vector.load %arg9[%c0_227, %c768] : memref<4x2304xf32, #tpu.memory_space<vmem>>, vector<4x32xf32>
    tpu.vector_store %arg9[%c0_227, %c768], %212 {strides = array<i32>} : memref<4x2304xf32, #tpu.memory_space<vmem>>, vector<4x32xf32>,
    %c10_228 = arith.constant 10 : index
    %c0_229 = arith.constant 0 : index
    %c0_230 = arith.constant 0 : index
    %c0_231 = arith.constant 0 : index
    %214 = vector.load %arg8[%c10_228, %c0_229, %c0_230, %c0_231] : memref<16x2x4x32xf32, #tpu.memory_space<vmem>>, vector<1x1x4x32xf32>
    %215 = vector.shape_cast %214 : vector<1x1x4x32xf32> to vector<4x32xf32>
    %cst_232 = arith.constant 0.838709652 : f32
    %216 = vector.broadcast %cst_232 : f32 to vector<4x32xf32>
    %217 = arith.mulf %215, %216 : vector<4x32xf32>
    %c11 = arith.constant 11 : index
    %c0_233 = arith.constant 0 : index
    %c0_234 = arith.constant 0 : index
    %c0_235 = arith.constant 0 : index
    %218 = vector.load %arg8[%c11, %c0_233, %c0_234, %c0_235] : memref<16x2x4x32xf32, #tpu.memory_space<vmem>>, vector<1x1x4x32xf32>
    %219 = vector.shape_cast %218 : vector<1x1x4x32xf32> to vector<4x32xf32>
    %cst_236 = arith.constant 0.161290318 : f32
    %220 = vector.broadcast %cst_236 : f32 to vector<4x32xf32>
    %221 = arith.mulf %219, %220 : vector<4x32xf32>
    %222 = arith.addf %217, %221 : vector<4x32xf32>
    %c0_237 = arith.constant 0 : index
    %c800 = arith.constant 800 : index
    %223 = vector.load %arg9[%c0_237, %c800] : memref<4x2304xf32, #tpu.memory_space<vmem>>, vector<4x32xf32>
    tpu.vector_store %arg9[%c0_237, %c800], %222 {strides = array<i32>} : memref<4x2304xf32, #tpu.memory_space<vmem>>, vector<4x32xf32>,
    %c10_238 = arith.constant 10 : index
    %c0_239 = arith.constant 0 : index
    %c0_240 = arith.constant 0 : index
    %c0_241 = arith.constant 0 : index
    %224 = vector.load %arg8[%c10_238, %c0_239, %c0_240, %c0_241] : memref<16x2x4x32xf32, #tpu.memory_space<vmem>>, vector<1x1x4x32xf32>
    %225 = vector.shape_cast %224 : vector<1x1x4x32xf32> to vector<4x32xf32>
    %cst_242 = arith.constant 0.354838699 : f32
    %226 = vector.broadcast %cst_242 : f32 to vector<4x32xf32>
    %227 = arith.mulf %225, %226 : vector<4x32xf32>
    %c11_243 = arith.constant 11 : index
    %c0_244 = arith.constant 0 : index
    %c0_245 = arith.constant 0 : index
    %c0_246 = arith.constant 0 : index
    %228 = vector.load %arg8[%c11_243, %c0_244, %c0_245, %c0_246] : memref<16x2x4x32xf32, #tpu.memory_space<vmem>>, vector<1x1x4x32xf32>
    %229 = vector.shape_cast %228 : vector<1x1x4x32xf32> to vector<4x32xf32>
    %cst_247 = arith.constant 0.645161271 : f32
    %230 = vector.broadcast %cst_247 : f32 to vector<4x32xf32>
    %231 = arith.mulf %229, %230 : vector<4x32xf32>
    %232 = arith.addf %227, %231 : vector<4x32xf32>
    %c0_248 = arith.constant 0 : index
    %c832 = arith.constant 832 : index
    %233 = vector.load %arg9[%c0_248, %c832] : memref<4x2304xf32, #tpu.memory_space<vmem>>, vector<4x32xf32>
    tpu.vector_store %arg9[%c0_248, %c832], %232 {strides = array<i32>} : memref<4x2304xf32, #tpu.memory_space<vmem>>, vector<4x32xf32>,
    %c11_249 = arith.constant 11 : index
    %c0_250 = arith.constant 0 : index
    %c0_251 = arith.constant 0 : index
    %c0_252 = arith.constant 0 : index
    %234 = vector.load %arg8[%c11_249, %c0_250, %c0_251, %c0_252] : memref<16x2x4x32xf32, #tpu.memory_space<vmem>>, vector<1x1x4x32xf32>
    %235 = vector.shape_cast %234 : vector<1x1x4x32xf32> to vector<4x32xf32>
    %cst_253 = arith.constant 0.870967745 : f32
    %236 = vector.broadcast %cst_253 : f32 to vector<4x32xf32>
    %237 = arith.mulf %235, %236 : vector<4x32xf32>
    %c12 = arith.constant 12 : index
    %c0_254 = arith.constant 0 : index
    %c0_255 = arith.constant 0 : index
    %c0_256 = arith.constant 0 : index
    %238 = vector.load %arg8[%c12, %c0_254, %c0_255, %c0_256] : memref<16x2x4x32xf32, #tpu.memory_space<vmem>>, vector<1x1x4x32xf32>
    %239 = vector.shape_cast %238 : vector<1x1x4x32xf32> to vector<4x32xf32>
    %cst_257 = arith.constant 0.129032254 : f32
    %240 = vector.broadcast %cst_257 : f32 to vector<4x32xf32>
    %241 = arith.mulf %239, %240 : vector<4x32xf32>
    %242 = arith.addf %237, %241 : vector<4x32xf32>
    %c0_258 = arith.constant 0 : index
    %c864 = arith.constant 864 : index
    %243 = vector.load %arg9[%c0_258, %c864] : memref<4x2304xf32, #tpu.memory_space<vmem>>, vector<4x32xf32>
    tpu.vector_store %arg9[%c0_258, %c864], %242 {strides = array<i32>} : memref<4x2304xf32, #tpu.memory_space<vmem>>, vector<4x32xf32>,
    %c11_259 = arith.constant 11 : index
    %c0_260 = arith.constant 0 : index
    %c0_261 = arith.constant 0 : index
    %c0_262 = arith.constant 0 : index
    %244 = vector.load %arg8[%c11_259, %c0_260, %c0_261, %c0_262] : memref<16x2x4x32xf32, #tpu.memory_space<vmem>>, vector<1x1x4x32xf32>
    %245 = vector.shape_cast %244 : vector<1x1x4x32xf32> to vector<4x32xf32>
    %cst_263 = arith.constant 0.387096763 : f32
    %246 = vector.broadcast %cst_263 : f32 to vector<4x32xf32>
    %247 = arith.mulf %245, %246 : vector<4x32xf32>
    %c12_264 = arith.constant 12 : index
    %c0_265 = arith.constant 0 : index
    %c0_266 = arith.constant 0 : index
    %c0_267 = arith.constant 0 : index
    %248 = vector.load %arg8[%c12_264, %c0_265, %c0_266, %c0_267] : memref<16x2x4x32xf32, #tpu.memory_space<vmem>>, vector<1x1x4x32xf32>
    %249 = vector.shape_cast %248 : vector<1x1x4x32xf32> to vector<4x32xf32>
    %cst_268 = arith.constant 0.612903237 : f32
    %250 = vector.broadcast %cst_268 : f32 to vector<4x32xf32>
    %251 = arith.mulf %249, %250 : vector<4x32xf32>
    %252 = arith.addf %247, %251 : vector<4x32xf32>
    %c0_269 = arith.constant 0 : index
    %c896 = arith.constant 896 : index
    %253 = vector.load %arg9[%c0_269, %c896] : memref<4x2304xf32, #tpu.memory_space<vmem>>, vector<4x32xf32>
    tpu.vector_store %arg9[%c0_269, %c896], %252 {strides = array<i32>} : memref<4x2304xf32, #tpu.memory_space<vmem>>, vector<4x32xf32>,
    %c12_270 = arith.constant 12 : index
    %c0_271 = arith.constant 0 : index
    %c0_272 = arith.constant 0 : index
    %c0_273 = arith.constant 0 : index
    %254 = vector.load %arg8[%c12_270, %c0_271, %c0_272, %c0_273] : memref<16x2x4x32xf32, #tpu.memory_space<vmem>>, vector<1x1x4x32xf32>
    %255 = vector.shape_cast %254 : vector<1x1x4x32xf32> to vector<4x32xf32>
    %cst_274 = arith.constant 0.903225779 : f32
    %256 = vector.broadcast %cst_274 : f32 to vector<4x32xf32>
    %257 = arith.mulf %255, %256 : vector<4x32xf32>
    %c13 = arith.constant 13 : index
    %c0_275 = arith.constant 0 : index
    %c0_276 = arith.constant 0 : index
    %c0_277 = arith.constant 0 : index
    %258 = vector.load %arg8[%c13, %c0_275, %c0_276, %c0_277] : memref<16x2x4x32xf32, #tpu.memory_space<vmem>>, vector<1x1x4x32xf32>
    %259 = vector.shape_cast %258 : vector<1x1x4x32xf32> to vector<4x32xf32>
    %cst_278 = arith.constant 0.0967741906 : f32
    %260 = vector.broadcast %cst_278 : f32 to vector<4x32xf32>
    %261 = arith.mulf %259, %260 : vector<4x32xf32>
    %262 = arith.addf %257, %261 : vector<4x32xf32>
    %c0_279 = arith.constant 0 : index
    %c928 = arith.constant 928 : index
    %263 = vector.load %arg9[%c0_279, %c928] : memref<4x2304xf32, #tpu.memory_space<vmem>>, vector<4x32xf32>
    tpu.vector_store %arg9[%c0_279, %c928], %262 {strides = array<i32>} : memref<4x2304xf32, #tpu.memory_space<vmem>>, vector<4x32xf32>,
    %c12_280 = arith.constant 12 : index
    %c0_281 = arith.constant 0 : index
    %c0_282 = arith.constant 0 : index
    %c0_283 = arith.constant 0 : index
    %264 = vector.load %arg8[%c12_280, %c0_281, %c0_282, %c0_283] : memref<16x2x4x32xf32, #tpu.memory_space<vmem>>, vector<1x1x4x32xf32>
    %265 = vector.shape_cast %264 : vector<1x1x4x32xf32> to vector<4x32xf32>
    %cst_284 = arith.constant 0.419354826 : f32
    %266 = vector.broadcast %cst_284 : f32 to vector<4x32xf32>
    %267 = arith.mulf %265, %266 : vector<4x32xf32>
    %c13_285 = arith.constant 13 : index
    %c0_286 = arith.constant 0 : index
    %c0_287 = arith.constant 0 : index
    %c0_288 = arith.constant 0 : index
    %268 = vector.load %arg8[%c13_285, %c0_286, %c0_287, %c0_288] : memref<16x2x4x32xf32, #tpu.memory_space<vmem>>, vector<1x1x4x32xf32>
    %269 = vector.shape_cast %268 : vector<1x1x4x32xf32> to vector<4x32xf32>
    %cst_289 = arith.constant 0.580645144 : f32
    %270 = vector.broadcast %cst_289 : f32 to vector<4x32xf32>
    %271 = arith.mulf %269, %270 : vector<4x32xf32>
    %272 = arith.addf %267, %271 : vector<4x32xf32>
    %c0_290 = arith.constant 0 : index
    %c960 = arith.constant 960 : index
    %273 = vector.load %arg9[%c0_290, %c960] : memref<4x2304xf32, #tpu.memory_space<vmem>>, vector<4x32xf32>
    tpu.vector_store %arg9[%c0_290, %c960], %272 {strides = array<i32>} : memref<4x2304xf32, #tpu.memory_space<vmem>>, vector<4x32xf32>,
    %c13_291 = arith.constant 13 : index
    %c0_292 = arith.constant 0 : index
    %c0_293 = arith.constant 0 : index
    %c0_294 = arith.constant 0 : index
    %274 = vector.load %arg8[%c13_291, %c0_292, %c0_293, %c0_294] : memref<16x2x4x32xf32, #tpu.memory_space<vmem>>, vector<1x1x4x32xf32>
    %275 = vector.shape_cast %274 : vector<1x1x4x32xf32> to vector<4x32xf32>
    %cst_295 = arith.constant 0.935483872 : f32
    %276 = vector.broadcast %cst_295 : f32 to vector<4x32xf32>
    %277 = arith.mulf %275, %276 : vector<4x32xf32>
    %c14 = arith.constant 14 : index
    %c0_296 = arith.constant 0 : index
    %c0_297 = arith.constant 0 : index
    %c0_298 = arith.constant 0 : index
    %278 = vector.load %arg8[%c14, %c0_296, %c0_297, %c0_298] : memref<16x2x4x32xf32, #tpu.memory_space<vmem>>, vector<1x1x4x32xf32>
    %279 = vector.shape_cast %278 : vector<1x1x4x32xf32> to vector<4x32xf32>
    %cst_299 = arith.constant 0.0645161271 : f32
    %280 = vector.broadcast %cst_299 : f32 to vector<4x32xf32>
    %281 = arith.mulf %279, %280 : vector<4x32xf32>
    %282 = arith.addf %277, %281 : vector<4x32xf32>
    %c0_300 = arith.constant 0 : index
    %c992 = arith.constant 992 : index
    %283 = vector.load %arg9[%c0_300, %c992] : memref<4x2304xf32, #tpu.memory_space<vmem>>, vector<4x32xf32>
    tpu.vector_store %arg9[%c0_300, %c992], %282 {strides = array<i32>} : memref<4x2304xf32, #tpu.memory_space<vmem>>, vector<4x32xf32>,
    %c13_301 = arith.constant 13 : index
    %c0_302 = arith.constant 0 : index
    %c0_303 = arith.constant 0 : index
    %c0_304 = arith.constant 0 : index
    %284 = vector.load %arg8[%c13_301, %c0_302, %c0_303, %c0_304] : memref<16x2x4x32xf32, #tpu.memory_space<vmem>>, vector<1x1x4x32xf32>
    %285 = vector.shape_cast %284 : vector<1x1x4x32xf32> to vector<4x32xf32>
    %cst_305 = arith.constant 0.45161289 : f32
    %286 = vector.broadcast %cst_305 : f32 to vector<4x32xf32>
    %287 = arith.mulf %285, %286 : vector<4x32xf32>
    %c14_306 = arith.constant 14 : index
    %c0_307 = arith.constant 0 : index
    %c0_308 = arith.constant 0 : index
    %c0_309 = arith.constant 0 : index
    %288 = vector.load %arg8[%c14_306, %c0_307, %c0_308, %c0_309] : memref<16x2x4x32xf32, #tpu.memory_space<vmem>>, vector<1x1x4x32xf32>
    %289 = vector.shape_cast %288 : vector<1x1x4x32xf32> to vector<4x32xf32>
    %cst_310 = arith.constant 0.54838711 : f32
    %290 = vector.broadcast %cst_310 : f32 to vector<4x32xf32>
    %291 = arith.mulf %289, %290 : vector<4x32xf32>
    %292 = arith.addf %287, %291 : vector<4x32xf32>
    %c0_311 = arith.constant 0 : index
    %c1024 = arith.constant 1024 : index
    %293 = vector.load %arg9[%c0_311, %c1024] : memref<4x2304xf32, #tpu.memory_space<vmem>>, vector<4x32xf32>
    tpu.vector_store %arg9[%c0_311, %c1024], %292 {strides = array<i32>} : memref<4x2304xf32, #tpu.memory_space<vmem>>, vector<4x32xf32>,
    %c14_312 = arith.constant 14 : index
    %c0_313 = arith.constant 0 : index
    %c0_314 = arith.constant 0 : index
    %c0_315 = arith.constant 0 : index
    %294 = vector.load %arg8[%c14_312, %c0_313, %c0_314, %c0_315] : memref<16x2x4x32xf32, #tpu.memory_space<vmem>>, vector<1x1x4x32xf32>
    %295 = vector.shape_cast %294 : vector<1x1x4x32xf32> to vector<4x32xf32>
    %cst_316 = arith.constant 0.967741906 : f32
    %296 = vector.broadcast %cst_316 : f32 to vector<4x32xf32>
    %297 = arith.mulf %295, %296 : vector<4x32xf32>
    %c15 = arith.constant 15 : index
    %c0_317 = arith.constant 0 : index
    %c0_318 = arith.constant 0 : index
    %c0_319 = arith.constant 0 : index
    %298 = vector.load %arg8[%c15, %c0_317, %c0_318, %c0_319] : memref<16x2x4x32xf32, #tpu.memory_space<vmem>>, vector<1x1x4x32xf32>
    %299 = vector.shape_cast %298 : vector<1x1x4x32xf32> to vector<4x32xf32>
    %cst_320 = arith.constant 0.0322580636 : f32
    %300 = vector.broadcast %cst_320 : f32 to vector<4x32xf32>
    %301 = arith.mulf %299, %300 : vector<4x32xf32>
    %302 = arith.addf %297, %301 : vector<4x32xf32>
    %c0_321 = arith.constant 0 : index
    %c1056 = arith.constant 1056 : index
    %303 = vector.load %arg9[%c0_321, %c1056] : memref<4x2304xf32, #tpu.memory_space<vmem>>, vector<4x32xf32>
    tpu.vector_store %arg9[%c0_321, %c1056], %302 {strides = array<i32>} : memref<4x2304xf32, #tpu.memory_space<vmem>>, vector<4x32xf32>,
    %c14_322 = arith.constant 14 : index
    %c0_323 = arith.constant 0 : index
    %c0_324 = arith.constant 0 : index
    %c0_325 = arith.constant 0 : index
    %304 = vector.load %arg8[%c14_322, %c0_323, %c0_324, %c0_325] : memref<16x2x4x32xf32, #tpu.memory_space<vmem>>, vector<1x1x4x32xf32>
    %305 = vector.shape_cast %304 : vector<1x1x4x32xf32> to vector<4x32xf32>
    %cst_326 = arith.constant 0.483870953 : f32
    %306 = vector.broadcast %cst_326 : f32 to vector<4x32xf32>
    %307 = arith.mulf %305, %306 : vector<4x32xf32>
    %c15_327 = arith.constant 15 : index
    %c0_328 = arith.constant 0 : index
    %c0_329 = arith.constant 0 : index
    %c0_330 = arith.constant 0 : index
    %308 = vector.load %arg8[%c15_327, %c0_328, %c0_329, %c0_330] : memref<16x2x4x32xf32, #tpu.memory_space<vmem>>, vector<1x1x4x32xf32>
    %309 = vector.shape_cast %308 : vector<1x1x4x32xf32> to vector<4x32xf32>
    %cst_331 = arith.constant 5.161290e-01 : f32
    %310 = vector.broadcast %cst_331 : f32 to vector<4x32xf32>
    %311 = arith.mulf %309, %310 : vector<4x32xf32>
    %312 = arith.addf %307, %311 : vector<4x32xf32>
    %c0_332 = arith.constant 0 : index
    %c1088 = arith.constant 1088 : index
    %313 = vector.load %arg9[%c0_332, %c1088] : memref<4x2304xf32, #tpu.memory_space<vmem>>, vector<4x32xf32>
    tpu.vector_store %arg9[%c0_332, %c1088], %312 {strides = array<i32>} : memref<4x2304xf32, #tpu.memory_space<vmem>>, vector<4x32xf32>,
    %c15_333 = arith.constant 15 : index
    %c0_334 = arith.constant 0 : index
    %c0_335 = arith.constant 0 : index
    %c0_336 = arith.constant 0 : index
    %314 = vector.load %arg8[%c15_333, %c0_334, %c0_335, %c0_336] : memref<16x2x4x32xf32, #tpu.memory_space<vmem>>, vector<1x1x4x32xf32>
    %315 = vector.shape_cast %314 : vector<1x1x4x32xf32> to vector<4x32xf32>
    %cst_337 = arith.constant 1.000000e+00 : f32
    %316 = vector.broadcast %cst_337 : f32 to vector<4x32xf32>
    %317 = arith.mulf %315, %316 : vector<4x32xf32>
    %c0_338 = arith.constant 0 : index
    %c1120 = arith.constant 1120 : index
    %318 = vector.load %arg9[%c0_338, %c1120] : memref<4x2304xf32, #tpu.memory_space<vmem>>, vector<4x32xf32>
    tpu.vector_store %arg9[%c0_338, %c1120], %317 {strides = array<i32>} : memref<4x2304xf32, #tpu.memory_space<vmem>>, vector<4x32xf32>,
    %c0_339 = arith.constant 0 : index
    %c1_340 = arith.constant 1 : index
    %c0_341 = arith.constant 0 : index
    %c0_342 = arith.constant 0 : index
    %319 = vector.load %arg8[%c0_339, %c1_340, %c0_341, %c0_342] : memref<16x2x4x32xf32, #tpu.memory_space<vmem>>, vector<1x1x4x32xf32>
    %320 = vector.shape_cast %319 : vector<1x1x4x32xf32> to vector<4x32xf32>
    %cst_343 = arith.constant 1.000000e+00 : f32
    %321 = vector.broadcast %cst_343 : f32 to vector<4x32xf32>
    %322 = arith.mulf %320, %321 : vector<4x32xf32>
    %c0_344 = arith.constant 0 : index
    %c1152 = arith.constant 1152 : index
    %323 = vector.load %arg9[%c0_344, %c1152] : memref<4x2304xf32, #tpu.memory_space<vmem>>, vector<4x32xf32>
    tpu.vector_store %arg9[%c0_344, %c1152], %322 {strides = array<i32>} : memref<4x2304xf32, #tpu.memory_space<vmem>>, vector<4x32xf32>,
    %c0_345 = arith.constant 0 : index
    %c1_346 = arith.constant 1 : index
    %c0_347 = arith.constant 0 : index
    %c0_348 = arith.constant 0 : index
    %324 = vector.load %arg8[%c0_345, %c1_346, %c0_347, %c0_348] : memref<16x2x4x32xf32, #tpu.memory_space<vmem>>, vector<1x1x4x32xf32>
    %325 = vector.shape_cast %324 : vector<1x1x4x32xf32> to vector<4x32xf32>
    %cst_349 = arith.constant 5.161290e-01 : f32
    %326 = vector.broadcast %cst_349 : f32 to vector<4x32xf32>
    %327 = arith.mulf %325, %326 : vector<4x32xf32>
    %c1_350 = arith.constant 1 : index
    %c1_351 = arith.constant 1 : index
    %c0_352 = arith.constant 0 : index
    %c0_353 = arith.constant 0 : index
    %328 = vector.load %arg8[%c1_350, %c1_351, %c0_352, %c0_353] : memref<16x2x4x32xf32, #tpu.memory_space<vmem>>, vector<1x1x4x32xf32>
    %329 = vector.shape_cast %328 : vector<1x1x4x32xf32> to vector<4x32xf32>
    %cst_354 = arith.constant 0.483870953 : f32
    %330 = vector.broadcast %cst_354 : f32 to vector<4x32xf32>
    %331 = arith.mulf %329, %330 : vector<4x32xf32>
    %332 = arith.addf %327, %331 : vector<4x32xf32>
    %c0_355 = arith.constant 0 : index
    %c1184 = arith.constant 1184 : index
    %333 = vector.load %arg9[%c0_355, %c1184] : memref<4x2304xf32, #tpu.memory_space<vmem>>, vector<4x32xf32>
    tpu.vector_store %arg9[%c0_355, %c1184], %332 {strides = array<i32>} : memref<4x2304xf32, #tpu.memory_space<vmem>>, vector<4x32xf32>,
    %c0_356 = arith.constant 0 : index
    %c1_357 = arith.constant 1 : index
    %c0_358 = arith.constant 0 : index
    %c0_359 = arith.constant 0 : index
    %334 = vector.load %arg8[%c0_356, %c1_357, %c0_358, %c0_359] : memref<16x2x4x32xf32, #tpu.memory_space<vmem>>, vector<1x1x4x32xf32>
    %335 = vector.shape_cast %334 : vector<1x1x4x32xf32> to vector<4x32xf32>
    %cst_360 = arith.constant 0.0322580636 : f32
    %336 = vector.broadcast %cst_360 : f32 to vector<4x32xf32>
    %337 = arith.mulf %335, %336 : vector<4x32xf32>
    %c1_361 = arith.constant 1 : index
    %c1_362 = arith.constant 1 : index
    %c0_363 = arith.constant 0 : index
    %c0_364 = arith.constant 0 : index
    %338 = vector.load %arg8[%c1_361, %c1_362, %c0_363, %c0_364] : memref<16x2x4x32xf32, #tpu.memory_space<vmem>>, vector<1x1x4x32xf32>
    %339 = vector.shape_cast %338 : vector<1x1x4x32xf32> to vector<4x32xf32>
    %cst_365 = arith.constant 0.967741906 : f32
    %340 = vector.broadcast %cst_365 : f32 to vector<4x32xf32>
    %341 = arith.mulf %339, %340 : vector<4x32xf32>
    %342 = arith.addf %337, %341 : vector<4x32xf32>
    %c0_366 = arith.constant 0 : index
    %c1216 = arith.constant 1216 : index
    %343 = vector.load %arg9[%c0_366, %c1216] : memref<4x2304xf32, #tpu.memory_space<vmem>>, vector<4x32xf32>
    tpu.vector_store %arg9[%c0_366, %c1216], %342 {strides = array<i32>} : memref<4x2304xf32, #tpu.memory_space<vmem>>, vector<4x32xf32>,
    %c1_367 = arith.constant 1 : index
    %c1_368 = arith.constant 1 : index
    %c0_369 = arith.constant 0 : index
    %c0_370 = arith.constant 0 : index
    %344 = vector.load %arg8[%c1_367, %c1_368, %c0_369, %c0_370] : memref<16x2x4x32xf32, #tpu.memory_space<vmem>>, vector<1x1x4x32xf32>
    %345 = vector.shape_cast %344 : vector<1x1x4x32xf32> to vector<4x32xf32>
    %cst_371 = arith.constant 0.54838711 : f32
    %346 = vector.broadcast %cst_371 : f32 to vector<4x32xf32>
    %347 = arith.mulf %345, %346 : vector<4x32xf32>
    %c2_372 = arith.constant 2 : index
    %c1_373 = arith.constant 1 : index
    %c0_374 = arith.constant 0 : index
    %c0_375 = arith.constant 0 : index
    %348 = vector.load %arg8[%c2_372, %c1_373, %c0_374, %c0_375] : memref<16x2x4x32xf32, #tpu.memory_space<vmem>>, vector<1x1x4x32xf32>
    %349 = vector.shape_cast %348 : vector<1x1x4x32xf32> to vector<4x32xf32>
    %cst_376 = arith.constant 0.45161289 : f32
    %350 = vector.broadcast %cst_376 : f32 to vector<4x32xf32>
    %351 = arith.mulf %349, %350 : vector<4x32xf32>
    %352 = arith.addf %347, %351 : vector<4x32xf32>
    %c0_377 = arith.constant 0 : index
    %c1248 = arith.constant 1248 : index
    %353 = vector.load %arg9[%c0_377, %c1248] : memref<4x2304xf32, #tpu.memory_space<vmem>>, vector<4x32xf32>
    tpu.vector_store %arg9[%c0_377, %c1248], %352 {strides = array<i32>} : memref<4x2304xf32, #tpu.memory_space<vmem>>, vector<4x32xf32>,
    %c1_378 = arith.constant 1 : index
    %c1_379 = arith.constant 1 : index
    %c0_380 = arith.constant 0 : index
    %c0_381 = arith.constant 0 : index
    %354 = vector.load %arg8[%c1_378, %c1_379, %c0_380, %c0_381] : memref<16x2x4x32xf32, #tpu.memory_space<vmem>>, vector<1x1x4x32xf32>
    %355 = vector.shape_cast %354 : vector<1x1x4x32xf32> to vector<4x32xf32>
    %cst_382 = arith.constant 0.0645161271 : f32
    %356 = vector.broadcast %cst_382 : f32 to vector<4x32xf32>
    %357 = arith.mulf %355, %356 : vector<4x32xf32>
    %c2_383 = arith.constant 2 : index
    %c1_384 = arith.constant 1 : index
    %c0_385 = arith.constant 0 : index
    %c0_386 = arith.constant 0 : index
    %358 = vector.load %arg8[%c2_383, %c1_384, %c0_385, %c0_386] : memref<16x2x4x32xf32, #tpu.memory_space<vmem>>, vector<1x1x4x32xf32>
    %359 = vector.shape_cast %358 : vector<1x1x4x32xf32> to vector<4x32xf32>
    %cst_387 = arith.constant 0.935483872 : f32
    %360 = vector.broadcast %cst_387 : f32 to vector<4x32xf32>
    %361 = arith.mulf %359, %360 : vector<4x32xf32>
    %362 = arith.addf %357, %361 : vector<4x32xf32>
    %c0_388 = arith.constant 0 : index
    %c1280 = arith.constant 1280 : index
    %363 = vector.load %arg9[%c0_388, %c1280] : memref<4x2304xf32, #tpu.memory_space<vmem>>, vector<4x32xf32>
    tpu.vector_store %arg9[%c0_388, %c1280], %362 {strides = array<i32>} : memref<4x2304xf32, #tpu.memory_space<vmem>>, vector<4x32xf32>,
    %c2_389 = arith.constant 2 : index
    %c1_390 = arith.constant 1 : index
    %c0_391 = arith.constant 0 : index
    %c0_392 = arith.constant 0 : index
    %364 = vector.load %arg8[%c2_389, %c1_390, %c0_391, %c0_392] : memref<16x2x4x32xf32, #tpu.memory_space<vmem>>, vector<1x1x4x32xf32>
    %365 = vector.shape_cast %364 : vector<1x1x4x32xf32> to vector<4x32xf32>
    %cst_393 = arith.constant 0.580645144 : f32
    %366 = vector.broadcast %cst_393 : f32 to vector<4x32xf32>
    %367 = arith.mulf %365, %366 : vector<4x32xf32>
    %c3_394 = arith.constant 3 : index
    %c1_395 = arith.constant 1 : index
    %c0_396 = arith.constant 0 : index
    %c0_397 = arith.constant 0 : index
    %368 = vector.load %arg8[%c3_394, %c1_395, %c0_396, %c0_397] : memref<16x2x4x32xf32, #tpu.memory_space<vmem>>, vector<1x1x4x32xf32>
    %369 = vector.shape_cast %368 : vector<1x1x4x32xf32> to vector<4x32xf32>
    %cst_398 = arith.constant 0.419354826 : f32
    %370 = vector.broadcast %cst_398 : f32 to vector<4x32xf32>
    %371 = arith.mulf %369, %370 : vector<4x32xf32>
    %372 = arith.addf %367, %371 : vector<4x32xf32>
    %c0_399 = arith.constant 0 : index
    %c1312 = arith.constant 1312 : index
    %373 = vector.load %arg9[%c0_399, %c1312] : memref<4x2304xf32, #tpu.memory_space<vmem>>, vector<4x32xf32>
    tpu.vector_store %arg9[%c0_399, %c1312], %372 {strides = array<i32>} : memref<4x2304xf32, #tpu.memory_space<vmem>>, vector<4x32xf32>,
    %c2_400 = arith.constant 2 : index
    %c1_401 = arith.constant 1 : index
    %c0_402 = arith.constant 0 : index
    %c0_403 = arith.constant 0 : index
    %374 = vector.load %arg8[%c2_400, %c1_401, %c0_402, %c0_403] : memref<16x2x4x32xf32, #tpu.memory_space<vmem>>, vector<1x1x4x32xf32>
    %375 = vector.shape_cast %374 : vector<1x1x4x32xf32> to vector<4x32xf32>
    %cst_404 = arith.constant 0.0967741906 : f32
    %376 = vector.broadcast %cst_404 : f32 to vector<4x32xf32>
    %377 = arith.mulf %375, %376 : vector<4x32xf32>
    %c3_405 = arith.constant 3 : index
    %c1_406 = arith.constant 1 : index
    %c0_407 = arith.constant 0 : index
    %c0_408 = arith.constant 0 : index
    %378 = vector.load %arg8[%c3_405, %c1_406, %c0_407, %c0_408] : memref<16x2x4x32xf32, #tpu.memory_space<vmem>>, vector<1x1x4x32xf32>
    %379 = vector.shape_cast %378 : vector<1x1x4x32xf32> to vector<4x32xf32>
    %cst_409 = arith.constant 0.903225779 : f32
    %380 = vector.broadcast %cst_409 : f32 to vector<4x32xf32>
    %381 = arith.mulf %379, %380 : vector<4x32xf32>
    %382 = arith.addf %377, %381 : vector<4x32xf32>
    %c0_410 = arith.constant 0 : index
    %c1344 = arith.constant 1344 : index
    %383 = vector.load %arg9[%c0_410, %c1344] : memref<4x2304xf32, #tpu.memory_space<vmem>>, vector<4x32xf32>
    tpu.vector_store %arg9[%c0_410, %c1344], %382 {strides = array<i32>} : memref<4x2304xf32, #tpu.memory_space<vmem>>, vector<4x32xf32>,
    %c3_411 = arith.constant 3 : index
    %c1_412 = arith.constant 1 : index
    %c0_413 = arith.constant 0 : index
    %c0_414 = arith.constant 0 : index
    %384 = vector.load %arg8[%c3_411, %c1_412, %c0_413, %c0_414] : memref<16x2x4x32xf32, #tpu.memory_space<vmem>>, vector<1x1x4x32xf32>
    %385 = vector.shape_cast %384 : vector<1x1x4x32xf32> to vector<4x32xf32>
    %cst_415 = arith.constant 0.612903237 : f32
    %386 = vector.broadcast %cst_415 : f32 to vector<4x32xf32>
    %387 = arith.mulf %385, %386 : vector<4x32xf32>
    %c4_416 = arith.constant 4 : index
    %c1_417 = arith.constant 1 : index
    %c0_418 = arith.constant 0 : index
    %c0_419 = arith.constant 0 : index
    %388 = vector.load %arg8[%c4_416, %c1_417, %c0_418, %c0_419] : memref<16x2x4x32xf32, #tpu.memory_space<vmem>>, vector<1x1x4x32xf32>
    %389 = vector.shape_cast %388 : vector<1x1x4x32xf32> to vector<4x32xf32>
    %cst_420 = arith.constant 0.387096763 : f32
    %390 = vector.broadcast %cst_420 : f32 to vector<4x32xf32>
    %391 = arith.mulf %389, %390 : vector<4x32xf32>
    %392 = arith.addf %387, %391 : vector<4x32xf32>
    %c0_421 = arith.constant 0 : index
    %c1376 = arith.constant 1376 : index
    %393 = vector.load %arg9[%c0_421, %c1376] : memref<4x2304xf32, #tpu.memory_space<vmem>>, vector<4x32xf32>
    tpu.vector_store %arg9[%c0_421, %c1376], %392 {strides = array<i32>} : memref<4x2304xf32, #tpu.memory_space<vmem>>, vector<4x32xf32>,
    %c3_422 = arith.constant 3 : index
    %c1_423 = arith.constant 1 : index
    %c0_424 = arith.constant 0 : index
    %c0_425 = arith.constant 0 : index
    %394 = vector.load %arg8[%c3_422, %c1_423, %c0_424, %c0_425] : memref<16x2x4x32xf32, #tpu.memory_space<vmem>>, vector<1x1x4x32xf32>
    %395 = vector.shape_cast %394 : vector<1x1x4x32xf32> to vector<4x32xf32>
    %cst_426 = arith.constant 0.129032254 : f32
    %396 = vector.broadcast %cst_426 : f32 to vector<4x32xf32>
    %397 = arith.mulf %395, %396 : vector<4x32xf32>
    %c4_427 = arith.constant 4 : index
    %c1_428 = arith.constant 1 : index
    %c0_429 = arith.constant 0 : index
    %c0_430 = arith.constant 0 : index
    %398 = vector.load %arg8[%c4_427, %c1_428, %c0_429, %c0_430] : memref<16x2x4x32xf32, #tpu.memory_space<vmem>>, vector<1x1x4x32xf32>
    %399 = vector.shape_cast %398 : vector<1x1x4x32xf32> to vector<4x32xf32>
    %cst_431 = arith.constant 0.870967745 : f32
    %400 = vector.broadcast %cst_431 : f32 to vector<4x32xf32>
    %401 = arith.mulf %399, %400 : vector<4x32xf32>
    %402 = arith.addf %397, %401 : vector<4x32xf32>
    %c0_432 = arith.constant 0 : index
    %c1408 = arith.constant 1408 : index
    %403 = vector.load %arg9[%c0_432, %c1408] : memref<4x2304xf32, #tpu.memory_space<vmem>>, vector<4x32xf32>
    tpu.vector_store %arg9[%c0_432, %c1408], %402 {strides = array<i32>} : memref<4x2304xf32, #tpu.memory_space<vmem>>, vector<4x32xf32>,
    %c4_433 = arith.constant 4 : index
    %c1_434 = arith.constant 1 : index
    %c0_435 = arith.constant 0 : index
    %c0_436 = arith.constant 0 : index
    %404 = vector.load %arg8[%c4_433, %c1_434, %c0_435, %c0_436] : memref<16x2x4x32xf32, #tpu.memory_space<vmem>>, vector<1x1x4x32xf32>
    %405 = vector.shape_cast %404 : vector<1x1x4x32xf32> to vector<4x32xf32>
    %cst_437 = arith.constant 0.645161271 : f32
    %406 = vector.broadcast %cst_437 : f32 to vector<4x32xf32>
    %407 = arith.mulf %405, %406 : vector<4x32xf32>
    %c5_438 = arith.constant 5 : index
    %c1_439 = arith.constant 1 : index
    %c0_440 = arith.constant 0 : index
    %c0_441 = arith.constant 0 : index
    %408 = vector.load %arg8[%c5_438, %c1_439, %c0_440, %c0_441] : memref<16x2x4x32xf32, #tpu.memory_space<vmem>>, vector<1x1x4x32xf32>
    %409 = vector.shape_cast %408 : vector<1x1x4x32xf32> to vector<4x32xf32>
    %cst_442 = arith.constant 0.354838699 : f32
    %410 = vector.broadcast %cst_442 : f32 to vector<4x32xf32>
    %411 = arith.mulf %409, %410 : vector<4x32xf32>
    %412 = arith.addf %407, %411 : vector<4x32xf32>
    %c0_443 = arith.constant 0 : index
    %c1440 = arith.constant 1440 : index
    %413 = vector.load %arg9[%c0_443, %c1440] : memref<4x2304xf32, #tpu.memory_space<vmem>>, vector<4x32xf32>
    tpu.vector_store %arg9[%c0_443, %c1440], %412 {strides = array<i32>} : memref<4x2304xf32, #tpu.memory_space<vmem>>, vector<4x32xf32>,
    %c4_444 = arith.constant 4 : index
    %c1_445 = arith.constant 1 : index
    %c0_446 = arith.constant 0 : index
    %c0_447 = arith.constant 0 : index
    %414 = vector.load %arg8[%c4_444, %c1_445, %c0_446, %c0_447] : memref<16x2x4x32xf32, #tpu.memory_space<vmem>>, vector<1x1x4x32xf32>
    %415 = vector.shape_cast %414 : vector<1x1x4x32xf32> to vector<4x32xf32>
    %cst_448 = arith.constant 0.161290318 : f32
    %416 = vector.broadcast %cst_448 : f32 to vector<4x32xf32>
    %417 = arith.mulf %415, %416 : vector<4x32xf32>
    %c5_449 = arith.constant 5 : index
    %c1_450 = arith.constant 1 : index
    %c0_451 = arith.constant 0 : index
    %c0_452 = arith.constant 0 : index
    %418 = vector.load %arg8[%c5_449, %c1_450, %c0_451, %c0_452] : memref<16x2x4x32xf32, #tpu.memory_space<vmem>>, vector<1x1x4x32xf32>
    %419 = vector.shape_cast %418 : vector<1x1x4x32xf32> to vector<4x32xf32>
    %cst_453 = arith.constant 0.838709652 : f32
    %420 = vector.broadcast %cst_453 : f32 to vector<4x32xf32>
    %421 = arith.mulf %419, %420 : vector<4x32xf32>
    %422 = arith.addf %417, %421 : vector<4x32xf32>
    %c0_454 = arith.constant 0 : index
    %c1472 = arith.constant 1472 : index
    %423 = vector.load %arg9[%c0_454, %c1472] : memref<4x2304xf32, #tpu.memory_space<vmem>>, vector<4x32xf32>
    tpu.vector_store %arg9[%c0_454, %c1472], %422 {strides = array<i32>} : memref<4x2304xf32, #tpu.memory_space<vmem>>, vector<4x32xf32>,
    %c5_455 = arith.constant 5 : index
    %c1_456 = arith.constant 1 : index
    %c0_457 = arith.constant 0 : index
    %c0_458 = arith.constant 0 : index
    %424 = vector.load %arg8[%c5_455, %c1_456, %c0_457, %c0_458] : memref<16x2x4x32xf32, #tpu.memory_space<vmem>>, vector<1x1x4x32xf32>
    %425 = vector.shape_cast %424 : vector<1x1x4x32xf32> to vector<4x32xf32>
    %cst_459 = arith.constant 0.677419364 : f32
    %426 = vector.broadcast %cst_459 : f32 to vector<4x32xf32>
    %427 = arith.mulf %425, %426 : vector<4x32xf32>
    %c6_460 = arith.constant 6 : index
    %c1_461 = arith.constant 1 : index
    %c0_462 = arith.constant 0 : index
    %c0_463 = arith.constant 0 : index
    %428 = vector.load %arg8[%c6_460, %c1_461, %c0_462, %c0_463] : memref<16x2x4x32xf32, #tpu.memory_space<vmem>>, vector<1x1x4x32xf32>
    %429 = vector.shape_cast %428 : vector<1x1x4x32xf32> to vector<4x32xf32>
    %cst_464 = arith.constant 0.322580636 : f32
    %430 = vector.broadcast %cst_464 : f32 to vector<4x32xf32>
    %431 = arith.mulf %429, %430 : vector<4x32xf32>
    %432 = arith.addf %427, %431 : vector<4x32xf32>
    %c0_465 = arith.constant 0 : index
    %c1504 = arith.constant 1504 : index
    %433 = vector.load %arg9[%c0_465, %c1504] : memref<4x2304xf32, #tpu.memory_space<vmem>>, vector<4x32xf32>
    tpu.vector_store %arg9[%c0_465, %c1504], %432 {strides = array<i32>} : memref<4x2304xf32, #tpu.memory_space<vmem>>, vector<4x32xf32>,
    %c5_466 = arith.constant 5 : index
    %c1_467 = arith.constant 1 : index
    %c0_468 = arith.constant 0 : index
    %c0_469 = arith.constant 0 : index
    %434 = vector.load %arg8[%c5_466, %c1_467, %c0_468, %c0_469] : memref<16x2x4x32xf32, #tpu.memory_space<vmem>>, vector<1x1x4x32xf32>
    %435 = vector.shape_cast %434 : vector<1x1x4x32xf32> to vector<4x32xf32>
    %cst_470 = arith.constant 0.193548381 : f32
    %436 = vector.broadcast %cst_470 : f32 to vector<4x32xf32>
    %437 = arith.mulf %435, %436 : vector<4x32xf32>
    %c6_471 = arith.constant 6 : index
    %c1_472 = arith.constant 1 : index
    %c0_473 = arith.constant 0 : index
    %c0_474 = arith.constant 0 : index
    %438 = vector.load %arg8[%c6_471, %c1_472, %c0_473, %c0_474] : memref<16x2x4x32xf32, #tpu.memory_space<vmem>>, vector<1x1x4x32xf32>
    %439 = vector.shape_cast %438 : vector<1x1x4x32xf32> to vector<4x32xf32>
    %cst_475 = arith.constant 0.806451618 : f32
    %440 = vector.broadcast %cst_475 : f32 to vector<4x32xf32>
    %441 = arith.mulf %439, %440 : vector<4x32xf32>
    %442 = arith.addf %437, %441 : vector<4x32xf32>
    %c0_476 = arith.constant 0 : index
    %c1536 = arith.constant 1536 : index
    %443 = vector.load %arg9[%c0_476, %c1536] : memref<4x2304xf32, #tpu.memory_space<vmem>>, vector<4x32xf32>
    tpu.vector_store %arg9[%c0_476, %c1536], %442 {strides = array<i32>} : memref<4x2304xf32, #tpu.memory_space<vmem>>, vector<4x32xf32>,
    %c6_477 = arith.constant 6 : index
    %c1_478 = arith.constant 1 : index
    %c0_479 = arith.constant 0 : index
    %c0_480 = arith.constant 0 : index
    %444 = vector.load %arg8[%c6_477, %c1_478, %c0_479, %c0_480] : memref<16x2x4x32xf32, #tpu.memory_space<vmem>>, vector<1x1x4x32xf32>
    %445 = vector.shape_cast %444 : vector<1x1x4x32xf32> to vector<4x32xf32>
    %cst_481 = arith.constant 0.709677398 : f32
    %446 = vector.broadcast %cst_481 : f32 to vector<4x32xf32>
    %447 = arith.mulf %445, %446 : vector<4x32xf32>
    %c7_482 = arith.constant 7 : index
    %c1_483 = arith.constant 1 : index
    %c0_484 = arith.constant 0 : index
    %c0_485 = arith.constant 0 : index
    %448 = vector.load %arg8[%c7_482, %c1_483, %c0_484, %c0_485] : memref<16x2x4x32xf32, #tpu.memory_space<vmem>>, vector<1x1x4x32xf32>
    %449 = vector.shape_cast %448 : vector<1x1x4x32xf32> to vector<4x32xf32>
    %cst_486 = arith.constant 0.290322572 : f32
    %450 = vector.broadcast %cst_486 : f32 to vector<4x32xf32>
    %451 = arith.mulf %449, %450 : vector<4x32xf32>
    %452 = arith.addf %447, %451 : vector<4x32xf32>
    %c0_487 = arith.constant 0 : index
    %c1568 = arith.constant 1568 : index
    %453 = vector.load %arg9[%c0_487, %c1568] : memref<4x2304xf32, #tpu.memory_space<vmem>>, vector<4x32xf32>
    tpu.vector_store %arg9[%c0_487, %c1568], %452 {strides = array<i32>} : memref<4x2304xf32, #tpu.memory_space<vmem>>, vector<4x32xf32>,
    %c6_488 = arith.constant 6 : index
    %c1_489 = arith.constant 1 : index
    %c0_490 = arith.constant 0 : index
    %c0_491 = arith.constant 0 : index
    %454 = vector.load %arg8[%c6_488, %c1_489, %c0_490, %c0_491] : memref<16x2x4x32xf32, #tpu.memory_space<vmem>>, vector<1x1x4x32xf32>
    %455 = vector.shape_cast %454 : vector<1x1x4x32xf32> to vector<4x32xf32>
    %cst_492 = arith.constant 0.225806445 : f32
    %456 = vector.broadcast %cst_492 : f32 to vector<4x32xf32>
    %457 = arith.mulf %455, %456 : vector<4x32xf32>
    %c7_493 = arith.constant 7 : index
    %c1_494 = arith.constant 1 : index
    %c0_495 = arith.constant 0 : index
    %c0_496 = arith.constant 0 : index
    %458 = vector.load %arg8[%c7_493, %c1_494, %c0_495, %c0_496] : memref<16x2x4x32xf32, #tpu.memory_space<vmem>>, vector<1x1x4x32xf32>
    %459 = vector.shape_cast %458 : vector<1x1x4x32xf32> to vector<4x32xf32>
    %cst_497 = arith.constant 0.774193525 : f32
    %460 = vector.broadcast %cst_497 : f32 to vector<4x32xf32>
    %461 = arith.mulf %459, %460 : vector<4x32xf32>
    %462 = arith.addf %457, %461 : vector<4x32xf32>
    %c0_498 = arith.constant 0 : index
    %c1600 = arith.constant 1600 : index
    %463 = vector.load %arg9[%c0_498, %c1600] : memref<4x2304xf32, #tpu.memory_space<vmem>>, vector<4x32xf32>
    tpu.vector_store %arg9[%c0_498, %c1600], %462 {strides = array<i32>} : memref<4x2304xf32, #tpu.memory_space<vmem>>, vector<4x32xf32>,
    %c7_499 = arith.constant 7 : index
    %c1_500 = arith.constant 1 : index
    %c0_501 = arith.constant 0 : index
    %c0_502 = arith.constant 0 : index
    %464 = vector.load %arg8[%c7_499, %c1_500, %c0_501, %c0_502] : memref<16x2x4x32xf32, #tpu.memory_space<vmem>>, vector<1x1x4x32xf32>
    %465 = vector.shape_cast %464 : vector<1x1x4x32xf32> to vector<4x32xf32>
    %cst_503 = arith.constant 0.741935492 : f32
    %466 = vector.broadcast %cst_503 : f32 to vector<4x32xf32>
    %467 = arith.mulf %465, %466 : vector<4x32xf32>
    %c8_504 = arith.constant 8 : index
    %c1_505 = arith.constant 1 : index
    %c0_506 = arith.constant 0 : index
    %c0_507 = arith.constant 0 : index
    %468 = vector.load %arg8[%c8_504, %c1_505, %c0_506, %c0_507] : memref<16x2x4x32xf32, #tpu.memory_space<vmem>>, vector<1x1x4x32xf32>
    %469 = vector.shape_cast %468 : vector<1x1x4x32xf32> to vector<4x32xf32>
    %cst_508 = arith.constant 0.258064508 : f32
    %470 = vector.broadcast %cst_508 : f32 to vector<4x32xf32>
    %471 = arith.mulf %469, %470 : vector<4x32xf32>
    %472 = arith.addf %467, %471 : vector<4x32xf32>
    %c0_509 = arith.constant 0 : index
    %c1632 = arith.constant 1632 : index
    %473 = vector.load %arg9[%c0_509, %c1632] : memref<4x2304xf32, #tpu.memory_space<vmem>>, vector<4x32xf32>
    tpu.vector_store %arg9[%c0_509, %c1632], %472 {strides = array<i32>} : memref<4x2304xf32, #tpu.memory_space<vmem>>, vector<4x32xf32>,
    %c7_510 = arith.constant 7 : index
    %c1_511 = arith.constant 1 : index
    %c0_512 = arith.constant 0 : index
    %c0_513 = arith.constant 0 : index
    %474 = vector.load %arg8[%c7_510, %c1_511, %c0_512, %c0_513] : memref<16x2x4x32xf32, #tpu.memory_space<vmem>>, vector<1x1x4x32xf32>
    %475 = vector.shape_cast %474 : vector<1x1x4x32xf32> to vector<4x32xf32>
    %cst_514 = arith.constant 0.258064508 : f32
    %476 = vector.broadcast %cst_514 : f32 to vector<4x32xf32>
    %477 = arith.mulf %475, %476 : vector<4x32xf32>
    %c8_515 = arith.constant 8 : index
    %c1_516 = arith.constant 1 : index
    %c0_517 = arith.constant 0 : index
    %c0_518 = arith.constant 0 : index
    %478 = vector.load %arg8[%c8_515, %c1_516, %c0_517, %c0_518] : memref<16x2x4x32xf32, #tpu.memory_space<vmem>>, vector<1x1x4x32xf32>
    %479 = vector.shape_cast %478 : vector<1x1x4x32xf32> to vector<4x32xf32>
    %cst_519 = arith.constant 0.741935492 : f32
    %480 = vector.broadcast %cst_519 : f32 to vector<4x32xf32>
    %481 = arith.mulf %479, %480 : vector<4x32xf32>
    %482 = arith.addf %477, %481 : vector<4x32xf32>
    %c0_520 = arith.constant 0 : index
    %c1664 = arith.constant 1664 : index
    %483 = vector.load %arg9[%c0_520, %c1664] : memref<4x2304xf32, #tpu.memory_space<vmem>>, vector<4x32xf32>
    tpu.vector_store %arg9[%c0_520, %c1664], %482 {strides = array<i32>} : memref<4x2304xf32, #tpu.memory_space<vmem>>, vector<4x32xf32>,
    %c8_521 = arith.constant 8 : index
    %c1_522 = arith.constant 1 : index
    %c0_523 = arith.constant 0 : index
    %c0_524 = arith.constant 0 : index
    %484 = vector.load %arg8[%c8_521, %c1_522, %c0_523, %c0_524] : memref<16x2x4x32xf32, #tpu.memory_space<vmem>>, vector<1x1x4x32xf32>
    %485 = vector.shape_cast %484 : vector<1x1x4x32xf32> to vector<4x32xf32>
    %cst_525 = arith.constant 0.774193525 : f32
    %486 = vector.broadcast %cst_525 : f32 to vector<4x32xf32>
    %487 = arith.mulf %485, %486 : vector<4x32xf32>
    %c9_526 = arith.constant 9 : index
    %c1_527 = arith.constant 1 : index
    %c0_528 = arith.constant 0 : index
    %c0_529 = arith.constant 0 : index
    %488 = vector.load %arg8[%c9_526, %c1_527, %c0_528, %c0_529] : memref<16x2x4x32xf32, #tpu.memory_space<vmem>>, vector<1x1x4x32xf32>
    %489 = vector.shape_cast %488 : vector<1x1x4x32xf32> to vector<4x32xf32>
    %cst_530 = arith.constant 0.225806445 : f32
    %490 = vector.broadcast %cst_530 : f32 to vector<4x32xf32>
    %491 = arith.mulf %489, %490 : vector<4x32xf32>
    %492 = arith.addf %487, %491 : vector<4x32xf32>
    %c0_531 = arith.constant 0 : index
    %c1696 = arith.constant 1696 : index
    %493 = vector.load %arg9[%c0_531, %c1696] : memref<4x2304xf32, #tpu.memory_space<vmem>>, vector<4x32xf32>
    tpu.vector_store %arg9[%c0_531, %c1696], %492 {strides = array<i32>} : memref<4x2304xf32, #tpu.memory_space<vmem>>, vector<4x32xf32>,
    %c8_532 = arith.constant 8 : index
    %c1_533 = arith.constant 1 : index
    %c0_534 = arith.constant 0 : index
    %c0_535 = arith.constant 0 : index
    %494 = vector.load %arg8[%c8_532, %c1_533, %c0_534, %c0_535] : memref<16x2x4x32xf32, #tpu.memory_space<vmem>>, vector<1x1x4x32xf32>
    %495 = vector.shape_cast %494 : vector<1x1x4x32xf32> to vector<4x32xf32>
    %cst_536 = arith.constant 0.290322572 : f32
    %496 = vector.broadcast %cst_536 : f32 to vector<4x32xf32>
    %497 = arith.mulf %495, %496 : vector<4x32xf32>
    %c9_537 = arith.constant 9 : index
    %c1_538 = arith.constant 1 : index
    %c0_539 = arith.constant 0 : index
    %c0_540 = arith.constant 0 : index
    %498 = vector.load %arg8[%c9_537, %c1_538, %c0_539, %c0_540] : memref<16x2x4x32xf32, #tpu.memory_space<vmem>>, vector<1x1x4x32xf32>
    %499 = vector.shape_cast %498 : vector<1x1x4x32xf32> to vector<4x32xf32>
    %cst_541 = arith.constant 0.709677398 : f32
    %500 = vector.broadcast %cst_541 : f32 to vector<4x32xf32>
    %501 = arith.mulf %499, %500 : vector<4x32xf32>
    %502 = arith.addf %497, %501 : vector<4x32xf32>
    %c0_542 = arith.constant 0 : index
    %c1728 = arith.constant 1728 : index
    %503 = vector.load %arg9[%c0_542, %c1728] : memref<4x2304xf32, #tpu.memory_space<vmem>>, vector<4x32xf32>
    tpu.vector_store %arg9[%c0_542, %c1728], %502 {strides = array<i32>} : memref<4x2304xf32, #tpu.memory_space<vmem>>, vector<4x32xf32>,
    %c9_543 = arith.constant 9 : index
    %c1_544 = arith.constant 1 : index
    %c0_545 = arith.constant 0 : index
    %c0_546 = arith.constant 0 : index
    %504 = vector.load %arg8[%c9_543, %c1_544, %c0_545, %c0_546] : memref<16x2x4x32xf32, #tpu.memory_space<vmem>>, vector<1x1x4x32xf32>
    %505 = vector.shape_cast %504 : vector<1x1x4x32xf32> to vector<4x32xf32>
    %cst_547 = arith.constant 0.806451618 : f32
    %506 = vector.broadcast %cst_547 : f32 to vector<4x32xf32>
    %507 = arith.mulf %505, %506 : vector<4x32xf32>
    %c10_548 = arith.constant 10 : index
    %c1_549 = arith.constant 1 : index
    %c0_550 = arith.constant 0 : index
    %c0_551 = arith.constant 0 : index
    %508 = vector.load %arg8[%c10_548, %c1_549, %c0_550, %c0_551] : memref<16x2x4x32xf32, #tpu.memory_space<vmem>>, vector<1x1x4x32xf32>
    %509 = vector.shape_cast %508 : vector<1x1x4x32xf32> to vector<4x32xf32>
    %cst_552 = arith.constant 0.193548381 : f32
    %510 = vector.broadcast %cst_552 : f32 to vector<4x32xf32>
    %511 = arith.mulf %509, %510 : vector<4x32xf32>
    %512 = arith.addf %507, %511 : vector<4x32xf32>
    %c0_553 = arith.constant 0 : index
    %c1760 = arith.constant 1760 : index
    %513 = vector.load %arg9[%c0_553, %c1760] : memref<4x2304xf32, #tpu.memory_space<vmem>>, vector<4x32xf32>
    tpu.vector_store %arg9[%c0_553, %c1760], %512 {strides = array<i32>} : memref<4x2304xf32, #tpu.memory_space<vmem>>, vector<4x32xf32>,
    %c9_554 = arith.constant 9 : index
    %c1_555 = arith.constant 1 : index
    %c0_556 = arith.constant 0 : index
    %c0_557 = arith.constant 0 : index
    %514 = vector.load %arg8[%c9_554, %c1_555, %c0_556, %c0_557] : memref<16x2x4x32xf32, #tpu.memory_space<vmem>>, vector<1x1x4x32xf32>
    %515 = vector.shape_cast %514 : vector<1x1x4x32xf32> to vector<4x32xf32>
    %cst_558 = arith.constant 0.322580636 : f32
    %516 = vector.broadcast %cst_558 : f32 to vector<4x32xf32>
    %517 = arith.mulf %515, %516 : vector<4x32xf32>
    %c10_559 = arith.constant 10 : index
    %c1_560 = arith.constant 1 : index
    %c0_561 = arith.constant 0 : index
    %c0_562 = arith.constant 0 : index
    %518 = vector.load %arg8[%c10_559, %c1_560, %c0_561, %c0_562] : memref<16x2x4x32xf32, #tpu.memory_space<vmem>>, vector<1x1x4x32xf32>
    %519 = vector.shape_cast %518 : vector<1x1x4x32xf32> to vector<4x32xf32>
    %cst_563 = arith.constant 0.677419364 : f32
    %520 = vector.broadcast %cst_563 : f32 to vector<4x32xf32>
    %521 = arith.mulf %519, %520 : vector<4x32xf32>
    %522 = arith.addf %517, %521 : vector<4x32xf32>
    %c0_564 = arith.constant 0 : index
    %c1792 = arith.constant 1792 : index
    %523 = vector.load %arg9[%c0_564, %c1792] : memref<4x2304xf32, #tpu.memory_space<vmem>>, vector<4x32xf32>
    tpu.vector_store %arg9[%c0_564, %c1792], %522 {strides = array<i32>} : memref<4x2304xf32, #tpu.memory_space<vmem>>, vector<4x32xf32>,
    %c10_565 = arith.constant 10 : index
    %c1_566 = arith.constant 1 : index
    %c0_567 = arith.constant 0 : index
    %c0_568 = arith.constant 0 : index
    %524 = vector.load %arg8[%c10_565, %c1_566, %c0_567, %c0_568] : memref<16x2x4x32xf32, #tpu.memory_space<vmem>>, vector<1x1x4x32xf32>
    %525 = vector.shape_cast %524 : vector<1x1x4x32xf32> to vector<4x32xf32>
    %cst_569 = arith.constant 0.838709652 : f32
    %526 = vector.broadcast %cst_569 : f32 to vector<4x32xf32>
    %527 = arith.mulf %525, %526 : vector<4x32xf32>
    %c11_570 = arith.constant 11 : index
    %c1_571 = arith.constant 1 : index
    %c0_572 = arith.constant 0 : index
    %c0_573 = arith.constant 0 : index
    %528 = vector.load %arg8[%c11_570, %c1_571, %c0_572, %c0_573] : memref<16x2x4x32xf32, #tpu.memory_space<vmem>>, vector<1x1x4x32xf32>
    %529 = vector.shape_cast %528 : vector<1x1x4x32xf32> to vector<4x32xf32>
    %cst_574 = arith.constant 0.161290318 : f32
    %530 = vector.broadcast %cst_574 : f32 to vector<4x32xf32>
    %531 = arith.mulf %529, %530 : vector<4x32xf32>
    %532 = arith.addf %527, %531 : vector<4x32xf32>
    %c0_575 = arith.constant 0 : index
    %c1824 = arith.constant 1824 : index
    %533 = vector.load %arg9[%c0_575, %c1824] : memref<4x2304xf32, #tpu.memory_space<vmem>>, vector<4x32xf32>
    tpu.vector_store %arg9[%c0_575, %c1824], %532 {strides = array<i32>} : memref<4x2304xf32, #tpu.memory_space<vmem>>, vector<4x32xf32>,
    %c10_576 = arith.constant 10 : index
    %c1_577 = arith.constant 1 : index
    %c0_578 = arith.constant 0 : index
    %c0_579 = arith.constant 0 : index
    %534 = vector.load %arg8[%c10_576, %c1_577, %c0_578, %c0_579] : memref<16x2x4x32xf32, #tpu.memory_space<vmem>>, vector<1x1x4x32xf32>
    %535 = vector.shape_cast %534 : vector<1x1x4x32xf32> to vector<4x32xf32>
    %cst_580 = arith.constant 0.354838699 : f32
    %536 = vector.broadcast %cst_580 : f32 to vector<4x32xf32>
    %537 = arith.mulf %535, %536 : vector<4x32xf32>
    %c11_581 = arith.constant 11 : index
    %c1_582 = arith.constant 1 : index
    %c0_583 = arith.constant 0 : index
    %c0_584 = arith.constant 0 : index
    %538 = vector.load %arg8[%c11_581, %c1_582, %c0_583, %c0_584] : memref<16x2x4x32xf32, #tpu.memory_space<vmem>>, vector<1x1x4x32xf32>
    %539 = vector.shape_cast %538 : vector<1x1x4x32xf32> to vector<4x32xf32>
    %cst_585 = arith.constant 0.645161271 : f32
    %540 = vector.broadcast %cst_585 : f32 to vector<4x32xf32>
    %541 = arith.mulf %539, %540 : vector<4x32xf32>
    %542 = arith.addf %537, %541 : vector<4x32xf32>
    %c0_586 = arith.constant 0 : index
    %c1856 = arith.constant 1856 : index
    %543 = vector.load %arg9[%c0_586, %c1856] : memref<4x2304xf32, #tpu.memory_space<vmem>>, vector<4x32xf32>
    tpu.vector_store %arg9[%c0_586, %c1856], %542 {strides = array<i32>} : memref<4x2304xf32, #tpu.memory_space<vmem>>, vector<4x32xf32>,
    %c11_587 = arith.constant 11 : index
    %c1_588 = arith.constant 1 : index
    %c0_589 = arith.constant 0 : index
    %c0_590 = arith.constant 0 : index
    %544 = vector.load %arg8[%c11_587, %c1_588, %c0_589, %c0_590] : memref<16x2x4x32xf32, #tpu.memory_space<vmem>>, vector<1x1x4x32xf32>
    %545 = vector.shape_cast %544 : vector<1x1x4x32xf32> to vector<4x32xf32>
    %cst_591 = arith.constant 0.870967745 : f32
    %546 = vector.broadcast %cst_591 : f32 to vector<4x32xf32>
    %547 = arith.mulf %545, %546 : vector<4x32xf32>
    %c12_592 = arith.constant 12 : index
    %c1_593 = arith.constant 1 : index
    %c0_594 = arith.constant 0 : index
    %c0_595 = arith.constant 0 : index
    %548 = vector.load %arg8[%c12_592, %c1_593, %c0_594, %c0_595] : memref<16x2x4x32xf32, #tpu.memory_space<vmem>>, vector<1x1x4x32xf32>
    %549 = vector.shape_cast %548 : vector<1x1x4x32xf32> to vector<4x32xf32>
    %cst_596 = arith.constant 0.129032254 : f32
    %550 = vector.broadcast %cst_596 : f32 to vector<4x32xf32>
    %551 = arith.mulf %549, %550 : vector<4x32xf32>
    %552 = arith.addf %547, %551 : vector<4x32xf32>
    %c0_597 = arith.constant 0 : index
    %c1888 = arith.constant 1888 : index
    %553 = vector.load %arg9[%c0_597, %c1888] : memref<4x2304xf32, #tpu.memory_space<vmem>>, vector<4x32xf32>
    tpu.vector_store %arg9[%c0_597, %c1888], %552 {strides = array<i32>} : memref<4x2304xf32, #tpu.memory_space<vmem>>, vector<4x32xf32>,
    %c11_598 = arith.constant 11 : index
    %c1_599 = arith.constant 1 : index
    %c0_600 = arith.constant 0 : index
    %c0_601 = arith.constant 0 : index
    %554 = vector.load %arg8[%c11_598, %c1_599, %c0_600, %c0_601] : memref<16x2x4x32xf32, #tpu.memory_space<vmem>>, vector<1x1x4x32xf32>
    %555 = vector.shape_cast %554 : vector<1x1x4x32xf32> to vector<4x32xf32>
    %cst_602 = arith.constant 0.387096763 : f32
    %556 = vector.broadcast %cst_602 : f32 to vector<4x32xf32>
    %557 = arith.mulf %555, %556 : vector<4x32xf32>
    %c12_603 = arith.constant 12 : index
    %c1_604 = arith.constant 1 : index
    %c0_605 = arith.constant 0 : index
    %c0_606 = arith.constant 0 : index
    %558 = vector.load %arg8[%c12_603, %c1_604, %c0_605, %c0_606] : memref<16x2x4x32xf32, #tpu.memory_space<vmem>>, vector<1x1x4x32xf32>
    %559 = vector.shape_cast %558 : vector<1x1x4x32xf32> to vector<4x32xf32>
    %cst_607 = arith.constant 0.612903237 : f32
    %560 = vector.broadcast %cst_607 : f32 to vector<4x32xf32>
    %561 = arith.mulf %559, %560 : vector<4x32xf32>
    %562 = arith.addf %557, %561 : vector<4x32xf32>
    %c0_608 = arith.constant 0 : index
    %c1920 = arith.constant 1920 : index
    %563 = vector.load %arg9[%c0_608, %c1920] : memref<4x2304xf32, #tpu.memory_space<vmem>>, vector<4x32xf32>
    tpu.vector_store %arg9[%c0_608, %c1920], %562 {strides = array<i32>} : memref<4x2304xf32, #tpu.memory_space<vmem>>, vector<4x32xf32>,
    %c12_609 = arith.constant 12 : index
    %c1_610 = arith.constant 1 : index
    %c0_611 = arith.constant 0 : index
    %c0_612 = arith.constant 0 : index
    %564 = vector.load %arg8[%c12_609, %c1_610, %c0_611, %c0_612] : memref<16x2x4x32xf32, #tpu.memory_space<vmem>>, vector<1x1x4x32xf32>
    %565 = vector.shape_cast %564 : vector<1x1x4x32xf32> to vector<4x32xf32>
    %cst_613 = arith.constant 0.903225779 : f32
    %566 = vector.broadcast %cst_613 : f32 to vector<4x32xf32>
    %567 = arith.mulf %565, %566 : vector<4x32xf32>
    %c13_614 = arith.constant 13 : index
    %c1_615 = arith.constant 1 : index
    %c0_616 = arith.constant 0 : index
    %c0_617 = arith.constant 0 : index
    %568 = vector.load %arg8[%c13_614, %c1_615, %c0_616, %c0_617] : memref<16x2x4x32xf32, #tpu.memory_space<vmem>>, vector<1x1x4x32xf32>
    %569 = vector.shape_cast %568 : vector<1x1x4x32xf32> to vector<4x32xf32>
    %cst_618 = arith.constant 0.0967741906 : f32
    %570 = vector.broadcast %cst_618 : f32 to vector<4x32xf32>
    %571 = arith.mulf %569, %570 : vector<4x32xf32>
    %572 = arith.addf %567, %571 : vector<4x32xf32>
    %c0_619 = arith.constant 0 : index
    %c1952 = arith.constant 1952 : index
    %573 = vector.load %arg9[%c0_619, %c1952] : memref<4x2304xf32, #tpu.memory_space<vmem>>, vector<4x32xf32>
    tpu.vector_store %arg9[%c0_619, %c1952], %572 {strides = array<i32>} : memref<4x2304xf32, #tpu.memory_space<vmem>>, vector<4x32xf32>,
    %c12_620 = arith.constant 12 : index
    %c1_621 = arith.constant 1 : index
    %c0_622 = arith.constant 0 : index
    %c0_623 = arith.constant 0 : index
    %574 = vector.load %arg8[%c12_620, %c1_621, %c0_622, %c0_623] : memref<16x2x4x32xf32, #tpu.memory_space<vmem>>, vector<1x1x4x32xf32>
    %575 = vector.shape_cast %574 : vector<1x1x4x32xf32> to vector<4x32xf32>
    %cst_624 = arith.constant 0.419354826 : f32
    %576 = vector.broadcast %cst_624 : f32 to vector<4x32xf32>
    %577 = arith.mulf %575, %576 : vector<4x32xf32>
    %c13_625 = arith.constant 13 : index
    %c1_626 = arith.constant 1 : index
    %c0_627 = arith.constant 0 : index
    %c0_628 = arith.constant 0 : index
    %578 = vector.load %arg8[%c13_625, %c1_626, %c0_627, %c0_628] : memref<16x2x4x32xf32, #tpu.memory_space<vmem>>, vector<1x1x4x32xf32>
    %579 = vector.shape_cast %578 : vector<1x1x4x32xf32> to vector<4x32xf32>
    %cst_629 = arith.constant 0.580645144 : f32
    %580 = vector.broadcast %cst_629 : f32 to vector<4x32xf32>
    %581 = arith.mulf %579, %580 : vector<4x32xf32>
    %582 = arith.addf %577, %581 : vector<4x32xf32>
    %c0_630 = arith.constant 0 : index
    %c1984 = arith.constant 1984 : index
    %583 = vector.load %arg9[%c0_630, %c1984] : memref<4x2304xf32, #tpu.memory_space<vmem>>, vector<4x32xf32>
    tpu.vector_store %arg9[%c0_630, %c1984], %582 {strides = array<i32>} : memref<4x2304xf32, #tpu.memory_space<vmem>>, vector<4x32xf32>,
    %c13_631 = arith.constant 13 : index
    %c1_632 = arith.constant 1 : index
    %c0_633 = arith.constant 0 : index
    %c0_634 = arith.constant 0 : index
    %584 = vector.load %arg8[%c13_631, %c1_632, %c0_633, %c0_634] : memref<16x2x4x32xf32, #tpu.memory_space<vmem>>, vector<1x1x4x32xf32>
    %585 = vector.shape_cast %584 : vector<1x1x4x32xf32> to vector<4x32xf32>
    %cst_635 = arith.constant 0.935483872 : f32
    %586 = vector.broadcast %cst_635 : f32 to vector<4x32xf32>
    %587 = arith.mulf %585, %586 : vector<4x32xf32>
    %c14_636 = arith.constant 14 : index
    %c1_637 = arith.constant 1 : index
    %c0_638 = arith.constant 0 : index
    %c0_639 = arith.constant 0 : index
    %588 = vector.load %arg8[%c14_636, %c1_637, %c0_638, %c0_639] : memref<16x2x4x32xf32, #tpu.memory_space<vmem>>, vector<1x1x4x32xf32>
    %589 = vector.shape_cast %588 : vector<1x1x4x32xf32> to vector<4x32xf32>
    %cst_640 = arith.constant 0.0645161271 : f32
    %590 = vector.broadcast %cst_640 : f32 to vector<4x32xf32>
    %591 = arith.mulf %589, %590 : vector<4x32xf32>
    %592 = arith.addf %587, %591 : vector<4x32xf32>
    %c0_641 = arith.constant 0 : index
    %c2016 = arith.constant 2016 : index
    %593 = vector.load %arg9[%c0_641, %c2016] : memref<4x2304xf32, #tpu.memory_space<vmem>>, vector<4x32xf32>
    tpu.vector_store %arg9[%c0_641, %c2016], %592 {strides = array<i32>} : memref<4x2304xf32, #tpu.memory_space<vmem>>, vector<4x32xf32>,
    %c13_642 = arith.constant 13 : index
    %c1_643 = arith.constant 1 : index
    %c0_644 = arith.constant 0 : index
    %c0_645 = arith.constant 0 : index
    %594 = vector.load %arg8[%c13_642, %c1_643, %c0_644, %c0_645] : memref<16x2x4x32xf32, #tpu.memory_space<vmem>>, vector<1x1x4x32xf32>
    %595 = vector.shape_cast %594 : vector<1x1x4x32xf32> to vector<4x32xf32>
    %cst_646 = arith.constant 0.45161289 : f32
    %596 = vector.broadcast %cst_646 : f32 to vector<4x32xf32>
    %597 = arith.mulf %595, %596 : vector<4x32xf32>
    %c14_647 = arith.constant 14 : index
    %c1_648 = arith.constant 1 : index
    %c0_649 = arith.constant 0 : index
    %c0_650 = arith.constant 0 : index
    %598 = vector.load %arg8[%c14_647, %c1_648, %c0_649, %c0_650] : memref<16x2x4x32xf32, #tpu.memory_space<vmem>>, vector<1x1x4x32xf32>
    %599 = vector.shape_cast %598 : vector<1x1x4x32xf32> to vector<4x32xf32>
    %cst_651 = arith.constant 0.54838711 : f32
    %600 = vector.broadcast %cst_651 : f32 to vector<4x32xf32>
    %601 = arith.mulf %599, %600 : vector<4x32xf32>
    %602 = arith.addf %597, %601 : vector<4x32xf32>
    %c0_652 = arith.constant 0 : index
    %c2048 = arith.constant 2048 : index
    %603 = vector.load %arg9[%c0_652, %c2048] : memref<4x2304xf32, #tpu.memory_space<vmem>>, vector<4x32xf32>
    tpu.vector_store %arg9[%c0_652, %c2048], %602 {strides = array<i32>} : memref<4x2304xf32, #tpu.memory_space<vmem>>, vector<4x32xf32>,
    %c14_653 = arith.constant 14 : index
    %c1_654 = arith.constant 1 : index
    %c0_655 = arith.constant 0 : index
    %c0_656 = arith.constant 0 : index
    %604 = vector.load %arg8[%c14_653, %c1_654, %c0_655, %c0_656] : memref<16x2x4x32xf32, #tpu.memory_space<vmem>>, vector<1x1x4x32xf32>
    %605 = vector.shape_cast %604 : vector<1x1x4x32xf32> to vector<4x32xf32>
    %cst_657 = arith.constant 0.967741906 : f32
    %606 = vector.broadcast %cst_657 : f32 to vector<4x32xf32>
    %607 = arith.mulf %605, %606 : vector<4x32xf32>
    %c15_658 = arith.constant 15 : index
    %c1_659 = arith.constant 1 : index
    %c0_660 = arith.constant 0 : index
    %c0_661 = arith.constant 0 : index
    %608 = vector.load %arg8[%c15_658, %c1_659, %c0_660, %c0_661] : memref<16x2x4x32xf32, #tpu.memory_space<vmem>>, vector<1x1x4x32xf32>
    %609 = vector.shape_cast %608 : vector<1x1x4x32xf32> to vector<4x32xf32>
    %cst_662 = arith.constant 0.0322580636 : f32
    %610 = vector.broadcast %cst_662 : f32 to vector<4x32xf32>
    %611 = arith.mulf %609, %610 : vector<4x32xf32>
    %612 = arith.addf %607, %611 : vector<4x32xf32>
    %c0_663 = arith.constant 0 : index
    %c2080 = arith.constant 2080 : index
    %613 = vector.load %arg9[%c0_663, %c2080] : memref<4x2304xf32, #tpu.memory_space<vmem>>, vector<4x32xf32>
    tpu.vector_store %arg9[%c0_663, %c2080], %612 {strides = array<i32>} : memref<4x2304xf32, #tpu.memory_space<vmem>>, vector<4x32xf32>,
    %c14_664 = arith.constant 14 : index
    %c1_665 = arith.constant 1 : index
    %c0_666 = arith.constant 0 : index
    %c0_667 = arith.constant 0 : index
    %614 = vector.load %arg8[%c14_664, %c1_665, %c0_666, %c0_667] : memref<16x2x4x32xf32, #tpu.memory_space<vmem>>, vector<1x1x4x32xf32>
    %615 = vector.shape_cast %614 : vector<1x1x4x32xf32> to vector<4x32xf32>
    %cst_668 = arith.constant 0.483870953 : f32
    %616 = vector.broadcast %cst_668 : f32 to vector<4x32xf32>
    %617 = arith.mulf %615, %616 : vector<4x32xf32>
    %c15_669 = arith.constant 15 : index
    %c1_670 = arith.constant 1 : index
    %c0_671 = arith.constant 0 : index
    %c0_672 = arith.constant 0 : index
    %618 = vector.load %arg8[%c15_669, %c1_670, %c0_671, %c0_672] : memref<16x2x4x32xf32, #tpu.memory_space<vmem>>, vector<1x1x4x32xf32>
    %619 = vector.shape_cast %618 : vector<1x1x4x32xf32> to vector<4x32xf32>
    %cst_673 = arith.constant 5.161290e-01 : f32
    %620 = vector.broadcast %cst_673 : f32 to vector<4x32xf32>
    %621 = arith.mulf %619, %620 : vector<4x32xf32>
    %622 = arith.addf %617, %621 : vector<4x32xf32>
    %c0_674 = arith.constant 0 : index
    %c2112 = arith.constant 2112 : index
    %623 = vector.load %arg9[%c0_674, %c2112] : memref<4x2304xf32, #tpu.memory_space<vmem>>, vector<4x32xf32>
    tpu.vector_store %arg9[%c0_674, %c2112], %622 {strides = array<i32>} : memref<4x2304xf32, #tpu.memory_space<vmem>>, vector<4x32xf32>,
    %c15_675 = arith.constant 15 : index
    %c1_676 = arith.constant 1 : index
    %c0_677 = arith.constant 0 : index
    %c0_678 = arith.constant 0 : index
    %624 = vector.load %arg8[%c15_675, %c1_676, %c0_677, %c0_678] : memref<16x2x4x32xf32, #tpu.memory_space<vmem>>, vector<1x1x4x32xf32>
    %625 = vector.shape_cast %624 : vector<1x1x4x32xf32> to vector<4x32xf32>
    %cst_679 = arith.constant 1.000000e+00 : f32
    %626 = vector.broadcast %cst_679 : f32 to vector<4x32xf32>
    %627 = arith.mulf %625, %626 : vector<4x32xf32>
    %c0_680 = arith.constant 0 : index
    %c2144 = arith.constant 2144 : index
    %628 = vector.load %arg9[%c0_680, %c2144] : memref<4x2304xf32, #tpu.memory_space<vmem>>, vector<4x32xf32>
    tpu.vector_store %arg9[%c0_680, %c2144], %627 {strides = array<i32>} : memref<4x2304xf32, #tpu.memory_space<vmem>>, vector<4x32xf32>,
    %c0_681 = arith.constant 0 : index
    %c95 = arith.constant 95 : index
    %629 = vector.load %arg9[%c0_681, %c95] : memref<4x2304xf32, #tpu.memory_space<vmem>>, vector<4x2048xf32>
    %c0_682 = arith.constant 0 : index
    %c0_683 = arith.constant 0 : index
    %c0_684 = arith.constant 0 : index
    %630 = vector.load %arg5[%c0_682, %c0_683, %c0_684] : memref<9x1x2048xbf16, #tpu.memory_space<vmem>>, vector<1x1x2048xbf16>
    %631 = vector.shape_cast %630 : vector<1x1x2048xbf16> to vector<1x2048xbf16>
    %632 = arith.extf %631 : vector<1x2048xbf16> to vector<1x2048xf32>
    %633 = vector.broadcast %632 : vector<1x2048xf32> to vector<4x2048xf32>
    %634 = arith.mulf %629, %633 : vector<4x2048xf32>
    %635 = arith.truncf %634 : vector<4x2048xf32> to vector<4x2048xbf16>
    %c0_685 = arith.constant 0 : index
    %c0_686 = arith.constant 0 : index
    %c0_687 = arith.constant 0 : index
    %636 = vector.load %arg3[%c0_685, %c0_686, %c0_687] : memref<9x8x4xbf16, #tpu.memory_space<vmem>>, vector<1x8x4xbf16>
    %637 = vector.shape_cast %636 : vector<1x8x4xbf16> to vector<8x4xbf16>
    %cst_688 = arith.constant dense<0.000000e+00> : vector<8x2048xf32>
    %638 = tpu.matmul %637, %635, %cst_688 {dimension_numbers = #tpu.dot_dimension_numbers<[1], [0], [0], [1], [0, 0, 1, 1], [], []>} : vector<8x4xbf16>, vector<4x2048xbf16>, vector<8x2048xf32> -> vector<8x2048xf32>
    %c0_689 = arith.constant 0 : index
    %c96 = arith.constant 96 : index
    %639 = vector.load %arg9[%c0_689, %c96] : memref<4x2304xf32, #tpu.memory_space<vmem>>, vector<4x2048xf32>
    %c1_690 = arith.constant 1 : index
    %c0_691 = arith.constant 0 : index
    %c0_692 = arith.constant 0 : index
    %640 = vector.load %arg5[%c1_690, %c0_691, %c0_692] : memref<9x1x2048xbf16, #tpu.memory_space<vmem>>, vector<1x1x2048xbf16>
    %641 = vector.shape_cast %640 : vector<1x1x2048xbf16> to vector<1x2048xbf16>
    %642 = arith.extf %641 : vector<1x2048xbf16> to vector<1x2048xf32>
    %643 = vector.broadcast %642 : vector<1x2048xf32> to vector<4x2048xf32>
    %644 = arith.mulf %639, %643 : vector<4x2048xf32>
    %645 = arith.truncf %644 : vector<4x2048xf32> to vector<4x2048xbf16>
    %c1_693 = arith.constant 1 : index
    %c0_694 = arith.constant 0 : index
    %c0_695 = arith.constant 0 : index
    %646 = vector.load %arg3[%c1_693, %c0_694, %c0_695] : memref<9x8x4xbf16, #tpu.memory_space<vmem>>, vector<1x8x4xbf16>
    %647 = vector.shape_cast %646 : vector<1x8x4xbf16> to vector<8x4xbf16>
    %cst_696 = arith.constant dense<0.000000e+00> : vector<8x2048xf32>
    %648 = tpu.matmul %647, %645, %cst_696 {dimension_numbers = #tpu.dot_dimension_numbers<[1], [0], [0], [1], [0, 0, 1, 1], [], []>} : vector<8x4xbf16>, vector<4x2048xbf16>, vector<8x2048xf32> -> vector<8x2048xf32>
    %649 = arith.addf %638, %648 : vector<8x2048xf32>
    %c0_697 = arith.constant 0 : index
    %c97 = arith.constant 97 : index
    %650 = vector.load %arg9[%c0_697, %c97] : memref<4x2304xf32, #tpu.memory_space<vmem>>, vector<4x2048xf32>
    %c2_698 = arith.constant 2 : index
    %c0_699 = arith.constant 0 : index
    %c0_700 = arith.constant 0 : index
    %651 = vector.load %arg5[%c2_698, %c0_699, %c0_700] : memref<9x1x2048xbf16, #tpu.memory_space<vmem>>, vector<1x1x2048xbf16>
    %652 = vector.shape_cast %651 : vector<1x1x2048xbf16> to vector<1x2048xbf16>
    %653 = arith.extf %652 : vector<1x2048xbf16> to vector<1x2048xf32>
    %654 = vector.broadcast %653 : vector<1x2048xf32> to vector<4x2048xf32>
    %655 = arith.mulf %650, %654 : vector<4x2048xf32>
    %656 = arith.truncf %655 : vector<4x2048xf32> to vector<4x2048xbf16>
    %c2_701 = arith.constant 2 : index
    %c0_702 = arith.constant 0 : index
    %c0_703 = arith.constant 0 : index
    %657 = vector.load %arg3[%c2_701, %c0_702, %c0_703] : memref<9x8x4xbf16, #tpu.memory_space<vmem>>, vector<1x8x4xbf16>
    %658 = vector.shape_cast %657 : vector<1x8x4xbf16> to vector<8x4xbf16>
    %cst_704 = arith.constant dense<0.000000e+00> : vector<8x2048xf32>
    %659 = tpu.matmul %658, %656, %cst_704 {dimension_numbers = #tpu.dot_dimension_numbers<[1], [0], [0], [1], [0, 0, 1, 1], [], []>} : vector<8x4xbf16>, vector<4x2048xbf16>, vector<8x2048xf32> -> vector<8x2048xf32>
    %660 = arith.addf %649, %659 : vector<8x2048xf32>
    %c0_705 = arith.constant 0 : index
    %c127 = arith.constant 127 : index
    %661 = vector.load %arg9[%c0_705, %c127] : memref<4x2304xf32, #tpu.memory_space<vmem>>, vector<4x2048xf32>
    %c3_706 = arith.constant 3 : index
    %c0_707 = arith.constant 0 : index
    %c0_708 = arith.constant 0 : index
    %662 = vector.load %arg5[%c3_706, %c0_707, %c0_708] : memref<9x1x2048xbf16, #tpu.memory_space<vmem>>, vector<1x1x2048xbf16>
    %663 = vector.shape_cast %662 : vector<1x1x2048xbf16> to vector<1x2048xbf16>
    %664 = arith.extf %663 : vector<1x2048xbf16> to vector<1x2048xf32>
    %665 = vector.broadcast %664 : vector<1x2048xf32> to vector<4x2048xf32>
    %666 = arith.mulf %661, %665 : vector<4x2048xf32>
    %667 = arith.truncf %666 : vector<4x2048xf32> to vector<4x2048xbf16>
    %c3_709 = arith.constant 3 : index
    %c0_710 = arith.constant 0 : index
    %c0_711 = arith.constant 0 : index
    %668 = vector.load %arg3[%c3_709, %c0_710, %c0_711] : memref<9x8x4xbf16, #tpu.memory_space<vmem>>, vector<1x8x4xbf16>
    %669 = vector.shape_cast %668 : vector<1x8x4xbf16> to vector<8x4xbf16>
    %cst_712 = arith.constant dense<0.000000e+00> : vector<8x2048xf32>
    %670 = tpu.matmul %669, %667, %cst_712 {dimension_numbers = #tpu.dot_dimension_numbers<[1], [0], [0], [1], [0, 0, 1, 1], [], []>} : vector<8x4xbf16>, vector<4x2048xbf16>, vector<8x2048xf32> -> vector<8x2048xf32>
    %671 = arith.addf %660, %670 : vector<8x2048xf32>
    %c0_713 = arith.constant 0 : index
    %c128_714 = arith.constant 128 : index
    %672 = vector.load %arg9[%c0_713, %c128_714] : memref<4x2304xf32, #tpu.memory_space<vmem>>, vector<4x2048xf32>
    %673 = arith.truncf %672 : vector<4x2048xf32> to vector<4x2048xbf16>
    %c4_715 = arith.constant 4 : index
    %c0_716 = arith.constant 0 : index
    %c0_717 = arith.constant 0 : index
    %674 = vector.load %arg3[%c4_715, %c0_716, %c0_717] : memref<9x8x4xbf16, #tpu.memory_space<vmem>>, vector<1x8x4xbf16>
    %675 = vector.shape_cast %674 : vector<1x8x4xbf16> to vector<8x4xbf16>
    %cst_718 = arith.constant dense<0.000000e+00> : vector<8x2048xf32>
    %676 = tpu.matmul %675, %673, %cst_718 {dimension_numbers = #tpu.dot_dimension_numbers<[1], [0], [0], [1], [0, 0, 1, 1], [], []>} : vector<8x4xbf16>, vector<4x2048xbf16>, vector<8x2048xf32> -> vector<8x2048xf32>
    %677 = arith.addf %671, %676 : vector<8x2048xf32>
    %c0_719 = arith.constant 0 : index
    %c129 = arith.constant 129 : index
    %678 = vector.load %arg9[%c0_719, %c129] : memref<4x2304xf32, #tpu.memory_space<vmem>>, vector<4x2048xf32>
    %c5_720 = arith.constant 5 : index
    %c0_721 = arith.constant 0 : index
    %c0_722 = arith.constant 0 : index
    %679 = vector.load %arg5[%c5_720, %c0_721, %c0_722] : memref<9x1x2048xbf16, #tpu.memory_space<vmem>>, vector<1x1x2048xbf16>
    %680 = vector.shape_cast %679 : vector<1x1x2048xbf16> to vector<1x2048xbf16>
    %681 = arith.extf %680 : vector<1x2048xbf16> to vector<1x2048xf32>
    %682 = vector.broadcast %681 : vector<1x2048xf32> to vector<4x2048xf32>
    %683 = arith.mulf %678, %682 : vector<4x2048xf32>
    %684 = arith.truncf %683 : vector<4x2048xf32> to vector<4x2048xbf16>
    %c5_723 = arith.constant 5 : index
    %c0_724 = arith.constant 0 : index
    %c0_725 = arith.constant 0 : index
    %685 = vector.load %arg3[%c5_723, %c0_724, %c0_725] : memref<9x8x4xbf16, #tpu.memory_space<vmem>>, vector<1x8x4xbf16>
    %686 = vector.shape_cast %685 : vector<1x8x4xbf16> to vector<8x4xbf16>
    %cst_726 = arith.constant dense<0.000000e+00> : vector<8x2048xf32>
    %687 = tpu.matmul %686, %684, %cst_726 {dimension_numbers = #tpu.dot_dimension_numbers<[1], [0], [0], [1], [0, 0, 1, 1], [], []>} : vector<8x4xbf16>, vector<4x2048xbf16>, vector<8x2048xf32> -> vector<8x2048xf32>
    %688 = arith.addf %677, %687 : vector<8x2048xf32>
    %c0_727 = arith.constant 0 : index
    %c159 = arith.constant 159 : index
    %689 = vector.load %arg9[%c0_727, %c159] : memref<4x2304xf32, #tpu.memory_space<vmem>>, vector<4x2048xf32>
    %c6_728 = arith.constant 6 : index
    %c0_729 = arith.constant 0 : index
    %c0_730 = arith.constant 0 : index
    %690 = vector.load %arg5[%c6_728, %c0_729, %c0_730] : memref<9x1x2048xbf16, #tpu.memory_space<vmem>>, vector<1x1x2048xbf16>
    %691 = vector.shape_cast %690 : vector<1x1x2048xbf16> to vector<1x2048xbf16>
    %692 = arith.extf %691 : vector<1x2048xbf16> to vector<1x2048xf32>
    %693 = vector.broadcast %692 : vector<1x2048xf32> to vector<4x2048xf32>
    %694 = arith.mulf %689, %693 : vector<4x2048xf32>
    %695 = arith.truncf %694 : vector<4x2048xf32> to vector<4x2048xbf16>
    %c6_731 = arith.constant 6 : index
    %c0_732 = arith.constant 0 : index
    %c0_733 = arith.constant 0 : index
    %696 = vector.load %arg3[%c6_731, %c0_732, %c0_733] : memref<9x8x4xbf16, #tpu.memory_space<vmem>>, vector<1x8x4xbf16>
    %697 = vector.shape_cast %696 : vector<1x8x4xbf16> to vector<8x4xbf16>
    %cst_734 = arith.constant dense<0.000000e+00> : vector<8x2048xf32>
    %698 = tpu.matmul %697, %695, %cst_734 {dimension_numbers = #tpu.dot_dimension_numbers<[1], [0], [0], [1], [0, 0, 1, 1], [], []>} : vector<8x4xbf16>, vector<4x2048xbf16>, vector<8x2048xf32> -> vector<8x2048xf32>
    %699 = arith.addf %688, %698 : vector<8x2048xf32>
    %c0_735 = arith.constant 0 : index
    %c160_736 = arith.constant 160 : index
    %700 = vector.load %arg9[%c0_735, %c160_736] : memref<4x2304xf32, #tpu.memory_space<vmem>>, vector<4x2048xf32>
    %c7_737 = arith.constant 7 : index
    %c0_738 = arith.constant 0 : index
    %c0_739 = arith.constant 0 : index
    %701 = vector.load %arg5[%c7_737, %c0_738, %c0_739] : memref<9x1x2048xbf16, #tpu.memory_space<vmem>>, vector<1x1x2048xbf16>
    %702 = vector.shape_cast %701 : vector<1x1x2048xbf16> to vector<1x2048xbf16>
    %703 = arith.extf %702 : vector<1x2048xbf16> to vector<1x2048xf32>
    %704 = vector.broadcast %703 : vector<1x2048xf32> to vector<4x2048xf32>
    %705 = arith.mulf %700, %704 : vector<4x2048xf32>
    %706 = arith.truncf %705 : vector<4x2048xf32> to vector<4x2048xbf16>
    %c7_740 = arith.constant 7 : index
    %c0_741 = arith.constant 0 : index
    %c0_742 = arith.constant 0 : index
    %707 = vector.load %arg3[%c7_740, %c0_741, %c0_742] : memref<9x8x4xbf16, #tpu.memory_space<vmem>>, vector<1x8x4xbf16>
    %708 = vector.shape_cast %707 : vector<1x8x4xbf16> to vector<8x4xbf16>
    %cst_743 = arith.constant dense<0.000000e+00> : vector<8x2048xf32>
    %709 = tpu.matmul %708, %706, %cst_743 {dimension_numbers = #tpu.dot_dimension_numbers<[1], [0], [0], [1], [0, 0, 1, 1], [], []>} : vector<8x4xbf16>, vector<4x2048xbf16>, vector<8x2048xf32> -> vector<8x2048xf32>
    %710 = arith.addf %699, %709 : vector<8x2048xf32>
    %c0_744 = arith.constant 0 : index
    %c161 = arith.constant 161 : index
    %711 = vector.load %arg9[%c0_744, %c161] : memref<4x2304xf32, #tpu.memory_space<vmem>>, vector<4x2048xf32>
    %c8_745 = arith.constant 8 : index
    %c0_746 = arith.constant 0 : index
    %c0_747 = arith.constant 0 : index
    %712 = vector.load %arg5[%c8_745, %c0_746, %c0_747] : memref<9x1x2048xbf16, #tpu.memory_space<vmem>>, vector<1x1x2048xbf16>
    %713 = vector.shape_cast %712 : vector<1x1x2048xbf16> to vector<1x2048xbf16>
    %714 = arith.extf %713 : vector<1x2048xbf16> to vector<1x2048xf32>
    %715 = vector.broadcast %714 : vector<1x2048xf32> to vector<4x2048xf32>
    %716 = arith.mulf %711, %715 : vector<4x2048xf32>
    %717 = arith.truncf %716 : vector<4x2048xf32> to vector<4x2048xbf16>
    %c8_748 = arith.constant 8 : index
    %c0_749 = arith.constant 0 : index
    %c0_750 = arith.constant 0 : index
    %718 = vector.load %arg3[%c8_748, %c0_749, %c0_750] : memref<9x8x4xbf16, #tpu.memory_space<vmem>>, vector<1x8x4xbf16>
    %719 = vector.shape_cast %718 : vector<1x8x4xbf16> to vector<8x4xbf16>
    %cst_751 = arith.constant dense<0.000000e+00> : vector<8x2048xf32>
    %720 = tpu.matmul %719, %717, %cst_751 {dimension_numbers = #tpu.dot_dimension_numbers<[1], [0], [0], [1], [0, 0, 1, 1], [], []>} : vector<8x4xbf16>, vector<4x2048xbf16>, vector<8x2048xf32> -> vector<8x2048xf32>
    %721 = arith.addf %710, %720 : vector<8x2048xf32>
    %c0_752 = arith.constant 0 : index
    %c0_753 = arith.constant 0 : index
    %722 = vector.load %arg4[%c0_752, %c0_753] : memref<8x1xf32, #tpu.memory_space<vmem>>, vector<8x1xf32>
    %723 = vector.broadcast %722 : vector<8x1xf32> to vector<8x2048xf32>
    %724 = arith.addf %721, %723 : vector<8x2048xf32>
    %c0_754 = arith.constant 0 : index
    %725 = memref.load %arg6[%c0_754] : memref<1xf32, #tpu.memory_space<smem>>
    %cst_755 = arith.constant 0.000000e+00 : f32
    %726 = vector.broadcast %cst_755 : f32 to vector<8x2048xf32>
    %727 = arith.cmpf ogt, %724, %726 : vector<8x2048xf32>
    %728 = vector.broadcast %725 : f32 to vector<8x2048xf32>
    %729 = arith.mulf %728, %724 : vector<8x2048xf32>
    %730 = arith.select %727, %724, %729 : vector<8x2048xi1>, vector<8x2048xf32>
    %731 = vector.extract_strided_slice %730 {offsets = [0, 0], sizes = [8, 1024], strides = [1, 1]} : vector<8x2048xf32> to vector<8x1024xf32>
    %c0_756 = arith.constant 0 : index
    %c0_757 = arith.constant 0 : index
    %c0_758 = arith.constant 0 : index
    %732 = vector.load %arg7[%c0_756, %c0_757, %c0_758] : memref<2x8x1024xf32, #tpu.memory_space<vmem>>, vector<1x8x1024xf32>
    %733 = vector.shape_cast %732 : vector<1x8x1024xf32> to vector<8x1024xf32>
    %734 = vector.shape_cast %731 : vector<8x1024xf32> to vector<1x8x1024xf32>
    tpu.vector_store %arg7[%c0_756, %c0_757, %c0_758], %734 {strides = array<i32>} : memref<2x8x1024xf32, #tpu.memory_space<vmem>>, vector<1x8x1024xf32>,
    %735 = vector.extract_strided_slice %730 {offsets = [0, 1024], sizes = [8, 1024], strides = [1, 1]} : vector<8x2048xf32> to vector<8x1024xf32>
    %c1_759 = arith.constant 1 : index
    %c0_760 = arith.constant 0 : index
    %c0_761 = arith.constant 0 : index
    %736 = vector.load %arg7[%c1_759, %c0_760, %c0_761] : memref<2x8x1024xf32, #tpu.memory_space<vmem>>, vector<1x8x1024xf32>
    %737 = vector.shape_cast %736 : vector<1x8x1024xf32> to vector<8x1024xf32>
    %738 = vector.shape_cast %735 : vector<8x1024xf32> to vector<1x8x1024xf32>
    tpu.vector_store %arg7[%c1_759, %c0_760, %c0_761], %738 {strides = array<i32>} : memref<2x8x1024xf32, #tpu.memory_space<vmem>>, vector<1x8x1024xf32>,
    return
  }
  func.func @transform_0(%arg0: i32) -> (i32, i32) {
    %c0_i32 = arith.constant 0 : i32
    %c0_i32_0 = arith.constant 0 : i32
    %c0_i32_1 = arith.constant 0 : i32
    return %c0_i32, %c0_i32_0 : i32, i32
  }
  func.func @transform_1(%arg0: i32) -> (i32, i32) {
    %c0_i32 = arith.constant 0 : i32
    %c0_i32_0 = arith.constant 0 : i32
    %c0_i32_1 = arith.constant 0 : i32
    return %c0_i32, %c0_i32_0 : i32, i32
  }
  func.func @transform_2(%arg0: i32) -> (i32, i32, i32) {
    %c0_i32 = arith.constant 0 : i32
    %c0_i32_0 = arith.constant 0 : i32
    %c0_i32_1 = arith.constant 0 : i32
    %c0_i32_2 = arith.constant 0 : i32
    return %c0_i32, %c0_i32_0, %c0_i32_1 : i32, i32, i32
  }
  func.func @transform_3(%arg0: i32) -> (i32, i32) {
    %c0_i32 = arith.constant 0 : i32
    %c0_i32_0 = arith.constant 0 : i32
    %c0_i32_1 = arith.constant 0 : i32
    return %c0_i32, %c0_i32_0 : i32, i32
  }
  func.func @transform_4(%arg0: i32) -> (i32, i32, i32) {
    %c0_i32 = arith.constant 0 : i32
    %c0_i32_0 = arith.constant 0 : i32
    %c0_i32_1 = arith.constant 0 : i32
    %c0_i32_2 = arith.constant 0 : i32
    return %c0_i32, %c0_i32_0, %c0_i32_1 : i32, i32, i32
  }
  func.func @transform_5(%arg0: i32) -> i32 {
    %c0_i32 = arith.constant 0 : i32
    %c0_i32_0 = arith.constant 0 : i32
    return %c0_i32 : i32
  }
  func.func @transform_6(%arg0: i32) -> (i32, i32, i32) {
    %c0_i32 = arith.constant 0 : i32
    %c0_i32_0 = arith.constant 0 : i32
    %c0_i32_1 = arith.constant 0 : i32
    %c0_i32_2 = arith.constant 0 : i32
    return %c0_i32, %c0_i32_0, %c0_i32_1 : i32, i32, i32
  }
}

</mosaic_0001>

<llo_original>
// kernel: tpu_custom_call.1
$region0: #{tpu_custom_call.1}
  #allocation0 [shape = 'u32[]', space=smem, size = 0x4, offset = 0x4, fixed_abs, tag = 'smem constant byte address 0x4 - core index']
  #allocation1 [shape = 'u32[144,128]{1,0:T(1,128)}', space=vmem, size = 0x12000, scoped, tag = 'internal scratch']
  #allocation2 [shape = 'f32[16,2,4,32]{3,2,1,0:T(4,128)}', space=vmem, size = 0x10000, scoped, tag = 'scratch operand']
  #allocation3 [shape = 'f32[4,2304]{1,0:T(4,128)}', space=vmem, size = 0x9000, scoped, tag = 'scratch operand']
  #allocation4 [shape = 'f32[1]{0:T(128)S(6)}', space=smem, size = 0x200, scoped, tag = 'scoped memory for tpu_custom_call.1']
  %s0 = inlined_call_operand.vmem [shape: bf16[128,16], index: 0, kind: input, shape index: {}]
  %s1 = inlined_call_operand.vmem [shape: bf16[16,32], index: 1, kind: input, shape index: {}]
  %s2 = inlined_call_operand.vmem [shape: bf16[9,8,4], index: 2, kind: input, shape index: {}]
  %s3 = inlined_call_operand.vmem [shape: f32[8,1], index: 3, kind: input, shape index: {}]
  %s4 = inlined_call_operand.vmem [shape: bf16[9,1,2048], index: 4, kind: input, shape index: {}]
  %s5 = inlined_call_operand.<no memory space> [shape: f32[1], index: 5, kind: input, shape index: {}]
  %s6 = inlined_call_operand.hbm [shape: f32[2,8,1024], index: 6, kind: output, shape index: {}]
  %s7 = sld [smem:[#allocation0]]
  $region34: #{tpu_custom_call.1} parent=0
    _
  %s9 = ssub.s32 1, %s7
  %s10 = scalar_select 0, %s9, %s7
  %11 = sst [smem:[#allocation4]] %s5
  $region1: #{tpu_custom_call.1} parent=0
    #allocation5 [shape = 'u8[65536]{0}', space=vmem, size = 0x10000, scoped, tag = 'output window, operand 0, single buffered']
    #allocation6 [shape = 's32[1]{0}', space=sflag, size = 0x4, scoped, tag = 'scoped memory for tpu_custom_call.1']
    %12 = vsyncpa [#allocation6], 0
    // Predicated region
    $region2: #{tpu_custom_call.1} parent=1 // pred_check
      _
    $region3: #{tpu_custom_call.1} parent=1 // pred_check_branch
      %14 = sbr.rel (0) target = $region5
    $region4: #{tpu_custom_call.1} parent=1 // pred_region
      _
    $region5: #{tpu_custom_call.1} parent=1 // pred_fallthru
      _
    // Predicated region
    $region6: #{tpu_custom_call.1} parent=1 // pred_check
      _
    $region7: #{tpu_custom_call.1} parent=1 // pred_check_branch
      %16 = sbr.rel (0) target = $region9
    $region8: #{tpu_custom_call.1} parent=1 // pred_region
      _
    $region9: #{tpu_custom_call.1} parent=1 // pred_fallthru
      _
    // Predicated region
    $region10: #{tpu_custom_call.1} parent=1 // pred_check
      _
    $region11: #{tpu_custom_call.1} parent=1 // pred_check_branch
      %18 = sbr.rel (0) target = $region13
    $region12: #{tpu_custom_call.1} parent=1 // pred_region
      _
    $region13: #{tpu_custom_call.1} parent=1 // pred_fallthru
      _
    // Predicated region
    $region14: #{tpu_custom_call.1} parent=1 // pred_check
      _
    $region15: #{tpu_custom_call.1} parent=1 // pred_check_branch
      %20 = sbr.rel (0) target = $region17
    $region16: #{tpu_custom_call.1} parent=1 // pred_region
      _
    $region17: #{tpu_custom_call.1} parent=1 // pred_fallthru
      _
    // Predicated region
    $region18: #{tpu_custom_call.1} parent=1 // pred_check
      _
    $region19: #{tpu_custom_call.1} parent=1 // pred_check_branch
      %22 = sbr.rel (0) target = $region21
    $region20: #{tpu_custom_call.1} parent=1 // pred_region
      _
    $region21: #{tpu_custom_call.1} parent=1 // pred_fallthru
      _
    // Predicated region
    $region22: #{tpu_custom_call.1} parent=1 // pred_check
      _
    $region23: #{tpu_custom_call.1} parent=1 // pred_check_branch
      %24 = sbr.rel (0) target = $region25
    $region24: #{tpu_custom_call.1} parent=1 // pred_region
      _
    $region25: #{tpu_custom_call.1} parent=1 // pred_fallthru
      _
    %v26 = vld [vmem:[%s0] sm:$0xf]
    %v27 = vld [vmem:[%s0 + $0x4] sm:$0xf]
    %v28 = vld [vmem:[%s0 + $0x8] sm:$0xf]
    %v29 = vld [vmem:[%s0 + $0xc] sm:$0xf]
    %v30 = vld [vmem:[%s0 + $0x10] sm:$0xf]
    %v31 = vld [vmem:[%s0 + $0x14] sm:$0xf]
    %v32 = vld [vmem:[%s0 + $0x18] sm:$0xf]
    %v33 = vld [vmem:[%s0 + $0x1c] sm:$0xf]
    %v34 = vld [vmem:[%s0 + $0x20] sm:$0xf]
    %v35 = vld [vmem:[%s0 + $0x24] sm:$0xf]
    %v36 = vld [vmem:[%s0 + $0x28] sm:$0xf]
    %v37 = vld [vmem:[%s0 + $0x2c] sm:$0xf]
    %v38 = vld [vmem:[%s0 + $0x30] sm:$0xf]
    %v39 = vld [vmem:[%s0 + $0x34] sm:$0xf]
    %v40 = vld [vmem:[%s0 + $0x38] sm:$0xf]
    %v41 = vld [vmem:[%s0 + $0x3c] sm:$0xf]
    %v42 = vld [vmem:[%s1] sm:$0xf]
    %v43 = vld [vmem:[%s1 + $0x4] sm:$0xf]
    %v60 = vunpack.c.l.b16 %v26
    %v61 = vunpack.c.l.b16 %v27
    %v62 = vunpack.c.l.b16 %v28
    %v63 = vunpack.c.l.b16 %v29
    %v64 = vunpack.c.l.b16 %v30
    %v65 = vunpack.c.l.b16 %v31
    %v66 = vunpack.c.l.b16 %v32
    %v67 = vunpack.c.l.b16 %v33
    %v68 = vunpack.c.l.b16 %v34
    %v69 = vunpack.c.l.b16 %v35
    %v70 = vunpack.c.l.b16 %v36
    %v71 = vunpack.c.l.b16 %v37
    %v72 = vunpack.c.l.b16 %v38
    %v73 = vunpack.c.l.b16 %v39
    %v74 = vunpack.c.l.b16 %v40
    %v75 = vunpack.c.l.b16 %v41
    %v76 = vpack.c.b16 %v61, %v60
    %v77 = vpack.c.b16 %v63, %v62
    %v78 = vpack.c.b16 %v65, %v64
    %v79 = vpack.c.b16 %v67, %v66
    %v80 = vpack.c.b16 %v69, %v68
    %v81 = vpack.c.b16 %v71, %v70
    %v82 = vpack.c.b16 %v73, %v72
    %v83 = vpack.c.b16 %v75, %v74
    %v86 = vunpack.c.l.b16 %v42
    %v87 = vunpack.c.l.b16 %v43
    %v88 = vpack.c.b16 %v87, %v86
    %vm90 = vcmask 130048
    %v92 = vsel %vm90, %v76, 0
    %v95 = vsel %vm90, %v77, 0
    %v98 = vsel %vm90, %v78, 0
    %v101 = vsel %vm90, %v79, 0
    %v104 = vsel %vm90, %v80, 0
    %v107 = vsel %vm90, %v81, 0
    %v110 = vsel %vm90, %v82, 0
    %v113 = vsel %vm90, %v83, 0
    %115 = vmatprep.subr.bf16.mxu0 0
    %116 = vmatpush1.bf16.msra.mxu0 %v88
    %117 = vmatprep.subr.bf16.mxu0 0
    %118 = vmatpush1.bf16.msra.mxu0 0
    %119 = vmatprep.subr.bf16.mxu0 0
    %120 = vmatpush1.bf16.msra.mxu0 0
    %121 = vmatprep.subr.bf16.mxu0 0
    %122 = vmatpush1.bf16.msra.mxu0 0
    %123 = vmatprep.subr.bf16.mxu0 0
    %124 = vmatpush1.bf16.msra.mxu0 0
    %125 = vmatprep.subr.bf16.mxu0 0
    %126 = vmatpush1.bf16.msra.mxu0 0
    %127 = vmatprep.subr.bf16.mxu0 0
    %128 = vmatpush1.bf16.msra.mxu0 0
    %129 = vmatprep.subr.bf16.mxu0 0
    %130 = vmatpush1.bf16.msra.mxu0 0
    %131 = vmatprep.subr.bf16.mxu0 0
    %132 = vmatpush1.bf16.msra.mxu0 0
    %133 = vmatprep.subr.bf16.mxu0 0
    %134 = vmatpush1.bf16.msra.mxu0 0
    %135 = vmatprep.subr.bf16.mxu0 0
    %136 = vmatpush1.bf16.msra.mxu0 0
    %137 = vmatprep.subr.bf16.mxu0 0
    %138 = vmatpush1.bf16.msra.mxu0 0
    %139 = vmatprep.subr.bf16.mxu0 0
    %140 = vmatpush1.bf16.msra.mxu0 0
    %141 = vmatprep.subr.bf16.mxu0 0
    %142 = vmatpush1.bf16.msra.mxu0 0
    %143 = vmatprep.subr.bf16.mxu0 0
    %144 = vmatpush1.bf16.msra.mxu0 0
    %145 = vmatprep.subr.bf16.mxu0 0
    %146 = vmatpush1.bf16.msra.mxu0 0
    %147 = vmatprep.mubr.bf16.mxu0 0
    %148 = vmatmul.mubr.bf16.gmra.mrb[0].mxu0 %v92
    %v149 = vpop.f32.mrb[0].mxu0
    %v150 = vadd.f32 0.0, %v149
    %v151 = vpop.f32.mrb[0].mxu0
    %v152 = vpop.f32.mrb[0].mxu0
    %v153 = vadd.f32 0.0, %v152
    %v154 = vpop.f32.mrb[0].mxu0
    %155 = vmatprep.mubr.bf16.mxu0 0
    %156 = vmatmul.mubr.bf16.gmra.mrb[0].mxu0 %v95
    %v157 = vpop.f32.mrb[0].mxu0
    %v158 = vadd.f32 0.0, %v157
    %v159 = vpop.f32.mrb[0].mxu0
    %v160 = vpop.f32.mrb[0].mxu0
    %v161 = vadd.f32 0.0, %v160
    %v162 = vpop.f32.mrb[0].mxu0
    %163 = vmatprep.mubr.bf16.mxu0 0
    %164 = vmatmul.mubr.bf16.gmra.mrb[0].mxu0 %v98
    %v165 = vpop.f32.mrb[0].mxu0
    %v166 = vadd.f32 0.0, %v165
    %v167 = vpop.f32.mrb[0].mxu0
    %v168 = vpop.f32.mrb[0].mxu0
    %v169 = vadd.f32 0.0, %v168
    %v170 = vpop.f32.mrb[0].mxu0
    %171 = vmatprep.mubr.bf16.mxu0 0
    %172 = vmatmul.mubr.bf16.gmra.mrb[0].mxu0 %v101
    %v173 = vpop.f32.mrb[0].mxu0
    %v174 = vadd.f32 0.0, %v173
    %v175 = vpop.f32.mrb[0].mxu0
    %v176 = vpop.f32.mrb[0].mxu0
    %v177 = vadd.f32 0.0, %v176
    %v178 = vpop.f32.mrb[0].mxu0
    %179 = vmatprep.mubr.bf16.mxu0 0
    %180 = vmatmul.mubr.bf16.gmra.mrb[0].mxu0 %v104
    %v181 = vpop.f32.mrb[0].mxu0
    %v182 = vadd.f32 0.0, %v181
    %v183 = vpop.f32.mrb[0].mxu0
    %v184 = vpop.f32.mrb[0].mxu0
    %v185 = vadd.f32 0.0, %v184
    %v186 = vpop.f32.mrb[0].mxu0
    %187 = vmatprep.mubr.bf16.mxu0 0
    %188 = vmatmul.mubr.bf16.gmra.mrb[0].mxu0 %v107
    %v189 = vpop.f32.mrb[0].mxu0
    %v190 = vadd.f32 0.0, %v189
    %v191 = vpop.f32.mrb[0].mxu0
    %v192 = vpop.f32.mrb[0].mxu0
    %v193 = vadd.f32 0.0, %v192
    %v194 = vpop.f32.mrb[0].mxu0
    %195 = vmatprep.mubr.bf16.mxu0 0
    %196 = vmatmul.mubr.bf16.gmra.mrb[0].mxu0 %v110
    %v197 = vpop.f32.mrb[0].mxu0
    %v198 = vadd.f32 0.0, %v197
    %v199 = vpop.f32.mrb[0].mxu0
    %v200 = vpop.f32.mrb[0].mxu0
    %v201 = vadd.f32 0.0, %v200
    %v202 = vpop.f32.mrb[0].mxu0
    %203 = vmatprep.mubr.bf16.mxu0 0
    %204 = vmatmul.mubr.bf16.gmra.mrb[0].mxu0 %v113
    %v205 = vpop.f32.mrb[0].mxu0
    %v206 = vadd.f32 0.0, %v205
    %v207 = vpop.f32.mrb[0].mxu0
    %v208 = vpop.f32.mrb[0].mxu0
    %v209 = vadd.f32 0.0, %v208
    %v210 = vpop.f32.mrb[0].mxu0
    %211 = vdwg.mxu0
    %v228 = vcombine.high %v150, %v150
    %v229 = vcombine.high %v153, %v153
    %v230 = vcombine.high %v158, %v158
    %v231 = vcombine.high %v161, %v161
    %v232 = vcombine.high %v166, %v166
    %v233 = vcombine.high %v169, %v169
    %v234 = vcombine.high %v174, %v174
    %v235 = vcombine.high %v177, %v177
    %v236 = vcombine.high %v182, %v182
    %v237 = vcombine.high %v185, %v185
    %v238 = vcombine.high %v190, %v190
    %v239 = vcombine.high %v193, %v193
    %v240 = vcombine.high %v198, %v198
    %v241 = vcombine.high %v201, %v201
    %v242 = vcombine.high %v206, %v206
    %v243 = vcombine.high %v209, %v209
    %vm260 = vcmask 257024
    %261 = vst.msk [vmem:[#allocation2] sm:$0xf] %vm260, %v150
    %262 = vst.msk [vmem:[#allocation2 + $0x4] sm:$0xf] %vm260, %v228
    %263 = vst.msk [vmem:[#allocation2 + $0x8] sm:$0xf] %vm260, %v153
    %264 = vst.msk [vmem:[#allocation2 + $0xc] sm:$0xf] %vm260, %v229
    %265 = vst.msk [vmem:[#allocation2 + $0x10] sm:$0xf] %vm260, %v158
    %266 = vst.msk [vmem:[#allocation2 + $0x14] sm:$0xf] %vm260, %v230
    %267 = vst.msk [vmem:[#allocation2 + $0x18] sm:$0xf] %vm260, %v161
    %268 = vst.msk [vmem:[#allocation2 + $0x1c] sm:$0xf] %vm260, %v231
    %269 = vst.msk [vmem:[#allocation2 + $0x20] sm:$0xf] %vm260, %v166
    %270 = vst.msk [vmem:[#allocation2 + $0x24] sm:$0xf] %vm260, %v232
    %271 = vst.msk [vmem:[#allocation2 + $0x28] sm:$0xf] %vm260, %v169
    %272 = vst.msk [vmem:[#allocation2 + $0x2c] sm:$0xf] %vm260, %v233
    %273 = vst.msk [vmem:[#allocation2 + $0x30] sm:$0xf] %vm260, %v174
    %274 = vst.msk [vmem:[#allocation2 + $0x34] sm:$0xf] %vm260, %v234
    %275 = vst.msk [vmem:[#allocation2 + $0x38] sm:$0xf] %vm260, %v177
    %276 = vst.msk [vmem:[#allocation2 + $0x3c] sm:$0xf] %vm260, %v235
    %277 = vst.msk [vmem:[#allocation2 + $0x40] sm:$0xf] %vm260, %v182
    %278 = vst.msk [vmem:[#allocation2 + $0x44] sm:$0xf] %vm260, %v236
    %279 = vst.msk [vmem:[#allocation2 + $0x48] sm:$0xf] %vm260, %v185
    %280 = vst.msk [vmem:[#allocation2 + $0x4c] sm:$0xf] %vm260, %v237
    %281 = vst.msk [vmem:[#allocation2 + $0x50] sm:$0xf] %vm260, %v190
    %282 = vst.msk [vmem:[#allocation2 + $0x54] sm:$0xf] %vm260, %v238
    %283 = vst.msk [vmem:[#allocation2 + $0x58] sm:$0xf] %vm260, %v193
    %284 = vst.msk [vmem:[#allocation2 + $0x5c] sm:$0xf] %vm260, %v239
    %285 = vst.msk [vmem:[#allocation2 + $0x60] sm:$0xf] %vm260, %v198
    %286 = vst.msk [vmem:[#allocation2 + $0x64] sm:$0xf] %vm260, %v240
    %287 = vst.msk [vmem:[#allocation2 + $0x68] sm:$0xf] %vm260, %v201
    %288 = vst.msk [vmem:[#allocation2 + $0x6c] sm:$0xf] %vm260, %v241
    %289 = vst.msk [vmem:[#allocation2 + $0x70] sm:$0xf] %vm260, %v206
    %290 = vst.msk [vmem:[#allocation2 + $0x74] sm:$0xf] %vm260, %v242
    %291 = vst.msk [vmem:[#allocation2 + $0x78] sm:$0xf] %vm260, %v209
    %292 = vst.msk [vmem:[#allocation2 + $0x7c] sm:$0xf] %vm260, %v243
    %293 = vst [vmem:[#allocation3] sm:$0xf] 0.0
    %294 = vst [vmem:[#allocation3 + $0x44] sm:$0xf] 0.0
    %v295 = vld [vmem:[#allocation2] sm:$0xf]
    %296 = vst.msk [vmem:[#allocation3 + $0x4] sm:$0xf] %vm260, %v295
    %v297 = vld [vmem:[#allocation2] sm:$0xf]
    %v298 = vmul.f32 %v297, 0.516129
    %s299 = scalar_lea.vmem [#allocation2], 8
    %v300 = vld [vmem:[%s299] sm:$0xf]
    %v301 = vmul.f32 %v300, 0.48387095
    %v302 = vadd.f32 %v298, %v301
    %304 = vrot.lane.b32.xlu0 %v302, 32
    %v305 = vpop.permute.xlu0 %304
    %vm307 = vcmask 519424
    %308 = vst.msk [vmem:[#allocation3 + $0x4] sm:$0xf] %vm307, %v305
    %v309 = vld [vmem:[#allocation2] sm:$0xf]
    %v310 = vmul.f32 %v309, 0.032258064
    %v311 = vld [vmem:[%s299] sm:$0xf]
    %v312 = vmul.f32 %v311, 0.9677419
    %v313 = vadd.f32 %v310, %v312
    %315 = vrot.lane.b32.xlu0 %v313, 64
    %v316 = vpop.permute.xlu0 %315
    %vm318 = vcmask 781824
    %319 = vst.msk [vmem:[#allocation3 + $0x4] sm:$0xf] %vm318, %v316
    %v320 = vld [vmem:[%s299] sm:$0xf]
    %v321 = vmul.f32 %v320, 0.5483871
    %s322 = scalar_lea.vmem [#allocation2], 16
    %v323 = vld [vmem:[%s322] sm:$0xf]
    %v324 = vmul.f32 %v323, 0.4516129
    %v325 = vadd.f32 %v321, %v324
    %327 = vrot.lane.b32.xlu0 %v325, 96
    %v328 = vpop.permute.xlu0 %327
    %vm330 = vcmask 1044224
    %331 = vst.msk [vmem:[#allocation3 + $0x4] sm:$0xf] %vm330, %v328
    %v332 = vld [vmem:[%s299] sm:$0xf]
    %v333 = vmul.f32 %v332, 0.06451613
    %v334 = vld [vmem:[%s322] sm:$0xf]
    %v335 = vmul.f32 %v334, 0.9354839
    %v336 = vadd.f32 %v333, %v335
    %337 = vst.msk [vmem:[#allocation3 + $0x8] sm:$0xf] %vm260, %v336
    %v338 = vld [vmem:[%s322] sm:$0xf]
    %v339 = vmul.f32 %v338, 0.58064514
    %s340 = scalar_lea.vmem [#allocation2], 24
    %v341 = vld [vmem:[%s340] sm:$0xf]
    %v342 = vmul.f32 %v341, 0.41935483
    %v343 = vadd.f32 %v339, %v342
    %345 = vrot.lane.b32.xlu0 %v343, 32
    %v346 = vpop.permute.xlu0 %345
    %348 = vst.msk [vmem:[#allocation3 + $0x8] sm:$0xf] %vm307, %v346
    %v349 = vld [vmem:[%s322] sm:$0xf]
    %v350 = vmul.f32 %v349, 0.09677419
    %v351 = vld [vmem:[%s340] sm:$0xf]
    %v352 = vmul.f32 %v351, 0.9032258
    %v353 = vadd.f32 %v350, %v352
    %355 = vrot.lane.b32.xlu0 %v353, 64
    %v356 = vpop.permute.xlu0 %355
    %358 = vst.msk [vmem:[#allocation3 + $0x8] sm:$0xf] %vm318, %v356
    %v359 = vld [vmem:[%s340] sm:$0xf]
    %v360 = vmul.f32 %v359, 0.61290324
    %s361 = scalar_lea.vmem [#allocation2], 32
    %v362 = vld [vmem:[%s361] sm:$0xf]
    %v363 = vmul.f32 %v362, 0.38709676
    %v364 = vadd.f32 %v360, %v363
    %366 = vrot.lane.b32.xlu0 %v364, 96
    %v367 = vpop.permute.xlu0 %366
    %369 = vst.msk [vmem:[#allocation3 + $0x8] sm:$0xf] %vm330, %v367
    %v370 = vld [vmem:[%s340] sm:$0xf]
    %v371 = vmul.f32 %v370, 0.12903225
    %v372 = vld [vmem:[%s361] sm:$0xf]
    %v373 = vmul.f32 %v372, 0.87096775
    %v374 = vadd.f32 %v371, %v373
    %375 = vst.msk [vmem:[#allocation3 + $0xc] sm:$0xf] %vm260, %v374
    %v376 = vld [vmem:[%s361] sm:$0xf]
    %v377 = vmul.f32 %v376, 0.6451613
    %s378 = scalar_lea.vmem [#allocation2], 40
    %v379 = vld [vmem:[%s378] sm:$0xf]
    %v380 = vmul.f32 %v379, 0.3548387
    %v381 = vadd.f32 %v377, %v380
    %383 = vrot.lane.b32.xlu0 %v381, 32
    %v384 = vpop.permute.xlu0 %383
    %386 = vst.msk [vmem:[#allocation3 + $0xc] sm:$0xf] %vm307, %v384
    %v387 = vld [vmem:[%s361] sm:$0xf]
    %v388 = vmul.f32 %v387, 0.16129032
    %v389 = vld [vmem:[%s378] sm:$0xf]
    %v390 = vmul.f32 %v389, 0.83870965
    %v391 = vadd.f32 %v388, %v390
    %393 = vrot.lane.b32.xlu0 %v391, 64
    %v394 = vpop.permute.xlu0 %393
    %396 = vst.msk [vmem:[#allocation3 + $0xc] sm:$0xf] %vm318, %v394
    %v397 = vld [vmem:[%s378] sm:$0xf]
    %v398 = vmul.f32 %v397, 0.67741936
    %s399 = scalar_lea.vmem [#allocation2], 48
    %v400 = vld [vmem:[%s399] sm:$0xf]
    %v401 = vmul.f32 %v400, 0.32258064
    %v402 = vadd.f32 %v398, %v401
    %404 = vrot.lane.b32.xlu0 %v402, 96
    %v405 = vpop.permute.xlu0 %404
    %407 = vst.msk [vmem:[#allocation3 + $0xc] sm:$0xf] %vm330, %v405
    %v408 = vld [vmem:[%s378] sm:$0xf]
    %v409 = vmul.f32 %v408, 0.19354838
    %v410 = vld [vmem:[%s399] sm:$0xf]
    %v411 = vmul.f32 %v410, 0.8064516
    %v412 = vadd.f32 %v409, %v411
    %413 = vst.msk [vmem:[#allocation3 + $0x10] sm:$0xf] %vm260, %v412
    %v414 = vld [vmem:[%s399] sm:$0xf]
    %v415 = vmul.f32 %v414, 0.7096774
    %s416 = scalar_lea.vmem [#allocation2], 56
    %v417 = vld [vmem:[%s416] sm:$0xf]
    %v418 = vmul.f32 %v417, 0.29032257
    %v419 = vadd.f32 %v415, %v418
    %421 = vrot.lane.b32.xlu0 %v419, 32
    %v422 = vpop.permute.xlu0 %421
    %424 = vst.msk [vmem:[#allocation3 + $0x10] sm:$0xf] %vm307, %v422
    %v425 = vld [vmem:[%s399] sm:$0xf]
    %v426 = vmul.f32 %v425, 0.22580644
    %v427 = vld [vmem:[%s416] sm:$0xf]
    %v428 = vmul.f32 %v427, 0.7741935
    %v429 = vadd.f32 %v426, %v428
    %431 = vrot.lane.b32.xlu0 %v429, 64
    %v432 = vpop.permute.xlu0 %431
    %434 = vst.msk [vmem:[#allocation3 + $0x10] sm:$0xf] %vm318, %v432
    %v435 = vld [vmem:[%s416] sm:$0xf]
    %v436 = vmul.f32 %v435, 0.7419355
    %s437 = scalar_lea.vmem [#allocation2], 64
    %v438 = vld [vmem:[%s437] sm:$0xf]
    %v439 = vmul.f32 %v438, 0.2580645
    %v440 = vadd.f32 %v436, %v439
    %442 = vrot.lane.b32.xlu0 %v440, 96
    %v443 = vpop.permute.xlu0 %442
    %445 = vst.msk [vmem:[#allocation3 + $0x10] sm:$0xf] %vm330, %v443
    %v446 = vld [vmem:[%s416] sm:$0xf]
    %v447 = vmul.f32 %v446, 0.2580645
    %v448 = vld [vmem:[%s437] sm:$0xf]
    %v449 = vmul.f32 %v448, 0.7419355
    %v450 = vadd.f32 %v447, %v449
    %451 = vst.msk [vmem:[#allocation3 + $0x14] sm:$0xf] %vm260, %v450
    %v452 = vld [vmem:[%s437] sm:$0xf]
    %v453 = vmul.f32 %v452, 0.7741935
    %s454 = scalar_lea.vmem [#allocation2], 72
    %v455 = vld [vmem:[%s454] sm:$0xf]
    %v456 = vmul.f32 %v455, 0.22580644
    %v457 = vadd.f32 %v453, %v456
    %459 = vrot.lane.b32.xlu0 %v457, 32
    %v460 = vpop.permute.xlu0 %459
    %462 = vst.msk [vmem:[#allocation3 + $0x14] sm:$0xf] %vm307, %v460
    %v463 = vld [vmem:[%s437] sm:$0xf]
    %v464 = vmul.f32 %v463, 0.29032257
    %v465 = vld [vmem:[%s454] sm:$0xf]
    %v466 = vmul.f32 %v465, 0.7096774
    %v467 = vadd.f32 %v464, %v466
    %469 = vrot.lane.b32.xlu0 %v467, 64
    %v470 = vpop.permute.xlu0 %469
    %472 = vst.msk [vmem:[#allocation3 + $0x14] sm:$0xf] %vm318, %v470
    %v473 = vld [vmem:[%s454] sm:$0xf]
    %v474 = vmul.f32 %v473, 0.8064516
    %s475 = scalar_lea.vmem [#allocation2], 80
    %v476 = vld [vmem:[%s475] sm:$0xf]
    %v477 = vmul.f32 %v476, 0.19354838
    %v478 = vadd.f32 %v474, %v477
    %480 = vrot.lane.b32.xlu0 %v478, 96
    %v481 = vpop.permute.xlu0 %480
    %483 = vst.msk [vmem:[#allocation3 + $0x14] sm:$0xf] %vm330, %v481
    %v484 = vld [vmem:[%s454] sm:$0xf]
    %v485 = vmul.f32 %v484, 0.32258064
    %v486 = vld [vmem:[%s475] sm:$0xf]
    %v487 = vmul.f32 %v486, 0.67741936
    %v488 = vadd.f32 %v485, %v487
    %489 = vst.msk [vmem:[#allocation3 + $0x18] sm:$0xf] %vm260, %v488
    %v490 = vld [vmem:[%s475] sm:$0xf]
    %v491 = vmul.f32 %v490, 0.83870965
    %s492 = scalar_lea.vmem [#allocation2], 88
    %v493 = vld [vmem:[%s492] sm:$0xf]
    %v494 = vmul.f32 %v493, 0.16129032
    %v495 = vadd.f32 %v491, %v494
    %497 = vrot.lane.b32.xlu0 %v495, 32
    %v498 = vpop.permute.xlu0 %497
    %500 = vst.msk [vmem:[#allocation3 + $0x18] sm:$0xf] %vm307, %v498
    %v501 = vld [vmem:[%s475] sm:$0xf]
    %v502 = vmul.f32 %v501, 0.3548387
    %v503 = vld [vmem:[%s492] sm:$0xf]
    %v504 = vmul.f32 %v503, 0.6451613
    %v505 = vadd.f32 %v502, %v504
    %507 = vrot.lane.b32.xlu0 %v505, 64
    %v508 = vpop.permute.xlu0 %507
    %510 = vst.msk [vmem:[#allocation3 + $0x18] sm:$0xf] %vm318, %v508
    %v511 = vld [vmem:[%s492] sm:$0xf]
    %v512 = vmul.f32 %v511, 0.87096775
    %s513 = scalar_lea.vmem [#allocation2], 96
    %v514 = vld [vmem:[%s513] sm:$0xf]
    %v515 = vmul.f32 %v514, 0.12903225
    %v516 = vadd.f32 %v512, %v515
    %518 = vrot.lane.b32.xlu0 %v516, 96
    %v519 = vpop.permute.xlu0 %518
    %521 = vst.msk [vmem:[#allocation3 + $0x18] sm:$0xf] %vm330, %v519
    %v522 = vld [vmem:[%s492] sm:$0xf]
    %v523 = vmul.f32 %v522, 0.38709676
    %v524 = vld [vmem:[%s513] sm:$0xf]
    %v525 = vmul.f32 %v524, 0.61290324
    %v526 = vadd.f32 %v523, %v525
    %527 = vst.msk [vmem:[#allocation3 + $0x1c] sm:$0xf] %vm260, %v526
    %v528 = vld [vmem:[%s513] sm:$0xf]
    %v529 = vmul.f32 %v528, 0.9032258
    %s530 = scalar_lea.vmem [#allocation2], 104
    %v531 = vld [vmem:[%s530] sm:$0xf]
    %v532 = vmul.f32 %v531, 0.09677419
    %v533 = vadd.f32 %v529, %v532
    %535 = vrot.lane.b32.xlu0 %v533, 32
    %v536 = vpop.permute.xlu0 %535
    %538 = vst.msk [vmem:[#allocation3 + $0x1c] sm:$0xf] %vm307, %v536
    %v539 = vld [vmem:[%s513] sm:$0xf]
    %v540 = vmul.f32 %v539, 0.41935483
    %v541 = vld [vmem:[%s530] sm:$0xf]
    %v542 = vmul.f32 %v541, 0.58064514
    %v543 = vadd.f32 %v540, %v542
    %545 = vrot.lane.b32.xlu0 %v543, 64
    %v546 = vpop.permute.xlu0 %545
    %548 = vst.msk [vmem:[#allocation3 + $0x1c] sm:$0xf] %vm318, %v546
    %v549 = vld [vmem:[%s530] sm:$0xf]
    %v550 = vmul.f32 %v549, 0.9354839
    %s551 = scalar_lea.vmem [#allocation2], 112
    %v552 = vld [vmem:[%s551] sm:$0xf]
    %v553 = vmul.f32 %v552, 0.06451613
    %v554 = vadd.f32 %v550, %v553
    %556 = vrot.lane.b32.xlu0 %v554, 96
    %v557 = vpop.permute.xlu0 %556
    %559 = vst.msk [vmem:[#allocation3 + $0x1c] sm:$0xf] %vm330, %v557
    %v560 = vld [vmem:[%s530] sm:$0xf]
    %v561 = vmul.f32 %v560, 0.4516129
    %v562 = vld [vmem:[%s551] sm:$0xf]
    %v563 = vmul.f32 %v562, 0.5483871
    %v564 = vadd.f32 %v561, %v563
    %565 = vst.msk [vmem:[#allocation3 + $0x20] sm:$0xf] %vm260, %v564
    %v566 = vld [vmem:[%s551] sm:$0xf]
    %v567 = vmul.f32 %v566, 0.9677419
    %s568 = scalar_lea.vmem [#allocation2], 120
    %v569 = vld [vmem:[%s568] sm:$0xf]
    %v570 = vmul.f32 %v569, 0.032258064
    %v571 = vadd.f32 %v567, %v570
    %573 = vrot.lane.b32.xlu0 %v571, 32
    %v574 = vpop.permute.xlu0 %573
    %576 = vst.msk [vmem:[#allocation3 + $0x20] sm:$0xf] %vm307, %v574
    %v577 = vld [vmem:[%s551] sm:$0xf]
    %v578 = vmul.f32 %v577, 0.48387095
    %v579 = vld [vmem:[%s568] sm:$0xf]
    %v580 = vmul.f32 %v579, 0.516129
    %v581 = vadd.f32 %v578, %v580
    %583 = vrot.lane.b32.xlu0 %v581, 64
    %v584 = vpop.permute.xlu0 %583
    %586 = vst.msk [vmem:[#allocation3 + $0x20] sm:$0xf] %vm318, %v584
    %v587 = vld [vmem:[%s568] sm:$0xf]
    %589 = vrot.lane.b32.xlu0 %v587, 96
    %v590 = vpop.permute.xlu0 %589
    %592 = vst.msk [vmem:[#allocation3 + $0x20] sm:$0xf] %vm330, %v590
    %s593 = scalar_lea.vmem [#allocation2], 4
    %v594 = vld [vmem:[%s593] sm:$0xf]
    %595 = vst.msk [vmem:[#allocation3 + $0x24] sm:$0xf] %vm260, %v594
    %v596 = vld [vmem:[%s593] sm:$0xf]
    %v597 = vmul.f32 %v596, 0.516129
    %s598 = scalar_lea.vmem [#allocation2], 12
    %v599 = vld [vmem:[%s598] sm:$0xf]
    %v600 = vmul.f32 %v599, 0.48387095
    %v601 = vadd.f32 %v597, %v600
    %603 = vrot.lane.b32.xlu0 %v601, 32
    %v604 = vpop.permute.xlu0 %603
    %606 = vst.msk [vmem:[#allocation3 + $0x24] sm:$0xf] %vm307, %v604
    %v607 = vld [vmem:[%s593] sm:$0xf]
    %v608 = vmul.f32 %v607, 0.032258064
    %v609 = vld [vmem:[%s598] sm:$0xf]
    %v610 = vmul.f32 %v609, 0.9677419
    %v611 = vadd.f32 %v608, %v610
    %613 = vrot.lane.b32.xlu0 %v611, 64
    %v614 = vpop.permute.xlu0 %613
    %616 = vst.msk [vmem:[#allocation3 + $0x24] sm:$0xf] %vm318, %v614
    %v617 = vld [vmem:[%s598] sm:$0xf]
    %v618 = vmul.f32 %v617, 0.5483871
    %s619 = scalar_lea.vmem [#allocation2], 20
    %v620 = vld [vmem:[%s619] sm:$0xf]
    %v621 = vmul.f32 %v620, 0.4516129
    %v622 = vadd.f32 %v618, %v621
    %624 = vrot.lane.b32.xlu0 %v622, 96
    %v625 = vpop.permute.xlu0 %624
    %627 = vst.msk [vmem:[#allocation3 + $0x24] sm:$0xf] %vm330, %v625
    %v628 = vld [vmem:[%s598] sm:$0xf]
    %v629 = vmul.f32 %v628, 0.06451613
    %v630 = vld [vmem:[%s619] sm:$0xf]
    %v631 = vmul.f32 %v630, 0.9354839
    %v632 = vadd.f32 %v629, %v631
    %633 = vst.msk [vmem:[#allocation3 + $0x28] sm:$0xf] %vm260, %v632
    %v634 = vld [vmem:[%s619] sm:$0xf]
    %v635 = vmul.f32 %v634, 0.58064514
    %s636 = scalar_lea.vmem [#allocation2], 28
    %v637 = vld [vmem:[%s636] sm:$0xf]
    %v638 = vmul.f32 %v637, 0.41935483
    %v639 = vadd.f32 %v635, %v638
    %641 = vrot.lane.b32.xlu0 %v639, 32
    %v642 = vpop.permute.xlu0 %641
    %644 = vst.msk [vmem:[#allocation3 + $0x28] sm:$0xf] %vm307, %v642
    %v645 = vld [vmem:[%s619] sm:$0xf]
    %v646 = vmul.f32 %v645, 0.09677419
    %v647 = vld [vmem:[%s636] sm:$0xf]
    %v648 = vmul.f32 %v647, 0.9032258
    %v649 = vadd.f32 %v646, %v648
    %651 = vrot.lane.b32.xlu0 %v649, 64
    %v652 = vpop.permute.xlu0 %651
    %654 = vst.msk [vmem:[#allocation3 + $0x28] sm:$0xf] %vm318, %v652
    %v655 = vld [vmem:[%s636] sm:$0xf]
    %v656 = vmul.f32 %v655, 0.61290324
    %s657 = scalar_lea.vmem [#allocation2], 36
    %v658 = vld [vmem:[%s657] sm:$0xf]
    %v659 = vmul.f32 %v658, 0.38709676
    %v660 = vadd.f32 %v656, %v659
    %662 = vrot.lane.b32.xlu0 %v660, 96
    %v663 = vpop.permute.xlu0 %662
    %665 = vst.msk [vmem:[#allocation3 + $0x28] sm:$0xf] %vm330, %v663
    %v666 = vld [vmem:[%s636] sm:$0xf]
    %v667 = vmul.f32 %v666, 0.12903225
    %v668 = vld [vmem:[%s657] sm:$0xf]
    %v669 = vmul.f32 %v668, 0.87096775
    %v670 = vadd.f32 %v667, %v669
    %671 = vst.msk [vmem:[#allocation3 + $0x2c] sm:$0xf] %vm260, %v670
    %v672 = vld [vmem:[%s657] sm:$0xf]
    %v673 = vmul.f32 %v672, 0.6451613
    %s674 = scalar_lea.vmem [#allocation2], 44
    %v675 = vld [vmem:[%s674] sm:$0xf]
    %v676 = vmul.f32 %v675, 0.3548387
    %v677 = vadd.f32 %v673, %v676
    %679 = vrot.lane.b32.xlu0 %v677, 32
    %v680 = vpop.permute.xlu0 %679
    %682 = vst.msk [vmem:[#allocation3 + $0x2c] sm:$0xf] %vm307, %v680
    %v683 = vld [vmem:[%s657] sm:$0xf]
    %v684 = vmul.f32 %v683, 0.16129032
    %v685 = vld [vmem:[%s674] sm:$0xf]
    %v686 = vmul.f32 %v685, 0.83870965
    %v687 = vadd.f32 %v684, %v686
    %689 = vrot.lane.b32.xlu0 %v687, 64
    %v690 = vpop.permute.xlu0 %689
    %692 = vst.msk [vmem:[#allocation3 + $0x2c] sm:$0xf] %vm318, %v690
    %v693 = vld [vmem:[%s674] sm:$0xf]
    %v694 = vmul.f32 %v693, 0.67741936
    %s695 = scalar_lea.vmem [#allocation2], 52
    %v696 = vld [vmem:[%s695] sm:$0xf]
    %v697 = vmul.f32 %v696, 0.32258064
    %v698 = vadd.f32 %v694, %v697
    %700 = vrot.lane.b32.xlu0 %v698, 96
    %v701 = vpop.permute.xlu0 %700
    %703 = vst.msk [vmem:[#allocation3 + $0x2c] sm:$0xf] %vm330, %v701
    %v704 = vld [vmem:[%s674] sm:$0xf]
    %v705 = vmul.f32 %v704, 0.19354838
    %v706 = vld [vmem:[%s695] sm:$0xf]
    %v707 = vmul.f32 %v706, 0.8064516
    %v708 = vadd.f32 %v705, %v707
    %709 = vst.msk [vmem:[#allocation3 + $0x30] sm:$0xf] %vm260, %v708
    %v710 = vld [vmem:[%s695] sm:$0xf]
    %v711 = vmul.f32 %v710, 0.7096774
    %s712 = scalar_lea.vmem [#allocation2], 60
    %v713 = vld [vmem:[%s712] sm:$0xf]
    %v714 = vmul.f32 %v713, 0.29032257
    %v715 = vadd.f32 %v711, %v714
    %717 = vrot.lane.b32.xlu0 %v715, 32
    %v718 = vpop.permute.xlu0 %717
    %720 = vst.msk [vmem:[#allocation3 + $0x30] sm:$0xf] %vm307, %v718
    %v721 = vld [vmem:[%s695] sm:$0xf]
    %v722 = vmul.f32 %v721, 0.22580644
    %v723 = vld [vmem:[%s712] sm:$0xf]
    %v724 = vmul.f32 %v723, 0.7741935
    %v725 = vadd.f32 %v722, %v724
    %727 = vrot.lane.b32.xlu0 %v725, 64
    %v728 = vpop.permute.xlu0 %727
    %730 = vst.msk [vmem:[#allocation3 + $0x30] sm:$0xf] %vm318, %v728
    %v731 = vld [vmem:[%s712] sm:$0xf]
    %v732 = vmul.f32 %v731, 0.7419355
    %s733 = scalar_lea.vmem [#allocation2], 68
    %v734 = vld [vmem:[%s733] sm:$0xf]
    %v735 = vmul.f32 %v734, 0.2580645
    %v736 = vadd.f32 %v732, %v735
    %738 = vrot.lane.b32.xlu0 %v736, 96
    %v739 = vpop.permute.xlu0 %738
    %741 = vst.msk [vmem:[#allocation3 + $0x30] sm:$0xf] %vm330, %v739
    %v742 = vld [vmem:[%s712] sm:$0xf]
    %v743 = vmul.f32 %v742, 0.2580645
    %v744 = vld [vmem:[%s733] sm:$0xf]
    %v745 = vmul.f32 %v744, 0.7419355
    %v746 = vadd.f32 %v743, %v745
    %747 = vst.msk [vmem:[#allocation3 + $0x34] sm:$0xf] %vm260, %v746
    %v748 = vld [vmem:[%s733] sm:$0xf]
    %v749 = vmul.f32 %v748, 0.7741935
    %s750 = scalar_lea.vmem [#allocation2], 76
    %v751 = vld [vmem:[%s750] sm:$0xf]
    %v752 = vmul.f32 %v751, 0.22580644
    %v753 = vadd.f32 %v749, %v752
    %755 = vrot.lane.b32.xlu0 %v753, 32
    %v756 = vpop.permute.xlu0 %755
    %758 = vst.msk [vmem:[#allocation3 + $0x34] sm:$0xf] %vm307, %v756
    %v759 = vld [vmem:[%s733] sm:$0xf]
    %v760 = vmul.f32 %v759, 0.29032257
    %v761 = vld [vmem:[%s750] sm:$0xf]
    %v762 = vmul.f32 %v761, 0.7096774
    %v763 = vadd.f32 %v760, %v762
    %765 = vrot.lane.b32.xlu0 %v763, 64
    %v766 = vpop.permute.xlu0 %765
    %768 = vst.msk [vmem:[#allocation3 + $0x34] sm:$0xf] %vm318, %v766
    %v769 = vld [vmem:[%s750] sm:$0xf]
    %v770 = vmul.f32 %v769, 0.8064516
    %s771 = scalar_lea.vmem [#allocation2], 84
    %v772 = vld [vmem:[%s771] sm:$0xf]
    %v773 = vmul.f32 %v772, 0.19354838
    %v774 = vadd.f32 %v770, %v773
    %776 = vrot.lane.b32.xlu0 %v774, 96
    %v777 = vpop.permute.xlu0 %776
    %779 = vst.msk [vmem:[#allocation3 + $0x34] sm:$0xf] %vm330, %v777
    %v780 = vld [vmem:[%s750] sm:$0xf]
    %v781 = vmul.f32 %v780, 0.32258064
    %v782 = vld [vmem:[%s771] sm:$0xf]
    %v783 = vmul.f32 %v782, 0.67741936
    %v784 = vadd.f32 %v781, %v783
    %785 = vst.msk [vmem:[#allocation3 + $0x38] sm:$0xf] %vm260, %v784
    %v786 = vld [vmem:[%s771] sm:$0xf]
    %v787 = vmul.f32 %v786, 0.83870965
    %s788 = scalar_lea.vmem [#allocation2], 92
    %v789 = vld [vmem:[%s788] sm:$0xf]
    %v790 = vmul.f32 %v789, 0.16129032
    %v791 = vadd.f32 %v787, %v790
    %793 = vrot.lane.b32.xlu0 %v791, 32
    %v794 = vpop.permute.xlu0 %793
    %796 = vst.msk [vmem:[#allocation3 + $0x38] sm:$0xf] %vm307, %v794
    %v797 = vld [vmem:[%s771] sm:$0xf]
    %v798 = vmul.f32 %v797, 0.3548387
    %v799 = vld [vmem:[%s788] sm:$0xf]
    %v800 = vmul.f32 %v799, 0.6451613
    %v801 = vadd.f32 %v798, %v800
    %803 = vrot.lane.b32.xlu0 %v801, 64
    %v804 = vpop.permute.xlu0 %803
    %806 = vst.msk [vmem:[#allocation3 + $0x38] sm:$0xf] %vm318, %v804
    %v807 = vld [vmem:[%s788] sm:$0xf]
    %v808 = vmul.f32 %v807, 0.87096775
    %s809 = scalar_lea.vmem [#allocation2], 100
    %v810 = vld [vmem:[%s809] sm:$0xf]
    %v811 = vmul.f32 %v810, 0.12903225
    %v812 = vadd.f32 %v808, %v811
    %814 = vrot.lane.b32.xlu0 %v812, 96
    %v815 = vpop.permute.xlu0 %814
    %817 = vst.msk [vmem:[#allocation3 + $0x38] sm:$0xf] %vm330, %v815
    %v818 = vld [vmem:[%s788] sm:$0xf]
    %v819 = vmul.f32 %v818, 0.38709676
    %v820 = vld [vmem:[%s809] sm:$0xf]
    %v821 = vmul.f32 %v820, 0.61290324
    %v822 = vadd.f32 %v819, %v821
    %823 = vst.msk [vmem:[#allocation3 + $0x3c] sm:$0xf] %vm260, %v822
    %v824 = vld [vmem:[%s809] sm:$0xf]
    %v825 = vmul.f32 %v824, 0.9032258
    %s826 = scalar_lea.vmem [#allocation2], 108
    %v827 = vld [vmem:[%s826] sm:$0xf]
    %v828 = vmul.f32 %v827, 0.09677419
    %v829 = vadd.f32 %v825, %v828
    %831 = vrot.lane.b32.xlu0 %v829, 32
    %v832 = vpop.permute.xlu0 %831
    %834 = vst.msk [vmem:[#allocation3 + $0x3c] sm:$0xf] %vm307, %v832
    %v835 = vld [vmem:[%s809] sm:$0xf]
    %v836 = vmul.f32 %v835, 0.41935483
    %v837 = vld [vmem:[%s826] sm:$0xf]
    %v838 = vmul.f32 %v837, 0.58064514
    %v839 = vadd.f32 %v836, %v838
    %841 = vrot.lane.b32.xlu0 %v839, 64
    %v842 = vpop.permute.xlu0 %841
    %844 = vst.msk [vmem:[#allocation3 + $0x3c] sm:$0xf] %vm318, %v842
    %v845 = vld [vmem:[%s826] sm:$0xf]
    %v846 = vmul.f32 %v845, 0.9354839
    %s847 = scalar_lea.vmem [#allocation2], 116
    %v848 = vld [vmem:[%s847] sm:$0xf]
    %v849 = vmul.f32 %v848, 0.06451613
    %v850 = vadd.f32 %v846, %v849
    %852 = vrot.lane.b32.xlu0 %v850, 96
    %v853 = vpop.permute.xlu0 %852
    %855 = vst.msk [vmem:[#allocation3 + $0x3c] sm:$0xf] %vm330, %v853
    %v856 = vld [vmem:[%s826] sm:$0xf]
    %v857 = vmul.f32 %v856, 0.4516129
    %v858 = vld [vmem:[%s847] sm:$0xf]
    %v859 = vmul.f32 %v858, 0.5483871
    %v860 = vadd.f32 %v857, %v859
    %861 = vst.msk [vmem:[#allocation3 + $0x40] sm:$0xf] %vm260, %v860
    %v862 = vld [vmem:[%s847] sm:$0xf]
    %v863 = vmul.f32 %v862, 0.9677419
    %s864 = scalar_lea.vmem [#allocation2], 124
    %v865 = vld [vmem:[%s864] sm:$0xf]
    %v866 = vmul.f32 %v865, 0.032258064
    %v867 = vadd.f32 %v863, %v866
    %869 = vrot.lane.b32.xlu0 %v867, 32
    %v870 = vpop.permute.xlu0 %869
    %872 = vst.msk [vmem:[#allocation3 + $0x40] sm:$0xf] %vm307, %v870
    %v873 = vld [vmem:[%s847] sm:$0xf]
    %v874 = vmul.f32 %v873, 0.48387095
    %v875 = vld [vmem:[%s864] sm:$0xf]
    %v876 = vmul.f32 %v875, 0.516129
    %v877 = vadd.f32 %v874, %v876
    %879 = vrot.lane.b32.xlu0 %v877, 64
    %v880 = vpop.permute.xlu0 %879
    %882 = vst.msk [vmem:[#allocation3 + $0x40] sm:$0xf] %vm318, %v880
    %v883 = vld [vmem:[%s864] sm:$0xf]
    %885 = vrot.lane.b32.xlu0 %v883, 96
    %v886 = vpop.permute.xlu0 %885
    %888 = vst.msk [vmem:[#allocation3 + $0x40] sm:$0xf] %vm330, %v886
    %v889 = vld [vmem:[#allocation3] sm:$0xff]
    %v890 = vld [vmem:[#allocation3 + $0x8] sm:$0xff]
    %v891 = vld [vmem:[#allocation3 + $0x10] sm:$0xff]
    %v892 = vld [vmem:[#allocation3 + $0x18] sm:$0xff]
    %v893 = vld [vmem:[#allocation3 + $0x20] sm:$0xff]
    %v894 = vld [vmem:[#allocation3 + $0x28] sm:$0xff]
    %v895 = vld [vmem:[#allocation3 + $0x30] sm:$0xff]
    %v896 = vld [vmem:[#allocation3 + $0x38] sm:$0xff]
    %v897 = vld [vmem:[#allocation3 + $0x40] sm:$0xf]
    %v898 = vld [vmem:[%s4] sm:$0xff]
    %v899 = vld [vmem:[%s4 + $0x8] sm:$0xff]
    %v900 = vunpack.c.l.bf16 %v898
    %v901 = vunpack.c.h.bf16 %v898
    %v902 = vunpack.c.l.bf16 %v899
    %v903 = vunpack.c.h.bf16 %v899
    %v908 = vlaneseq
    %v909 = vshrl.u32 %v908, 7
    %v910 = vsub.s32 0, %v909
    %v911 = vrot.slane %v900, %v910
    %v912 = vlaneseq
    %v913 = vshrl.u32 %v912, 7
    %v914 = vsub.s32 2, %v913
    %v915 = vrot.slane %v900, %v914
    %v916 = vlaneseq
    %v917 = vshrl.u32 %v916, 7
    %v918 = vsub.s32 4, %v917
    %v919 = vrot.slane %v900, %v918
    %v920 = vlaneseq
    %v921 = vshrl.u32 %v920, 7
    %v922 = vsub.s32 6, %v921
    %v923 = vrot.slane %v900, %v922
    %v924 = vlaneseq
    %v925 = vshrl.u32 %v924, 7
    %v926 = vsub.s32 0, %v925
    %v927 = vrot.slane %v901, %v926
    %v928 = vlaneseq
    %v929 = vshrl.u32 %v928, 7
    %v930 = vsub.s32 2, %v929
    %v931 = vrot.slane %v901, %v930
    %v932 = vlaneseq
    %v933 = vshrl.u32 %v932, 7
    %v934 = vsub.s32 4, %v933
    %v935 = vrot.slane %v901, %v934
    %v936 = vlaneseq
    %v937 = vshrl.u32 %v936, 7
    %v938 = vsub.s32 6, %v937
    %v939 = vrot.slane %v901, %v938
    %v940 = vlaneseq
    %v941 = vshrl.u32 %v940, 7
    %v942 = vsub.s32 0, %v941
    %v943 = vrot.slane %v902, %v942
    %v944 = vlaneseq
    %v945 = vshrl.u32 %v944, 7
    %v946 = vsub.s32 2, %v945
    %v947 = vrot.slane %v902, %v946
    %v948 = vlaneseq
    %v949 = vshrl.u32 %v948, 7
    %v950 = vsub.s32 4, %v949
    %v951 = vrot.slane %v902, %v950
    %v952 = vlaneseq
    %v953 = vshrl.u32 %v952, 7
    %v954 = vsub.s32 6, %v953
    %v955 = vrot.slane %v902, %v954
    %v956 = vlaneseq
    %v957 = vshrl.u32 %v956, 7
    %v958 = vsub.s32 0, %v957
    %v959 = vrot.slane %v903, %v958
    %v960 = vlaneseq
    %v961 = vshrl.u32 %v960, 7
    %v962 = vsub.s32 2, %v961
    %v963 = vrot.slane %v903, %v962
    %v964 = vlaneseq
    %v965 = vshrl.u32 %v964, 7
    %v966 = vsub.s32 4, %v965
    %v967 = vrot.slane %v903, %v966
    %v968 = vlaneseq
    %v969 = vshrl.u32 %v968, 7
    %v970 = vsub.s32 6, %v969
    %v971 = vrot.slane %v903, %v970
    %v988 = vlaneseq
    %v989 = vshrl.u32 %v988, 7
    %v990 = vsub.s32 0, %v989
    %v991 = vrot.slane %v911, %v990
    %v992 = vlaneseq
    %v993 = vshrl.u32 %v992, 7
    %v994 = vsub.s32 0, %v993
    %v995 = vrot.slane %v915, %v994
    %v996 = vlaneseq
    %v997 = vshrl.u32 %v996, 7
    %v998 = vsub.s32 0, %v997
    %v999 = vrot.slane %v919, %v998
    %v1000 = vlaneseq
    %v1001 = vshrl.u32 %v1000, 7
    %v1002 = vsub.s32 0, %v1001
    %v1003 = vrot.slane %v923, %v1002
    %v1004 = vlaneseq
    %v1005 = vshrl.u32 %v1004, 7
    %v1006 = vsub.s32 0, %v1005
    %v1007 = vrot.slane %v927, %v1006
    %v1008 = vlaneseq
    %v1009 = vshrl.u32 %v1008, 7
    %v1010 = vsub.s32 0, %v1009
    %v1011 = vrot.slane %v931, %v1010
    %v1012 = vlaneseq
    %v1013 = vshrl.u32 %v1012, 7
    %v1014 = vsub.s32 0, %v1013
    %v1015 = vrot.slane %v935, %v1014
    %v1016 = vlaneseq
    %v1017 = vshrl.u32 %v1016, 7
    %v1018 = vsub.s32 0, %v1017
    %v1019 = vrot.slane %v939, %v1018
    %v1020 = vlaneseq
    %v1021 = vshrl.u32 %v1020, 7
    %v1022 = vsub.s32 0, %v1021
    %v1023 = vrot.slane %v943, %v1022
    %v1024 = vlaneseq
    %v1025 = vshrl.u32 %v1024, 7
    %v1026 = vsub.s32 0, %v1025
    %v1027 = vrot.slane %v947, %v1026
    %v1028 = vlaneseq
    %v1029 = vshrl.u32 %v1028, 7
    %v1030 = vsub.s32 0, %v1029
    %v1031 = vrot.slane %v951, %v1030
    %v1032 = vlaneseq
    %v1033 = vshrl.u32 %v1032, 7
    %v1034 = vsub.s32 0, %v1033
    %v1035 = vrot.slane %v955, %v1034
    %v1036 = vlaneseq
    %v1037 = vshrl.u32 %v1036, 7
    %v1038 = vsub.s32 0, %v1037
    %v1039 = vrot.slane %v959, %v1038
    %v1040 = vlaneseq
    %v1041 = vshrl.u32 %v1040, 7
    %v1042 = vsub.s32 0, %v1041
    %v1043 = vrot.slane %v963, %v1042
    %v1044 = vlaneseq
    %v1045 = vshrl.u32 %v1044, 7
    %v1046 = vsub.s32 0, %v1045
    %v1047 = vrot.slane %v967, %v1046
    %v1048 = vlaneseq
    %v1049 = vshrl.u32 %v1048, 7
    %v1050 = vsub.s32 0, %v1049
    %v1051 = vrot.slane %v971, %v1050
    %v1068 = vcombine.low %v991, %v995
    %v1069 = vcombine.low %v999, %v1003
    %v1070 = vcombine.low %v1007, %v1011
    %v1071 = vcombine.low %v1015, %v1019
    %v1072 = vcombine.low %v1023, %v1027
    %v1073 = vcombine.low %v1031, %v1035
    %v1074 = vcombine.low %v1039, %v1043
    %v1075 = vcombine.low %v1047, %v1051
    %1076 = vrot.lane.b32.xlu0 %v1068, 95
    %v1077 = vpop.permute.xlu0 %1076
    %1078 = vrot.lane.b32.xlu0 %v1069, 95
    %v1079 = vpop.permute.xlu0 %1078
    %1080 = vrot.lane.b32.xlu0 %v1070, 95
    %v1081 = vpop.permute.xlu0 %1080
    %1082 = vrot.lane.b32.xlu0 %v1071, 95
    %v1083 = vpop.permute.xlu0 %1082
    %1084 = vrot.lane.b32.xlu0 %v1072, 95
    %v1085 = vpop.permute.xlu0 %1084
    %1086 = vrot.lane.b32.xlu0 %v1073, 95
    %v1087 = vpop.permute.xlu0 %1086
    %1088 = vrot.lane.b32.xlu0 %v1074, 95
    %v1089 = vpop.permute.xlu0 %1088
    %1090 = vrot.lane.b32.xlu0 %v1075, 95
    %v1091 = vpop.permute.xlu0 %1090
    %v1092 = vrot.slane %v1077, 4
    %v1093 = vrot.slane %v1079, 4
    %v1094 = vrot.slane %v1081, 4
    %v1095 = vrot.slane %v1083, 4
    %v1096 = vrot.slane %v1085, 4
    %v1097 = vrot.slane %v1087, 4
    %v1098 = vrot.slane %v1089, 4
    %v1099 = vrot.slane %v1091, 4
    %vm1100 = vcmask 777216
    %v1101 = vsel %vm1100, %v1092, %v1077
    %vm1102 = vcmask 1043456
    %v1103 = vsel %vm1102, %v1092, %v1093
    %v1104 = vsel %vm1100, %v1103, %v1079
    %v1105 = vsel %vm1102, %v1093, %v1094
    %v1106 = vsel %vm1100, %v1105, %v1081
    %v1107 = vsel %vm1102, %v1094, %v1095
    %v1108 = vsel %vm1100, %v1107, %v1083
    %v1109 = vsel %vm1102, %v1095, %v1096
    %v1110 = vsel %vm1100, %v1109, %v1085
    %v1111 = vsel %vm1102, %v1096, %v1097
    %v1112 = vsel %vm1100, %v1111, %v1087
    %v1113 = vsel %vm1102, %v1097, %v1098
    %v1114 = vsel %vm1100, %v1113, %v1089
    %v1115 = vsel %vm1102, %v1098, %v1099
    %v1116 = vsel %vm1100, %v1115, %v1091
    %v1126 = vmul.f32 %v889, %v1101
    %v1127 = vmul.f32 %v890, %v1104
    %v1128 = vmul.f32 %v891, %v1106
    %v1129 = vmul.f32 %v892, %v1108
    %v1130 = vmul.f32 %v893, %v1110
    %v1131 = vmul.f32 %v894, %v1112
    %v1132 = vmul.f32 %v895, %v1114
    %v1133 = vmul.f32 %v896, %v1116
    %v1134 = vmul.f32 %v897, %v1099
    %v1143 = vcombine.high %v1126, %v1126
    %v1144 = vcombine.high %v1127, %v1127
    %v1145 = vcombine.high %v1128, %v1128
    %v1146 = vcombine.high %v1129, %v1129
    %v1147 = vcombine.high %v1130, %v1130
    %v1148 = vcombine.high %v1131, %v1131
    %v1149 = vcombine.high %v1132, %v1132
    %v1150 = vcombine.high %v1133, %v1133
    %v1159 = vpack.c.bf16 %v1126, %v1126
    %v1160 = vpack.c.bf16 %v1143, %v1143
    %v1161 = vpack.c.bf16 %v1127, %v1127
    %v1162 = vpack.c.bf16 %v1144, %v1144
    %v1163 = vpack.c.bf16 %v1128, %v1128
    %v1164 = vpack.c.bf16 %v1145, %v1145
    %v1165 = vpack.c.bf16 %v1129, %v1129
    %v1166 = vpack.c.bf16 %v1146, %v1146
    %v1167 = vpack.c.bf16 %v1130, %v1130
    %v1168 = vpack.c.bf16 %v1147, %v1147
    %v1169 = vpack.c.bf16 %v1131, %v1131
    %v1170 = vpack.c.bf16 %v1148, %v1148
    %v1171 = vpack.c.bf16 %v1132, %v1132
    %v1172 = vpack.c.bf16 %v1149, %v1149
    %v1173 = vpack.c.bf16 %v1133, %v1133
    %v1174 = vpack.c.bf16 %v1150, %v1150
    %v1175 = vpack.c.bf16 %v1134, %v1134
    %v1176 = vld [vmem:[%s2] sm:$0xf]
    %s1177 = scalar_lea.vmem %s4, 16
    %v1178 = vld [vmem:[%s1177] sm:$0xff]
    %v1179 = vld [vmem:[%s1177 + $0x8] sm:$0xff]
    %v1180 = vunpack.c.l.bf16 %v1178
    %v1181 = vunpack.c.h.bf16 %v1178
    %v1182 = vunpack.c.l.bf16 %v1179
    %v1183 = vunpack.c.h.bf16 %v1179
    %v1188 = vlaneseq
    %v1189 = vshrl.u32 %v1188, 7
    %v1190 = vsub.s32 0, %v1189
    %v1191 = vrot.slane %v1180, %v1190
    %v1192 = vlaneseq
    %v1193 = vshrl.u32 %v1192, 7
    %v1194 = vsub.s32 2, %v1193
    %v1195 = vrot.slane %v1180, %v1194
    %v1196 = vlaneseq
    %v1197 = vshrl.u32 %v1196, 7
    %v1198 = vsub.s32 4, %v1197
    %v1199 = vrot.slane %v1180, %v1198
    %v1200 = vlaneseq
    %v1201 = vshrl.u32 %v1200, 7
    %v1202 = vsub.s32 6, %v1201
    %v1203 = vrot.slane %v1180, %v1202
    %v1204 = vlaneseq
    %v1205 = vshrl.u32 %v1204, 7
    %v1206 = vsub.s32 0, %v1205
    %v1207 = vrot.slane %v1181, %v1206
    %v1208 = vlaneseq
    %v1209 = vshrl.u32 %v1208, 7
    %v1210 = vsub.s32 2, %v1209
    %v1211 = vrot.slane %v1181, %v1210
    %v1212 = vlaneseq
    %v1213 = vshrl.u32 %v1212, 7
    %v1214 = vsub.s32 4, %v1213
    %v1215 = vrot.slane %v1181, %v1214
    %v1216 = vlaneseq
    %v1217 = vshrl.u32 %v1216, 7
    %v1218 = vsub.s32 6, %v1217
    %v1219 = vrot.slane %v1181, %v1218
    %v1220 = vlaneseq
    %v1221 = vshrl.u32 %v1220, 7
    %v1222 = vsub.s32 0, %v1221
    %v1223 = vrot.slane %v1182, %v1222
    %v1224 = vlaneseq
    %v1225 = vshrl.u32 %v1224, 7
    %v1226 = vsub.s32 2, %v1225
    %v1227 = vrot.slane %v1182, %v1226
    %v1228 = vlaneseq
    %v1229 = vshrl.u32 %v1228, 7
    %v1230 = vsub.s32 4, %v1229
    %v1231 = vrot.slane %v1182, %v1230
    %v1232 = vlaneseq
    %v1233 = vshrl.u32 %v1232, 7
    %v1234 = vsub.s32 6, %v1233
    %v1235 = vrot.slane %v1182, %v1234
    %v1236 = vlaneseq
    %v1237 = vshrl.u32 %v1236, 7
    %v1238 = vsub.s32 0, %v1237
    %v1239 = vrot.slane %v1183, %v1238
    %v1240 = vlaneseq
    %v1241 = vshrl.u32 %v1240, 7
    %v1242 = vsub.s32 2, %v1241
    %v1243 = vrot.slane %v1183, %v1242
    %v1244 = vlaneseq
    %v1245 = vshrl.u32 %v1244, 7
    %v1246 = vsub.s32 4, %v1245
    %v1247 = vrot.slane %v1183, %v1246
    %v1248 = vlaneseq
    %v1249 = vshrl.u32 %v1248, 7
    %v1250 = vsub.s32 6, %v1249
    %v1251 = vrot.slane %v1183, %v1250
    %v1268 = vlaneseq
    %v1269 = vshrl.u32 %v1268, 7
    %v1270 = vsub.s32 0, %v1269
    %v1271 = vrot.slane %v1191, %v1270
    %v1272 = vlaneseq
    %v1273 = vshrl.u32 %v1272, 7
    %v1274 = vsub.s32 0, %v1273
    %v1275 = vrot.slane %v1195, %v1274
    %v1276 = vlaneseq
    %v1277 = vshrl.u32 %v1276, 7
    %v1278 = vsub.s32 0, %v1277
    %v1279 = vrot.slane %v1199, %v1278
    %v1280 = vlaneseq
    %v1281 = vshrl.u32 %v1280, 7
    %v1282 = vsub.s32 0, %v1281
    %v1283 = vrot.slane %v1203, %v1282
    %v1284 = vlaneseq
    %v1285 = vshrl.u32 %v1284, 7
    %v1286 = vsub.s32 0, %v1285
    %v1287 = vrot.slane %v1207, %v1286
    %v1288 = vlaneseq
    %v1289 = vshrl.u32 %v1288, 7
    %v1290 = vsub.s32 0, %v1289
    %v1291 = vrot.slane %v1211, %v1290
    %v1292 = vlaneseq
    %v1293 = vshrl.u32 %v1292, 7
    %v1294 = vsub.s32 0, %v1293
    %v1295 = vrot.slane %v1215, %v1294
    %v1296 = vlaneseq
    %v1297 = vshrl.u32 %v1296, 7
    %v1298 = vsub.s32 0, %v1297
    %v1299 = vrot.slane %v1219, %v1298
    %v1300 = vlaneseq
    %v1301 = vshrl.u32 %v1300, 7
    %v1302 = vsub.s32 0, %v1301
    %v1303 = vrot.slane %v1223, %v1302
    %v1304 = vlaneseq
    %v1305 = vshrl.u32 %v1304, 7
    %v1306 = vsub.s32 0, %v1305
    %v1307 = vrot.slane %v1227, %v1306
    %v1308 = vlaneseq
    %v1309 = vshrl.u32 %v1308, 7
    %v1310 = vsub.s32 0, %v1309
    %v1311 = vrot.slane %v1231, %v1310
    %v1312 = vlaneseq
    %v1313 = vshrl.u32 %v1312, 7
    %v1314 = vsub.s32 0, %v1313
    %v1315 = vrot.slane %v1235, %v1314
    %v1316 = vlaneseq
    %v1317 = vshrl.u32 %v1316, 7
    %v1318 = vsub.s32 0, %v1317
    %v1319 = vrot.slane %v1239, %v1318
    %v1320 = vlaneseq
    %v1321 = vshrl.u32 %v1320, 7
    %v1322 = vsub.s32 0, %v1321
    %v1323 = vrot.slane %v1243, %v1322
    %v1324 = vlaneseq
    %v1325 = vshrl.u32 %v1324, 7
    %v1326 = vsub.s32 0, %v1325
    %v1327 = vrot.slane %v1247, %v1326
    %v1328 = vlaneseq
    %v1329 = vshrl.u32 %v1328, 7
    %v1330 = vsub.s32 0, %v1329
    %v1331 = vrot.slane %v1251, %v1330
    %v1348 = vcombine.low %v1271, %v1275
    %v1349 = vcombine.low %v1279, %v1283
    %v1350 = vcombine.low %v1287, %v1291
    %v1351 = vcombine.low %v1295, %v1299
    %v1352 = vcombine.low %v1303, %v1307
    %v1353 = vcombine.low %v1311, %v1315
    %v1354 = vcombine.low %v1319, %v1323
    %v1355 = vcombine.low %v1327, %v1331
    %1356 = vrot.lane.b32.xlu0 %v1348, 96
    %v1357 = vpop.permute.xlu0 %1356
    %1358 = vrot.lane.b32.xlu0 %v1349, 96
    %v1359 = vpop.permute.xlu0 %1358
    %1360 = vrot.lane.b32.xlu0 %v1350, 96
    %v1361 = vpop.permute.xlu0 %1360
    %1362 = vrot.lane.b32.xlu0 %v1351, 96
    %v1363 = vpop.permute.xlu0 %1362
    %1364 = vrot.lane.b32.xlu0 %v1352, 96
    %v1365 = vpop.permute.xlu0 %1364
    %1366 = vrot.lane.b32.xlu0 %v1353, 96
    %v1367 = vpop.permute.xlu0 %1366
    %1368 = vrot.lane.b32.xlu0 %v1354, 96
    %v1369 = vpop.permute.xlu0 %1368
    %1370 = vrot.lane.b32.xlu0 %v1355, 96
    %v1371 = vpop.permute.xlu0 %1370
    %v1372 = vrot.slane %v1357, 4
    %v1373 = vrot.slane %v1359, 4
    %v1374 = vrot.slane %v1361, 4
    %v1375 = vrot.slane %v1363, 4
    %v1376 = vrot.slane %v1365, 4
    %v1377 = vrot.slane %v1367, 4
    %v1378 = vrot.slane %v1369, 4
    %v1379 = vrot.slane %v1371, 4
    %vm1380 = vcmask 785408
    %v1381 = vsel %vm1380, %v1372, %v1357
    %v1382 = vsel %vm1102, %v1372, %v1373
    %v1383 = vsel %vm1380, %v1382, %v1359
    %v1384 = vsel %vm1102, %v1373, %v1374
    %v1385 = vsel %vm1380, %v1384, %v1361
    %v1386 = vsel %vm1102, %v1374, %v1375
    %v1387 = vsel %vm1380, %v1386, %v1363
    %v1388 = vsel %vm1102, %v1375, %v1376
    %v1389 = vsel %vm1380, %v1388, %v1365
    %v1390 = vsel %vm1102, %v1376, %v1377
    %v1391 = vsel %vm1380, %v1390, %v1367
    %v1392 = vsel %vm1102, %v1377, %v1378
    %v1393 = vsel %vm1380, %v1392, %v1369
    %v1394 = vsel %vm1102, %v1378, %v1379
    %v1395 = vsel %vm1380, %v1394, %v1371
    %v1405 = vmul.f32 %v889, %v1381
    %v1406 = vmul.f32 %v890, %v1383
    %v1407 = vmul.f32 %v891, %v1385
    %v1408 = vmul.f32 %v892, %v1387
    %v1409 = vmul.f32 %v893, %v1389
    %v1410 = vmul.f32 %v894, %v1391
    %v1411 = vmul.f32 %v895, %v1393
    %v1412 = vmul.f32 %v896, %v1395
    %v1413 = vmul.f32 %v897, %v1379
    %v1422 = vcombine.high %v1405, %v1405
    %v1423 = vcombine.high %v1406, %v1406
    %v1424 = vcombine.high %v1407, %v1407
    %v1425 = vcombine.high %v1408, %v1408
    %v1426 = vcombine.high %v1409, %v1409
    %v1427 = vcombine.high %v1410, %v1410
    %v1428 = vcombine.high %v1411, %v1411
    %v1429 = vcombine.high %v1412, %v1412
    %v1438 = vpack.c.bf16 %v1405, %v1405
    %v1439 = vpack.c.bf16 %v1422, %v1422
    %v1440 = vpack.c.bf16 %v1406, %v1406
    %v1441 = vpack.c.bf16 %v1423, %v1423
    %v1442 = vpack.c.bf16 %v1407, %v1407
    %v1443 = vpack.c.bf16 %v1424, %v1424
    %v1444 = vpack.c.bf16 %v1408, %v1408
    %v1445 = vpack.c.bf16 %v1425, %v1425
    %v1446 = vpack.c.bf16 %v1409, %v1409
    %v1447 = vpack.c.bf16 %v1426, %v1426
    %v1448 = vpack.c.bf16 %v1410, %v1410
    %v1449 = vpack.c.bf16 %v1427, %v1427
    %v1450 = vpack.c.bf16 %v1411, %v1411
    %v1451 = vpack.c.bf16 %v1428, %v1428
    %v1452 = vpack.c.bf16 %v1412, %v1412
    %v1453 = vpack.c.bf16 %v1429, %v1429
    %v1454 = vpack.c.bf16 %v1413, %v1413
    %s1455 = scalar_lea.vmem %s2, 4
    %v1456 = vld [vmem:[%s1455] sm:$0xf]
    %1474 = vrot.lane.b32.xlu0 %v1438, 32
    %v1475 = vpop.permute.xlu0 %1474
    %1476 = vrot.lane.b32.xlu0 %v1439, 32
    %v1477 = vpop.permute.xlu0 %1476
    %1478 = vrot.lane.b32.xlu0 %v1440, 32
    %v1479 = vpop.permute.xlu0 %1478
    %1480 = vrot.lane.b32.xlu0 %v1441, 32
    %v1481 = vpop.permute.xlu0 %1480
    %1482 = vrot.lane.b32.xlu0 %v1442, 32
    %v1483 = vpop.permute.xlu0 %1482
    %1484 = vrot.lane.b32.xlu0 %v1443, 32
    %v1485 = vpop.permute.xlu0 %1484
    %1486 = vrot.lane.b32.xlu0 %v1444, 32
    %v1487 = vpop.permute.xlu0 %1486
    %1488 = vrot.lane.b32.xlu0 %v1445, 32
    %v1489 = vpop.permute.xlu0 %1488
    %1490 = vrot.lane.b32.xlu0 %v1446, 32
    %v1491 = vpop.permute.xlu0 %1490
    %1492 = vrot.lane.b32.xlu0 %v1447, 32
    %v1493 = vpop.permute.xlu0 %1492
    %1494 = vrot.lane.b32.xlu0 %v1448, 32
    %v1495 = vpop.permute.xlu0 %1494
    %1496 = vrot.lane.b32.xlu0 %v1449, 32
    %v1497 = vpop.permute.xlu0 %1496
    %1498 = vrot.lane.b32.xlu0 %v1450, 32
    %v1499 = vpop.permute.xlu0 %1498
    %1500 = vrot.lane.b32.xlu0 %v1451, 32
    %v1501 = vpop.permute.xlu0 %1500
    %1502 = vrot.lane.b32.xlu0 %v1452, 32
    %v1503 = vpop.permute.xlu0 %1502
    %1504 = vrot.lane.b32.xlu0 %v1453, 32
    %v1505 = vpop.permute.xlu0 %1504
    %1506 = vrot.lane.b32.xlu0 %v1454, 32
    %v1507 = vpop.permute.xlu0 %1506
    %vm1508 = vcmask 261120
    %v1509 = vsel %vm1508, %v1475, %v1477
    %v1510 = vsel %vm1508, %v1477, %v1479
    %v1511 = vsel %vm1508, %v1479, %v1481
    %v1512 = vsel %vm1508, %v1481, %v1483
    %v1513 = vsel %vm1508, %v1483, %v1485
    %v1514 = vsel %vm1508, %v1485, %v1487
    %v1515 = vsel %vm1508, %v1487, %v1489
    %v1516 = vsel %vm1508, %v1489, %v1491
    %v1517 = vsel %vm1508, %v1491, %v1493
    %v1518 = vsel %vm1508, %v1493, %v1495
    %v1519 = vsel %vm1508, %v1495, %v1497
    %v1520 = vsel %vm1508, %v1497, %v1499
    %v1521 = vsel %vm1508, %v1499, %v1501
    %v1522 = vsel %vm1508, %v1501, %v1503
    %v1523 = vsel %vm1508, %v1503, %v1505
    %v1524 = vsel %vm1508, %v1505, %v1507
    %vm1525 = vcmask 31744
    %v1527 = vsel %vm1525, %v1456, 0
    %vm1529 = vcmask 1041408
    %v1531 = vsel %vm1529, %v1509, 0
    %v1534 = vsel %vm1529, %v1510, 0
    %v1537 = vsel %vm1529, %v1511, 0
    %v1540 = vsel %vm1529, %v1512, 0
    %v1543 = vsel %vm1529, %v1513, 0
    %v1546 = vsel %vm1529, %v1514, 0
    %v1549 = vsel %vm1529, %v1515, 0
    %v1552 = vsel %vm1529, %v1516, 0
    %v1555 = vsel %vm1529, %v1517, 0
    %v1558 = vsel %vm1529, %v1518, 0
    %v1561 = vsel %vm1529, %v1519, 0
    %v1564 = vsel %vm1529, %v1520, 0
    %v1567 = vsel %vm1529, %v1521, 0
    %v1570 = vsel %vm1529, %v1522, 0
    %v1573 = vsel %vm1529, %v1523, 0
    %v1576 = vsel %vm1529, %v1524, 0
    %1578 = vmatprep.subr.bf16.mxu0 %v1534
    %1579 = vmatpush1.bf16.msra.mxu0 %v1531
    %1580 = vmatprep.subr.bf16.mxu0 0
    %1581 = vmatpush1.bf16.msra.mxu0 0
    %1582 = vmatprep.subr.bf16.mxu0 0
    %1583 = vmatpush1.bf16.msra.mxu0 0
    %1584 = vmatprep.subr.bf16.mxu0 0
    %1585 = vmatpush1.bf16.msra.mxu0 0
    %1586 = vmatprep.subr.bf16.mxu0 0
    %1587 = vmatpush1.bf16.msra.mxu0 0
    %1588 = vmatprep.subr.bf16.mxu0 0
    %1589 = vmatpush1.bf16.msra.mxu0 0
    %1590 = vmatprep.subr.bf16.mxu0 0
    %1591 = vmatpush1.bf16.msra.mxu0 0
    %1592 = vmatprep.subr.bf16.mxu0 0
    %1593 = vmatpush1.bf16.msra.mxu0 0
    %1594 = vmatprep.subr.bf16.mxu0 0
    %1595 = vmatpush1.bf16.msra.mxu0 0
    %1596 = vmatprep.subr.bf16.mxu0 0
    %1597 = vmatpush1.bf16.msra.mxu0 0
    %1598 = vmatprep.subr.bf16.mxu0 0
    %1599 = vmatpush1.bf16.msra.mxu0 0
    %1600 = vmatprep.subr.bf16.mxu0 0
    %1601 = vmatpush1.bf16.msra.mxu0 0
    %1602 = vmatprep.subr.bf16.mxu0 0
    %1603 = vmatpush1.bf16.msra.mxu0 0
    %1604 = vmatprep.subr.bf16.mxu0 0
    %1605 = vmatpush1.bf16.msra.mxu0 0
    %1606 = vmatprep.subr.bf16.mxu0 0
    %1607 = vmatpush1.bf16.msra.mxu0 0
    %1608 = vmatprep.subr.bf16.mxu0 0
    %1609 = vmatpush1.bf16.msra.mxu0 0
    %1610 = vmatprep.mubr.bf16.mxu0 0
    %1611 = vmatmul.mubr.bf16.gmra.mrb[0].mxu0 %v1527
    %v1612 = vpop.f32.mrb[0].mxu0
    %v1613 = vadd.f32 0.0, %v1612
    %v1614 = vpop.f32.mrb[0].mxu0
    %v1615 = vadd.f32 0.0, %v1614
    %v1616 = vpop.f32.mrb[0].mxu0
    %v1617 = vpop.f32.mrb[0].mxu0
    %1618 = vdwg.mxu0
    %1619 = vmatprep.subr.bf16.mxu0 %v1540
    %1620 = vmatpush1.bf16.msra.mxu0 %v1537
    %1621 = vmatprep.subr.bf16.mxu0 0
    %1622 = vmatpush1.bf16.msra.mxu0 0
    %1623 = vmatprep.subr.bf16.mxu0 0
    %1624 = vmatpush1.bf16.msra.mxu0 0
    %1625 = vmatprep.subr.bf16.mxu0 0
    %1626 = vmatpush1.bf16.msra.mxu0 0
    %1627 = vmatprep.subr.bf16.mxu0 0
    %1628 = vmatpush1.bf16.msra.mxu0 0
    %1629 = vmatprep.subr.bf16.mxu0 0
    %1630 = vmatpush1.bf16.msra.mxu0 0
    %1631 = vmatprep.subr.bf16.mxu0 0
    %1632 = vmatpush1.bf16.msra.mxu0 0
    %1633 = vmatprep.subr.bf16.mxu0 0
    %1634 = vmatpush1.bf16.msra.mxu0 0
    %1635 = vmatprep.subr.bf16.mxu0 0
    %1636 = vmatpush1.bf16.msra.mxu0 0
    %1637 = vmatprep.subr.bf16.mxu0 0
    %1638 = vmatpush1.bf16.msra.mxu0 0
    %1639 = vmatprep.subr.bf16.mxu0 0
    %1640 = vmatpush1.bf16.msra.mxu0 0
    %1641 = vmatprep.subr.bf16.mxu0 0
    %1642 = vmatpush1.bf16.msra.mxu0 0
    %1643 = vmatprep.subr.bf16.mxu0 0
    %1644 = vmatpush1.bf16.msra.mxu0 0
    %1645 = vmatprep.subr.bf16.mxu0 0
    %1646 = vmatpush1.bf16.msra.mxu0 0
    %1647 = vmatprep.subr.bf16.mxu0 0
    %1648 = vmatpush1.bf16.msra.mxu0 0
    %1649 = vmatprep.subr.bf16.mxu0 0
    %1650 = vmatpush1.bf16.msra.mxu0 0
    %1651 = vmatprep.mubr.bf16.mxu0 0
    %1652 = vmatmul.mubr.bf16.gmra.mrb[0].mxu0 %v1527
    %v1653 = vpop.f32.mrb[0].mxu0
    %v1654 = vadd.f32 0.0, %v1653
    %v1655 = vpop.f32.mrb[0].mxu0
    %v1656 = vadd.f32 0.0, %v1655
    %v1657 = vpop.f32.mrb[0].mxu0
    %v1658 = vpop.f32.mrb[0].mxu0
    %1659 = vdwg.mxu0
    %1660 = vmatprep.subr.bf16.mxu0 %v1546
    %1661 = vmatpush1.bf16.msra.mxu0 %v1543
    %1662 = vmatprep.subr.bf16.mxu0 0
    %1663 = vmatpush1.bf16.msra.mxu0 0
    %1664 = vmatprep.subr.bf16.mxu0 0
    %1665 = vmatpush1.bf16.msra.mxu0 0
    %1666 = vmatprep.subr.bf16.mxu0 0
    %1667 = vmatpush1.bf16.msra.mxu0 0
    %1668 = vmatprep.subr.bf16.mxu0 0
    %1669 = vmatpush1.bf16.msra.mxu0 0
    %1670 = vmatprep.subr.bf16.mxu0 0
    %1671 = vmatpush1.bf16.msra.mxu0 0
    %1672 = vmatprep.subr.bf16.mxu0 0
    %1673 = vmatpush1.bf16.msra.mxu0 0
    %1674 = vmatprep.subr.bf16.mxu0 0
    %1675 = vmatpush1.bf16.msra.mxu0 0
    %1676 = vmatprep.subr.bf16.mxu0 0
    %1677 = vmatpush1.bf16.msra.mxu0 0
    %1678 = vmatprep.subr.bf16.mxu0 0
    %1679 = vmatpush1.bf16.msra.mxu0 0
    %1680 = vmatprep.subr.bf16.mxu0 0
    %1681 = vmatpush1.bf16.msra.mxu0 0
    %1682 = vmatprep.subr.bf16.mxu0 0
    %1683 = vmatpush1.bf16.msra.mxu0 0
    %1684 = vmatprep.subr.bf16.mxu0 0
    %1685 = vmatpush1.bf16.msra.mxu0 0
    %1686 = vmatprep.subr.bf16.mxu0 0
    %1687 = vmatpush1.bf16.msra.mxu0 0
    %1688 = vmatprep.subr.bf16.mxu0 0
    %1689 = vmatpush1.bf16.msra.mxu0 0
    %1690 = vmatprep.subr.bf16.mxu0 0
    %1691 = vmatpush1.bf16.msra.mxu0 0
    %1692 = vmatprep.mubr.bf16.mxu0 0
    %1693 = vmatmul.mubr.bf16.gmra.mrb[0].mxu0 %v1527
    %v1694 = vpop.f32.mrb[0].mxu0
    %v1695 = vadd.f32 0.0, %v1694
    %v1696 = vpop.f32.mrb[0].mxu0
    %v1697 = vadd.f32 0.0, %v1696
    %v1698 = vpop.f32.mrb[0].mxu0
    %v1699 = vpop.f32.mrb[0].mxu0
    %1700 = vdwg.mxu0
    %1701 = vmatprep.subr.bf16.mxu0 %v1552
    %1702 = vmatpush1.bf16.msra.mxu0 %v1549
    %1703 = vmatprep.subr.bf16.mxu0 0
    %1704 = vmatpush1.bf16.msra.mxu0 0
    %1705 = vmatprep.subr.bf16.mxu0 0
    %1706 = vmatpush1.bf16.msra.mxu0 0
    %1707 = vmatprep.subr.bf16.mxu0 0
    %1708 = vmatpush1.bf16.msra.mxu0 0
    %1709 = vmatprep.subr.bf16.mxu0 0
    %1710 = vmatpush1.bf16.msra.mxu0 0
    %1711 = vmatprep.subr.bf16.mxu0 0
    %1712 = vmatpush1.bf16.msra.mxu0 0
    %1713 = vmatprep.subr.bf16.mxu0 0
    %1714 = vmatpush1.bf16.msra.mxu0 0
    %1715 = vmatprep.subr.bf16.mxu0 0
    %1716 = vmatpush1.bf16.msra.mxu0 0
    %1717 = vmatprep.subr.bf16.mxu0 0
    %1718 = vmatpush1.bf16.msra.mxu0 0
    %1719 = vmatprep.subr.bf16.mxu0 0
    %1720 = vmatpush1.bf16.msra.mxu0 0
    %1721 = vmatprep.subr.bf16.mxu0 0
    %1722 = vmatpush1.bf16.msra.mxu0 0
    %1723 = vmatprep.subr.bf16.mxu0 0
    %1724 = vmatpush1.bf16.msra.mxu0 0
    %1725 = vmatprep.subr.bf16.mxu0 0
    %1726 = vmatpush1.bf16.msra.mxu0 0
    %1727 = vmatprep.subr.bf16.mxu0 0
    %1728 = vmatpush1.bf16.msra.mxu0 0
    %1729 = vmatprep.subr.bf16.mxu0 0
    %1730 = vmatpush1.bf16.msra.mxu0 0
    %1731 = vmatprep.subr.bf16.mxu0 0
    %1732 = vmatpush1.bf16.msra.mxu0 0
    %1733 = vmatprep.mubr.bf16.mxu0 0
    %1734 = vmatmul.mubr.bf16.gmra.mrb[0].mxu0 %v1527
    %v1735 = vpop.f32.mrb[0].mxu0
    %v1736 = vadd.f32 0.0, %v1735
    %v1737 = vpop.f32.mrb[0].mxu0
    %v1738 = vadd.f32 0.0, %v1737
    %v1739 = vpop.f32.mrb[0].mxu0
    %v1740 = vpop.f32.mrb[0].mxu0
    %1741 = vdwg.mxu0
    %1742 = vmatprep.subr.bf16.mxu0 %v1558
    %1743 = vmatpush1.bf16.msra.mxu0 %v1555
    %1744 = vmatprep.subr.bf16.mxu0 0
    %1745 = vmatpush1.bf16.msra.mxu0 0
    %1746 = vmatprep.subr.bf16.mxu0 0
    %1747 = vmatpush1.bf16.msra.mxu0 0
    %1748 = vmatprep.subr.bf16.mxu0 0
    %1749 = vmatpush1.bf16.msra.mxu0 0
    %1750 = vmatprep.subr.bf16.mxu0 0
    %1751 = vmatpush1.bf16.msra.mxu0 0
    %1752 = vmatprep.subr.bf16.mxu0 0
    %1753 = vmatpush1.bf16.msra.mxu0 0
    %1754 = vmatprep.subr.bf16.mxu0 0
    %1755 = vmatpush1.bf16.msra.mxu0 0
    %1756 = vmatprep.subr.bf16.mxu0 0
    %1757 = vmatpush1.bf16.msra.mxu0 0
    %1758 = vmatprep.subr.bf16.mxu0 0
    %1759 = vmatpush1.bf16.msra.mxu0 0
    %1760 = vmatprep.subr.bf16.mxu0 0
    %1761 = vmatpush1.bf16.msra.mxu0 0
    %1762 = vmatprep.subr.bf16.mxu0 0
    %1763 = vmatpush1.bf16.msra.mxu0 0
    %1764 = vmatprep.subr.bf16.mxu0 0
    %1765 = vmatpush1.bf16.msra.mxu0 0
    %1766 = vmatprep.subr.bf16.mxu0 0
    %1767 = vmatpush1.bf16.msra.mxu0 0
    %1768 = vmatprep.subr.bf16.mxu0 0
    %1769 = vmatpush1.bf16.msra.mxu0 0
    %1770 = vmatprep.subr.bf16.mxu0 0
    %1771 = vmatpush1.bf16.msra.mxu0 0
    %1772 = vmatprep.subr.bf16.mxu0 0
    %1773 = vmatpush1.bf16.msra.mxu0 0
    %1774 = vmatprep.mubr.bf16.mxu0 0
    %1775 = vmatmul.mubr.bf16.gmra.mrb[0].mxu0 %v1527
    %v1776 = vpop.f32.mrb[0].mxu0
    %v1777 = vadd.f32 0.0, %v1776
    %v1778 = vpop.f32.mrb[0].mxu0
    %v1779 = vadd.f32 0.0, %v1778
    %v1780 = vpop.f32.mrb[0].mxu0
    %v1781 = vpop.f32.mrb[0].mxu0
    %1782 = vdwg.mxu0
    %1783 = vmatprep.subr.bf16.mxu0 %v1564
    %1784 = vmatpush1.bf16.msra.mxu0 %v1561
    %1785 = vmatprep.subr.bf16.mxu0 0
    %1786 = vmatpush1.bf16.msra.mxu0 0
    %1787 = vmatprep.subr.bf16.mxu0 0
    %1788 = vmatpush1.bf16.msra.mxu0 0
    %1789 = vmatprep.subr.bf16.mxu0 0
    %1790 = vmatpush1.bf16.msra.mxu0 0
    %1791 = vmatprep.subr.bf16.mxu0 0
    %1792 = vmatpush1.bf16.msra.mxu0 0
    %1793 = vmatprep.subr.bf16.mxu0 0
    %1794 = vmatpush1.bf16.msra.mxu0 0
    %1795 = vmatprep.subr.bf16.mxu0 0
    %1796 = vmatpush1.bf16.msra.mxu0 0
    %1797 = vmatprep.subr.bf16.mxu0 0
    %1798 = vmatpush1.bf16.msra.mxu0 0
    %1799 = vmatprep.subr.bf16.mxu0 0
    %1800 = vmatpush1.bf16.msra.mxu0 0
    %1801 = vmatprep.subr.bf16.mxu0 0
    %1802 = vmatpush1.bf16.msra.mxu0 0
    %1803 = vmatprep.subr.bf16.mxu0 0
    %1804 = vmatpush1.bf16.msra.mxu0 0
    %1805 = vmatprep.subr.bf16.mxu0 0
    %1806 = vmatpush1.bf16.msra.mxu0 0
    %1807 = vmatprep.subr.bf16.mxu0 0
    %1808 = vmatpush1.bf16.msra.mxu0 0
    %1809 = vmatprep.subr.bf16.mxu0 0
    %1810 = vmatpush1.bf16.msra.mxu0 0
    %1811 = vmatprep.subr.bf16.mxu0 0
    %1812 = vmatpush1.bf16.msra.mxu0 0
    %1813 = vmatprep.subr.bf16.mxu0 0
    %1814 = vmatpush1.bf16.msra.mxu0 0
    %1815 = vmatprep.mubr.bf16.mxu0 0
    %1816 = vmatmul.mubr.bf16.gmra.mrb[0].mxu0 %v1527
    %v1817 = vpop.f32.mrb[0].mxu0
    %v1818 = vadd.f32 0.0, %v1817
    %v1819 = vpop.f32.mrb[0].mxu0
    %v1820 = vadd.f32 0.0, %v1819
    %v1821 = vpop.f32.mrb[0].mxu0
    %v1822 = vpop.f32.mrb[0].mxu0
    %1823 = vdwg.mxu0
    %1824 = vmatprep.subr.bf16.mxu0 %v1570
    %1825 = vmatpush1.bf16.msra.mxu0 %v1567
    %1826 = vmatprep.subr.bf16.mxu0 0
    %1827 = vmatpush1.bf16.msra.mxu0 0
    %1828 = vmatprep.subr.bf16.mxu0 0
    %1829 = vmatpush1.bf16.msra.mxu0 0
    %1830 = vmatprep.subr.bf16.mxu0 0
    %1831 = vmatpush1.bf16.msra.mxu0 0
    %1832 = vmatprep.subr.bf16.mxu0 0
    %1833 = vmatpush1.bf16.msra.mxu0 0
    %1834 = vmatprep.subr.bf16.mxu0 0
    %1835 = vmatpush1.bf16.msra.mxu0 0
    %1836 = vmatprep.subr.bf16.mxu0 0
    %1837 = vmatpush1.bf16.msra.mxu0 0
    %1838 = vmatprep.subr.bf16.mxu0 0
    %1839 = vmatpush1.bf16.msra.mxu0 0
    %1840 = vmatprep.subr.bf16.mxu0 0
    %1841 = vmatpush1.bf16.msra.mxu0 0
    %1842 = vmatprep.subr.bf16.mxu0 0
    %1843 = vmatpush1.bf16.msra.mxu0 0
    %1844 = vmatprep.subr.bf16.mxu0 0
    %1845 = vmatpush1.bf16.msra.mxu0 0
    %1846 = vmatprep.subr.bf16.mxu0 0
    %1847 = vmatpush1.bf16.msra.mxu0 0
    %1848 = vmatprep.subr.bf16.mxu0 0
    %1849 = vmatpush1.bf16.msra.mxu0 0
    %1850 = vmatprep.subr.bf16.mxu0 0
    %1851 = vmatpush1.bf16.msra.mxu0 0
    %1852 = vmatprep.subr.bf16.mxu0 0
    %1853 = vmatpush1.bf16.msra.mxu0 0
    %1854 = vmatprep.subr.bf16.mxu0 0
    %1855 = vmatpush1.bf16.msra.mxu0 0
    %1856 = vmatprep.mubr.bf16.mxu0 0
    %1857 = vmatmul.mubr.bf16.gmra.mrb[0].mxu0 %v1527
    %v1858 = vpop.f32.mrb[0].mxu0
    %v1859 = vadd.f32 0.0, %v1858
    %v1860 = vpop.f32.mrb[0].mxu0
    %v1861 = vadd.f32 0.0, %v1860
    %v1862 = vpop.f32.mrb[0].mxu0
    %v1863 = vpop.f32.mrb[0].mxu0
    %1864 = vdwg.mxu0
    %1865 = vmatprep.subr.bf16.mxu0 %v1576
    %1866 = vmatpush1.bf16.msra.mxu0 %v1573
    %1867 = vmatprep.subr.bf16.mxu0 0
    %1868 = vmatpush1.bf16.msra.mxu0 0
    %1869 = vmatprep.subr.bf16.mxu0 0
    %1870 = vmatpush1.bf16.msra.mxu0 0
    %1871 = vmatprep.subr.bf16.mxu0 0
    %1872 = vmatpush1.bf16.msra.mxu0 0
    %1873 = vmatprep.subr.bf16.mxu0 0
    %1874 = vmatpush1.bf16.msra.mxu0 0
    %1875 = vmatprep.subr.bf16.mxu0 0
    %1876 = vmatpush1.bf16.msra.mxu0 0
    %1877 = vmatprep.subr.bf16.mxu0 0
    %1878 = vmatpush1.bf16.msra.mxu0 0
    %1879 = vmatprep.subr.bf16.mxu0 0
    %1880 = vmatpush1.bf16.msra.mxu0 0
    %1881 = vmatprep.subr.bf16.mxu0 0
    %1882 = vmatpush1.bf16.msra.mxu0 0
    %1883 = vmatprep.subr.bf16.mxu0 0
    %1884 = vmatpush1.bf16.msra.mxu0 0
    %1885 = vmatprep.subr.bf16.mxu0 0
    %1886 = vmatpush1.bf16.msra.mxu0 0
    %1887 = vmatprep.subr.bf16.mxu0 0
    %1888 = vmatpush1.bf16.msra.mxu0 0
    %1889 = vmatprep.subr.bf16.mxu0 0
    %1890 = vmatpush1.bf16.msra.mxu0 0
    %1891 = vmatprep.subr.bf16.mxu0 0
    %1892 = vmatpush1.bf16.msra.mxu0 0
    %1893 = vmatprep.subr.bf16.mxu0 0
    %1894 = vmatpush1.bf16.msra.mxu0 0
    %1895 = vmatprep.subr.bf16.mxu0 0
    %1896 = vmatpush1.bf16.msra.mxu0 0
    %1897 = vmatprep.mubr.bf16.mxu0 0
    %1898 = vmatmul.mubr.bf16.gmra.mrb[0].mxu0 %v1527
    %v1899 = vpop.f32.mrb[0].mxu0
    %v1900 = vadd.f32 0.0, %v1899
    %v1901 = vpop.f32.mrb[0].mxu0
    %v1902 = vadd.f32 0.0, %v1901
    %v1903 = vpop.f32.mrb[0].mxu0
    %v1904 = vpop.f32.mrb[0].mxu0
    %1905 = vdwg.mxu0
    %1923 = vrot.lane.b32.xlu0 %v1159, 33
    %v1924 = vpop.permute.xlu0 %1923
    %1925 = vrot.lane.b32.xlu0 %v1160, 33
    %v1926 = vpop.permute.xlu0 %1925
    %1927 = vrot.lane.b32.xlu0 %v1161, 33
    %v1928 = vpop.permute.xlu0 %1927
    %1929 = vrot.lane.b32.xlu0 %v1162, 33
    %v1930 = vpop.permute.xlu0 %1929
    %1931 = vrot.lane.b32.xlu0 %v1163, 33
    %v1932 = vpop.permute.xlu0 %1931
    %1933 = vrot.lane.b32.xlu0 %v1164, 33
    %v1934 = vpop.permute.xlu0 %1933
    %1935 = vrot.lane.b32.xlu0 %v1165, 33
    %v1936 = vpop.permute.xlu0 %1935
    %1937 = vrot.lane.b32.xlu0 %v1166, 33
    %v1938 = vpop.permute.xlu0 %1937
    %1939 = vrot.lane.b32.xlu0 %v1167, 33
    %v1940 = vpop.permute.xlu0 %1939
    %1941 = vrot.lane.b32.xlu0 %v1168, 33
    %v1942 = vpop.permute.xlu0 %1941
    %1943 = vrot.lane.b32.xlu0 %v1169, 33
    %v1944 = vpop.permute.xlu0 %1943
    %1945 = vrot.lane.b32.xlu0 %v1170, 33
    %v1946 = vpop.permute.xlu0 %1945
    %1947 = vrot.lane.b32.xlu0 %v1171, 33
    %v1948 = vpop.permute.xlu0 %1947
    %1949 = vrot.lane.b32.xlu0 %v1172, 33
    %v1950 = vpop.permute.xlu0 %1949
    %1951 = vrot.lane.b32.xlu0 %v1173, 33
    %v1952 = vpop.permute.xlu0 %1951
    %1953 = vrot.lane.b32.xlu0 %v1174, 33
    %v1954 = vpop.permute.xlu0 %1953
    %1955 = vrot.lane.b32.xlu0 %v1175, 33
    %v1956 = vpop.permute.xlu0 %1955
    %vm1957 = vcmask 269312
    %v1958 = vsel %vm1957, %v1924, %v1926
    %v1959 = vsel %vm1957, %v1926, %v1928
    %v1960 = vsel %vm1957, %v1928, %v1930
    %v1961 = vsel %vm1957, %v1930, %v1932
    %v1962 = vsel %vm1957, %v1932, %v1934
    %v1963 = vsel %vm1957, %v1934, %v1936
    %v1964 = vsel %vm1957, %v1936, %v1938
    %v1965 = vsel %vm1957, %v1938, %v1940
    %v1966 = vsel %vm1957, %v1940, %v1942
    %v1967 = vsel %vm1957, %v1942, %v1944
    %v1968 = vsel %vm1957, %v1944, %v1946
    %v1969 = vsel %vm1957, %v1946, %v1948
    %v1970 = vsel %vm1957, %v1948, %v1950
    %v1971 = vsel %vm1957, %v1950, %v1952
    %v1972 = vsel %vm1957, %v1952, %v1954
    %v1973 = vsel %vm1957, %v1954, %v1956
    %v1975 = vsel %vm1525, %v1176, 0
    %v1978 = vsel %vm1529, %v1958, 0
    %v1981 = vsel %vm1529, %v1959, 0
    %v1984 = vsel %vm1529, %v1960, 0
    %v1987 = vsel %vm1529, %v1961, 0
    %v1990 = vsel %vm1529, %v1962, 0
    %v1993 = vsel %vm1529, %v1963, 0
    %v1996 = vsel %vm1529, %v1964, 0
    %v1999 = vsel %vm1529, %v1965, 0
    %v2002 = vsel %vm1529, %v1966, 0
    %v2005 = vsel %vm1529, %v1967, 0
    %v2008 = vsel %vm1529, %v1968, 0
    %v2011 = vsel %vm1529, %v1969, 0
    %v2014 = vsel %vm1529, %v1970, 0
    %v2017 = vsel %vm1529, %v1971, 0
    %v2020 = vsel %vm1529, %v1972, 0
    %v2023 = vsel %vm1529, %v1973, 0
    %2025 = vmatprep.subr.bf16.mxu0 %v1981
    %2026 = vmatpush1.bf16.msra.mxu0 %v1978
    %2027 = vmatprep.subr.bf16.mxu0 0
    %2028 = vmatpush1.bf16.msra.mxu0 0
    %2029 = vmatprep.subr.bf16.mxu0 0
    %2030 = vmatpush1.bf16.msra.mxu0 0
    %2031 = vmatprep.subr.bf16.mxu0 0
    %2032 = vmatpush1.bf16.msra.mxu0 0
    %2033 = vmatprep.subr.bf16.mxu0 0
    %2034 = vmatpush1.bf16.msra.mxu0 0
    %2035 = vmatprep.subr.bf16.mxu0 0
    %2036 = vmatpush1.bf16.msra.mxu0 0
    %2037 = vmatprep.subr.bf16.mxu0 0
    %2038 = vmatpush1.bf16.msra.mxu0 0
    %2039 = vmatprep.subr.bf16.mxu0 0
    %2040 = vmatpush1.bf16.msra.mxu0 0
    %2041 = vmatprep.subr.bf16.mxu0 0
    %2042 = vmatpush1.bf16.msra.mxu0 0
    %2043 = vmatprep.subr.bf16.mxu0 0
    %2044 = vmatpush1.bf16.msra.mxu0 0
    %2045 = vmatprep.subr.bf16.mxu0 0
    %2046 = vmatpush1.bf16.msra.mxu0 0
    %2047 = vmatprep.subr.bf16.mxu0 0
    %2048 = vmatpush1.bf16.msra.mxu0 0
    %2049 = vmatprep.subr.bf16.mxu0 0
    %2050 = vmatpush1.bf16.msra.mxu0 0
    %2051 = vmatprep.subr.bf16.mxu0 0
    %2052 = vmatpush1.bf16.msra.mxu0 0
    %2053 = vmatprep.subr.bf16.mxu0 0
    %2054 = vmatpush1.bf16.msra.mxu0 0
    %2055 = vmatprep.subr.bf16.mxu0 0
    %2056 = vmatpush1.bf16.msra.mxu0 0
    %2057 = vmatprep.mubr.bf16.mxu0 0
    %2058 = vmatmul.mubr.bf16.gmra.mrb[0].mxu0 %v1975
    %v2059 = vpop.f32.mrb[0].mxu0
    %v2060 = vadd.f32 %v1613, %v2059
    %v2061 = vpop.f32.mrb[0].mxu0
    %v2062 = vadd.f32 %v1615, %v2061
    %v2063 = vpop.f32.mrb[0].mxu0
    %v2064 = vpop.f32.mrb[0].mxu0
    %2065 = vdwg.mxu0
    %2066 = vmatprep.subr.bf16.mxu0 %v1987
    %2067 = vmatpush1.bf16.msra.mxu0 %v1984
    %2068 = vmatprep.subr.bf16.mxu0 0
    %2069 = vmatpush1.bf16.msra.mxu0 0
    %2070 = vmatprep.subr.bf16.mxu0 0
    %2071 = vmatpush1.bf16.msra.mxu0 0
    %2072 = vmatprep.subr.bf16.mxu0 0
    %2073 = vmatpush1.bf16.msra.mxu0 0
    %2074 = vmatprep.subr.bf16.mxu0 0
    %2075 = vmatpush1.bf16.msra.mxu0 0
    %2076 = vmatprep.subr.bf16.mxu0 0
    %2077 = vmatpush1.bf16.msra.mxu0 0
    %2078 = vmatprep.subr.bf16.mxu0 0
    %2079 = vmatpush1.bf16.msra.mxu0 0
    %2080 = vmatprep.subr.bf16.mxu0 0
    %2081 = vmatpush1.bf16.msra.mxu0 0
    %2082 = vmatprep.subr.bf16.mxu0 0
    %2083 = vmatpush1.bf16.msra.mxu0 0
    %2084 = vmatprep.subr.bf16.mxu0 0
    %2085 = vmatpush1.bf16.msra.mxu0 0
    %2086 = vmatprep.subr.bf16.mxu0 0
    %2087 = vmatpush1.bf16.msra.mxu0 0
    %2088 = vmatprep.subr.bf16.mxu0 0
    %2089 = vmatpush1.bf16.msra.mxu0 0
    %2090 = vmatprep.subr.bf16.mxu0 0
    %2091 = vmatpush1.bf16.msra.mxu0 0
    %2092 = vmatprep.subr.bf16.mxu0 0
    %2093 = vmatpush1.bf16.msra.mxu0 0
    %2094 = vmatprep.subr.bf16.mxu0 0
    %2095 = vmatpush1.bf16.msra.mxu0 0
    %2096 = vmatprep.subr.bf16.mxu0 0
    %2097 = vmatpush1.bf16.msra.mxu0 0
    %2098 = vmatprep.mubr.bf16.mxu0 0
    %2099 = vmatmul.mubr.bf16.gmra.mrb[0].mxu0 %v1975
    %v2100 = vpop.f32.mrb[0].mxu0
    %v2101 = vadd.f32 %v1654, %v2100
    %v2102 = vpop.f32.mrb[0].mxu0
    %v2103 = vadd.f32 %v1656, %v2102
    %v2104 = vpop.f32.mrb[0].mxu0
    %v2105 = vpop.f32.mrb[0].mxu0
    %2106 = vdwg.mxu0
    %2107 = vmatprep.subr.bf16.mxu0 %v1993
    %2108 = vmatpush1.bf16.msra.mxu0 %v1990
    %2109 = vmatprep.subr.bf16.mxu0 0
    %2110 = vmatpush1.bf16.msra.mxu0 0
    %2111 = vmatprep.subr.bf16.mxu0 0
    %2112 = vmatpush1.bf16.msra.mxu0 0
    %2113 = vmatprep.subr.bf16.mxu0 0
    %2114 = vmatpush1.bf16.msra.mxu0 0
    %2115 = vmatprep.subr.bf16.mxu0 0
    %2116 = vmatpush1.bf16.msra.mxu0 0
    %2117 = vmatprep.subr.bf16.mxu0 0
    %2118 = vmatpush1.bf16.msra.mxu0 0
    %2119 = vmatprep.subr.bf16.mxu0 0
    %2120 = vmatpush1.bf16.msra.mxu0 0
    %2121 = vmatprep.subr.bf16.mxu0 0
    %2122 = vmatpush1.bf16.msra.mxu0 0
    %2123 = vmatprep.subr.bf16.mxu0 0
    %2124 = vmatpush1.bf16.msra.mxu0 0
    %2125 = vmatprep.subr.bf16.mxu0 0
    %2126 = vmatpush1.bf16.msra.mxu0 0
    %2127 = vmatprep.subr.bf16.mxu0 0
    %2128 = vmatpush1.bf16.msra.mxu0 0
    %2129 = vmatprep.subr.bf16.mxu0 0
    %2130 = vmatpush1.bf16.msra.mxu0 0
    %2131 = vmatprep.subr.bf16.mxu0 0
    %2132 = vmatpush1.bf16.msra.mxu0 0
    %2133 = vmatprep.subr.bf16.mxu0 0
    %2134 = vmatpush1.bf16.msra.mxu0 0
    %2135 = vmatprep.subr.bf16.mxu0 0
    %2136 = vmatpush1.bf16.msra.mxu0 0
    %2137 = vmatprep.subr.bf16.mxu0 0
    %2138 = vmatpush1.bf16.msra.mxu0 0
    %2139 = vmatprep.mubr.bf16.mxu0 0
    %2140 = vmatmul.mubr.bf16.gmra.mrb[0].mxu0 %v1975
    %v2141 = vpop.f32.mrb[0].mxu0
    %v2142 = vadd.f32 %v1695, %v2141
    %v2143 = vpop.f32.mrb[0].mxu0
    %v2144 = vadd.f32 %v1697, %v2143
    %v2145 = vpop.f32.mrb[0].mxu0
    %v2146 = vpop.f32.mrb[0].mxu0
    %2147 = vdwg.mxu0
    %2148 = vmatprep.subr.bf16.mxu0 %v1999
    %2149 = vmatpush1.bf16.msra.mxu0 %v1996
    %2150 = vmatprep.subr.bf16.mxu0 0
    %2151 = vmatpush1.bf16.msra.mxu0 0
    %2152 = vmatprep.subr.bf16.mxu0 0
    %2153 = vmatpush1.bf16.msra.mxu0 0
    %2154 = vmatprep.subr.bf16.mxu0 0
    %2155 = vmatpush1.bf16.msra.mxu0 0
    %2156 = vmatprep.subr.bf16.mxu0 0
    %2157 = vmatpush1.bf16.msra.mxu0 0
    %2158 = vmatprep.subr.bf16.mxu0 0
    %2159 = vmatpush1.bf16.msra.mxu0 0
    %2160 = vmatprep.subr.bf16.mxu0 0
    %2161 = vmatpush1.bf16.msra.mxu0 0
    %2162 = vmatprep.subr.bf16.mxu0 0
    %2163 = vmatpush1.bf16.msra.mxu0 0
    %2164 = vmatprep.subr.bf16.mxu0 0
    %2165 = vmatpush1.bf16.msra.mxu0 0
    %2166 = vmatprep.subr.bf16.mxu0 0
    %2167 = vmatpush1.bf16.msra.mxu0 0
    %2168 = vmatprep.subr.bf16.mxu0 0
    %2169 = vmatpush1.bf16.msra.mxu0 0
    %2170 = vmatprep.subr.bf16.mxu0 0
    %2171 = vmatpush1.bf16.msra.mxu0 0
    %2172 = vmatprep.subr.bf16.mxu0 0
    %2173 = vmatpush1.bf16.msra.mxu0 0
    %2174 = vmatprep.subr.bf16.mxu0 0
    %2175 = vmatpush1.bf16.msra.mxu0 0
    %2176 = vmatprep.subr.bf16.mxu0 0
    %2177 = vmatpush1.bf16.msra.mxu0 0
    %2178 = vmatprep.subr.bf16.mxu0 0
    %2179 = vmatpush1.bf16.msra.mxu0 0
    %2180 = vmatprep.mubr.bf16.mxu0 0
    %2181 = vmatmul.mubr.bf16.gmra.mrb[0].mxu0 %v1975
    %v2182 = vpop.f32.mrb[0].mxu0
    %v2183 = vadd.f32 %v1736, %v2182
    %v2184 = vpop.f32.mrb[0].mxu0
    %v2185 = vadd.f32 %v1738, %v2184
    %v2186 = vpop.f32.mrb[0].mxu0
    %v2187 = vpop.f32.mrb[0].mxu0
    %2188 = vdwg.mxu0
    %2189 = vmatprep.subr.bf16.mxu0 %v2005
    %2190 = vmatpush1.bf16.msra.mxu0 %v2002
    %2191 = vmatprep.subr.bf16.mxu0 0
    %2192 = vmatpush1.bf16.msra.mxu0 0
    %2193 = vmatprep.subr.bf16.mxu0 0
    %2194 = vmatpush1.bf16.msra.mxu0 0
    %2195 = vmatprep.subr.bf16.mxu0 0
    %2196 = vmatpush1.bf16.msra.mxu0 0
    %2197 = vmatprep.subr.bf16.mxu0 0
    %2198 = vmatpush1.bf16.msra.mxu0 0
    %2199 = vmatprep.subr.bf16.mxu0 0
    %2200 = vmatpush1.bf16.msra.mxu0 0
    %2201 = vmatprep.subr.bf16.mxu0 0
    %2202 = vmatpush1.bf16.msra.mxu0 0
    %2203 = vmatprep.subr.bf16.mxu0 0
    %2204 = vmatpush1.bf16.msra.mxu0 0
    %2205 = vmatprep.subr.bf16.mxu0 0
    %2206 = vmatpush1.bf16.msra.mxu0 0
    %2207 = vmatprep.subr.bf16.mxu0 0
    %2208 = vmatpush1.bf16.msra.mxu0 0
    %2209 = vmatprep.subr.bf16.mxu0 0
    %2210 = vmatpush1.bf16.msra.mxu0 0
    %2211 = vmatprep.subr.bf16.mxu0 0
    %2212 = vmatpush1.bf16.msra.mxu0 0
    %2213 = vmatprep.subr.bf16.mxu0 0
    %2214 = vmatpush1.bf16.msra.mxu0 0
    %2215 = vmatprep.subr.bf16.mxu0 0
    %2216 = vmatpush1.bf16.msra.mxu0 0
    %2217 = vmatprep.subr.bf16.mxu0 0
    %2218 = vmatpush1.bf16.msra.mxu0 0
    %2219 = vmatprep.subr.bf16.mxu0 0
    %2220 = vmatpush1.bf16.msra.mxu0 0
    %2221 = vmatprep.mubr.bf16.mxu0 0
    %2222 = vmatmul.mubr.bf16.gmra.mrb[0].mxu0 %v1975
    %v2223 = vpop.f32.mrb[0].mxu0
    %v2224 = vadd.f32 %v1777, %v2223
    %v2225 = vpop.f32.mrb[0].mxu0
    %v2226 = vadd.f32 %v1779, %v2225
    %v2227 = vpop.f32.mrb[0].mxu0
    %v2228 = vpop.f32.mrb[0].mxu0
    %2229 = vdwg.mxu0
    %2230 = vmatprep.subr.bf16.mxu0 %v2011
    %2231 = vmatpush1.bf16.msra.mxu0 %v2008
    %2232 = vmatprep.subr.bf16.mxu0 0
    %2233 = vmatpush1.bf16.msra.mxu0 0
    %2234 = vmatprep.subr.bf16.mxu0 0
    %2235 = vmatpush1.bf16.msra.mxu0 0
    %2236 = vmatprep.subr.bf16.mxu0 0
    %2237 = vmatpush1.bf16.msra.mxu0 0
    %2238 = vmatprep.subr.bf16.mxu0 0
    %2239 = vmatpush1.bf16.msra.mxu0 0
    %2240 = vmatprep.subr.bf16.mxu0 0
    %2241 = vmatpush1.bf16.msra.mxu0 0
    %2242 = vmatprep.subr.bf16.mxu0 0
    %2243 = vmatpush1.bf16.msra.mxu0 0
    %2244 = vmatprep.subr.bf16.mxu0 0
    %2245 = vmatpush1.bf16.msra.mxu0 0
    %2246 = vmatprep.subr.bf16.mxu0 0
    %2247 = vmatpush1.bf16.msra.mxu0 0
    %2248 = vmatprep.subr.bf16.mxu0 0
    %2249 = vmatpush1.bf16.msra.mxu0 0
    %2250 = vmatprep.subr.bf16.mxu0 0
    %2251 = vmatpush1.bf16.msra.mxu0 0
    %2252 = vmatprep.subr.bf16.mxu0 0
    %2253 = vmatpush1.bf16.msra.mxu0 0
    %2254 = vmatprep.subr.bf16.mxu0 0
    %2255 = vmatpush1.bf16.msra.mxu0 0
    %2256 = vmatprep.subr.bf16.mxu0 0
    %2257 = vmatpush1.bf16.msra.mxu0 0
    %2258 = vmatprep.subr.bf16.mxu0 0
    %2259 = vmatpush1.bf16.msra.mxu0 0
    %2260 = vmatprep.subr.bf16.mxu0 0
    %2261 = vmatpush1.bf16.msra.mxu0 0
    %2262 = vmatprep.mubr.bf16.mxu0 0
    %2263 = vmatmul.mubr.bf16.gmra.mrb[0].mxu0 %v1975
    %v2264 = vpop.f32.mrb[0].mxu0
    %v2265 = vadd.f32 %v1818, %v2264
    %v2266 = vpop.f32.mrb[0].mxu0
    %v2267 = vadd.f32 %v1820, %v2266
    %v2268 = vpop.f32.mrb[0].mxu0
    %v2269 = vpop.f32.mrb[0].mxu0
    %2270 = vdwg.mxu0
    %2271 = vmatprep.subr.bf16.mxu0 %v2017
    %2272 = vmatpush1.bf16.msra.mxu0 %v2014
    %2273 = vmatprep.subr.bf16.mxu0 0
    %2274 = vmatpush1.bf16.msra.mxu0 0
    %2275 = vmatprep.subr.bf16.mxu0 0
    %2276 = vmatpush1.bf16.msra.mxu0 0
    %2277 = vmatprep.subr.bf16.mxu0 0
    %2278 = vmatpush1.bf16.msra.mxu0 0
    %2279 = vmatprep.subr.bf16.mxu0 0
    %2280 = vmatpush1.bf16.msra.mxu0 0
    %2281 = vmatprep.subr.bf16.mxu0 0
    %2282 = vmatpush1.bf16.msra.mxu0 0
    %2283 = vmatprep.subr.bf16.mxu0 0
    %2284 = vmatpush1.bf16.msra.mxu0 0
    %2285 = vmatprep.subr.bf16.mxu0 0
    %2286 = vmatpush1.bf16.msra.mxu0 0
    %2287 = vmatprep.subr.bf16.mxu0 0
    %2288 = vmatpush1.bf16.msra.mxu0 0
    %2289 = vmatprep.subr.bf16.mxu0 0
    %2290 = vmatpush1.bf16.msra.mxu0 0
    %2291 = vmatprep.subr.bf16.mxu0 0
    %2292 = vmatpush1.bf16.msra.mxu0 0
    %2293 = vmatprep.subr.bf16.mxu0 0
    %2294 = vmatpush1.bf16.msra.mxu0 0
    %2295 = vmatprep.subr.bf16.mxu0 0
    %2296 = vmatpush1.bf16.msra.mxu0 0
    %2297 = vmatprep.subr.bf16.mxu0 0
    %2298 = vmatpush1.bf16.msra.mxu0 0
    %2299 = vmatprep.subr.bf16.mxu0 0
    %2300 = vmatpush1.bf16.msra.mxu0 0
    %2301 = vmatprep.subr.bf16.mxu0 0
    %2302 = vmatpush1.bf16.msra.mxu0 0
    %2303 = vmatprep.mubr.bf16.mxu0 0
    %2304 = vmatmul.mubr.bf16.gmra.mrb[0].mxu0 %v1975
    %v2305 = vpop.f32.mrb[0].mxu0
    %v2306 = vadd.f32 %v1859, %v2305
    %v2307 = vpop.f32.mrb[0].mxu0
    %v2308 = vadd.f32 %v1861, %v2307
    %v2309 = vpop.f32.mrb[0].mxu0
    %v2310 = vpop.f32.mrb[0].mxu0
    %2311 = vdwg.mxu0
    %2312 = vmatprep.subr.bf16.mxu0 %v2023
    %2313 = vmatpush1.bf16.msra.mxu0 %v2020
    %2314 = vmatprep.subr.bf16.mxu0 0
    %2315 = vmatpush1.bf16.msra.mxu0 0
    %2316 = vmatprep.subr.bf16.mxu0 0
    %2317 = vmatpush1.bf16.msra.mxu0 0
    %2318 = vmatprep.subr.bf16.mxu0 0
    %2319 = vmatpush1.bf16.msra.mxu0 0
    %2320 = vmatprep.subr.bf16.mxu0 0
    %2321 = vmatpush1.bf16.msra.mxu0 0
    %2322 = vmatprep.subr.bf16.mxu0 0
    %2323 = vmatpush1.bf16.msra.mxu0 0
    %2324 = vmatprep.subr.bf16.mxu0 0
    %2325 = vmatpush1.bf16.msra.mxu0 0
    %2326 = vmatprep.subr.bf16.mxu0 0
    %2327 = vmatpush1.bf16.msra.mxu0 0
    %2328 = vmatprep.subr.bf16.mxu0 0
    %2329 = vmatpush1.bf16.msra.mxu0 0
    %2330 = vmatprep.subr.bf16.mxu0 0
    %2331 = vmatpush1.bf16.msra.mxu0 0
    %2332 = vmatprep.subr.bf16.mxu0 0
    %2333 = vmatpush1.bf16.msra.mxu0 0
    %2334 = vmatprep.subr.bf16.mxu0 0
    %2335 = vmatpush1.bf16.msra.mxu0 0
    %2336 = vmatprep.subr.bf16.mxu0 0
    %2337 = vmatpush1.bf16.msra.mxu0 0
    %2338 = vmatprep.subr.bf16.mxu0 0
    %2339 = vmatpush1.bf16.msra.mxu0 0
    %2340 = vmatprep.subr.bf16.mxu0 0
    %2341 = vmatpush1.bf16.msra.mxu0 0
    %2342 = vmatprep.subr.bf16.mxu0 0
    %2343 = vmatpush1.bf16.msra.mxu0 0
    %2344 = vmatprep.mubr.bf16.mxu0 0
    %2345 = vmatmul.mubr.bf16.gmra.mrb[0].mxu0 %v1975
    %v2346 = vpop.f32.mrb[0].mxu0
    %v2347 = vadd.f32 %v1900, %v2346
    %v2348 = vpop.f32.mrb[0].mxu0
    %v2349 = vadd.f32 %v1902, %v2348
    %v2350 = vpop.f32.mrb[0].mxu0
    %v2351 = vpop.f32.mrb[0].mxu0
    %2352 = vdwg.mxu0
    %v2353 = vld [vmem:[#allocation3] sm:$0xff]
    %v2354 = vld [vmem:[#allocation3 + $0x8] sm:$0xff]
    %v2355 = vld [vmem:[#allocation3 + $0x10] sm:$0xff]
    %v2356 = vld [vmem:[#allocation3 + $0x18] sm:$0xff]
    %v2357 = vld [vmem:[#allocation3 + $0x20] sm:$0xff]
    %v2358 = vld [vmem:[#allocation3 + $0x28] sm:$0xff]
    %v2359 = vld [vmem:[#allocation3 + $0x30] sm:$0xff]
    %v2360 = vld [vmem:[#allocation3 + $0x38] sm:$0xff]
    %v2361 = vld [vmem:[#allocation3 + $0x40] sm:$0xf]
    %s2362 = scalar_lea.vmem %s4, 32
    %v2363 = vld [vmem:[%s2362] sm:$0xff]
    %v2364 = vld [vmem:[%s2362 + $0x8] sm:$0xff]
    %v2365 = vunpack.c.l.bf16 %v2363
    %v2366 = vunpack.c.h.bf16 %v2363
    %v2367 = vunpack.c.l.bf16 %v2364
    %v2368 = vunpack.c.h.bf16 %v2364
    %v2373 = vlaneseq
    %v2374 = vshrl.u32 %v2373, 7
    %v2375 = vsub.s32 0, %v2374
    %v2376 = vrot.slane %v2365, %v2375
    %v2377 = vlaneseq
    %v2378 = vshrl.u32 %v2377, 7
    %v2379 = vsub.s32 2, %v2378
    %v2380 = vrot.slane %v2365, %v2379
    %v2381 = vlaneseq
    %v2382 = vshrl.u32 %v2381, 7
    %v2383 = vsub.s32 4, %v2382
    %v2384 = vrot.slane %v2365, %v2383
    %v2385 = vlaneseq
    %v2386 = vshrl.u32 %v2385, 7
    %v2387 = vsub.s32 6, %v2386
    %v2388 = vrot.slane %v2365, %v2387
    %v2389 = vlaneseq
    %v2390 = vshrl.u32 %v2389, 7
    %v2391 = vsub.s32 0, %v2390
    %v2392 = vrot.slane %v2366, %v2391
    %v2393 = vlaneseq
    %v2394 = vshrl.u32 %v2393, 7
    %v2395 = vsub.s32 2, %v2394
    %v2396 = vrot.slane %v2366, %v2395
    %v2397 = vlaneseq
    %v2398 = vshrl.u32 %v2397, 7
    %v2399 = vsub.s32 4, %v2398
    %v2400 = vrot.slane %v2366, %v2399
    %v2401 = vlaneseq
    %v2402 = vshrl.u32 %v2401, 7
    %v2403 = vsub.s32 6, %v2402
    %v2404 = vrot.slane %v2366, %v2403
    %v2405 = vlaneseq
    %v2406 = vshrl.u32 %v2405, 7
    %v2407 = vsub.s32 0, %v2406
    %v2408 = vrot.slane %v2367, %v2407
    %v2409 = vlaneseq
    %v2410 = vshrl.u32 %v2409, 7
    %v2411 = vsub.s32 2, %v2410
    %v2412 = vrot.slane %v2367, %v2411
    %v2413 = vlaneseq
    %v2414 = vshrl.u32 %v2413, 7
    %v2415 = vsub.s32 4, %v2414
    %v2416 = vrot.slane %v2367, %v2415
    %v2417 = vlaneseq
    %v2418 = vshrl.u32 %v2417, 7
    %v2419 = vsub.s32 6, %v2418
    %v2420 = vrot.slane %v2367, %v2419
    %v2421 = vlaneseq
    %v2422 = vshrl.u32 %v2421, 7
    %v2423 = vsub.s32 0, %v2422
    %v2424 = vrot.slane %v2368, %v2423
    %v2425 = vlaneseq
    %v2426 = vshrl.u32 %v2425, 7
    %v2427 = vsub.s32 2, %v2426
    %v2428 = vrot.slane %v2368, %v2427
    %v2429 = vlaneseq
    %v2430 = vshrl.u32 %v2429, 7
    %v2431 = vsub.s32 4, %v2430
    %v2432 = vrot.slane %v2368, %v2431
    %v2433 = vlaneseq
    %v2434 = vshrl.u32 %v2433, 7
    %v2435 = vsub.s32 6, %v2434
    %v2436 = vrot.slane %v2368, %v2435
    %v2453 = vlaneseq
    %v2454 = vshrl.u32 %v2453, 7
    %v2455 = vsub.s32 0, %v2454
    %v2456 = vrot.slane %v2376, %v2455
    %v2457 = vlaneseq
    %v2458 = vshrl.u32 %v2457, 7
    %v2459 = vsub.s32 0, %v2458
    %v2460 = vrot.slane %v2380, %v2459
    %v2461 = vlaneseq
    %v2462 = vshrl.u32 %v2461, 7
    %v2463 = vsub.s32 0, %v2462
    %v2464 = vrot.slane %v2384, %v2463
    %v2465 = vlaneseq
    %v2466 = vshrl.u32 %v2465, 7
    %v2467 = vsub.s32 0, %v2466
    %v2468 = vrot.slane %v2388, %v2467
    %v2469 = vlaneseq
    %v2470 = vshrl.u32 %v2469, 7
    %v2471 = vsub.s32 0, %v2470
    %v2472 = vrot.slane %v2392, %v2471
    %v2473 = vlaneseq
    %v2474 = vshrl.u32 %v2473, 7
    %v2475 = vsub.s32 0, %v2474
    %v2476 = vrot.slane %v2396, %v2475
    %v2477 = vlaneseq
    %v2478 = vshrl.u32 %v2477, 7
    %v2479 = vsub.s32 0, %v2478
    %v2480 = vrot.slane %v2400, %v2479
    %v2481 = vlaneseq
    %v2482 = vshrl.u32 %v2481, 7
    %v2483 = vsub.s32 0, %v2482
    %v2484 = vrot.slane %v2404, %v2483
    %v2485 = vlaneseq
    %v2486 = vshrl.u32 %v2485, 7
    %v2487 = vsub.s32 0, %v2486
    %v2488 = vrot.slane %v2408, %v2487
    %v2489 = vlaneseq
    %v2490 = vshrl.u32 %v2489, 7
    %v2491 = vsub.s32 0, %v2490
    %v2492 = vrot.slane %v2412, %v2491
    %v2493 = vlaneseq
    %v2494 = vshrl.u32 %v2493, 7
    %v2495 = vsub.s32 0, %v2494
    %v2496 = vrot.slane %v2416, %v2495
    %v2497 = vlaneseq
    %v2498 = vshrl.u32 %v2497, 7
    %v2499 = vsub.s32 0, %v2498
    %v2500 = vrot.slane %v2420, %v2499
    %v2501 = vlaneseq
    %v2502 = vshrl.u32 %v2501, 7
    %v2503 = vsub.s32 0, %v2502
    %v2504 = vrot.slane %v2424, %v2503
    %v2505 = vlaneseq
    %v2506 = vshrl.u32 %v2505, 7
    %v2507 = vsub.s32 0, %v2506
    %v2508 = vrot.slane %v2428, %v2507
    %v2509 = vlaneseq
    %v2510 = vshrl.u32 %v2509, 7
    %v2511 = vsub.s32 0, %v2510
    %v2512 = vrot.slane %v2432, %v2511
    %v2513 = vlaneseq
    %v2514 = vshrl.u32 %v2513, 7
    %v2515 = vsub.s32 0, %v2514
    %v2516 = vrot.slane %v2436, %v2515
    %v2533 = vcombine.low %v2456, %v2460
    %v2534 = vcombine.low %v2464, %v2468
    %v2535 = vcombine.low %v2472, %v2476
    %v2536 = vcombine.low %v2480, %v2484
    %v2537 = vcombine.low %v2488, %v2492
    %v2538 = vcombine.low %v2496, %v2500
    %v2539 = vcombine.low %v2504, %v2508
    %v2540 = vcombine.low %v2512, %v2516
    %2541 = vrot.lane.b32.xlu0 %v2533, 97
    %v2542 = vpop.permute.xlu0 %2541
    %2543 = vrot.lane.b32.xlu0 %v2534, 97
    %v2544 = vpop.permute.xlu0 %2543
    %2545 = vrot.lane.b32.xlu0 %v2535, 97
    %v2546 = vpop.permute.xlu0 %2545
    %2547 = vrot.lane.b32.xlu0 %v2536, 97
    %v2548 = vpop.permute.xlu0 %2547
    %2549 = vrot.lane.b32.xlu0 %v2537, 97
    %v2550 = vpop.permute.xlu0 %2549
    %2551 = vrot.lane.b32.xlu0 %v2538, 97
    %v2552 = vpop.permute.xlu0 %2551
    %2553 = vrot.lane.b32.xlu0 %v2539, 97
    %v2554 = vpop.permute.xlu0 %2553
    %2555 = vrot.lane.b32.xlu0 %v2540, 97
    %v2556 = vpop.permute.xlu0 %2555
    %v2557 = vrot.slane %v2542, 4
    %v2558 = vrot.slane %v2544, 4
    %v2559 = vrot.slane %v2546, 4
    %v2560 = vrot.slane %v2548, 4
    %v2561 = vrot.slane %v2550, 4
    %v2562 = vrot.slane %v2552, 4
    %v2563 = vrot.slane %v2554, 4
    %v2564 = vrot.slane %v2556, 4
    %vm2565 = vcmask 793600
    %v2566 = vsel %vm2565, %v2557, %v2542
    %v2567 = vsel %vm1102, %v2557, %v2558
    %v2568 = vsel %vm2565, %v2567, %v2544
    %v2569 = vsel %vm1102, %v2558, %v2559
    %v2570 = vsel %vm2565, %v2569, %v2546
    %v2571 = vsel %vm1102, %v2559, %v2560
    %v2572 = vsel %vm2565, %v2571, %v2548
    %v2573 = vsel %vm1102, %v2560, %v2561
    %v2574 = vsel %vm2565, %v2573, %v2550
    %v2575 = vsel %vm1102, %v2561, %v2562
    %v2576 = vsel %vm2565, %v2575, %v2552
    %v2577 = vsel %vm1102, %v2562, %v2563
    %v2578 = vsel %vm2565, %v2577, %v2554
    %v2579 = vsel %vm1102, %v2563, %v2564
    %v2580 = vsel %vm2565, %v2579, %v2556
    %v2590 = vmul.f32 %v2353, %v2566
    %v2591 = vmul.f32 %v2354, %v2568
    %v2592 = vmul.f32 %v2355, %v2570
    %v2593 = vmul.f32 %v2356, %v2572
    %v2594 = vmul.f32 %v2357, %v2574
    %v2595 = vmul.f32 %v2358, %v2576
    %v2596 = vmul.f32 %v2359, %v2578
    %v2597 = vmul.f32 %v2360, %v2580
    %v2598 = vmul.f32 %v2361, %v2564
    %v2607 = vcombine.high %v2590, %v2590
    %v2608 = vcombine.high %v2591, %v2591
    %v2609 = vcombine.high %v2592, %v2592
    %v2610 = vcombine.high %v2593, %v2593
    %v2611 = vcombine.high %v2594, %v2594
    %v2612 = vcombine.high %v2595, %v2595
    %v2613 = vcombine.high %v2596, %v2596
    %v2614 = vcombine.high %v2597, %v2597
    %v2623 = vpack.c.bf16 %v2590, %v2590
    %v2624 = vpack.c.bf16 %v2607, %v2607
    %v2625 = vpack.c.bf16 %v2591, %v2591
    %v2626 = vpack.c.bf16 %v2608, %v2608
    %v2627 = vpack.c.bf16 %v2592, %v2592
    %v2628 = vpack.c.bf16 %v2609, %v2609
    %v2629 = vpack.c.bf16 %v2593, %v2593
    %v2630 = vpack.c.bf16 %v2610, %v2610
    %v2631 = vpack.c.bf16 %v2594, %v2594
    %v2632 = vpack.c.bf16 %v2611, %v2611
    %v2633 = vpack.c.bf16 %v2595, %v2595
    %v2634 = vpack.c.bf16 %v2612, %v2612
    %v2635 = vpack.c.bf16 %v2596, %v2596
    %v2636 = vpack.c.bf16 %v2613, %v2613
    %v2637 = vpack.c.bf16 %v2597, %v2597
    %v2638 = vpack.c.bf16 %v2614, %v2614
    %v2639 = vpack.c.bf16 %v2598, %v2598
    %s2640 = scalar_lea.vmem %s2, 8
    %v2641 = vld [vmem:[%s2640] sm:$0xf]
    %2659 = vrot.lane.b32.xlu0 %v2623, 31
    %v2660 = vpop.permute.xlu0 %2659
    %2661 = vrot.lane.b32.xlu0 %v2624, 31
    %v2662 = vpop.permute.xlu0 %2661
    %2663 = vrot.lane.b32.xlu0 %v2625, 31
    %v2664 = vpop.permute.xlu0 %2663
    %2665 = vrot.lane.b32.xlu0 %v2626, 31
    %v2666 = vpop.permute.xlu0 %2665
    %2667 = vrot.lane.b32.xlu0 %v2627, 31
    %v2668 = vpop.permute.xlu0 %2667
    %2669 = vrot.lane.b32.xlu0 %v2628, 31
    %v2670 = vpop.permute.xlu0 %2669
    %2671 = vrot.lane.b32.xlu0 %v2629, 31
    %v2672 = vpop.permute.xlu0 %2671
    %2673 = vrot.lane.b32.xlu0 %v2630, 31
    %v2674 = vpop.permute.xlu0 %2673
    %2675 = vrot.lane.b32.xlu0 %v2631, 31
    %v2676 = vpop.permute.xlu0 %2675
    %2677 = vrot.lane.b32.xlu0 %v2632, 31
    %v2678 = vpop.permute.xlu0 %2677
    %2679 = vrot.lane.b32.xlu0 %v2633, 31
    %v2680 = vpop.permute.xlu0 %2679
    %2681 = vrot.lane.b32.xlu0 %v2634, 31
    %v2682 = vpop.permute.xlu0 %2681
    %2683 = vrot.lane.b32.xlu0 %v2635, 31
    %v2684 = vpop.permute.xlu0 %2683
    %2685 = vrot.lane.b32.xlu0 %v2636, 31
    %v2686 = vpop.permute.xlu0 %2685
    %2687 = vrot.lane.b32.xlu0 %v2637, 31
    %v2688 = vpop.permute.xlu0 %2687
    %2689 = vrot.lane.b32.xlu0 %v2638, 31
    %v2690 = vpop.permute.xlu0 %2689
    %2691 = vrot.lane.b32.xlu0 %v2639, 31
    %v2692 = vpop.permute.xlu0 %2691
    %vm2693 = vcmask 252928
    %v2694 = vsel %vm2693, %v2660, %v2662
    %v2695 = vsel %vm2693, %v2662, %v2664
    %v2696 = vsel %vm2693, %v2664, %v2666
    %v2697 = vsel %vm2693, %v2666, %v2668
    %v2698 = vsel %vm2693, %v2668, %v2670
    %v2699 = vsel %vm2693, %v2670, %v2672
    %v2700 = vsel %vm2693, %v2672, %v2674
    %v2701 = vsel %vm2693, %v2674, %v2676
    %v2702 = vsel %vm2693, %v2676, %v2678
    %v2703 = vsel %vm2693, %v2678, %v2680
    %v2704 = vsel %vm2693, %v2680, %v2682
    %v2705 = vsel %vm2693, %v2682, %v2684
    %v2706 = vsel %vm2693, %v2684, %v2686
    %v2707 = vsel %vm2693, %v2686, %v2688
    %v2708 = vsel %vm2693, %v2688, %v2690
    %v2709 = vsel %vm2693, %v2690, %v2692
    %v2711 = vsel %vm1525, %v2641, 0
    %v2714 = vsel %vm1529, %v2694, 0
    %v2717 = vsel %vm1529, %v2695, 0
    %v2720 = vsel %vm1529, %v2696, 0
    %v2723 = vsel %vm1529, %v2697, 0
    %v2726 = vsel %vm1529, %v2698, 0
    %v2729 = vsel %vm1529, %v2699, 0
    %v2732 = vsel %vm1529, %v2700, 0
    %v2735 = vsel %vm1529, %v2701, 0
    %v2738 = vsel %vm1529, %v2702, 0
    %v2741 = vsel %vm1529, %v2703, 0
    %v2744 = vsel %vm1529, %v2704, 0
    %v2747 = vsel %vm1529, %v2705, 0
    %v2750 = vsel %vm1529, %v2706, 0
    %v2753 = vsel %vm1529, %v2707, 0
    %v2756 = vsel %vm1529, %v2708, 0
    %v2759 = vsel %vm1529, %v2709, 0
    %2761 = vmatprep.subr.bf16.mxu0 %v2717
    %2762 = vmatpush1.bf16.msra.mxu0 %v2714
    %2763 = vmatprep.subr.bf16.mxu0 0
    %2764 = vmatpush1.bf16.msra.mxu0 0
    %2765 = vmatprep.subr.bf16.mxu0 0
    %2766 = vmatpush1.bf16.msra.mxu0 0
    %2767 = vmatprep.subr.bf16.mxu0 0
    %2768 = vmatpush1.bf16.msra.mxu0 0
    %2769 = vmatprep.subr.bf16.mxu0 0
    %2770 = vmatpush1.bf16.msra.mxu0 0
    %2771 = vmatprep.subr.bf16.mxu0 0
    %2772 = vmatpush1.bf16.msra.mxu0 0
    %2773 = vmatprep.subr.bf16.mxu0 0
    %2774 = vmatpush1.bf16.msra.mxu0 0
    %2775 = vmatprep.subr.bf16.mxu0 0
    %2776 = vmatpush1.bf16.msra.mxu0 0
    %2777 = vmatprep.subr.bf16.mxu0 0
    %2778 = vmatpush1.bf16.msra.mxu0 0
    %2779 = vmatprep.subr.bf16.mxu0 0
    %2780 = vmatpush1.bf16.msra.mxu0 0
    %2781 = vmatprep.subr.bf16.mxu0 0
    %2782 = vmatpush1.bf16.msra.mxu0 0
    %2783 = vmatprep.subr.bf16.mxu0 0
    %2784 = vmatpush1.bf16.msra.mxu0 0
    %2785 = vmatprep.subr.bf16.mxu0 0
    %2786 = vmatpush1.bf16.msra.mxu0 0
    %2787 = vmatprep.subr.bf16.mxu0 0
    %2788 = vmatpush1.bf16.msra.mxu0 0
    %2789 = vmatprep.subr.bf16.mxu0 0
    %2790 = vmatpush1.bf16.msra.mxu0 0
    %2791 = vmatprep.subr.bf16.mxu0 0
    %2792 = vmatpush1.bf16.msra.mxu0 0
    %2793 = vmatprep.mubr.bf16.mxu0 0
    %2794 = vmatmul.mubr.bf16.gmra.mrb[0].mxu0 %v2711
    %v2795 = vpop.f32.mrb[0].mxu0
    %v2796 = vadd.f32 0.0, %v2795
    %v2797 = vpop.f32.mrb[0].mxu0
    %v2798 = vadd.f32 0.0, %v2797
    %v2799 = vpop.f32.mrb[0].mxu0
    %v2800 = vpop.f32.mrb[0].mxu0
    %2801 = vdwg.mxu0
    %2802 = vmatprep.subr.bf16.mxu0 %v2723
    %2803 = vmatpush1.bf16.msra.mxu0 %v2720
    %2804 = vmatprep.subr.bf16.mxu0 0
    %2805 = vmatpush1.bf16.msra.mxu0 0
    %2806 = vmatprep.subr.bf16.mxu0 0
    %2807 = vmatpush1.bf16.msra.mxu0 0
    %2808 = vmatprep.subr.bf16.mxu0 0
    %2809 = vmatpush1.bf16.msra.mxu0 0
    %2810 = vmatprep.subr.bf16.mxu0 0
    %2811 = vmatpush1.bf16.msra.mxu0 0
    %2812 = vmatprep.subr.bf16.mxu0 0
    %2813 = vmatpush1.bf16.msra.mxu0 0
    %2814 = vmatprep.subr.bf16.mxu0 0
    %2815 = vmatpush1.bf16.msra.mxu0 0
    %2816 = vmatprep.subr.bf16.mxu0 0
    %2817 = vmatpush1.bf16.msra.mxu0 0
    %2818 = vmatprep.subr.bf16.mxu0 0
    %2819 = vmatpush1.bf16.msra.mxu0 0
    %2820 = vmatprep.subr.bf16.mxu0 0
    %2821 = vmatpush1.bf16.msra.mxu0 0
    %2822 = vmatprep.subr.bf16.mxu0 0
    %2823 = vmatpush1.bf16.msra.mxu0 0
    %2824 = vmatprep.subr.bf16.mxu0 0
    %2825 = vmatpush1.bf16.msra.mxu0 0
    %2826 = vmatprep.subr.bf16.mxu0 0
    %2827 = vmatpush1.bf16.msra.mxu0 0
    %2828 = vmatprep.subr.bf16.mxu0 0
    %2829 = vmatpush1.bf16.msra.mxu0 0
    %2830 = vmatprep.subr.bf16.mxu0 0
    %2831 = vmatpush1.bf16.msra.mxu0 0
    %2832 = vmatprep.subr.bf16.mxu0 0
    %2833 = vmatpush1.bf16.msra.mxu0 0
    %2834 = vmatprep.mubr.bf16.mxu0 0
    %2835 = vmatmul.mubr.bf16.gmra.mrb[0].mxu0 %v2711
    %v2836 = vpop.f32.mrb[0].mxu0
    %v2837 = vadd.f32 0.0, %v2836
    %v2838 = vpop.f32.mrb[0].mxu0
    %v2839 = vadd.f32 0.0, %v2838
    %v2840 = vpop.f32.mrb[0].mxu0
    %v2841 = vpop.f32.mrb[0].mxu0
    %2842 = vdwg.mxu0
    %2843 = vmatprep.subr.bf16.mxu0 %v2729
    %2844 = vmatpush1.bf16.msra.mxu0 %v2726
    %2845 = vmatprep.subr.bf16.mxu0 0
    %2846 = vmatpush1.bf16.msra.mxu0 0
    %2847 = vmatprep.subr.bf16.mxu0 0
    %2848 = vmatpush1.bf16.msra.mxu0 0
    %2849 = vmatprep.subr.bf16.mxu0 0
    %2850 = vmatpush1.bf16.msra.mxu0 0
    %2851 = vmatprep.subr.bf16.mxu0 0
    %2852 = vmatpush1.bf16.msra.mxu0 0
    %2853 = vmatprep.subr.bf16.mxu0 0
    %2854 = vmatpush1.bf16.msra.mxu0 0
    %2855 = vmatprep.subr.bf16.mxu0 0
    %2856 = vmatpush1.bf16.msra.mxu0 0
    %2857 = vmatprep.subr.bf16.mxu0 0
    %2858 = vmatpush1.bf16.msra.mxu0 0
    %2859 = vmatprep.subr.bf16.mxu0 0
    %2860 = vmatpush1.bf16.msra.mxu0 0
    %2861 = vmatprep.subr.bf16.mxu0 0
    %2862 = vmatpush1.bf16.msra.mxu0 0
    %2863 = vmatprep.subr.bf16.mxu0 0
    %2864 = vmatpush1.bf16.msra.mxu0 0
    %2865 = vmatprep.subr.bf16.mxu0 0
    %2866 = vmatpush1.bf16.msra.mxu0 0
    %2867 = vmatprep.subr.bf16.mxu0 0
    %2868 = vmatpush1.bf16.msra.mxu0 0
    %2869 = vmatprep.subr.bf16.mxu0 0
    %2870 = vmatpush1.bf16.msra.mxu0 0
    %2871 = vmatprep.subr.bf16.mxu0 0
    %2872 = vmatpush1.bf16.msra.mxu0 0
    %2873 = vmatprep.subr.bf16.mxu0 0
    %2874 = vmatpush1.bf16.msra.mxu0 0
    %2875 = vmatprep.mubr.bf16.mxu0 0
    %2876 = vmatmul.mubr.bf16.gmra.mrb[0].mxu0 %v2711
    %v2877 = vpop.f32.mrb[0].mxu0
    %v2878 = vadd.f32 0.0, %v2877
    %v2879 = vpop.f32.mrb[0].mxu0
    %v2880 = vadd.f32 0.0, %v2879
    %v2881 = vpop.f32.mrb[0].mxu0
    %v2882 = vpop.f32.mrb[0].mxu0
    %2883 = vdwg.mxu0
    %2884 = vmatprep.subr.bf16.mxu0 %v2735
    %2885 = vmatpush1.bf16.msra.mxu0 %v2732
    %2886 = vmatprep.subr.bf16.mxu0 0
    %2887 = vmatpush1.bf16.msra.mxu0 0
    %2888 = vmatprep.subr.bf16.mxu0 0
    %2889 = vmatpush1.bf16.msra.mxu0 0
    %2890 = vmatprep.subr.bf16.mxu0 0
    %2891 = vmatpush1.bf16.msra.mxu0 0
    %2892 = vmatprep.subr.bf16.mxu0 0
    %2893 = vmatpush1.bf16.msra.mxu0 0
    %2894 = vmatprep.subr.bf16.mxu0 0
    %2895 = vmatpush1.bf16.msra.mxu0 0
    %2896 = vmatprep.subr.bf16.mxu0 0
    %2897 = vmatpush1.bf16.msra.mxu0 0
    %2898 = vmatprep.subr.bf16.mxu0 0
    %2899 = vmatpush1.bf16.msra.mxu0 0
    %2900 = vmatprep.subr.bf16.mxu0 0
    %2901 = vmatpush1.bf16.msra.mxu0 0
    %2902 = vmatprep.subr.bf16.mxu0 0
    %2903 = vmatpush1.bf16.msra.mxu0 0
    %2904 = vmatprep.subr.bf16.mxu0 0
    %2905 = vmatpush1.bf16.msra.mxu0 0
    %2906 = vmatprep.subr.bf16.mxu0 0
    %2907 = vmatpush1.bf16.msra.mxu0 0
    %2908 = vmatprep.subr.bf16.mxu0 0
    %2909 = vmatpush1.bf16.msra.mxu0 0
    %2910 = vmatprep.subr.bf16.mxu0 0
    %2911 = vmatpush1.bf16.msra.mxu0 0
    %2912 = vmatprep.subr.bf16.mxu0 0
    %2913 = vmatpush1.bf16.msra.mxu0 0
    %2914 = vmatprep.subr.bf16.mxu0 0
    %2915 = vmatpush1.bf16.msra.mxu0 0
    %2916 = vmatprep.mubr.bf16.mxu0 0
    %2917 = vmatmul.mubr.bf16.gmra.mrb[0].mxu0 %v2711
    %v2918 = vpop.f32.mrb[0].mxu0
    %v2919 = vadd.f32 0.0, %v2918
    %v2920 = vpop.f32.mrb[0].mxu0
    %v2921 = vadd.f32 0.0, %v2920
    %v2922 = vpop.f32.mrb[0].mxu0
    %v2923 = vpop.f32.mrb[0].mxu0
    %2924 = vdwg.mxu0
    %2925 = vmatprep.subr.bf16.mxu0 %v2741
    %2926 = vmatpush1.bf16.msra.mxu0 %v2738
    %2927 = vmatprep.subr.bf16.mxu0 0
    %2928 = vmatpush1.bf16.msra.mxu0 0
    %2929 = vmatprep.subr.bf16.mxu0 0
    %2930 = vmatpush1.bf16.msra.mxu0 0
    %2931 = vmatprep.subr.bf16.mxu0 0
    %2932 = vmatpush1.bf16.msra.mxu0 0
    %2933 = vmatprep.subr.bf16.mxu0 0
    %2934 = vmatpush1.bf16.msra.mxu0 0
    %2935 = vmatprep.subr.bf16.mxu0 0
    %2936 = vmatpush1.bf16.msra.mxu0 0
    %2937 = vmatprep.subr.bf16.mxu0 0
    %2938 = vmatpush1.bf16.msra.mxu0 0
    %2939 = vmatprep.subr.bf16.mxu0 0
    %2940 = vmatpush1.bf16.msra.mxu0 0
    %2941 = vmatprep.subr.bf16.mxu0 0
    %2942 = vmatpush1.bf16.msra.mxu0 0
    %2943 = vmatprep.subr.bf16.mxu0 0
    %2944 = vmatpush1.bf16.msra.mxu0 0
    %2945 = vmatprep.subr.bf16.mxu0 0
    %2946 = vmatpush1.bf16.msra.mxu0 0
    %2947 = vmatprep.subr.bf16.mxu0 0
    %2948 = vmatpush1.bf16.msra.mxu0 0
    %2949 = vmatprep.subr.bf16.mxu0 0
    %2950 = vmatpush1.bf16.msra.mxu0 0
    %2951 = vmatprep.subr.bf16.mxu0 0
    %2952 = vmatpush1.bf16.msra.mxu0 0
    %2953 = vmatprep.subr.bf16.mxu0 0
    %2954 = vmatpush1.bf16.msra.mxu0 0
    %2955 = vmatprep.subr.bf16.mxu0 0
    %2956 = vmatpush1.bf16.msra.mxu0 0
    %2957 = vmatprep.mubr.bf16.mxu0 0
    %2958 = vmatmul.mubr.bf16.gmra.mrb[0].mxu0 %v2711
    %v2959 = vpop.f32.mrb[0].mxu0
    %v2960 = vadd.f32 0.0, %v2959
    %v2961 = vpop.f32.mrb[0].mxu0
    %v2962 = vadd.f32 0.0, %v2961
    %v2963 = vpop.f32.mrb[0].mxu0
    %v2964 = vpop.f32.mrb[0].mxu0
    %2965 = vdwg.mxu0
    %2966 = vmatprep.subr.bf16.mxu0 %v2747
    %2967 = vmatpush1.bf16.msra.mxu0 %v2744
    %2968 = vmatprep.subr.bf16.mxu0 0
    %2969 = vmatpush1.bf16.msra.mxu0 0
    %2970 = vmatprep.subr.bf16.mxu0 0
    %2971 = vmatpush1.bf16.msra.mxu0 0
    %2972 = vmatprep.subr.bf16.mxu0 0
    %2973 = vmatpush1.bf16.msra.mxu0 0
    %2974 = vmatprep.subr.bf16.mxu0 0
    %2975 = vmatpush1.bf16.msra.mxu0 0
    %2976 = vmatprep.subr.bf16.mxu0 0
    %2977 = vmatpush1.bf16.msra.mxu0 0
    %2978 = vmatprep.subr.bf16.mxu0 0
    %2979 = vmatpush1.bf16.msra.mxu0 0
    %2980 = vmatprep.subr.bf16.mxu0 0
    %2981 = vmatpush1.bf16.msra.mxu0 0
    %2982 = vmatprep.subr.bf16.mxu0 0
    %2983 = vmatpush1.bf16.msra.mxu0 0
    %2984 = vmatprep.subr.bf16.mxu0 0
    %2985 = vmatpush1.bf16.msra.mxu0 0
    %2986 = vmatprep.subr.bf16.mxu0 0
    %2987 = vmatpush1.bf16.msra.mxu0 0
    %2988 = vmatprep.subr.bf16.mxu0 0
    %2989 = vmatpush1.bf16.msra.mxu0 0
    %2990 = vmatprep.subr.bf16.mxu0 0
    %2991 = vmatpush1.bf16.msra.mxu0 0
    %2992 = vmatprep.subr.bf16.mxu0 0
    %2993 = vmatpush1.bf16.msra.mxu0 0
    %2994 = vmatprep.subr.bf16.mxu0 0
    %2995 = vmatpush1.bf16.msra.mxu0 0
    %2996 = vmatprep.subr.bf16.mxu0 0
    %2997 = vmatpush1.bf16.msra.mxu0 0
    %2998 = vmatprep.mubr.bf16.mxu0 0
    %2999 = vmatmul.mubr.bf16.gmra.mrb[0].mxu0 %v2711
    %v3000 = vpop.f32.mrb[0].mxu0
    %v3001 = vadd.f32 0.0, %v3000
    %v3002 = vpop.f32.mrb[0].mxu0
    %v3003 = vadd.f32 0.0, %v3002
    %v3004 = vpop.f32.mrb[0].mxu0
    %v3005 = vpop.f32.mrb[0].mxu0
    %3006 = vdwg.mxu0
    %3007 = vmatprep.subr.bf16.mxu0 %v2753
    %3008 = vmatpush1.bf16.msra.mxu0 %v2750
    %3009 = vmatprep.subr.bf16.mxu0 0
    %3010 = vmatpush1.bf16.msra.mxu0 0
    %3011 = vmatprep.subr.bf16.mxu0 0
    %3012 = vmatpush1.bf16.msra.mxu0 0
    %3013 = vmatprep.subr.bf16.mxu0 0
    %3014 = vmatpush1.bf16.msra.mxu0 0
    %3015 = vmatprep.subr.bf16.mxu0 0
    %3016 = vmatpush1.bf16.msra.mxu0 0
    %3017 = vmatprep.subr.bf16.mxu0 0
    %3018 = vmatpush1.bf16.msra.mxu0 0
    %3019 = vmatprep.subr.bf16.mxu0 0
    %3020 = vmatpush1.bf16.msra.mxu0 0
    %3021 = vmatprep.subr.bf16.mxu0 0
    %3022 = vmatpush1.bf16.msra.mxu0 0
    %3023 = vmatprep.subr.bf16.mxu0 0
    %3024 = vmatpush1.bf16.msra.mxu0 0
    %3025 = vmatprep.subr.bf16.mxu0 0
    %3026 = vmatpush1.bf16.msra.mxu0 0
    %3027 = vmatprep.subr.bf16.mxu0 0
    %3028 = vmatpush1.bf16.msra.mxu0 0
    %3029 = vmatprep.subr.bf16.mxu0 0
    %3030 = vmatpush1.bf16.msra.mxu0 0
    %3031 = vmatprep.subr.bf16.mxu0 0
    %3032 = vmatpush1.bf16.msra.mxu0 0
    %3033 = vmatprep.subr.bf16.mxu0 0
    %3034 = vmatpush1.bf16.msra.mxu0 0
    %3035 = vmatprep.subr.bf16.mxu0 0
    %3036 = vmatpush1.bf16.msra.mxu0 0
    %3037 = vmatprep.subr.bf16.mxu0 0
    %3038 = vmatpush1.bf16.msra.mxu0 0
    %3039 = vmatprep.mubr.bf16.mxu0 0
    %3040 = vmatmul.mubr.bf16.gmra.mrb[0].mxu0 %v2711
    %v3041 = vpop.f32.mrb[0].mxu0
    %v3042 = vadd.f32 0.0, %v3041
    %v3043 = vpop.f32.mrb[0].mxu0
    %v3044 = vadd.f32 0.0, %v3043
    %v3045 = vpop.f32.mrb[0].mxu0
    %v3046 = vpop.f32.mrb[0].mxu0
    %3047 = vdwg.mxu0
    %3048 = vmatprep.subr.bf16.mxu0 %v2759
    %3049 = vmatpush1.bf16.msra.mxu0 %v2756
    %3050 = vmatprep.subr.bf16.mxu0 0
    %3051 = vmatpush1.bf16.msra.mxu0 0
    %3052 = vmatprep.subr.bf16.mxu0 0
    %3053 = vmatpush1.bf16.msra.mxu0 0
    %3054 = vmatprep.subr.bf16.mxu0 0
    %3055 = vmatpush1.bf16.msra.mxu0 0
    %3056 = vmatprep.subr.bf16.mxu0 0
    %3057 = vmatpush1.bf16.msra.mxu0 0
    %3058 = vmatprep.subr.bf16.mxu0 0
    %3059 = vmatpush1.bf16.msra.mxu0 0
    %3060 = vmatprep.subr.bf16.mxu0 0
    %3061 = vmatpush1.bf16.msra.mxu0 0
    %3062 = vmatprep.subr.bf16.mxu0 0
    %3063 = vmatpush1.bf16.msra.mxu0 0
    %3064 = vmatprep.subr.bf16.mxu0 0
    %3065 = vmatpush1.bf16.msra.mxu0 0
    %3066 = vmatprep.subr.bf16.mxu0 0
    %3067 = vmatpush1.bf16.msra.mxu0 0
    %3068 = vmatprep.subr.bf16.mxu0 0
    %3069 = vmatpush1.bf16.msra.mxu0 0
    %3070 = vmatprep.subr.bf16.mxu0 0
    %3071 = vmatpush1.bf16.msra.mxu0 0
    %3072 = vmatprep.subr.bf16.mxu0 0
    %3073 = vmatpush1.bf16.msra.mxu0 0
    %3074 = vmatprep.subr.bf16.mxu0 0
    %3075 = vmatpush1.bf16.msra.mxu0 0
    %3076 = vmatprep.subr.bf16.mxu0 0
    %3077 = vmatpush1.bf16.msra.mxu0 0
    %3078 = vmatprep.subr.bf16.mxu0 0
    %3079 = vmatpush1.bf16.msra.mxu0 0
    %3080 = vmatprep.mubr.bf16.mxu0 0
    %3081 = vmatmul.mubr.bf16.gmra.mrb[0].mxu0 %v2711
    %v3082 = vpop.f32.mrb[0].mxu0
    %v3083 = vadd.f32 0.0, %v3082
    %v3084 = vpop.f32.mrb[0].mxu0
    %v3085 = vadd.f32 0.0, %v3084
    %v3086 = vpop.f32.mrb[0].mxu0
    %v3087 = vpop.f32.mrb[0].mxu0
    %3088 = vdwg.mxu0
    %v3089 = vadd.f32 %v2060, %v2796
    %v3090 = vadd.f32 %v2062, %v2798
    %v3091 = vadd.f32 %v2101, %v2837
    %v3092 = vadd.f32 %v2103, %v2839
    %v3093 = vadd.f32 %v2142, %v2878
    %v3094 = vadd.f32 %v2144, %v2880
    %v3095 = vadd.f32 %v2183, %v2919
    %v3096 = vadd.f32 %v2185, %v2921
    %v3097 = vadd.f32 %v2224, %v2960
    %v3098 = vadd.f32 %v2226, %v2962
    %v3099 = vadd.f32 %v2265, %v3001
    %v3100 = vadd.f32 %v2267, %v3003
    %v3101 = vadd.f32 %v2306, %v3042
    %v3102 = vadd.f32 %v2308, %v3044
    %v3103 = vadd.f32 %v2347, %v3083
    %v3104 = vadd.f32 %v2349, %v3085
    %v3105 = vld [vmem:[#allocation3] sm:$0xff]
    %v3106 = vld [vmem:[#allocation3 + $0x8] sm:$0xff]
    %v3107 = vld [vmem:[#allocation3 + $0x10] sm:$0xff]
    %v3108 = vld [vmem:[#allocation3 + $0x18] sm:$0xff]
    %v3109 = vld [vmem:[#allocation3 + $0x20] sm:$0xff]
    %v3110 = vld [vmem:[#allocation3 + $0x28] sm:$0xff]
    %v3111 = vld [vmem:[#allocation3 + $0x30] sm:$0xff]
    %v3112 = vld [vmem:[#allocation3 + $0x38] sm:$0xff]
    %v3113 = vld [vmem:[#allocation3 + $0x40] sm:$0xf]
    %s3114 = scalar_lea.vmem %s4, 48
    %v3115 = vld [vmem:[%s3114] sm:$0xff]
    %v3116 = vld [vmem:[%s3114 + $0x8] sm:$0xff]
    %v3117 = vunpack.c.l.bf16 %v3115
    %v3118 = vunpack.c.h.bf16 %v3115
    %v3119 = vunpack.c.l.bf16 %v3116
    %v3120 = vunpack.c.h.bf16 %v3116
    %v3125 = vlaneseq
    %v3126 = vshrl.u32 %v3125, 7
    %v3127 = vsub.s32 0, %v3126
    %v3128 = vrot.slane %v3117, %v3127
    %v3129 = vlaneseq
    %v3130 = vshrl.u32 %v3129, 7
    %v3131 = vsub.s32 2, %v3130
    %v3132 = vrot.slane %v3117, %v3131
    %v3133 = vlaneseq
    %v3134 = vshrl.u32 %v3133, 7
    %v3135 = vsub.s32 4, %v3134
    %v3136 = vrot.slane %v3117, %v3135
    %v3137 = vlaneseq
    %v3138 = vshrl.u32 %v3137, 7
    %v3139 = vsub.s32 6, %v3138
    %v3140 = vrot.slane %v3117, %v3139
    %v3141 = vlaneseq
    %v3142 = vshrl.u32 %v3141, 7
    %v3143 = vsub.s32 0, %v3142
    %v3144 = vrot.slane %v3118, %v3143
    %v3145 = vlaneseq
    %v3146 = vshrl.u32 %v3145, 7
    %v3147 = vsub.s32 2, %v3146
    %v3148 = vrot.slane %v3118, %v3147
    %v3149 = vlaneseq
    %v3150 = vshrl.u32 %v3149, 7
    %v3151 = vsub.s32 4, %v3150
    %v3152 = vrot.slane %v3118, %v3151
    %v3153 = vlaneseq
    %v3154 = vshrl.u32 %v3153, 7
    %v3155 = vsub.s32 6, %v3154
    %v3156 = vrot.slane %v3118, %v3155
    %v3157 = vlaneseq
    %v3158 = vshrl.u32 %v3157, 7
    %v3159 = vsub.s32 0, %v3158
    %v3160 = vrot.slane %v3119, %v3159
    %v3161 = vlaneseq
    %v3162 = vshrl.u32 %v3161, 7
    %v3163 = vsub.s32 2, %v3162
    %v3164 = vrot.slane %v3119, %v3163
    %v3165 = vlaneseq
    %v3166 = vshrl.u32 %v3165, 7
    %v3167 = vsub.s32 4, %v3166
    %v3168 = vrot.slane %v3119, %v3167
    %v3169 = vlaneseq
    %v3170 = vshrl.u32 %v3169, 7
    %v3171 = vsub.s32 6, %v3170
    %v3172 = vrot.slane %v3119, %v3171
    %v3173 = vlaneseq
    %v3174 = vshrl.u32 %v3173, 7
    %v3175 = vsub.s32 0, %v3174
    %v3176 = vrot.slane %v3120, %v3175
    %v3177 = vlaneseq
    %v3178 = vshrl.u32 %v3177, 7
    %v3179 = vsub.s32 2, %v3178
    %v3180 = vrot.slane %v3120, %v3179
    %v3181 = vlaneseq
    %v3182 = vshrl.u32 %v3181, 7
    %v3183 = vsub.s32 4, %v3182
    %v3184 = vrot.slane %v3120, %v3183
    %v3185 = vlaneseq
    %v3186 = vshrl.u32 %v3185, 7
    %v3187 = vsub.s32 6, %v3186
    %v3188 = vrot.slane %v3120, %v3187
    %v3205 = vlaneseq
    %v3206 = vshrl.u32 %v3205, 7
    %v3207 = vsub.s32 0, %v3206
    %v3208 = vrot.slane %v3128, %v3207
    %v3209 = vlaneseq
    %v3210 = vshrl.u32 %v3209, 7
    %v3211 = vsub.s32 0, %v3210
    %v3212 = vrot.slane %v3132, %v3211
    %v3213 = vlaneseq
    %v3214 = vshrl.u32 %v3213, 7
    %v3215 = vsub.s32 0, %v3214
    %v3216 = vrot.slane %v3136, %v3215
    %v3217 = vlaneseq
    %v3218 = vshrl.u32 %v3217, 7
    %v3219 = vsub.s32 0, %v3218
    %v3220 = vrot.slane %v3140, %v3219
    %v3221 = vlaneseq
    %v3222 = vshrl.u32 %v3221, 7
    %v3223 = vsub.s32 0, %v3222
    %v3224 = vrot.slane %v3144, %v3223
    %v3225 = vlaneseq
    %v3226 = vshrl.u32 %v3225, 7
    %v3227 = vsub.s32 0, %v3226
    %v3228 = vrot.slane %v3148, %v3227
    %v3229 = vlaneseq
    %v3230 = vshrl.u32 %v3229, 7
    %v3231 = vsub.s32 0, %v3230
    %v3232 = vrot.slane %v3152, %v3231
    %v3233 = vlaneseq
    %v3234 = vshrl.u32 %v3233, 7
    %v3235 = vsub.s32 0, %v3234
    %v3236 = vrot.slane %v3156, %v3235
    %v3237 = vlaneseq
    %v3238 = vshrl.u32 %v3237, 7
    %v3239 = vsub.s32 0, %v3238
    %v3240 = vrot.slane %v3160, %v3239
    %v3241 = vlaneseq
    %v3242 = vshrl.u32 %v3241, 7
    %v3243 = vsub.s32 0, %v3242
    %v3244 = vrot.slane %v3164, %v3243
    %v3245 = vlaneseq
    %v3246 = vshrl.u32 %v3245, 7
    %v3247 = vsub.s32 0, %v3246
    %v3248 = vrot.slane %v3168, %v3247
    %v3249 = vlaneseq
    %v3250 = vshrl.u32 %v3249, 7
    %v3251 = vsub.s32 0, %v3250
    %v3252 = vrot.slane %v3172, %v3251
    %v3253 = vlaneseq
    %v3254 = vshrl.u32 %v3253, 7
    %v3255 = vsub.s32 0, %v3254
    %v3256 = vrot.slane %v3176, %v3255
    %v3257 = vlaneseq
    %v3258 = vshrl.u32 %v3257, 7
    %v3259 = vsub.s32 0, %v3258
    %v3260 = vrot.slane %v3180, %v3259
    %v3261 = vlaneseq
    %v3262 = vshrl.u32 %v3261, 7
    %v3263 = vsub.s32 0, %v3262
    %v3264 = vrot.slane %v3184, %v3263
    %v3265 = vlaneseq
    %v3266 = vshrl.u32 %v3265, 7
    %v3267 = vsub.s32 0, %v3266
    %v3268 = vrot.slane %v3188, %v3267
    %v3285 = vcombine.low %v3208, %v3212
    %v3286 = vcombine.low %v3216, %v3220
    %v3287 = vcombine.low %v3224, %v3228
    %v3288 = vcombine.low %v3232, %v3236
    %v3289 = vcombine.low %v3240, %v3244
    %v3290 = vcombine.low %v3248, %v3252
    %v3291 = vcombine.low %v3256, %v3260
    %v3292 = vcombine.low %v3264, %v3268
    %3293 = vrot.lane.b32.xlu0 %v3285, 127
    %v3294 = vpop.permute.xlu0 %3293
    %3295 = vrot.lane.b32.xlu0 %v3286, 127
    %v3296 = vpop.permute.xlu0 %3295
    %3297 = vrot.lane.b32.xlu0 %v3287, 127
    %v3298 = vpop.permute.xlu0 %3297
    %3299 = vrot.lane.b32.xlu0 %v3288, 127
    %v3300 = vpop.permute.xlu0 %3299
    %3301 = vrot.lane.b32.xlu0 %v3289, 127
    %v3302 = vpop.permute.xlu0 %3301
    %3303 = vrot.lane.b32.xlu0 %v3290, 127
    %v3304 = vpop.permute.xlu0 %3303
    %3305 = vrot.lane.b32.xlu0 %v3291, 127
    %v3306 = vpop.permute.xlu0 %3305
    %3307 = vrot.lane.b32.xlu0 %v3292, 127
    %v3308 = vpop.permute.xlu0 %3307
    %v3309 = vrot.slane %v3294, 4
    %v3310 = vrot.slane %v3296, 4
    %v3311 = vrot.slane %v3298, 4
    %v3312 = vrot.slane %v3300, 4
    %v3313 = vrot.slane %v3302, 4
    %v3314 = vrot.slane %v3304, 4
    %v3315 = vrot.slane %v3306, 4
    %v3316 = vrot.slane %v3308, 4
    %vm3317 = vcmask 1039360
    %v3318 = vsel %vm3317, %v3309, %v3294
    %v3319 = vsel %vm1102, %v3309, %v3310
    %v3320 = vsel %vm3317, %v3319, %v3296
    %v3321 = vsel %vm1102, %v3310, %v3311
    %v3322 = vsel %vm3317, %v3321, %v3298
    %v3323 = vsel %vm1102, %v3311, %v3312
    %v3324 = vsel %vm3317, %v3323, %v3300
    %v3325 = vsel %vm1102, %v3312, %v3313
    %v3326 = vsel %vm3317, %v3325, %v3302
    %v3327 = vsel %vm1102, %v3313, %v3314
    %v3328 = vsel %vm3317, %v3327, %v3304
    %v3329 = vsel %vm1102, %v3314, %v3315
    %v3330 = vsel %vm3317, %v3329, %v3306
    %v3331 = vsel %vm1102, %v3315, %v3316
    %v3332 = vsel %vm3317, %v3331, %v3308
    %v3342 = vmul.f32 %v3105, %v3318
    %v3343 = vmul.f32 %v3106, %v3320
    %v3344 = vmul.f32 %v3107, %v3322
    %v3345 = vmul.f32 %v3108, %v3324
    %v3346 = vmul.f32 %v3109, %v3326
    %v3347 = vmul.f32 %v3110, %v3328
    %v3348 = vmul.f32 %v3111, %v3330
    %v3349 = vmul.f32 %v3112, %v3332
    %v3350 = vmul.f32 %v3113, %v3316
    %v3359 = vcombine.high %v3342, %v3342
    %v3360 = vcombine.high %v3343, %v3343
    %v3361 = vcombine.high %v3344, %v3344
    %v3362 = vcombine.high %v3345, %v3345
    %v3363 = vcombine.high %v3346, %v3346
    %v3364 = vcombine.high %v3347, %v3347
    %v3365 = vcombine.high %v3348, %v3348
    %v3366 = vcombine.high %v3349, %v3349
    %v3375 = vpack.c.bf16 %v3342, %v3342
    %v3376 = vpack.c.bf16 %v3359, %v3359
    %v3377 = vpack.c.bf16 %v3343, %v3343
    %v3378 = vpack.c.bf16 %v3360, %v3360
    %v3379 = vpack.c.bf16 %v3344, %v3344
    %v3380 = vpack.c.bf16 %v3361, %v3361
    %v3381 = vpack.c.bf16 %v3345, %v3345
    %v3382 = vpack.c.bf16 %v3362, %v3362
    %v3383 = vpack.c.bf16 %v3346, %v3346
    %v3384 = vpack.c.bf16 %v3363, %v3363
    %v3385 = vpack.c.bf16 %v3347, %v3347
    %v3386 = vpack.c.bf16 %v3364, %v3364
    %v3387 = vpack.c.bf16 %v3348, %v3348
    %v3388 = vpack.c.bf16 %v3365, %v3365
    %v3389 = vpack.c.bf16 %v3349, %v3349
    %v3390 = vpack.c.bf16 %v3366, %v3366
    %v3391 = vpack.c.bf16 %v3350, %v3350
    %s3392 = scalar_lea.vmem %s2, 12
    %v3393 = vld [vmem:[%s3392] sm:$0xf]
    %3411 = vrot.lane.b32.xlu0 %v3375, 1
    %v3412 = vpop.permute.xlu0 %3411
    %3413 = vrot.lane.b32.xlu0 %v3376, 1
    %v3414 = vpop.permute.xlu0 %3413
    %3415 = vrot.lane.b32.xlu0 %v3377, 1
    %v3416 = vpop.permute.xlu0 %3415
    %3417 = vrot.lane.b32.xlu0 %v3378, 1
    %v3418 = vpop.permute.xlu0 %3417
    %3419 = vrot.lane.b32.xlu0 %v3379, 1
    %v3420 = vpop.permute.xlu0 %3419
    %3421 = vrot.lane.b32.xlu0 %v3380, 1
    %v3422 = vpop.permute.xlu0 %3421
    %3423 = vrot.lane.b32.xlu0 %v3381, 1
    %v3424 = vpop.permute.xlu0 %3423
    %3425 = vrot.lane.b32.xlu0 %v3382, 1
    %v3426 = vpop.permute.xlu0 %3425
    %3427 = vrot.lane.b32.xlu0 %v3383, 1
    %v3428 = vpop.permute.xlu0 %3427
    %3429 = vrot.lane.b32.xlu0 %v3384, 1
    %v3430 = vpop.permute.xlu0 %3429
    %3431 = vrot.lane.b32.xlu0 %v3385, 1
    %v3432 = vpop.permute.xlu0 %3431
    %3433 = vrot.lane.b32.xlu0 %v3386, 1
    %v3434 = vpop.permute.xlu0 %3433
    %3435 = vrot.lane.b32.xlu0 %v3387, 1
    %v3436 = vpop.permute.xlu0 %3435
    %3437 = vrot.lane.b32.xlu0 %v3388, 1
    %v3438 = vpop.permute.xlu0 %3437
    %3439 = vrot.lane.b32.xlu0 %v3389, 1
    %v3440 = vpop.permute.xlu0 %3439
    %3441 = vrot.lane.b32.xlu0 %v3390, 1
    %v3442 = vpop.permute.xlu0 %3441
    %3443 = vrot.lane.b32.xlu0 %v3391, 1
    %v3444 = vpop.permute.xlu0 %3443
    %vm3445 = vcmask 7168
    %v3446 = vsel %vm3445, %v3412, %v3414
    %v3447 = vsel %vm3445, %v3414, %v3416
    %v3448 = vsel %vm3445, %v3416, %v3418
    %v3449 = vsel %vm3445, %v3418, %v3420
    %v3450 = vsel %vm3445, %v3420, %v3422
    %v3451 = vsel %vm3445, %v3422, %v3424
    %v3452 = vsel %vm3445, %v3424, %v3426
    %v3453 = vsel %vm3445, %v3426, %v3428
    %v3454 = vsel %vm3445, %v3428, %v3430
    %v3455 = vsel %vm3445, %v3430, %v3432
    %v3456 = vsel %vm3445, %v3432, %v3434
    %v3457 = vsel %vm3445, %v3434, %v3436
    %v3458 = vsel %vm3445, %v3436, %v3438
    %v3459 = vsel %vm3445, %v3438, %v3440
    %v3460 = vsel %vm3445, %v3440, %v3442
    %v3461 = vsel %vm3445, %v3442, %v3444
    %v3463 = vsel %vm1525, %v3393, 0
    %v3466 = vsel %vm1529, %v3446, 0
    %v3469 = vsel %vm1529, %v3447, 0
    %v3472 = vsel %vm1529, %v3448, 0
    %v3475 = vsel %vm1529, %v3449, 0
    %v3478 = vsel %vm1529, %v3450, 0
    %v3481 = vsel %vm1529, %v3451, 0
    %v3484 = vsel %vm1529, %v3452, 0
    %v3487 = vsel %vm1529, %v3453, 0
    %v3490 = vsel %vm1529, %v3454, 0
    %v3493 = vsel %vm1529, %v3455, 0
    %v3496 = vsel %vm1529, %v3456, 0
    %v3499 = vsel %vm1529, %v3457, 0
    %v3502 = vsel %vm1529, %v3458, 0
    %v3505 = vsel %vm1529, %v3459, 0
    %v3508 = vsel %vm1529, %v3460, 0
    %v3511 = vsel %vm1529, %v3461, 0
    %3513 = vmatprep.subr.bf16.mxu0 %v3469
    %3514 = vmatpush1.bf16.msra.mxu0 %v3466
    %3515 = vmatprep.subr.bf16.mxu0 0
    %3516 = vmatpush1.bf16.msra.mxu0 0
    %3517 = vmatprep.subr.bf16.mxu0 0
    %3518 = vmatpush1.bf16.msra.mxu0 0
    %3519 = vmatprep.subr.bf16.mxu0 0
    %3520 = vmatpush1.bf16.msra.mxu0 0
    %3521 = vmatprep.subr.bf16.mxu0 0
    %3522 = vmatpush1.bf16.msra.mxu0 0
    %3523 = vmatprep.subr.bf16.mxu0 0
    %3524 = vmatpush1.bf16.msra.mxu0 0
    %3525 = vmatprep.subr.bf16.mxu0 0
    %3526 = vmatpush1.bf16.msra.mxu0 0
    %3527 = vmatprep.subr.bf16.mxu0 0
    %3528 = vmatpush1.bf16.msra.mxu0 0
    %3529 = vmatprep.subr.bf16.mxu0 0
    %3530 = vmatpush1.bf16.msra.mxu0 0
    %3531 = vmatprep.subr.bf16.mxu0 0
    %3532 = vmatpush1.bf16.msra.mxu0 0
    %3533 = vmatprep.subr.bf16.mxu0 0
    %3534 = vmatpush1.bf16.msra.mxu0 0
    %3535 = vmatprep.subr.bf16.mxu0 0
    %3536 = vmatpush1.bf16.msra.mxu0 0
    %3537 = vmatprep.subr.bf16.mxu0 0
    %3538 = vmatpush1.bf16.msra.mxu0 0
    %3539 = vmatprep.subr.bf16.mxu0 0
    %3540 = vmatpush1.bf16.msra.mxu0 0
    %3541 = vmatprep.subr.bf16.mxu0 0
    %3542 = vmatpush1.bf16.msra.mxu0 0
    %3543 = vmatprep.subr.bf16.mxu0 0
    %3544 = vmatpush1.bf16.msra.mxu0 0
    %3545 = vmatprep.mubr.bf16.mxu0 0
    %3546 = vmatmul.mubr.bf16.gmra.mrb[0].mxu0 %v3463
    %v3547 = vpop.f32.mrb[0].mxu0
    %v3548 = vadd.f32 0.0, %v3547
    %v3549 = vpop.f32.mrb[0].mxu0
    %v3550 = vadd.f32 0.0, %v3549
    %v3551 = vpop.f32.mrb[0].mxu0
    %v3552 = vpop.f32.mrb[0].mxu0
    %3553 = vdwg.mxu0
    %3554 = vmatprep.subr.bf16.mxu0 %v3475
    %3555 = vmatpush1.bf16.msra.mxu0 %v3472
    %3556 = vmatprep.subr.bf16.mxu0 0
    %3557 = vmatpush1.bf16.msra.mxu0 0
    %3558 = vmatprep.subr.bf16.mxu0 0
    %3559 = vmatpush1.bf16.msra.mxu0 0
    %3560 = vmatprep.subr.bf16.mxu0 0
    %3561 = vmatpush1.bf16.msra.mxu0 0
    %3562 = vmatprep.subr.bf16.mxu0 0
    %3563 = vmatpush1.bf16.msra.mxu0 0
    %3564 = vmatprep.subr.bf16.mxu0 0
    %3565 = vmatpush1.bf16.msra.mxu0 0
    %3566 = vmatprep.subr.bf16.mxu0 0
    %3567 = vmatpush1.bf16.msra.mxu0 0
    %3568 = vmatprep.subr.bf16.mxu0 0
    %3569 = vmatpush1.bf16.msra.mxu0 0
    %3570 = vmatprep.subr.bf16.mxu0 0
    %3571 = vmatpush1.bf16.msra.mxu0 0
    %3572 = vmatprep.subr.bf16.mxu0 0
    %3573 = vmatpush1.bf16.msra.mxu0 0
    %3574 = vmatprep.subr.bf16.mxu0 0
    %3575 = vmatpush1.bf16.msra.mxu0 0
    %3576 = vmatprep.subr.bf16.mxu0 0
    %3577 = vmatpush1.bf16.msra.mxu0 0
    %3578 = vmatprep.subr.bf16.mxu0 0
    %3579 = vmatpush1.bf16.msra.mxu0 0
    %3580 = vmatprep.subr.bf16.mxu0 0
    %3581 = vmatpush1.bf16.msra.mxu0 0
    %3582 = vmatprep.subr.bf16.mxu0 0
    %3583 = vmatpush1.bf16.msra.mxu0 0
    %3584 = vmatprep.subr.bf16.mxu0 0
    %3585 = vmatpush1.bf16.msra.mxu0 0
    %3586 = vmatprep.mubr.bf16.mxu0 0
    %3587 = vmatmul.mubr.bf16.gmra.mrb[0].mxu0 %v3463
    %v3588 = vpop.f32.mrb[0].mxu0
    %v3589 = vadd.f32 0.0, %v3588
    %v3590 = vpop.f32.mrb[0].mxu0
    %v3591 = vadd.f32 0.0, %v3590
    %v3592 = vpop.f32.mrb[0].mxu0
    %v3593 = vpop.f32.mrb[0].mxu0
    %3594 = vdwg.mxu0
    %3595 = vmatprep.subr.bf16.mxu0 %v3481
    %3596 = vmatpush1.bf16.msra.mxu0 %v3478
    %3597 = vmatprep.subr.bf16.mxu0 0
    %3598 = vmatpush1.bf16.msra.mxu0 0
    %3599 = vmatprep.subr.bf16.mxu0 0
    %3600 = vmatpush1.bf16.msra.mxu0 0
    %3601 = vmatprep.subr.bf16.mxu0 0
    %3602 = vmatpush1.bf16.msra.mxu0 0
    %3603 = vmatprep.subr.bf16.mxu0 0
    %3604 = vmatpush1.bf16.msra.mxu0 0
    %3605 = vmatprep.subr.bf16.mxu0 0
    %3606 = vmatpush1.bf16.msra.mxu0 0
    %3607 = vmatprep.subr.bf16.mxu0 0
    %3608 = vmatpush1.bf16.msra.mxu0 0
    %3609 = vmatprep.subr.bf16.mxu0 0
    %3610 = vmatpush1.bf16.msra.mxu0 0
    %3611 = vmatprep.subr.bf16.mxu0 0
    %3612 = vmatpush1.bf16.msra.mxu0 0
    %3613 = vmatprep.subr.bf16.mxu0 0
    %3614 = vmatpush1.bf16.msra.mxu0 0
    %3615 = vmatprep.subr.bf16.mxu0 0
    %3616 = vmatpush1.bf16.msra.mxu0 0
    %3617 = vmatprep.subr.bf16.mxu0 0
    %3618 = vmatpush1.bf16.msra.mxu0 0
    %3619 = vmatprep.subr.bf16.mxu0 0
    %3620 = vmatpush1.bf16.msra.mxu0 0
    %3621 = vmatprep.subr.bf16.mxu0 0
    %3622 = vmatpush1.bf16.msra.mxu0 0
    %3623 = vmatprep.subr.bf16.mxu0 0
    %3624 = vmatpush1.bf16.msra.mxu0 0
    %3625 = vmatprep.subr.bf16.mxu0 0
    %3626 = vmatpush1.bf16.msra.mxu0 0
    %3627 = vmatprep.mubr.bf16.mxu0 0
    %3628 = vmatmul.mubr.bf16.gmra.mrb[0].mxu0 %v3463
    %v3629 = vpop.f32.mrb[0].mxu0
    %v3630 = vadd.f32 0.0, %v3629
    %v3631 = vpop.f32.mrb[0].mxu0
    %v3632 = vadd.f32 0.0, %v3631
    %v3633 = vpop.f32.mrb[0].mxu0
    %v3634 = vpop.f32.mrb[0].mxu0
    %3635 = vdwg.mxu0
    %3636 = vmatprep.subr.bf16.mxu0 %v3487
    %3637 = vmatpush1.bf16.msra.mxu0 %v3484
    %3638 = vmatprep.subr.bf16.mxu0 0
    %3639 = vmatpush1.bf16.msra.mxu0 0
    %3640 = vmatprep.subr.bf16.mxu0 0
    %3641 = vmatpush1.bf16.msra.mxu0 0
    %3642 = vmatprep.subr.bf16.mxu0 0
    %3643 = vmatpush1.bf16.msra.mxu0 0
    %3644 = vmatprep.subr.bf16.mxu0 0
    %3645 = vmatpush1.bf16.msra.mxu0 0
    %3646 = vmatprep.subr.bf16.mxu0 0
    %3647 = vmatpush1.bf16.msra.mxu0 0
    %3648 = vmatprep.subr.bf16.mxu0 0
    %3649 = vmatpush1.bf16.msra.mxu0 0
    %3650 = vmatprep.subr.bf16.mxu0 0
    %3651 = vmatpush1.bf16.msra.mxu0 0
    %3652 = vmatprep.subr.bf16.mxu0 0
    %3653 = vmatpush1.bf16.msra.mxu0 0
    %3654 = vmatprep.subr.bf16.mxu0 0
    %3655 = vmatpush1.bf16.msra.mxu0 0
    %3656 = vmatprep.subr.bf16.mxu0 0
    %3657 = vmatpush1.bf16.msra.mxu0 0
    %3658 = vmatprep.subr.bf16.mxu0 0
    %3659 = vmatpush1.bf16.msra.mxu0 0
    %3660 = vmatprep.subr.bf16.mxu0 0
    %3661 = vmatpush1.bf16.msra.mxu0 0
    %3662 = vmatprep.subr.bf16.mxu0 0
    %3663 = vmatpush1.bf16.msra.mxu0 0
    %3664 = vmatprep.subr.bf16.mxu0 0
    %3665 = vmatpush1.bf16.msra.mxu0 0
    %3666 = vmatprep.subr.bf16.mxu0 0
    %3667 = vmatpush1.bf16.msra.mxu0 0
    %3668 = vmatprep.mubr.bf16.mxu0 0
    %3669 = vmatmul.mubr.bf16.gmra.mrb[0].mxu0 %v3463
    %v3670 = vpop.f32.mrb[0].mxu0
    %v3671 = vadd.f32 0.0, %v3670
    %v3672 = vpop.f32.mrb[0].mxu0
    %v3673 = vadd.f32 0.0, %v3672
    %v3674 = vpop.f32.mrb[0].mxu0
    %v3675 = vpop.f32.mrb[0].mxu0
    %3676 = vdwg.mxu0
    %3677 = vmatprep.subr.bf16.mxu0 %v3493
    %3678 = vmatpush1.bf16.msra.mxu0 %v3490
    %3679 = vmatprep.subr.bf16.mxu0 0
    %3680 = vmatpush1.bf16.msra.mxu0 0
    %3681 = vmatprep.subr.bf16.mxu0 0
    %3682 = vmatpush1.bf16.msra.mxu0 0
    %3683 = vmatprep.subr.bf16.mxu0 0
    %3684 = vmatpush1.bf16.msra.mxu0 0
    %3685 = vmatprep.subr.bf16.mxu0 0
    %3686 = vmatpush1.bf16.msra.mxu0 0
    %3687 = vmatprep.subr.bf16.mxu0 0
    %3688 = vmatpush1.bf16.msra.mxu0 0
    %3689 = vmatprep.subr.bf16.mxu0 0
    %3690 = vmatpush1.bf16.msra.mxu0 0
    %3691 = vmatprep.subr.bf16.mxu0 0
    %3692 = vmatpush1.bf16.msra.mxu0 0
    %3693 = vmatprep.subr.bf16.mxu0 0
    %3694 = vmatpush1.bf16.msra.mxu0 0
    %3695 = vmatprep.subr.bf16.mxu0 0
    %3696 = vmatpush1.bf16.msra.mxu0 0
    %3697 = vmatprep.subr.bf16.mxu0 0
    %3698 = vmatpush1.bf16.msra.mxu0 0
    %3699 = vmatprep.subr.bf16.mxu0 0
    %3700 = vmatpush1.bf16.msra.mxu0 0
    %3701 = vmatprep.subr.bf16.mxu0 0
    %3702 = vmatpush1.bf16.msra.mxu0 0
    %3703 = vmatprep.subr.bf16.mxu0 0
    %3704 = vmatpush1.bf16.msra.mxu0 0
    %3705 = vmatprep.subr.bf16.mxu0 0
    %3706 = vmatpush1.bf16.msra.mxu0 0
    %3707 = vmatprep.subr.bf16.mxu0 0
    %3708 = vmatpush1.bf16.msra.mxu0 0
    %3709 = vmatprep.mubr.bf16.mxu0 0
    %3710 = vmatmul.mubr.bf16.gmra.mrb[0].mxu0 %v3463
    %v3711 = vpop.f32.mrb[0].mxu0
    %v3712 = vadd.f32 0.0, %v3711
    %v3713 = vpop.f32.mrb[0].mxu0
    %v3714 = vadd.f32 0.0, %v3713
    %v3715 = vpop.f32.mrb[0].mxu0
    %v3716 = vpop.f32.mrb[0].mxu0
    %3717 = vdwg.mxu0
    %3718 = vmatprep.subr.bf16.mxu0 %v3499
    %3719 = vmatpush1.bf16.msra.mxu0 %v3496
    %3720 = vmatprep.subr.bf16.mxu0 0
    %3721 = vmatpush1.bf16.msra.mxu0 0
    %3722 = vmatprep.subr.bf16.mxu0 0
    %3723 = vmatpush1.bf16.msra.mxu0 0
    %3724 = vmatprep.subr.bf16.mxu0 0
    %3725 = vmatpush1.bf16.msra.mxu0 0
    %3726 = vmatprep.subr.bf16.mxu0 0
    %3727 = vmatpush1.bf16.msra.mxu0 0
    %3728 = vmatprep.subr.bf16.mxu0 0
    %3729 = vmatpush1.bf16.msra.mxu0 0
    %3730 = vmatprep.subr.bf16.mxu0 0
    %3731 = vmatpush1.bf16.msra.mxu0 0
    %3732 = vmatprep.subr.bf16.mxu0 0
    %3733 = vmatpush1.bf16.msra.mxu0 0
    %3734 = vmatprep.subr.bf16.mxu0 0
    %3735 = vmatpush1.bf16.msra.mxu0 0
    %3736 = vmatprep.subr.bf16.mxu0 0
    %3737 = vmatpush1.bf16.msra.mxu0 0
    %3738 = vmatprep.subr.bf16.mxu0 0
    %3739 = vmatpush1.bf16.msra.mxu0 0
    %3740 = vmatprep.subr.bf16.mxu0 0
    %3741 = vmatpush1.bf16.msra.mxu0 0
    %3742 = vmatprep.subr.bf16.mxu0 0
    %3743 = vmatpush1.bf16.msra.mxu0 0
    %3744 = vmatprep.subr.bf16.mxu0 0
    %3745 = vmatpush1.bf16.msra.mxu0 0
    %3746 = vmatprep.subr.bf16.mxu0 0
    %3747 = vmatpush1.bf16.msra.mxu0 0
    %3748 = vmatprep.subr.bf16.mxu0 0
    %3749 = vmatpush1.bf16.msra.mxu0 0
    %3750 = vmatprep.mubr.bf16.mxu0 0
    %3751 = vmatmul.mubr.bf16.gmra.mrb[0].mxu0 %v3463
    %v3752 = vpop.f32.mrb[0].mxu0
    %v3753 = vadd.f32 0.0, %v3752
    %v3754 = vpop.f32.mrb[0].mxu0
    %v3755 = vadd.f32 0.0, %v3754
    %v3756 = vpop.f32.mrb[0].mxu0
    %v3757 = vpop.f32.mrb[0].mxu0
    %3758 = vdwg.mxu0
    %3759 = vmatprep.subr.bf16.mxu0 %v3505
    %3760 = vmatpush1.bf16.msra.mxu0 %v3502
    %3761 = vmatprep.subr.bf16.mxu0 0
    %3762 = vmatpush1.bf16.msra.mxu0 0
    %3763 = vmatprep.subr.bf16.mxu0 0
    %3764 = vmatpush1.bf16.msra.mxu0 0
    %3765 = vmatprep.subr.bf16.mxu0 0
    %3766 = vmatpush1.bf16.msra.mxu0 0
    %3767 = vmatprep.subr.bf16.mxu0 0
    %3768 = vmatpush1.bf16.msra.mxu0 0
    %3769 = vmatprep.subr.bf16.mxu0 0
    %3770 = vmatpush1.bf16.msra.mxu0 0
    %3771 = vmatprep.subr.bf16.mxu0 0
    %3772 = vmatpush1.bf16.msra.mxu0 0
    %3773 = vmatprep.subr.bf16.mxu0 0
    %3774 = vmatpush1.bf16.msra.mxu0 0
    %3775 = vmatprep.subr.bf16.mxu0 0
    %3776 = vmatpush1.bf16.msra.mxu0 0
    %3777 = vmatprep.subr.bf16.mxu0 0
    %3778 = vmatpush1.bf16.msra.mxu0 0
    %3779 = vmatprep.subr.bf16.mxu0 0
    %3780 = vmatpush1.bf16.msra.mxu0 0
    %3781 = vmatprep.subr.bf16.mxu0 0
    %3782 = vmatpush1.bf16.msra.mxu0 0
    %3783 = vmatprep.subr.bf16.mxu0 0
    %3784 = vmatpush1.bf16.msra.mxu0 0
    %3785 = vmatprep.subr.bf16.mxu0 0
    %3786 = vmatpush1.bf16.msra.mxu0 0
    %3787 = vmatprep.subr.bf16.mxu0 0
    %3788 = vmatpush1.bf16.msra.mxu0 0
    %3789 = vmatprep.subr.bf16.mxu0 0
    %3790 = vmatpush1.bf16.msra.mxu0 0
    %3791 = vmatprep.mubr.bf16.mxu0 0
    %3792 = vmatmul.mubr.bf16.gmra.mrb[0].mxu0 %v3463
    %v3793 = vpop.f32.mrb[0].mxu0
    %v3794 = vadd.f32 0.0, %v3793
    %v3795 = vpop.f32.mrb[0].mxu0
    %v3796 = vadd.f32 0.0, %v3795
    %v3797 = vpop.f32.mrb[0].mxu0
    %v3798 = vpop.f32.mrb[0].mxu0
    %3799 = vdwg.mxu0
    %3800 = vmatprep.subr.bf16.mxu0 %v3511
    %3801 = vmatpush1.bf16.msra.mxu0 %v3508
    %3802 = vmatprep.subr.bf16.mxu0 0
    %3803 = vmatpush1.bf16.msra.mxu0 0
    %3804 = vmatprep.subr.bf16.mxu0 0
    %3805 = vmatpush1.bf16.msra.mxu0 0
    %3806 = vmatprep.subr.bf16.mxu0 0
    %3807 = vmatpush1.bf16.msra.mxu0 0
    %3808 = vmatprep.subr.bf16.mxu0 0
    %3809 = vmatpush1.bf16.msra.mxu0 0
    %3810 = vmatprep.subr.bf16.mxu0 0
    %3811 = vmatpush1.bf16.msra.mxu0 0
    %3812 = vmatprep.subr.bf16.mxu0 0
    %3813 = vmatpush1.bf16.msra.mxu0 0
    %3814 = vmatprep.subr.bf16.mxu0 0
    %3815 = vmatpush1.bf16.msra.mxu0 0
    %3816 = vmatprep.subr.bf16.mxu0 0
    %3817 = vmatpush1.bf16.msra.mxu0 0
    %3818 = vmatprep.subr.bf16.mxu0 0
    %3819 = vmatpush1.bf16.msra.mxu0 0
    %3820 = vmatprep.subr.bf16.mxu0 0
    %3821 = vmatpush1.bf16.msra.mxu0 0
    %3822 = vmatprep.subr.bf16.mxu0 0
    %3823 = vmatpush1.bf16.msra.mxu0 0
    %3824 = vmatprep.subr.bf16.mxu0 0
    %3825 = vmatpush1.bf16.msra.mxu0 0
    %3826 = vmatprep.subr.bf16.mxu0 0
    %3827 = vmatpush1.bf16.msra.mxu0 0
    %3828 = vmatprep.subr.bf16.mxu0 0
    %3829 = vmatpush1.bf16.msra.mxu0 0
    %3830 = vmatprep.subr.bf16.mxu0 0
    %3831 = vmatpush1.bf16.msra.mxu0 0
    %3832 = vmatprep.mubr.bf16.mxu0 0
    %3833 = vmatmul.mubr.bf16.gmra.mrb[0].mxu0 %v3463
    %v3834 = vpop.f32.mrb[0].mxu0
    %v3835 = vadd.f32 0.0, %v3834
    %v3836 = vpop.f32.mrb[0].mxu0
    %v3837 = vadd.f32 0.0, %v3836
    %v3838 = vpop.f32.mrb[0].mxu0
    %v3839 = vpop.f32.mrb[0].mxu0
    %3840 = vdwg.mxu0
    %v3841 = vadd.f32 %v3089, %v3548
    %v3842 = vadd.f32 %v3090, %v3550
    %v3843 = vadd.f32 %v3091, %v3589
    %v3844 = vadd.f32 %v3092, %v3591
    %v3845 = vadd.f32 %v3093, %v3630
    %v3846 = vadd.f32 %v3094, %v3632
    %v3847 = vadd.f32 %v3095, %v3671
    %v3848 = vadd.f32 %v3096, %v3673
    %v3849 = vadd.f32 %v3097, %v3712
    %v3850 = vadd.f32 %v3098, %v3714
    %v3851 = vadd.f32 %v3099, %v3753
    %v3852 = vadd.f32 %v3100, %v3755
    %v3853 = vadd.f32 %v3101, %v3794
    %v3854 = vadd.f32 %v3102, %v3796
    %v3855 = vadd.f32 %v3103, %v3835
    %v3856 = vadd.f32 %v3104, %v3837
    %v3857 = vld [vmem:[#allocation3 + $0x4] sm:$0xff]
    %v3858 = vld [vmem:[#allocation3 + $0xc] sm:$0xff]
    %v3859 = vld [vmem:[#allocation3 + $0x14] sm:$0xff]
    %v3860 = vld [vmem:[#allocation3 + $0x1c] sm:$0xff]
    %v3861 = vld [vmem:[#allocation3 + $0x24] sm:$0xff]
    %v3862 = vld [vmem:[#allocation3 + $0x2c] sm:$0xff]
    %v3863 = vld [vmem:[#allocation3 + $0x34] sm:$0xff]
    %v3864 = vld [vmem:[#allocation3 + $0x3c] sm:$0xff]
    %v3873 = vcombine.high %v3857, %v3857
    %v3874 = vcombine.high %v3858, %v3858
    %v3875 = vcombine.high %v3859, %v3859
    %v3876 = vcombine.high %v3860, %v3860
    %v3877 = vcombine.high %v3861, %v3861
    %v3878 = vcombine.high %v3862, %v3862
    %v3879 = vcombine.high %v3863, %v3863
    %v3880 = vcombine.high %v3864, %v3864
    %v3889 = vpack.c.bf16 %v3857, %v3857
    %v3890 = vpack.c.bf16 %v3873, %v3873
    %v3891 = vpack.c.bf16 %v3858, %v3858
    %v3892 = vpack.c.bf16 %v3874, %v3874
    %v3893 = vpack.c.bf16 %v3859, %v3859
    %v3894 = vpack.c.bf16 %v3875, %v3875
    %v3895 = vpack.c.bf16 %v3860, %v3860
    %v3896 = vpack.c.bf16 %v3876, %v3876
    %v3897 = vpack.c.bf16 %v3861, %v3861
    %v3898 = vpack.c.bf16 %v3877, %v3877
    %v3899 = vpack.c.bf16 %v3862, %v3862
    %v3900 = vpack.c.bf16 %v3878, %v3878
    %v3901 = vpack.c.bf16 %v3863, %v3863
    %v3902 = vpack.c.bf16 %v3879, %v3879
    %v3903 = vpack.c.bf16 %v3864, %v3864
    %v3904 = vpack.c.bf16 %v3880, %v3880
    %s3905 = scalar_lea.vmem %s2, 16
    %v3906 = vld [vmem:[%s3905] sm:$0xf]
    %v3908 = vsel %vm1525, %v3906, 0
    %v3911 = vsel %vm1529, %v3889, 0
    %v3914 = vsel %vm1529, %v3890, 0
    %v3917 = vsel %vm1529, %v3891, 0
    %v3920 = vsel %vm1529, %v3892, 0
    %v3923 = vsel %vm1529, %v3893, 0
    %v3926 = vsel %vm1529, %v3894, 0
    %v3929 = vsel %vm1529, %v3895, 0
    %v3932 = vsel %vm1529, %v3896, 0
    %v3935 = vsel %vm1529, %v3897, 0
    %v3938 = vsel %vm1529, %v3898, 0
    %v3941 = vsel %vm1529, %v3899, 0
    %v3944 = vsel %vm1529, %v3900, 0
    %v3947 = vsel %vm1529, %v3901, 0
    %v3950 = vsel %vm1529, %v3902, 0
    %v3953 = vsel %vm1529, %v3903, 0
    %v3956 = vsel %vm1529, %v3904, 0
    %3958 = vmatprep.subr.bf16.mxu0 %v3914
    %3959 = vmatpush1.bf16.msra.mxu0 %v3911
    %3960 = vmatprep.subr.bf16.mxu0 0
    %3961 = vmatpush1.bf16.msra.mxu0 0
    %3962 = vmatprep.subr.bf16.mxu0 0
    %3963 = vmatpush1.bf16.msra.mxu0 0
    %3964 = vmatprep.subr.bf16.mxu0 0
    %3965 = vmatpush1.bf16.msra.mxu0 0
    %3966 = vmatprep.subr.bf16.mxu0 0
    %3967 = vmatpush1.bf16.msra.mxu0 0
    %3968 = vmatprep.subr.bf16.mxu0 0
    %3969 = vmatpush1.bf16.msra.mxu0 0
    %3970 = vmatprep.subr.bf16.mxu0 0
    %3971 = vmatpush1.bf16.msra.mxu0 0
    %3972 = vmatprep.subr.bf16.mxu0 0
    %3973 = vmatpush1.bf16.msra.mxu0 0
    %3974 = vmatprep.subr.bf16.mxu0 0
    %3975 = vmatpush1.bf16.msra.mxu0 0
    %3976 = vmatprep.subr.bf16.mxu0 0
    %3977 = vmatpush1.bf16.msra.mxu0 0
    %3978 = vmatprep.subr.bf16.mxu0 0
    %3979 = vmatpush1.bf16.msra.mxu0 0
    %3980 = vmatprep.subr.bf16.mxu0 0
    %3981 = vmatpush1.bf16.msra.mxu0 0
    %3982 = vmatprep.subr.bf16.mxu0 0
    %3983 = vmatpush1.bf16.msra.mxu0 0
    %3984 = vmatprep.subr.bf16.mxu0 0
    %3985 = vmatpush1.bf16.msra.mxu0 0
    %3986 = vmatprep.subr.bf16.mxu0 0
    %3987 = vmatpush1.bf16.msra.mxu0 0
    %3988 = vmatprep.subr.bf16.mxu0 0
    %3989 = vmatpush1.bf16.msra.mxu0 0
    %3990 = vmatprep.mubr.bf16.mxu0 0
    %3991 = vmatmul.mubr.bf16.gmra.mrb[0].mxu0 %v3908
    %v3992 = vpop.f32.mrb[0].mxu0
    %v3993 = vadd.f32 0.0, %v3992
    %v3994 = vpop.f32.mrb[0].mxu0
    %v3995 = vadd.f32 0.0, %v3994
    %v3996 = vpop.f32.mrb[0].mxu0
    %v3997 = vpop.f32.mrb[0].mxu0
    %3998 = vdwg.mxu0
    %3999 = vmatprep.subr.bf16.mxu0 %v3920
    %4000 = vmatpush1.bf16.msra.mxu0 %v3917
    %4001 = vmatprep.subr.bf16.mxu0 0
    %4002 = vmatpush1.bf16.msra.mxu0 0
    %4003 = vmatprep.subr.bf16.mxu0 0
    %4004 = vmatpush1.bf16.msra.mxu0 0
    %4005 = vmatprep.subr.bf16.mxu0 0
    %4006 = vmatpush1.bf16.msra.mxu0 0
    %4007 = vmatprep.subr.bf16.mxu0 0
    %4008 = vmatpush1.bf16.msra.mxu0 0
    %4009 = vmatprep.subr.bf16.mxu0 0
    %4010 = vmatpush1.bf16.msra.mxu0 0
    %4011 = vmatprep.subr.bf16.mxu0 0
    %4012 = vmatpush1.bf16.msra.mxu0 0
    %4013 = vmatprep.subr.bf16.mxu0 0
    %4014 = vmatpush1.bf16.msra.mxu0 0
    %4015 = vmatprep.subr.bf16.mxu0 0
    %4016 = vmatpush1.bf16.msra.mxu0 0
    %4017 = vmatprep.subr.bf16.mxu0 0
    %4018 = vmatpush1.bf16.msra.mxu0 0
    %4019 = vmatprep.subr.bf16.mxu0 0
    %4020 = vmatpush1.bf16.msra.mxu0 0
    %4021 = vmatprep.subr.bf16.mxu0 0
    %4022 = vmatpush1.bf16.msra.mxu0 0
    %4023 = vmatprep.subr.bf16.mxu0 0
    %4024 = vmatpush1.bf16.msra.mxu0 0
    %4025 = vmatprep.subr.bf16.mxu0 0
    %4026 = vmatpush1.bf16.msra.mxu0 0
    %4027 = vmatprep.subr.bf16.mxu0 0
    %4028 = vmatpush1.bf16.msra.mxu0 0
    %4029 = vmatprep.subr.bf16.mxu0 0
    %4030 = vmatpush1.bf16.msra.mxu0 0
    %4031 = vmatprep.mubr.bf16.mxu0 0
    %4032 = vmatmul.mubr.bf16.gmra.mrb[0].mxu0 %v3908
    %v4033 = vpop.f32.mrb[0].mxu0
    %v4034 = vadd.f32 0.0, %v4033
    %v4035 = vpop.f32.mrb[0].mxu0
    %v4036 = vadd.f32 0.0, %v4035
    %v4037 = vpop.f32.mrb[0].mxu0
    %v4038 = vpop.f32.mrb[0].mxu0
    %4039 = vdwg.mxu0
    %4040 = vmatprep.subr.bf16.mxu0 %v3926
    %4041 = vmatpush1.bf16.msra.mxu0 %v3923
    %4042 = vmatprep.subr.bf16.mxu0 0
    %4043 = vmatpush1.bf16.msra.mxu0 0
    %4044 = vmatprep.subr.bf16.mxu0 0
    %4045 = vmatpush1.bf16.msra.mxu0 0
    %4046 = vmatprep.subr.bf16.mxu0 0
    %4047 = vmatpush1.bf16.msra.mxu0 0
    %4048 = vmatprep.subr.bf16.mxu0 0
    %4049 = vmatpush1.bf16.msra.mxu0 0
    %4050 = vmatprep.subr.bf16.mxu0 0
    %4051 = vmatpush1.bf16.msra.mxu0 0
    %4052 = vmatprep.subr.bf16.mxu0 0
    %4053 = vmatpush1.bf16.msra.mxu0 0
    %4054 = vmatprep.subr.bf16.mxu0 0
    %4055 = vmatpush1.bf16.msra.mxu0 0
    %4056 = vmatprep.subr.bf16.mxu0 0
    %4057 = vmatpush1.bf16.msra.mxu0 0
    %4058 = vmatprep.subr.bf16.mxu0 0
    %4059 = vmatpush1.bf16.msra.mxu0 0
    %4060 = vmatprep.subr.bf16.mxu0 0
    %4061 = vmatpush1.bf16.msra.mxu0 0
    %4062 = vmatprep.subr.bf16.mxu0 0
    %4063 = vmatpush1.bf16.msra.mxu0 0
    %4064 = vmatprep.subr.bf16.mxu0 0
    %4065 = vmatpush1.bf16.msra.mxu0 0
    %4066 = vmatprep.subr.bf16.mxu0 0
    %4067 = vmatpush1.bf16.msra.mxu0 0
    %4068 = vmatprep.subr.bf16.mxu0 0
    %4069 = vmatpush1.bf16.msra.mxu0 0
    %4070 = vmatprep.subr.bf16.mxu0 0
    %4071 = vmatpush1.bf16.msra.mxu0 0
    %4072 = vmatprep.mubr.bf16.mxu0 0
    %4073 = vmatmul.mubr.bf16.gmra.mrb[0].mxu0 %v3908
    %v4074 = vpop.f32.mrb[0].mxu0
    %v4075 = vadd.f32 0.0, %v4074
    %v4076 = vpop.f32.mrb[0].mxu0
    %v4077 = vadd.f32 0.0, %v4076
    %v4078 = vpop.f32.mrb[0].mxu0
    %v4079 = vpop.f32.mrb[0].mxu0
    %4080 = vdwg.mxu0
    %4081 = vmatprep.subr.bf16.mxu0 %v3932
    %4082 = vmatpush1.bf16.msra.mxu0 %v3929
    %4083 = vmatprep.subr.bf16.mxu0 0
    %4084 = vmatpush1.bf16.msra.mxu0 0
    %4085 = vmatprep.subr.bf16.mxu0 0
    %4086 = vmatpush1.bf16.msra.mxu0 0
    %4087 = vmatprep.subr.bf16.mxu0 0
    %4088 = vmatpush1.bf16.msra.mxu0 0
    %4089 = vmatprep.subr.bf16.mxu0 0
    %4090 = vmatpush1.bf16.msra.mxu0 0
    %4091 = vmatprep.subr.bf16.mxu0 0
    %4092 = vmatpush1.bf16.msra.mxu0 0
    %4093 = vmatprep.subr.bf16.mxu0 0
    %4094 = vmatpush1.bf16.msra.mxu0 0
    %4095 = vmatprep.subr.bf16.mxu0 0
    %4096 = vmatpush1.bf16.msra.mxu0 0
    %4097 = vmatprep.subr.bf16.mxu0 0
    %4098 = vmatpush1.bf16.msra.mxu0 0
    %4099 = vmatprep.subr.bf16.mxu0 0
    %4100 = vmatpush1.bf16.msra.mxu0 0
    %4101 = vmatprep.subr.bf16.mxu0 0
    %4102 = vmatpush1.bf16.msra.mxu0 0
    %4103 = vmatprep.subr.bf16.mxu0 0
    %4104 = vmatpush1.bf16.msra.mxu0 0
    %4105 = vmatprep.subr.bf16.mxu0 0
    %4106 = vmatpush1.bf16.msra.mxu0 0
    %4107 = vmatprep.subr.bf16.mxu0 0
    %4108 = vmatpush1.bf16.msra.mxu0 0
    %4109 = vmatprep.subr.bf16.mxu0 0
    %4110 = vmatpush1.bf16.msra.mxu0 0
    %4111 = vmatprep.subr.bf16.mxu0 0
    %4112 = vmatpush1.bf16.msra.mxu0 0
    %4113 = vmatprep.mubr.bf16.mxu0 0
    %4114 = vmatmul.mubr.bf16.gmra.mrb[0].mxu0 %v3908
    %v4115 = vpop.f32.mrb[0].mxu0
    %v4116 = vadd.f32 0.0, %v4115
    %v4117 = vpop.f32.mrb[0].mxu0
    %v4118 = vadd.f32 0.0, %v4117
    %v4119 = vpop.f32.mrb[0].mxu0
    %v4120 = vpop.f32.mrb[0].mxu0
    %4121 = vdwg.mxu0
    %4122 = vmatprep.subr.bf16.mxu0 %v3938
    %4123 = vmatpush1.bf16.msra.mxu0 %v3935
    %4124 = vmatprep.subr.bf16.mxu0 0
    %4125 = vmatpush1.bf16.msra.mxu0 0
    %4126 = vmatprep.subr.bf16.mxu0 0
    %4127 = vmatpush1.bf16.msra.mxu0 0
    %4128 = vmatprep.subr.bf16.mxu0 0
    %4129 = vmatpush1.bf16.msra.mxu0 0
    %4130 = vmatprep.subr.bf16.mxu0 0
    %4131 = vmatpush1.bf16.msra.mxu0 0
    %4132 = vmatprep.subr.bf16.mxu0 0
    %4133 = vmatpush1.bf16.msra.mxu0 0
    %4134 = vmatprep.subr.bf16.mxu0 0
    %4135 = vmatpush1.bf16.msra.mxu0 0
    %4136 = vmatprep.subr.bf16.mxu0 0
    %4137 = vmatpush1.bf16.msra.mxu0 0
    %4138 = vmatprep.subr.bf16.mxu0 0
    %4139 = vmatpush1.bf16.msra.mxu0 0
    %4140 = vmatprep.subr.bf16.mxu0 0
    %4141 = vmatpush1.bf16.msra.mxu0 0
    %4142 = vmatprep.subr.bf16.mxu0 0
    %4143 = vmatpush1.bf16.msra.mxu0 0
    %4144 = vmatprep.subr.bf16.mxu0 0
    %4145 = vmatpush1.bf16.msra.mxu0 0
    %4146 = vmatprep.subr.bf16.mxu0 0
    %4147 = vmatpush1.bf16.msra.mxu0 0
    %4148 = vmatprep.subr.bf16.mxu0 0
    %4149 = vmatpush1.bf16.msra.mxu0 0
    %4150 = vmatprep.subr.bf16.mxu0 0
    %4151 = vmatpush1.bf16.msra.mxu0 0
    %4152 = vmatprep.subr.bf16.mxu0 0
    %4153 = vmatpush1.bf16.msra.mxu0 0
    %4154 = vmatprep.mubr.bf16.mxu0 0
    %4155 = vmatmul.mubr.bf16.gmra.mrb[0].mxu0 %v3908
    %v4156 = vpop.f32.mrb[0].mxu0
    %v4157 = vadd.f32 0.0, %v4156
    %v4158 = vpop.f32.mrb[0].mxu0
    %v4159 = vadd.f32 0.0, %v4158
    %v4160 = vpop.f32.mrb[0].mxu0
    %v4161 = vpop.f32.mrb[0].mxu0
    %4162 = vdwg.mxu0
    %4163 = vmatprep.subr.bf16.mxu0 %v3944
    %4164 = vmatpush1.bf16.msra.mxu0 %v3941
    %4165 = vmatprep.subr.bf16.mxu0 0
    %4166 = vmatpush1.bf16.msra.mxu0 0
    %4167 = vmatprep.subr.bf16.mxu0 0
    %4168 = vmatpush1.bf16.msra.mxu0 0
    %4169 = vmatprep.subr.bf16.mxu0 0
    %4170 = vmatpush1.bf16.msra.mxu0 0
    %4171 = vmatprep.subr.bf16.mxu0 0
    %4172 = vmatpush1.bf16.msra.mxu0 0
    %4173 = vmatprep.subr.bf16.mxu0 0
    %4174 = vmatpush1.bf16.msra.mxu0 0
    %4175 = vmatprep.subr.bf16.mxu0 0
    %4176 = vmatpush1.bf16.msra.mxu0 0
    %4177 = vmatprep.subr.bf16.mxu0 0
    %4178 = vmatpush1.bf16.msra.mxu0 0
    %4179 = vmatprep.subr.bf16.mxu0 0
    %4180 = vmatpush1.bf16.msra.mxu0 0
    %4181 = vmatprep.subr.bf16.mxu0 0
    %4182 = vmatpush1.bf16.msra.mxu0 0
    %4183 = vmatprep.subr.bf16.mxu0 0
    %4184 = vmatpush1.bf16.msra.mxu0 0
    %4185 = vmatprep.subr.bf16.mxu0 0
    %4186 = vmatpush1.bf16.msra.mxu0 0
    %4187 = vmatprep.subr.bf16.mxu0 0
    %4188 = vmatpush1.bf16.msra.mxu0 0
    %4189 = vmatprep.subr.bf16.mxu0 0
    %4190 = vmatpush1.bf16.msra.mxu0 0
    %4191 = vmatprep.subr.bf16.mxu0 0
    %4192 = vmatpush1.bf16.msra.mxu0 0
    %4193 = vmatprep.subr.bf16.mxu0 0
    %4194 = vmatpush1.bf16.msra.mxu0 0
    %4195 = vmatprep.mubr.bf16.mxu0 0
    %4196 = vmatmul.mubr.bf16.gmra.mrb[0].mxu0 %v3908
    %v4197 = vpop.f32.mrb[0].mxu0
    %v4198 = vadd.f32 0.0, %v4197
    %v4199 = vpop.f32.mrb[0].mxu0
    %v4200 = vadd.f32 0.0, %v4199
    %v4201 = vpop.f32.mrb[0].mxu0
    %v4202 = vpop.f32.mrb[0].mxu0
    %4203 = vdwg.mxu0
    %4204 = vmatprep.subr.bf16.mxu0 %v3950
    %4205 = vmatpush1.bf16.msra.mxu0 %v3947
    %4206 = vmatprep.subr.bf16.mxu0 0
    %4207 = vmatpush1.bf16.msra.mxu0 0
    %4208 = vmatprep.subr.bf16.mxu0 0
    %4209 = vmatpush1.bf16.msra.mxu0 0
    %4210 = vmatprep.subr.bf16.mxu0 0
    %4211 = vmatpush1.bf16.msra.mxu0 0
    %4212 = vmatprep.subr.bf16.mxu0 0
    %4213 = vmatpush1.bf16.msra.mxu0 0
    %4214 = vmatprep.subr.bf16.mxu0 0
    %4215 = vmatpush1.bf16.msra.mxu0 0
    %4216 = vmatprep.subr.bf16.mxu0 0
    %4217 = vmatpush1.bf16.msra.mxu0 0
    %4218 = vmatprep.subr.bf16.mxu0 0
    %4219 = vmatpush1.bf16.msra.mxu0 0
    %4220 = vmatprep.subr.bf16.mxu0 0
    %4221 = vmatpush1.bf16.msra.mxu0 0
    %4222 = vmatprep.subr.bf16.mxu0 0
    %4223 = vmatpush1.bf16.msra.mxu0 0
    %4224 = vmatprep.subr.bf16.mxu0 0
    %4225 = vmatpush1.bf16.msra.mxu0 0
    %4226 = vmatprep.subr.bf16.mxu0 0
    %4227 = vmatpush1.bf16.msra.mxu0 0
    %4228 = vmatprep.subr.bf16.mxu0 0
    %4229 = vmatpush1.bf16.msra.mxu0 0
    %4230 = vmatprep.subr.bf16.mxu0 0
    %4231 = vmatpush1.bf16.msra.mxu0 0
    %4232 = vmatprep.subr.bf16.mxu0 0
    %4233 = vmatpush1.bf16.msra.mxu0 0
    %4234 = vmatprep.subr.bf16.mxu0 0
    %4235 = vmatpush1.bf16.msra.mxu0 0
    %4236 = vmatprep.mubr.bf16.mxu0 0
    %4237 = vmatmul.mubr.bf16.gmra.mrb[0].mxu0 %v3908
    %v4238 = vpop.f32.mrb[0].mxu0
    %v4239 = vadd.f32 0.0, %v4238
    %v4240 = vpop.f32.mrb[0].mxu0
    %v4241 = vadd.f32 0.0, %v4240
    %v4242 = vpop.f32.mrb[0].mxu0
    %v4243 = vpop.f32.mrb[0].mxu0
    %4244 = vdwg.mxu0
    %4245 = vmatprep.subr.bf16.mxu0 %v3956
    %4246 = vmatpush1.bf16.msra.mxu0 %v3953
    %4247 = vmatprep.subr.bf16.mxu0 0
    %4248 = vmatpush1.bf16.msra.mxu0 0
    %4249 = vmatprep.subr.bf16.mxu0 0
    %4250 = vmatpush1.bf16.msra.mxu0 0
    %4251 = vmatprep.subr.bf16.mxu0 0
    %4252 = vmatpush1.bf16.msra.mxu0 0
    %4253 = vmatprep.subr.bf16.mxu0 0
    %4254 = vmatpush1.bf16.msra.mxu0 0
    %4255 = vmatprep.subr.bf16.mxu0 0
    %4256 = vmatpush1.bf16.msra.mxu0 0
    %4257 = vmatprep.subr.bf16.mxu0 0
    %4258 = vmatpush1.bf16.msra.mxu0 0
    %4259 = vmatprep.subr.bf16.mxu0 0
    %4260 = vmatpush1.bf16.msra.mxu0 0
    %4261 = vmatprep.subr.bf16.mxu0 0
    %4262 = vmatpush1.bf16.msra.mxu0 0
    %4263 = vmatprep.subr.bf16.mxu0 0
    %4264 = vmatpush1.bf16.msra.mxu0 0
    %4265 = vmatprep.subr.bf16.mxu0 0
    %4266 = vmatpush1.bf16.msra.mxu0 0
    %4267 = vmatprep.subr.bf16.mxu0 0
    %4268 = vmatpush1.bf16.msra.mxu0 0
    %4269 = vmatprep.subr.bf16.mxu0 0
    %4270 = vmatpush1.bf16.msra.mxu0 0
    %4271 = vmatprep.subr.bf16.mxu0 0
    %4272 = vmatpush1.bf16.msra.mxu0 0
    %4273 = vmatprep.subr.bf16.mxu0 0
    %4274 = vmatpush1.bf16.msra.mxu0 0
    %4275 = vmatprep.subr.bf16.mxu0 0
    %4276 = vmatpush1.bf16.msra.mxu0 0
    %4277 = vmatprep.mubr.bf16.mxu0 0
    %4278 = vmatmul.mubr.bf16.gmra.mrb[0].mxu0 %v3908
    %v4279 = vpop.f32.mrb[0].mxu0
    %v4280 = vadd.f32 0.0, %v4279
    %v4281 = vpop.f32.mrb[0].mxu0
    %v4282 = vadd.f32 0.0, %v4281
    %v4283 = vpop.f32.mrb[0].mxu0
    %v4284 = vpop.f32.mrb[0].mxu0
    %4285 = vdwg.mxu0
    %v4286 = vadd.f32 %v3841, %v3993
    %v4287 = vadd.f32 %v3842, %v3995
    %v4288 = vadd.f32 %v3843, %v4034
    %v4289 = vadd.f32 %v3844, %v4036
    %v4290 = vadd.f32 %v3845, %v4075
    %v4291 = vadd.f32 %v3846, %v4077
    %v4292 = vadd.f32 %v3847, %v4116
    %v4293 = vadd.f32 %v3848, %v4118
    %v4294 = vadd.f32 %v3849, %v4157
    %v4295 = vadd.f32 %v3850, %v4159
    %v4296 = vadd.f32 %v3851, %v4198
    %v4297 = vadd.f32 %v3852, %v4200
    %v4298 = vadd.f32 %v3853, %v4239
    %v4299 = vadd.f32 %v3854, %v4241
    %v4300 = vadd.f32 %v3855, %v4280
    %v4301 = vadd.f32 %v3856, %v4282
    %v4302 = vld [vmem:[#allocation3 + $0x4] sm:$0xff]
    %v4303 = vld [vmem:[#allocation3 + $0xc] sm:$0xff]
    %v4304 = vld [vmem:[#allocation3 + $0x14] sm:$0xff]
    %v4305 = vld [vmem:[#allocation3 + $0x1c] sm:$0xff]
    %v4306 = vld [vmem:[#allocation3 + $0x24] sm:$0xff]
    %v4307 = vld [vmem:[#allocation3 + $0x2c] sm:$0xff]
    %v4308 = vld [vmem:[#allocation3 + $0x34] sm:$0xff]
    %v4309 = vld [vmem:[#allocation3 + $0x3c] sm:$0xff]
    %v4310 = vld [vmem:[#allocation3 + $0x44] sm:$0xf]
    %s4311 = scalar_lea.vmem %s4, 80
    %v4312 = vld [vmem:[%s4311] sm:$0xff]
    %v4313 = vld [vmem:[%s4311 + $0x8] sm:$0xff]
    %v4314 = vunpack.c.l.bf16 %v4312
    %v4315 = vunpack.c.h.bf16 %v4312
    %v4316 = vunpack.c.l.bf16 %v4313
    %v4317 = vunpack.c.h.bf16 %v4313
    %v4322 = vlaneseq
    %v4323 = vshrl.u32 %v4322, 7
    %v4324 = vsub.s32 0, %v4323
    %v4325 = vrot.slane %v4314, %v4324
    %v4326 = vlaneseq
    %v4327 = vshrl.u32 %v4326, 7
    %v4328 = vsub.s32 2, %v4327
    %v4329 = vrot.slane %v4314, %v4328
    %v4330 = vlaneseq
    %v4331 = vshrl.u32 %v4330, 7
    %v4332 = vsub.s32 4, %v4331
    %v4333 = vrot.slane %v4314, %v4332
    %v4334 = vlaneseq
    %v4335 = vshrl.u32 %v4334, 7
    %v4336 = vsub.s32 6, %v4335
    %v4337 = vrot.slane %v4314, %v4336
    %v4338 = vlaneseq
    %v4339 = vshrl.u32 %v4338, 7
    %v4340 = vsub.s32 0, %v4339
    %v4341 = vrot.slane %v4315, %v4340
    %v4342 = vlaneseq
    %v4343 = vshrl.u32 %v4342, 7
    %v4344 = vsub.s32 2, %v4343
    %v4345 = vrot.slane %v4315, %v4344
    %v4346 = vlaneseq
    %v4347 = vshrl.u32 %v4346, 7
    %v4348 = vsub.s32 4, %v4347
    %v4349 = vrot.slane %v4315, %v4348
    %v4350 = vlaneseq
    %v4351 = vshrl.u32 %v4350, 7
    %v4352 = vsub.s32 6, %v4351
    %v4353 = vrot.slane %v4315, %v4352
    %v4354 = vlaneseq
    %v4355 = vshrl.u32 %v4354, 7
    %v4356 = vsub.s32 0, %v4355
    %v4357 = vrot.slane %v4316, %v4356
    %v4358 = vlaneseq
    %v4359 = vshrl.u32 %v4358, 7
    %v4360 = vsub.s32 2, %v4359
    %v4361 = vrot.slane %v4316, %v4360
    %v4362 = vlaneseq
    %v4363 = vshrl.u32 %v4362, 7
    %v4364 = vsub.s32 4, %v4363
    %v4365 = vrot.slane %v4316, %v4364
    %v4366 = vlaneseq
    %v4367 = vshrl.u32 %v4366, 7
    %v4368 = vsub.s32 6, %v4367
    %v4369 = vrot.slane %v4316, %v4368
    %v4370 = vlaneseq
    %v4371 = vshrl.u32 %v4370, 7
    %v4372 = vsub.s32 0, %v4371
    %v4373 = vrot.slane %v4317, %v4372
    %v4374 = vlaneseq
    %v4375 = vshrl.u32 %v4374, 7
    %v4376 = vsub.s32 2, %v4375
    %v4377 = vrot.slane %v4317, %v4376
    %v4378 = vlaneseq
    %v4379 = vshrl.u32 %v4378, 7
    %v4380 = vsub.s32 4, %v4379
    %v4381 = vrot.slane %v4317, %v4380
    %v4382 = vlaneseq
    %v4383 = vshrl.u32 %v4382, 7
    %v4384 = vsub.s32 6, %v4383
    %v4385 = vrot.slane %v4317, %v4384
    %v4402 = vlaneseq
    %v4403 = vshrl.u32 %v4402, 7
    %v4404 = vsub.s32 0, %v4403
    %v4405 = vrot.slane %v4325, %v4404
    %v4406 = vlaneseq
    %v4407 = vshrl.u32 %v4406, 7
    %v4408 = vsub.s32 0, %v4407
    %v4409 = vrot.slane %v4329, %v4408
    %v4410 = vlaneseq
    %v4411 = vshrl.u32 %v4410, 7
    %v4412 = vsub.s32 0, %v4411
    %v4413 = vrot.slane %v4333, %v4412
    %v4414 = vlaneseq
    %v4415 = vshrl.u32 %v4414, 7
    %v4416 = vsub.s32 0, %v4415
    %v4417 = vrot.slane %v4337, %v4416
    %v4418 = vlaneseq
    %v4419 = vshrl.u32 %v4418, 7
    %v4420 = vsub.s32 0, %v4419
    %v4421 = vrot.slane %v4341, %v4420
    %v4422 = vlaneseq
    %v4423 = vshrl.u32 %v4422, 7
    %v4424 = vsub.s32 0, %v4423
    %v4425 = vrot.slane %v4345, %v4424
    %v4426 = vlaneseq
    %v4427 = vshrl.u32 %v4426, 7
    %v4428 = vsub.s32 0, %v4427
    %v4429 = vrot.slane %v4349, %v4428
    %v4430 = vlaneseq
    %v4431 = vshrl.u32 %v4430, 7
    %v4432 = vsub.s32 0, %v4431
    %v4433 = vrot.slane %v4353, %v4432
    %v4434 = vlaneseq
    %v4435 = vshrl.u32 %v4434, 7
    %v4436 = vsub.s32 0, %v4435
    %v4437 = vrot.slane %v4357, %v4436
    %v4438 = vlaneseq
    %v4439 = vshrl.u32 %v4438, 7
    %v4440 = vsub.s32 0, %v4439
    %v4441 = vrot.slane %v4361, %v4440
    %v4442 = vlaneseq
    %v4443 = vshrl.u32 %v4442, 7
    %v4444 = vsub.s32 0, %v4443
    %v4445 = vrot.slane %v4365, %v4444
    %v4446 = vlaneseq
    %v4447 = vshrl.u32 %v4446, 7
    %v4448 = vsub.s32 0, %v4447
    %v4449 = vrot.slane %v4369, %v4448
    %v4450 = vlaneseq
    %v4451 = vshrl.u32 %v4450, 7
    %v4452 = vsub.s32 0, %v4451
    %v4453 = vrot.slane %v4373, %v4452
    %v4454 = vlaneseq
    %v4455 = vshrl.u32 %v4454, 7
    %v4456 = vsub.s32 0, %v4455
    %v4457 = vrot.slane %v4377, %v4456
    %v4458 = vlaneseq
    %v4459 = vshrl.u32 %v4458, 7
    %v4460 = vsub.s32 0, %v4459
    %v4461 = vrot.slane %v4381, %v4460
    %v4462 = vlaneseq
    %v4463 = vshrl.u32 %v4462, 7
    %v4464 = vsub.s32 0, %v4463
    %v4465 = vrot.slane %v4385, %v4464
    %v4482 = vcombine.low %v4405, %v4409
    %v4483 = vcombine.low %v4413, %v4417
    %v4484 = vcombine.low %v4421, %v4425
    %v4485 = vcombine.low %v4429, %v4433
    %v4486 = vcombine.low %v4437, %v4441
    %v4487 = vcombine.low %v4445, %v4449
    %v4488 = vcombine.low %v4453, %v4457
    %v4489 = vcombine.low %v4461, %v4465
    %4490 = vrot.lane.b32.xlu0 %v4482, 1
    %v4491 = vpop.permute.xlu0 %4490
    %4492 = vrot.lane.b32.xlu0 %v4483, 1
    %v4493 = vpop.permute.xlu0 %4492
    %4494 = vrot.lane.b32.xlu0 %v4484, 1
    %v4495 = vpop.permute.xlu0 %4494
    %4496 = vrot.lane.b32.xlu0 %v4485, 1
    %v4497 = vpop.permute.xlu0 %4496
    %4498 = vrot.lane.b32.xlu0 %v4486, 1
    %v4499 = vpop.permute.xlu0 %4498
    %4500 = vrot.lane.b32.xlu0 %v4487, 1
    %v4501 = vpop.permute.xlu0 %4500
    %4502 = vrot.lane.b32.xlu0 %v4488, 1
    %v4503 = vpop.permute.xlu0 %4502
    %4504 = vrot.lane.b32.xlu0 %v4489, 1
    %v4505 = vpop.permute.xlu0 %4504
    %v4506 = vrot.slane %v4491, 4
    %v4507 = vrot.slane %v4493, 4
    %v4508 = vrot.slane %v4495, 4
    %v4509 = vrot.slane %v4497, 4
    %v4510 = vrot.slane %v4499, 4
    %v4511 = vrot.slane %v4501, 4
    %v4512 = vrot.slane %v4503, 4
    %v4513 = vrot.slane %v4505, 4
    %vm4514 = vcmask 7168
    %v4515 = vsel %vm4514, %v4506, %v4491
    %v4516 = vsel %vm1102, %v4506, %v4507
    %v4517 = vsel %vm4514, %v4516, %v4493
    %v4518 = vsel %vm1102, %v4507, %v4508
    %v4519 = vsel %vm4514, %v4518, %v4495
    %v4520 = vsel %vm1102, %v4508, %v4509
    %v4521 = vsel %vm4514, %v4520, %v4497
    %v4522 = vsel %vm1102, %v4509, %v4510
    %v4523 = vsel %vm4514, %v4522, %v4499
    %v4524 = vsel %vm1102, %v4510, %v4511
    %v4525 = vsel %vm4514, %v4524, %v4501
    %v4526 = vsel %vm1102, %v4511, %v4512
    %v4527 = vsel %vm4514, %v4526, %v4503
    %v4528 = vsel %vm1102, %v4512, %v4513
    %v4529 = vsel %vm4514, %v4528, %v4505
    %v4539 = vmul.f32 %v4302, %v4515
    %v4540 = vmul.f32 %v4303, %v4517
    %v4541 = vmul.f32 %v4304, %v4519
    %v4542 = vmul.f32 %v4305, %v4521
    %v4543 = vmul.f32 %v4306, %v4523
    %v4544 = vmul.f32 %v4307, %v4525
    %v4545 = vmul.f32 %v4308, %v4527
    %v4546 = vmul.f32 %v4309, %v4529
    %v4547 = vmul.f32 %v4310, %v4513
    %v4556 = vcombine.high %v4539, %v4539
    %v4557 = vcombine.high %v4540, %v4540
    %v4558 = vcombine.high %v4541, %v4541
    %v4559 = vcombine.high %v4542, %v4542
    %v4560 = vcombine.high %v4543, %v4543
    %v4561 = vcombine.high %v4544, %v4544
    %v4562 = vcombine.high %v4545, %v4545
    %v4563 = vcombine.high %v4546, %v4546
    %v4572 = vpack.c.bf16 %v4539, %v4539
    %v4573 = vpack.c.bf16 %v4556, %v4556
    %v4574 = vpack.c.bf16 %v4540, %v4540
    %v4575 = vpack.c.bf16 %v4557, %v4557
    %v4576 = vpack.c.bf16 %v4541, %v4541
    %v4577 = vpack.c.bf16 %v4558, %v4558
    %v4578 = vpack.c.bf16 %v4542, %v4542
    %v4579 = vpack.c.bf16 %v4559, %v4559
    %v4580 = vpack.c.bf16 %v4543, %v4543
    %v4581 = vpack.c.bf16 %v4560, %v4560
    %v4582 = vpack.c.bf16 %v4544, %v4544
    %v4583 = vpack.c.bf16 %v4561, %v4561
    %v4584 = vpack.c.bf16 %v4545, %v4545
    %v4585 = vpack.c.bf16 %v4562, %v4562
    %v4586 = vpack.c.bf16 %v4546, %v4546
    %v4587 = vpack.c.bf16 %v4563, %v4563
    %v4588 = vpack.c.bf16 %v4547, %v4547
    %s4589 = scalar_lea.vmem %s2, 20
    %v4590 = vld [vmem:[%s4589] sm:$0xf]
    %4608 = vrot.lane.b32.xlu0 %v4572, 127
    %v4609 = vpop.permute.xlu0 %4608
    %4610 = vrot.lane.b32.xlu0 %v4573, 127
    %v4611 = vpop.permute.xlu0 %4610
    %4612 = vrot.lane.b32.xlu0 %v4574, 127
    %v4613 = vpop.permute.xlu0 %4612
    %4614 = vrot.lane.b32.xlu0 %v4575, 127
    %v4615 = vpop.permute.xlu0 %4614
    %4616 = vrot.lane.b32.xlu0 %v4576, 127
    %v4617 = vpop.permute.xlu0 %4616
    %4618 = vrot.lane.b32.xlu0 %v4577, 127
    %v4619 = vpop.permute.xlu0 %4618
    %4620 = vrot.lane.b32.xlu0 %v4578, 127
    %v4621 = vpop.permute.xlu0 %4620
    %4622 = vrot.lane.b32.xlu0 %v4579, 127
    %v4623 = vpop.permute.xlu0 %4622
    %4624 = vrot.lane.b32.xlu0 %v4580, 127
    %v4625 = vpop.permute.xlu0 %4624
    %4626 = vrot.lane.b32.xlu0 %v4581, 127
    %v4627 = vpop.permute.xlu0 %4626
    %4628 = vrot.lane.b32.xlu0 %v4582, 127
    %v4629 = vpop.permute.xlu0 %4628
    %4630 = vrot.lane.b32.xlu0 %v4583, 127
    %v4631 = vpop.permute.xlu0 %4630
    %4632 = vrot.lane.b32.xlu0 %v4584, 127
    %v4633 = vpop.permute.xlu0 %4632
    %4634 = vrot.lane.b32.xlu0 %v4585, 127
    %v4635 = vpop.permute.xlu0 %4634
    %4636 = vrot.lane.b32.xlu0 %v4586, 127
    %v4637 = vpop.permute.xlu0 %4636
    %4638 = vrot.lane.b32.xlu0 %v4587, 127
    %v4639 = vpop.permute.xlu0 %4638
    %4640 = vrot.lane.b32.xlu0 %v4588, 127
    %v4641 = vpop.permute.xlu0 %4640
    %vm4642 = vcmask 1039360
    %v4643 = vsel %vm4642, %v4609, %v4611
    %v4644 = vsel %vm4642, %v4611, %v4613
    %v4645 = vsel %vm4642, %v4613, %v4615
    %v4646 = vsel %vm4642, %v4615, %v4617
    %v4647 = vsel %vm4642, %v4617, %v4619
    %v4648 = vsel %vm4642, %v4619, %v4621
    %v4649 = vsel %vm4642, %v4621, %v4623
    %v4650 = vsel %vm4642, %v4623, %v4625
    %v4651 = vsel %vm4642, %v4625, %v4627
    %v4652 = vsel %vm4642, %v4627, %v4629
    %v4653 = vsel %vm4642, %v4629, %v4631
    %v4654 = vsel %vm4642, %v4631, %v4633
    %v4655 = vsel %vm4642, %v4633, %v4635
    %v4656 = vsel %vm4642, %v4635, %v4637
    %v4657 = vsel %vm4642, %v4637, %v4639
    %v4658 = vsel %vm4642, %v4639, %v4641
    %v4660 = vsel %vm1525, %v4590, 0
    %v4663 = vsel %vm1529, %v4643, 0
    %v4666 = vsel %vm1529, %v4644, 0
    %v4669 = vsel %vm1529, %v4645, 0
    %v4672 = vsel %vm1529, %v4646, 0
    %v4675 = vsel %vm1529, %v4647, 0
    %v4678 = vsel %vm1529, %v4648, 0
    %v4681 = vsel %vm1529, %v4649, 0
    %v4684 = vsel %vm1529, %v4650, 0
    %v4687 = vsel %vm1529, %v4651, 0
    %v4690 = vsel %vm1529, %v4652, 0
    %v4693 = vsel %vm1529, %v4653, 0
    %v4696 = vsel %vm1529, %v4654, 0
    %v4699 = vsel %vm1529, %v4655, 0
    %v4702 = vsel %vm1529, %v4656, 0
    %v4705 = vsel %vm1529, %v4657, 0
    %v4708 = vsel %vm1529, %v4658, 0
    %4710 = vmatprep.subr.bf16.mxu0 %v4666
    %4711 = vmatpush1.bf16.msra.mxu0 %v4663
    %4712 = vmatprep.subr.bf16.mxu0 0
    %4713 = vmatpush1.bf16.msra.mxu0 0
    %4714 = vmatprep.subr.bf16.mxu0 0
    %4715 = vmatpush1.bf16.msra.mxu0 0
    %4716 = vmatprep.subr.bf16.mxu0 0
    %4717 = vmatpush1.bf16.msra.mxu0 0
    %4718 = vmatprep.subr.bf16.mxu0 0
    %4719 = vmatpush1.bf16.msra.mxu0 0
    %4720 = vmatprep.subr.bf16.mxu0 0
    %4721 = vmatpush1.bf16.msra.mxu0 0
    %4722 = vmatprep.subr.bf16.mxu0 0
    %4723 = vmatpush1.bf16.msra.mxu0 0
    %4724 = vmatprep.subr.bf16.mxu0 0
    %4725 = vmatpush1.bf16.msra.mxu0 0
    %4726 = vmatprep.subr.bf16.mxu0 0
    %4727 = vmatpush1.bf16.msra.mxu0 0
    %4728 = vmatprep.subr.bf16.mxu0 0
    %4729 = vmatpush1.bf16.msra.mxu0 0
    %4730 = vmatprep.subr.bf16.mxu0 0
    %4731 = vmatpush1.bf16.msra.mxu0 0
    %4732 = vmatprep.subr.bf16.mxu0 0
    %4733 = vmatpush1.bf16.msra.mxu0 0
    %4734 = vmatprep.subr.bf16.mxu0 0
    %4735 = vmatpush1.bf16.msra.mxu0 0
    %4736 = vmatprep.subr.bf16.mxu0 0
    %4737 = vmatpush1.bf16.msra.mxu0 0
    %4738 = vmatprep.subr.bf16.mxu0 0
    %4739 = vmatpush1.bf16.msra.mxu0 0
    %4740 = vmatprep.subr.bf16.mxu0 0
    %4741 = vmatpush1.bf16.msra.mxu0 0
    %4742 = vmatprep.mubr.bf16.mxu0 0
    %4743 = vmatmul.mubr.bf16.gmra.mrb[0].mxu0 %v4660
    %v4744 = vpop.f32.mrb[0].mxu0
    %v4745 = vadd.f32 0.0, %v4744
    %v4746 = vpop.f32.mrb[0].mxu0
    %v4747 = vadd.f32 0.0, %v4746
    %v4748 = vpop.f32.mrb[0].mxu0
    %v4749 = vpop.f32.mrb[0].mxu0
    %4750 = vdwg.mxu0
    %4751 = vmatprep.subr.bf16.mxu0 %v4672
    %4752 = vmatpush1.bf16.msra.mxu0 %v4669
    %4753 = vmatprep.subr.bf16.mxu0 0
    %4754 = vmatpush1.bf16.msra.mxu0 0
    %4755 = vmatprep.subr.bf16.mxu0 0
    %4756 = vmatpush1.bf16.msra.mxu0 0
    %4757 = vmatprep.subr.bf16.mxu0 0
    %4758 = vmatpush1.bf16.msra.mxu0 0
    %4759 = vmatprep.subr.bf16.mxu0 0
    %4760 = vmatpush1.bf16.msra.mxu0 0
    %4761 = vmatprep.subr.bf16.mxu0 0
    %4762 = vmatpush1.bf16.msra.mxu0 0
    %4763 = vmatprep.subr.bf16.mxu0 0
    %4764 = vmatpush1.bf16.msra.mxu0 0
    %4765 = vmatprep.subr.bf16.mxu0 0
    %4766 = vmatpush1.bf16.msra.mxu0 0
    %4767 = vmatprep.subr.bf16.mxu0 0
    %4768 = vmatpush1.bf16.msra.mxu0 0
    %4769 = vmatprep.subr.bf16.mxu0 0
    %4770 = vmatpush1.bf16.msra.mxu0 0
    %4771 = vmatprep.subr.bf16.mxu0 0
    %4772 = vmatpush1.bf16.msra.mxu0 0
    %4773 = vmatprep.subr.bf16.mxu0 0
    %4774 = vmatpush1.bf16.msra.mxu0 0
    %4775 = vmatprep.subr.bf16.mxu0 0
    %4776 = vmatpush1.bf16.msra.mxu0 0
    %4777 = vmatprep.subr.bf16.mxu0 0
    %4778 = vmatpush1.bf16.msra.mxu0 0
    %4779 = vmatprep.subr.bf16.mxu0 0
    %4780 = vmatpush1.bf16.msra.mxu0 0
    %4781 = vmatprep.subr.bf16.mxu0 0
    %4782 = vmatpush1.bf16.msra.mxu0 0
    %4783 = vmatprep.mubr.bf16.mxu0 0
    %4784 = vmatmul.mubr.bf16.gmra.mrb[0].mxu0 %v4660
    %v4785 = vpop.f32.mrb[0].mxu0
    %v4786 = vadd.f32 0.0, %v4785
    %v4787 = vpop.f32.mrb[0].mxu0
    %v4788 = vadd.f32 0.0, %v4787
    %v4789 = vpop.f32.mrb[0].mxu0
    %v4790 = vpop.f32.mrb[0].mxu0
    %4791 = vdwg.mxu0
    %4792 = vmatprep.subr.bf16.mxu0 %v4678
    %4793 = vmatpush1.bf16.msra.mxu0 %v4675
    %4794 = vmatprep.subr.bf16.mxu0 0
    %4795 = vmatpush1.bf16.msra.mxu0 0
    %4796 = vmatprep.subr.bf16.mxu0 0
    %4797 = vmatpush1.bf16.msra.mxu0 0
    %4798 = vmatprep.subr.bf16.mxu0 0
    %4799 = vmatpush1.bf16.msra.mxu0 0
    %4800 = vmatprep.subr.bf16.mxu0 0
    %4801 = vmatpush1.bf16.msra.mxu0 0
    %4802 = vmatprep.subr.bf16.mxu0 0
    %4803 = vmatpush1.bf16.msra.mxu0 0
    %4804 = vmatprep.subr.bf16.mxu0 0
    %4805 = vmatpush1.bf16.msra.mxu0 0
    %4806 = vmatprep.subr.bf16.mxu0 0
    %4807 = vmatpush1.bf16.msra.mxu0 0
    %4808 = vmatprep.subr.bf16.mxu0 0
    %4809 = vmatpush1.bf16.msra.mxu0 0
    %4810 = vmatprep.subr.bf16.mxu0 0
    %4811 = vmatpush1.bf16.msra.mxu0 0
    %4812 = vmatprep.subr.bf16.mxu0 0
    %4813 = vmatpush1.bf16.msra.mxu0 0
    %4814 = vmatprep.subr.bf16.mxu0 0
    %4815 = vmatpush1.bf16.msra.mxu0 0
    %4816 = vmatprep.subr.bf16.mxu0 0
    %4817 = vmatpush1.bf16.msra.mxu0 0
    %4818 = vmatprep.subr.bf16.mxu0 0
    %4819 = vmatpush1.bf16.msra.mxu0 0
    %4820 = vmatprep.subr.bf16.mxu0 0
    %4821 = vmatpush1.bf16.msra.mxu0 0
    %4822 = vmatprep.subr.bf16.mxu0 0
    %4823 = vmatpush1.bf16.msra.mxu0 0
    %4824 = vmatprep.mubr.bf16.mxu0 0
    %4825 = vmatmul.mubr.bf16.gmra.mrb[0].mxu0 %v4660
    %v4826 = vpop.f32.mrb[0].mxu0
    %v4827 = vadd.f32 0.0, %v4826
    %v4828 = vpop.f32.mrb[0].mxu0
    %v4829 = vadd.f32 0.0, %v4828
    %v4830 = vpop.f32.mrb[0].mxu0
    %v4831 = vpop.f32.mrb[0].mxu0
    %4832 = vdwg.mxu0
    %4833 = vmatprep.subr.bf16.mxu0 %v4684
    %4834 = vmatpush1.bf16.msra.mxu0 %v4681
    %4835 = vmatprep.subr.bf16.mxu0 0
    %4836 = vmatpush1.bf16.msra.mxu0 0
    %4837 = vmatprep.subr.bf16.mxu0 0
    %4838 = vmatpush1.bf16.msra.mxu0 0
    %4839 = vmatprep.subr.bf16.mxu0 0
    %4840 = vmatpush1.bf16.msra.mxu0 0
    %4841 = vmatprep.subr.bf16.mxu0 0
    %4842 = vmatpush1.bf16.msra.mxu0 0
    %4843 = vmatprep.subr.bf16.mxu0 0
    %4844 = vmatpush1.bf16.msra.mxu0 0
    %4845 = vmatprep.subr.bf16.mxu0 0
    %4846 = vmatpush1.bf16.msra.mxu0 0
    %4847 = vmatprep.subr.bf16.mxu0 0
    %4848 = vmatpush1.bf16.msra.mxu0 0
    %4849 = vmatprep.subr.bf16.mxu0 0
    %4850 = vmatpush1.bf16.msra.mxu0 0
    %4851 = vmatprep.subr.bf16.mxu0 0
    %4852 = vmatpush1.bf16.msra.mxu0 0
    %4853 = vmatprep.subr.bf16.mxu0 0
    %4854 = vmatpush1.bf16.msra.mxu0 0
    %4855 = vmatprep.subr.bf16.mxu0 0
    %4856 = vmatpush1.bf16.msra.mxu0 0
    %4857 = vmatprep.subr.bf16.mxu0 0
    %4858 = vmatpush1.bf16.msra.mxu0 0
    %4859 = vmatprep.subr.bf16.mxu0 0
    %4860 = vmatpush1.bf16.msra.mxu0 0
    %4861 = vmatprep.subr.bf16.mxu0 0
    %4862 = vmatpush1.bf16.msra.mxu0 0
    %4863 = vmatprep.subr.bf16.mxu0 0
    %4864 = vmatpush1.bf16.msra.mxu0 0
    %4865 = vmatprep.mubr.bf16.mxu0 0
    %4866 = vmatmul.mubr.bf16.gmra.mrb[0].mxu0 %v4660
    %v4867 = vpop.f32.mrb[0].mxu0
    %v4868 = vadd.f32 0.0, %v4867
    %v4869 = vpop.f32.mrb[0].mxu0
    %v4870 = vadd.f32 0.0, %v4869
    %v4871 = vpop.f32.mrb[0].mxu0
    %v4872 = vpop.f32.mrb[0].mxu0
    %4873 = vdwg.mxu0
    %4874 = vmatprep.subr.bf16.mxu0 %v4690
    %4875 = vmatpush1.bf16.msra.mxu0 %v4687
    %4876 = vmatprep.subr.bf16.mxu0 0
    %4877 = vmatpush1.bf16.msra.mxu0 0
    %4878 = vmatprep.subr.bf16.mxu0 0
    %4879 = vmatpush1.bf16.msra.mxu0 0
    %4880 = vmatprep.subr.bf16.mxu0 0
    %4881 = vmatpush1.bf16.msra.mxu0 0
    %4882 = vmatprep.subr.bf16.mxu0 0
    %4883 = vmatpush1.bf16.msra.mxu0 0
    %4884 = vmatprep.subr.bf16.mxu0 0
    %4885 = vmatpush1.bf16.msra.mxu0 0
    %4886 = vmatprep.subr.bf16.mxu0 0
    %4887 = vmatpush1.bf16.msra.mxu0 0
    %4888 = vmatprep.subr.bf16.mxu0 0
    %4889 = vmatpush1.bf16.msra.mxu0 0
    %4890 = vmatprep.subr.bf16.mxu0 0
    %4891 = vmatpush1.bf16.msra.mxu0 0
    %4892 = vmatprep.subr.bf16.mxu0 0
    %4893 = vmatpush1.bf16.msra.mxu0 0
    %4894 = vmatprep.subr.bf16.mxu0 0
    %4895 = vmatpush1.bf16.msra.mxu0 0
    %4896 = vmatprep.subr.bf16.mxu0 0
    %4897 = vmatpush1.bf16.msra.mxu0 0
    %4898 = vmatprep.subr.bf16.mxu0 0
    %4899 = vmatpush1.bf16.msra.mxu0 0
    %4900 = vmatprep.subr.bf16.mxu0 0
    %4901 = vmatpush1.bf16.msra.mxu0 0
    %4902 = vmatprep.subr.bf16.mxu0 0
    %4903 = vmatpush1.bf16.msra.mxu0 0
    %4904 = vmatprep.subr.bf16.mxu0 0
    %4905 = vmatpush1.bf16.msra.mxu0 0
    %4906 = vmatprep.mubr.bf16.mxu0 0
    %4907 = vmatmul.mubr.bf16.gmra.mrb[0].mxu0 %v4660
    %v4908 = vpop.f32.mrb[0].mxu0
    %v4909 = vadd.f32 0.0, %v4908
    %v4910 = vpop.f32.mrb[0].mxu0
    %v4911 = vadd.f32 0.0, %v4910
    %v4912 = vpop.f32.mrb[0].mxu0
    %v4913 = vpop.f32.mrb[0].mxu0
    %4914 = vdwg.mxu0
    %4915 = vmatprep.subr.bf16.mxu0 %v4696
    %4916 = vmatpush1.bf16.msra.mxu0 %v4693
    %4917 = vmatprep.subr.bf16.mxu0 0
    %4918 = vmatpush1.bf16.msra.mxu0 0
    %4919 = vmatprep.subr.bf16.mxu0 0
    %4920 = vmatpush1.bf16.msra.mxu0 0
    %4921 = vmatprep.subr.bf16.mxu0 0
    %4922 = vmatpush1.bf16.msra.mxu0 0
    %4923 = vmatprep.subr.bf16.mxu0 0
    %4924 = vmatpush1.bf16.msra.mxu0 0
    %4925 = vmatprep.subr.bf16.mxu0 0
    %4926 = vmatpush1.bf16.msra.mxu0 0
    %4927 = vmatprep.subr.bf16.mxu0 0
    %4928 = vmatpush1.bf16.msra.mxu0 0
    %4929 = vmatprep.subr.bf16.mxu0 0
    %4930 = vmatpush1.bf16.msra.mxu0 0
    %4931 = vmatprep.subr.bf16.mxu0 0
    %4932 = vmatpush1.bf16.msra.mxu0 0
    %4933 = vmatprep.subr.bf16.mxu0 0
    %4934 = vmatpush1.bf16.msra.mxu0 0
    %4935 = vmatprep.subr.bf16.mxu0 0
    %4936 = vmatpush1.bf16.msra.mxu0 0
    %4937 = vmatprep.subr.bf16.mxu0 0
    %4938 = vmatpush1.bf16.msra.mxu0 0
    %4939 = vmatprep.subr.bf16.mxu0 0
    %4940 = vmatpush1.bf16.msra.mxu0 0
    %4941 = vmatprep.subr.bf16.mxu0 0
    %4942 = vmatpush1.bf16.msra.mxu0 0
    %4943 = vmatprep.subr.bf16.mxu0 0
    %4944 = vmatpush1.bf16.msra.mxu0 0
    %4945 = vmatprep.subr.bf16.mxu0 0
    %4946 = vmatpush1.bf16.msra.mxu0 0
    %4947 = vmatprep.mubr.bf16.mxu0 0
    %4948 = vmatmul.mubr.bf16.gmra.mrb[0].mxu0 %v4660
    %v4949 = vpop.f32.mrb[0].mxu0
    %v4950 = vadd.f32 0.0, %v4949
    %v4951 = vpop.f32.mrb[0].mxu0
    %v4952 = vadd.f32 0.0, %v4951
    %v4953 = vpop.f32.mrb[0].mxu0
    %v4954 = vpop.f32.mrb[0].mxu0
    %4955 = vdwg.mxu0
    %4956 = vmatprep.subr.bf16.mxu0 %v4702
    %4957 = vmatpush1.bf16.msra.mxu0 %v4699
    %4958 = vmatprep.subr.bf16.mxu0 0
    %4959 = vmatpush1.bf16.msra.mxu0 0
    %4960 = vmatprep.subr.bf16.mxu0 0
    %4961 = vmatpush1.bf16.msra.mxu0 0
    %4962 = vmatprep.subr.bf16.mxu0 0
    %4963 = vmatpush1.bf16.msra.mxu0 0
    %4964 = vmatprep.subr.bf16.mxu0 0
    %4965 = vmatpush1.bf16.msra.mxu0 0
    %4966 = vmatprep.subr.bf16.mxu0 0
    %4967 = vmatpush1.bf16.msra.mxu0 0
    %4968 = vmatprep.subr.bf16.mxu0 0
    %4969 = vmatpush1.bf16.msra.mxu0 0
    %4970 = vmatprep.subr.bf16.mxu0 0
    %4971 = vmatpush1.bf16.msra.mxu0 0
    %4972 = vmatprep.subr.bf16.mxu0 0
    %4973 = vmatpush1.bf16.msra.mxu0 0
    %4974 = vmatprep.subr.bf16.mxu0 0
    %4975 = vmatpush1.bf16.msra.mxu0 0
    %4976 = vmatprep.subr.bf16.mxu0 0
    %4977 = vmatpush1.bf16.msra.mxu0 0
    %4978 = vmatprep.subr.bf16.mxu0 0
    %4979 = vmatpush1.bf16.msra.mxu0 0
    %4980 = vmatprep.subr.bf16.mxu0 0
    %4981 = vmatpush1.bf16.msra.mxu0 0
    %4982 = vmatprep.subr.bf16.mxu0 0
    %4983 = vmatpush1.bf16.msra.mxu0 0
    %4984 = vmatprep.subr.bf16.mxu0 0
    %4985 = vmatpush1.bf16.msra.mxu0 0
    %4986 = vmatprep.subr.bf16.mxu0 0
    %4987 = vmatpush1.bf16.msra.mxu0 0
    %4988 = vmatprep.mubr.bf16.mxu0 0
    %4989 = vmatmul.mubr.bf16.gmra.mrb[0].mxu0 %v4660
    %v4990 = vpop.f32.mrb[0].mxu0
    %v4991 = vadd.f32 0.0, %v4990
    %v4992 = vpop.f32.mrb[0].mxu0
    %v4993 = vadd.f32 0.0, %v4992
    %v4994 = vpop.f32.mrb[0].mxu0
    %v4995 = vpop.f32.mrb[0].mxu0
    %4996 = vdwg.mxu0
    %4997 = vmatprep.subr.bf16.mxu0 %v4708
    %4998 = vmatpush1.bf16.msra.mxu0 %v4705
    %4999 = vmatprep.subr.bf16.mxu0 0
    %5000 = vmatpush1.bf16.msra.mxu0 0
    %5001 = vmatprep.subr.bf16.mxu0 0
    %5002 = vmatpush1.bf16.msra.mxu0 0
    %5003 = vmatprep.subr.bf16.mxu0 0
    %5004 = vmatpush1.bf16.msra.mxu0 0
    %5005 = vmatprep.subr.bf16.mxu0 0
    %5006 = vmatpush1.bf16.msra.mxu0 0
    %5007 = vmatprep.subr.bf16.mxu0 0
    %5008 = vmatpush1.bf16.msra.mxu0 0
    %5009 = vmatprep.subr.bf16.mxu0 0
    %5010 = vmatpush1.bf16.msra.mxu0 0
    %5011 = vmatprep.subr.bf16.mxu0 0
    %5012 = vmatpush1.bf16.msra.mxu0 0
    %5013 = vmatprep.subr.bf16.mxu0 0
    %5014 = vmatpush1.bf16.msra.mxu0 0
    %5015 = vmatprep.subr.bf16.mxu0 0
    %5016 = vmatpush1.bf16.msra.mxu0 0
    %5017 = vmatprep.subr.bf16.mxu0 0
    %5018 = vmatpush1.bf16.msra.mxu0 0
    %5019 = vmatprep.subr.bf16.mxu0 0
    %5020 = vmatpush1.bf16.msra.mxu0 0
    %5021 = vmatprep.subr.bf16.mxu0 0
    %5022 = vmatpush1.bf16.msra.mxu0 0
    %5023 = vmatprep.subr.bf16.mxu0 0
    %5024 = vmatpush1.bf16.msra.mxu0 0
    %5025 = vmatprep.subr.bf16.mxu0 0
    %5026 = vmatpush1.bf16.msra.mxu0 0
    %5027 = vmatprep.subr.bf16.mxu0 0
    %5028 = vmatpush1.bf16.msra.mxu0 0
    %5029 = vmatprep.mubr.bf16.mxu0 0
    %5030 = vmatmul.mubr.bf16.gmra.mrb[0].mxu0 %v4660
    %v5031 = vpop.f32.mrb[0].mxu0
    %v5032 = vadd.f32 0.0, %v5031
    %v5033 = vpop.f32.mrb[0].mxu0
    %v5034 = vadd.f32 0.0, %v5033
    %v5035 = vpop.f32.mrb[0].mxu0
    %v5036 = vpop.f32.mrb[0].mxu0
    %5037 = vdwg.mxu0
    %v5038 = vadd.f32 %v4286, %v4745
    %v5039 = vadd.f32 %v4287, %v4747
    %v5040 = vadd.f32 %v4288, %v4786
    %v5041 = vadd.f32 %v4289, %v4788
    %v5042 = vadd.f32 %v4290, %v4827
    %v5043 = vadd.f32 %v4291, %v4829
    %v5044 = vadd.f32 %v4292, %v4868
    %v5045 = vadd.f32 %v4293, %v4870
    %v5046 = vadd.f32 %v4294, %v4909
    %v5047 = vadd.f32 %v4295, %v4911
    %v5048 = vadd.f32 %v4296, %v4950
    %v5049 = vadd.f32 %v4297, %v4952
    %v5050 = vadd.f32 %v4298, %v4991
    %v5051 = vadd.f32 %v4299, %v4993
    %v5052 = vadd.f32 %v4300, %v5032
    %v5053 = vadd.f32 %v4301, %v5034
    %v5054 = vld [vmem:[#allocation3 + $0x4] sm:$0xff]
    %v5055 = vld [vmem:[#allocation3 + $0xc] sm:$0xff]
    %v5056 = vld [vmem:[#allocation3 + $0x14] sm:$0xff]
    %v5057 = vld [vmem:[#allocation3 + $0x1c] sm:$0xff]
    %v5058 = vld [vmem:[#allocation3 + $0x24] sm:$0xff]
    %v5059 = vld [vmem:[#allocation3 + $0x2c] sm:$0xff]
    %v5060 = vld [vmem:[#allocation3 + $0x34] sm:$0xff]
    %v5061 = vld [vmem:[#allocation3 + $0x3c] sm:$0xff]
    %v5062 = vld [vmem:[#allocation3 + $0x44] sm:$0xf]
    %s5063 = scalar_lea.vmem %s4, 96
    %v5064 = vld [vmem:[%s5063] sm:$0xff]
    %v5065 = vld [vmem:[%s5063 + $0x8] sm:$0xff]
    %v5066 = vunpack.c.l.bf16 %v5064
    %v5067 = vunpack.c.h.bf16 %v5064
    %v5068 = vunpack.c.l.bf16 %v5065
    %v5069 = vunpack.c.h.bf16 %v5065
    %v5074 = vlaneseq
    %v5075 = vshrl.u32 %v5074, 7
    %v5076 = vsub.s32 0, %v5075
    %v5077 = vrot.slane %v5066, %v5076
    %v5078 = vlaneseq
    %v5079 = vshrl.u32 %v5078, 7
    %v5080 = vsub.s32 2, %v5079
    %v5081 = vrot.slane %v5066, %v5080
    %v5082 = vlaneseq
    %v5083 = vshrl.u32 %v5082, 7
    %v5084 = vsub.s32 4, %v5083
    %v5085 = vrot.slane %v5066, %v5084
    %v5086 = vlaneseq
    %v5087 = vshrl.u32 %v5086, 7
    %v5088 = vsub.s32 6, %v5087
    %v5089 = vrot.slane %v5066, %v5088
    %v5090 = vlaneseq
    %v5091 = vshrl.u32 %v5090, 7
    %v5092 = vsub.s32 0, %v5091
    %v5093 = vrot.slane %v5067, %v5092
    %v5094 = vlaneseq
    %v5095 = vshrl.u32 %v5094, 7
    %v5096 = vsub.s32 2, %v5095
    %v5097 = vrot.slane %v5067, %v5096
    %v5098 = vlaneseq
    %v5099 = vshrl.u32 %v5098, 7
    %v5100 = vsub.s32 4, %v5099
    %v5101 = vrot.slane %v5067, %v5100
    %v5102 = vlaneseq
    %v5103 = vshrl.u32 %v5102, 7
    %v5104 = vsub.s32 6, %v5103
    %v5105 = vrot.slane %v5067, %v5104
    %v5106 = vlaneseq
    %v5107 = vshrl.u32 %v5106, 7
    %v5108 = vsub.s32 0, %v5107
    %v5109 = vrot.slane %v5068, %v5108
    %v5110 = vlaneseq
    %v5111 = vshrl.u32 %v5110, 7
    %v5112 = vsub.s32 2, %v5111
    %v5113 = vrot.slane %v5068, %v5112
    %v5114 = vlaneseq
    %v5115 = vshrl.u32 %v5114, 7
    %v5116 = vsub.s32 4, %v5115
    %v5117 = vrot.slane %v5068, %v5116
    %v5118 = vlaneseq
    %v5119 = vshrl.u32 %v5118, 7
    %v5120 = vsub.s32 6, %v5119
    %v5121 = vrot.slane %v5068, %v5120
    %v5122 = vlaneseq
    %v5123 = vshrl.u32 %v5122, 7
    %v5124 = vsub.s32 0, %v5123
    %v5125 = vrot.slane %v5069, %v5124
    %v5126 = vlaneseq
    %v5127 = vshrl.u32 %v5126, 7
    %v5128 = vsub.s32 2, %v5127
    %v5129 = vrot.slane %v5069, %v5128
    %v5130 = vlaneseq
    %v5131 = vshrl.u32 %v5130, 7
    %v5132 = vsub.s32 4, %v5131
    %v5133 = vrot.slane %v5069, %v5132
    %v5134 = vlaneseq
    %v5135 = vshrl.u32 %v5134, 7
    %v5136 = vsub.s32 6, %v5135
    %v5137 = vrot.slane %v5069, %v5136
    %v5154 = vlaneseq
    %v5155 = vshrl.u32 %v5154, 7
    %v5156 = vsub.s32 0, %v5155
    %v5157 = vrot.slane %v5077, %v5156
    %v5158 = vlaneseq
    %v5159 = vshrl.u32 %v5158, 7
    %v5160 = vsub.s32 0, %v5159
    %v5161 = vrot.slane %v5081, %v5160
    %v5162 = vlaneseq
    %v5163 = vshrl.u32 %v5162, 7
    %v5164 = vsub.s32 0, %v5163
    %v5165 = vrot.slane %v5085, %v5164
    %v5166 = vlaneseq
    %v5167 = vshrl.u32 %v5166, 7
    %v5168 = vsub.s32 0, %v5167
    %v5169 = vrot.slane %v5089, %v5168
    %v5170 = vlaneseq
    %v5171 = vshrl.u32 %v5170, 7
    %v5172 = vsub.s32 0, %v5171
    %v5173 = vrot.slane %v5093, %v5172
    %v5174 = vlaneseq
    %v5175 = vshrl.u32 %v5174, 7
    %v5176 = vsub.s32 0, %v5175
    %v5177 = vrot.slane %v5097, %v5176
    %v5178 = vlaneseq
    %v5179 = vshrl.u32 %v5178, 7
    %v5180 = vsub.s32 0, %v5179
    %v5181 = vrot.slane %v5101, %v5180
    %v5182 = vlaneseq
    %v5183 = vshrl.u32 %v5182, 7
    %v5184 = vsub.s32 0, %v5183
    %v5185 = vrot.slane %v5105, %v5184
    %v5186 = vlaneseq
    %v5187 = vshrl.u32 %v5186, 7
    %v5188 = vsub.s32 0, %v5187
    %v5189 = vrot.slane %v5109, %v5188
    %v5190 = vlaneseq
    %v5191 = vshrl.u32 %v5190, 7
    %v5192 = vsub.s32 0, %v5191
    %v5193 = vrot.slane %v5113, %v5192
    %v5194 = vlaneseq
    %v5195 = vshrl.u32 %v5194, 7
    %v5196 = vsub.s32 0, %v5195
    %v5197 = vrot.slane %v5117, %v5196
    %v5198 = vlaneseq
    %v5199 = vshrl.u32 %v5198, 7
    %v5200 = vsub.s32 0, %v5199
    %v5201 = vrot.slane %v5121, %v5200
    %v5202 = vlaneseq
    %v5203 = vshrl.u32 %v5202, 7
    %v5204 = vsub.s32 0, %v5203
    %v5205 = vrot.slane %v5125, %v5204
    %v5206 = vlaneseq
    %v5207 = vshrl.u32 %v5206, 7
    %v5208 = vsub.s32 0, %v5207
    %v5209 = vrot.slane %v5129, %v5208
    %v5210 = vlaneseq
    %v5211 = vshrl.u32 %v5210, 7
    %v5212 = vsub.s32 0, %v5211
    %v5213 = vrot.slane %v5133, %v5212
    %v5214 = vlaneseq
    %v5215 = vshrl.u32 %v5214, 7
    %v5216 = vsub.s32 0, %v5215
    %v5217 = vrot.slane %v5137, %v5216
    %v5234 = vcombine.low %v5157, %v5161
    %v5235 = vcombine.low %v5165, %v5169
    %v5236 = vcombine.low %v5173, %v5177
    %v5237 = vcombine.low %v5181, %v5185
    %v5238 = vcombine.low %v5189, %v5193
    %v5239 = vcombine.low %v5197, %v5201
    %v5240 = vcombine.low %v5205, %v5209
    %v5241 = vcombine.low %v5213, %v5217
    %5242 = vrot.lane.b32.xlu0 %v5234, 31
    %v5243 = vpop.permute.xlu0 %5242
    %5244 = vrot.lane.b32.xlu0 %v5235, 31
    %v5245 = vpop.permute.xlu0 %5244
    %5246 = vrot.lane.b32.xlu0 %v5236, 31
    %v5247 = vpop.permute.xlu0 %5246
    %5248 = vrot.lane.b32.xlu0 %v5237, 31
    %v5249 = vpop.permute.xlu0 %5248
    %5250 = vrot.lane.b32.xlu0 %v5238, 31
    %v5251 = vpop.permute.xlu0 %5250
    %5252 = vrot.lane.b32.xlu0 %v5239, 31
    %v5253 = vpop.permute.xlu0 %5252
    %5254 = vrot.lane.b32.xlu0 %v5240, 31
    %v5255 = vpop.permute.xlu0 %5254
    %5256 = vrot.lane.b32.xlu0 %v5241, 31
    %v5257 = vpop.permute.xlu0 %5256
    %v5258 = vrot.slane %v5243, 4
    %v5259 = vrot.slane %v5245, 4
    %v5260 = vrot.slane %v5247, 4
    %v5261 = vrot.slane %v5249, 4
    %v5262 = vrot.slane %v5251, 4
    %v5263 = vrot.slane %v5253, 4
    %v5264 = vrot.slane %v5255, 4
    %v5265 = vrot.slane %v5257, 4
    %vm5266 = vcmask 252928
    %v5267 = vsel %vm5266, %v5258, %v5243
    %v5268 = vsel %vm1102, %v5258, %v5259
    %v5269 = vsel %vm5266, %v5268, %v5245
    %v5270 = vsel %vm1102, %v5259, %v5260
    %v5271 = vsel %vm5266, %v5270, %v5247
    %v5272 = vsel %vm1102, %v5260, %v5261
    %v5273 = vsel %vm5266, %v5272, %v5249
    %v5274 = vsel %vm1102, %v5261, %v5262
    %v5275 = vsel %vm5266, %v5274, %v5251
    %v5276 = vsel %vm1102, %v5262, %v5263
    %v5277 = vsel %vm5266, %v5276, %v5253
    %v5278 = vsel %vm1102, %v5263, %v5264
    %v5279 = vsel %vm5266, %v5278, %v5255
    %v5280 = vsel %vm1102, %v5264, %v5265
    %v5281 = vsel %vm5266, %v5280, %v5257
    %v5291 = vmul.f32 %v5054, %v5267
    %v5292 = vmul.f32 %v5055, %v5269
    %v5293 = vmul.f32 %v5056, %v5271
    %v5294 = vmul.f32 %v5057, %v5273
    %v5295 = vmul.f32 %v5058, %v5275
    %v5296 = vmul.f32 %v5059, %v5277
    %v5297 = vmul.f32 %v5060, %v5279
    %v5298 = vmul.f32 %v5061, %v5281
    %v5299 = vmul.f32 %v5062, %v5265
    %v5308 = vcombine.high %v5291, %v5291
    %v5309 = vcombine.high %v5292, %v5292
    %v5310 = vcombine.high %v5293, %v5293
    %v5311 = vcombine.high %v5294, %v5294
    %v5312 = vcombine.high %v5295, %v5295
    %v5313 = vcombine.high %v5296, %v5296
    %v5314 = vcombine.high %v5297, %v5297
    %v5315 = vcombine.high %v5298, %v5298
    %v5324 = vpack.c.bf16 %v5291, %v5291
    %v5325 = vpack.c.bf16 %v5308, %v5308
    %v5326 = vpack.c.bf16 %v5292, %v5292
    %v5327 = vpack.c.bf16 %v5309, %v5309
    %v5328 = vpack.c.bf16 %v5293, %v5293
    %v5329 = vpack.c.bf16 %v5310, %v5310
    %v5330 = vpack.c.bf16 %v5294, %v5294
    %v5331 = vpack.c.bf16 %v5311, %v5311
    %v5332 = vpack.c.bf16 %v5295, %v5295
    %v5333 = vpack.c.bf16 %v5312, %v5312
    %v5334 = vpack.c.bf16 %v5296, %v5296
    %v5335 = vpack.c.bf16 %v5313, %v5313
    %v5336 = vpack.c.bf16 %v5297, %v5297
    %v5337 = vpack.c.bf16 %v5314, %v5314
    %v5338 = vpack.c.bf16 %v5298, %v5298
    %v5339 = vpack.c.bf16 %v5315, %v5315
    %v5340 = vpack.c.bf16 %v5299, %v5299
    %s5341 = scalar_lea.vmem %s2, 24
    %v5342 = vld [vmem:[%s5341] sm:$0xf]
    %5360 = vrot.lane.b32.xlu0 %v5324, 97
    %v5361 = vpop.permute.xlu0 %5360
    %5362 = vrot.lane.b32.xlu0 %v5325, 97
    %v5363 = vpop.permute.xlu0 %5362
    %5364 = vrot.lane.b32.xlu0 %v5326, 97
    %v5365 = vpop.permute.xlu0 %5364
    %5366 = vrot.lane.b32.xlu0 %v5327, 97
    %v5367 = vpop.permute.xlu0 %5366
    %5368 = vrot.lane.b32.xlu0 %v5328, 97
    %v5369 = vpop.permute.xlu0 %5368
    %5370 = vrot.lane.b32.xlu0 %v5329, 97
    %v5371 = vpop.permute.xlu0 %5370
    %5372 = vrot.lane.b32.xlu0 %v5330, 97
    %v5373 = vpop.permute.xlu0 %5372
    %5374 = vrot.lane.b32.xlu0 %v5331, 97
    %v5375 = vpop.permute.xlu0 %5374
    %5376 = vrot.lane.b32.xlu0 %v5332, 97
    %v5377 = vpop.permute.xlu0 %5376
    %5378 = vrot.lane.b32.xlu0 %v5333, 97
    %v5379 = vpop.permute.xlu0 %5378
    %5380 = vrot.lane.b32.xlu0 %v5334, 97
    %v5381 = vpop.permute.xlu0 %5380
    %5382 = vrot.lane.b32.xlu0 %v5335, 97
    %v5383 = vpop.permute.xlu0 %5382
    %5384 = vrot.lane.b32.xlu0 %v5336, 97
    %v5385 = vpop.permute.xlu0 %5384
    %5386 = vrot.lane.b32.xlu0 %v5337, 97
    %v5387 = vpop.permute.xlu0 %5386
    %5388 = vrot.lane.b32.xlu0 %v5338, 97
    %v5389 = vpop.permute.xlu0 %5388
    %5390 = vrot.lane.b32.xlu0 %v5339, 97
    %v5391 = vpop.permute.xlu0 %5390
    %5392 = vrot.lane.b32.xlu0 %v5340, 97
    %v5393 = vpop.permute.xlu0 %5392
    %vm5394 = vcmask 793600
    %v5395 = vsel %vm5394, %v5361, %v5363
    %v5396 = vsel %vm5394, %v5363, %v5365
    %v5397 = vsel %vm5394, %v5365, %v5367
    %v5398 = vsel %vm5394, %v5367, %v5369
    %v5399 = vsel %vm5394, %v5369, %v5371
    %v5400 = vsel %vm5394, %v5371, %v5373
    %v5401 = vsel %vm5394, %v5373, %v5375
    %v5402 = vsel %vm5394, %v5375, %v5377
    %v5403 = vsel %vm5394, %v5377, %v5379
    %v5404 = vsel %vm5394, %v5379, %v5381
    %v5405 = vsel %vm5394, %v5381, %v5383
    %v5406 = vsel %vm5394, %v5383, %v5385
    %v5407 = vsel %vm5394, %v5385, %v5387
    %v5408 = vsel %vm5394, %v5387, %v5389
    %v5409 = vsel %vm5394, %v5389, %v5391
    %v5410 = vsel %vm5394, %v5391, %v5393
    %v5412 = vsel %vm1525, %v5342, 0
    %v5415 = vsel %vm1529, %v5395, 0
    %v5418 = vsel %vm1529, %v5396, 0
    %v5421 = vsel %vm1529, %v5397, 0
    %v5424 = vsel %vm1529, %v5398, 0
    %v5427 = vsel %vm1529, %v5399, 0
    %v5430 = vsel %vm1529, %v5400, 0
    %v5433 = vsel %vm1529, %v5401, 0
    %v5436 = vsel %vm1529, %v5402, 0
    %v5439 = vsel %vm1529, %v5403, 0
    %v5442 = vsel %vm1529, %v5404, 0
    %v5445 = vsel %vm1529, %v5405, 0
    %v5448 = vsel %vm1529, %v5406, 0
    %v5451 = vsel %vm1529, %v5407, 0
    %v5454 = vsel %vm1529, %v5408, 0
    %v5457 = vsel %vm1529, %v5409, 0
    %v5460 = vsel %vm1529, %v5410, 0
    %5462 = vmatprep.subr.bf16.mxu0 %v5418
    %5463 = vmatpush1.bf16.msra.mxu0 %v5415
    %5464 = vmatprep.subr.bf16.mxu0 0
    %5465 = vmatpush1.bf16.msra.mxu0 0
    %5466 = vmatprep.subr.bf16.mxu0 0
    %5467 = vmatpush1.bf16.msra.mxu0 0
    %5468 = vmatprep.subr.bf16.mxu0 0
    %5469 = vmatpush1.bf16.msra.mxu0 0
    %5470 = vmatprep.subr.bf16.mxu0 0
    %5471 = vmatpush1.bf16.msra.mxu0 0
    %5472 = vmatprep.subr.bf16.mxu0 0
    %5473 = vmatpush1.bf16.msra.mxu0 0
    %5474 = vmatprep.subr.bf16.mxu0 0
    %5475 = vmatpush1.bf16.msra.mxu0 0
    %5476 = vmatprep.subr.bf16.mxu0 0
    %5477 = vmatpush1.bf16.msra.mxu0 0
    %5478 = vmatprep.subr.bf16.mxu0 0
    %5479 = vmatpush1.bf16.msra.mxu0 0
    %5480 = vmatprep.subr.bf16.mxu0 0
    %5481 = vmatpush1.bf16.msra.mxu0 0
    %5482 = vmatprep.subr.bf16.mxu0 0
    %5483 = vmatpush1.bf16.msra.mxu0 0
    %5484 = vmatprep.subr.bf16.mxu0 0
    %5485 = vmatpush1.bf16.msra.mxu0 0
    %5486 = vmatprep.subr.bf16.mxu0 0
    %5487 = vmatpush1.bf16.msra.mxu0 0
    %5488 = vmatprep.subr.bf16.mxu0 0
    %5489 = vmatpush1.bf16.msra.mxu0 0
    %5490 = vmatprep.subr.bf16.mxu0 0
    %5491 = vmatpush1.bf16.msra.mxu0 0
    %5492 = vmatprep.subr.bf16.mxu0 0
    %5493 = vmatpush1.bf16.msra.mxu0 0
    %5494 = vmatprep.mubr.bf16.mxu0 0
    %5495 = vmatmul.mubr.bf16.gmra.mrb[0].mxu0 %v5412
    %v5496 = vpop.f32.mrb[0].mxu0
    %v5497 = vadd.f32 0.0, %v5496
    %v5498 = vpop.f32.mrb[0].mxu0
    %v5499 = vadd.f32 0.0, %v5498
    %v5500 = vpop.f32.mrb[0].mxu0
    %v5501 = vpop.f32.mrb[0].mxu0
    %5502 = vdwg.mxu0
    %5503 = vmatprep.subr.bf16.mxu0 %v5424
    %5504 = vmatpush1.bf16.msra.mxu0 %v5421
    %5505 = vmatprep.subr.bf16.mxu0 0
    %5506 = vmatpush1.bf16.msra.mxu0 0
    %5507 = vmatprep.subr.bf16.mxu0 0
    %5508 = vmatpush1.bf16.msra.mxu0 0
    %5509 = vmatprep.subr.bf16.mxu0 0
    %5510 = vmatpush1.bf16.msra.mxu0 0
    %5511 = vmatprep.subr.bf16.mxu0 0
    %5512 = vmatpush1.bf16.msra.mxu0 0
    %5513 = vmatprep.subr.bf16.mxu0 0
    %5514 = vmatpush1.bf16.msra.mxu0 0
    %5515 = vmatprep.subr.bf16.mxu0 0
    %5516 = vmatpush1.bf16.msra.mxu0 0
    %5517 = vmatprep.subr.bf16.mxu0 0
    %5518 = vmatpush1.bf16.msra.mxu0 0
    %5519 = vmatprep.subr.bf16.mxu0 0
    %5520 = vmatpush1.bf16.msra.mxu0 0
    %5521 = vmatprep.subr.bf16.mxu0 0
    %5522 = vmatpush1.bf16.msra.mxu0 0
    %5523 = vmatprep.subr.bf16.mxu0 0
    %5524 = vmatpush1.bf16.msra.mxu0 0
    %5525 = vmatprep.subr.bf16.mxu0 0
    %5526 = vmatpush1.bf16.msra.mxu0 0
    %5527 = vmatprep.subr.bf16.mxu0 0
    %5528 = vmatpush1.bf16.msra.mxu0 0
    %5529 = vmatprep.subr.bf16.mxu0 0
    %5530 = vmatpush1.bf16.msra.mxu0 0
    %5531 = vmatprep.subr.bf16.mxu0 0
    %5532 = vmatpush1.bf16.msra.mxu0 0
    %5533 = vmatprep.subr.bf16.mxu0 0
    %5534 = vmatpush1.bf16.msra.mxu0 0
    %5535 = vmatprep.mubr.bf16.mxu0 0
    %5536 = vmatmul.mubr.bf16.gmra.mrb[0].mxu0 %v5412
    %v5537 = vpop.f32.mrb[0].mxu0
    %v5538 = vadd.f32 0.0, %v5537
    %v5539 = vpop.f32.mrb[0].mxu0
    %v5540 = vadd.f32 0.0, %v5539
    %v5541 = vpop.f32.mrb[0].mxu0
    %v5542 = vpop.f32.mrb[0].mxu0
    %5543 = vdwg.mxu0
    %5544 = vmatprep.subr.bf16.mxu0 %v5430
    %5545 = vmatpush1.bf16.msra.mxu0 %v5427
    %5546 = vmatprep.subr.bf16.mxu0 0
    %5547 = vmatpush1.bf16.msra.mxu0 0
    %5548 = vmatprep.subr.bf16.mxu0 0
    %5549 = vmatpush1.bf16.msra.mxu0 0
    %5550 = vmatprep.subr.bf16.mxu0 0
    %5551 = vmatpush1.bf16.msra.mxu0 0
    %5552 = vmatprep.subr.bf16.mxu0 0
    %5553 = vmatpush1.bf16.msra.mxu0 0
    %5554 = vmatprep.subr.bf16.mxu0 0
    %5555 = vmatpush1.bf16.msra.mxu0 0
    %5556 = vmatprep.subr.bf16.mxu0 0
    %5557 = vmatpush1.bf16.msra.mxu0 0
    %5558 = vmatprep.subr.bf16.mxu0 0
    %5559 = vmatpush1.bf16.msra.mxu0 0
    %5560 = vmatprep.subr.bf16.mxu0 0
    %5561 = vmatpush1.bf16.msra.mxu0 0
    %5562 = vmatprep.subr.bf16.mxu0 0
    %5563 = vmatpush1.bf16.msra.mxu0 0
    %5564 = vmatprep.subr.bf16.mxu0 0
    %5565 = vmatpush1.bf16.msra.mxu0 0
    %5566 = vmatprep.subr.bf16.mxu0 0
    %5567 = vmatpush1.bf16.msra.mxu0 0
    %5568 = vmatprep.subr.bf16.mxu0 0
    %5569 = vmatpush1.bf16.msra.mxu0 0
    %5570 = vmatprep.subr.bf16.mxu0 0
    %5571 = vmatpush1.bf16.msra.mxu0 0
    %5572 = vmatprep.subr.bf16.mxu0 0
    %5573 = vmatpush1.bf16.msra.mxu0 0
    %5574 = vmatprep.subr.bf16.mxu0 0
    %5575 = vmatpush1.bf16.msra.mxu0 0
    %5576 = vmatprep.mubr.bf16.mxu0 0
    %5577 = vmatmul.mubr.bf16.gmra.mrb[0].mxu0 %v5412
    %v5578 = vpop.f32.mrb[0].mxu0
    %v5579 = vadd.f32 0.0, %v5578
    %v5580 = vpop.f32.mrb[0].mxu0
    %v5581 = vadd.f32 0.0, %v5580
    %v5582 = vpop.f32.mrb[0].mxu0
    %v5583 = vpop.f32.mrb[0].mxu0
    %5584 = vdwg.mxu0
    %5585 = vmatprep.subr.bf16.mxu0 %v5436
    %5586 = vmatpush1.bf16.msra.mxu0 %v5433
    %5587 = vmatprep.subr.bf16.mxu0 0
    %5588 = vmatpush1.bf16.msra.mxu0 0
    %5589 = vmatprep.subr.bf16.mxu0 0
    %5590 = vmatpush1.bf16.msra.mxu0 0
    %5591 = vmatprep.subr.bf16.mxu0 0
    %5592 = vmatpush1.bf16.msra.mxu0 0
    %5593 = vmatprep.subr.bf16.mxu0 0
    %5594 = vmatpush1.bf16.msra.mxu0 0
    %5595 = vmatprep.subr.bf16.mxu0 0
    %5596 = vmatpush1.bf16.msra.mxu0 0
    %5597 = vmatprep.subr.bf16.mxu0 0
    %5598 = vmatpush1.bf16.msra.mxu0 0
    %5599 = vmatprep.subr.bf16.mxu0 0
    %5600 = vmatpush1.bf16.msra.mxu0 0
    %5601 = vmatprep.subr.bf16.mxu0 0
    %5602 = vmatpush1.bf16.msra.mxu0 0
    %5603 = vmatprep.subr.bf16.mxu0 0
    %5604 = vmatpush1.bf16.msra.mxu0 0
    %5605 = vmatprep.subr.bf16.mxu0 0
    %5606 = vmatpush1.bf16.msra.mxu0 0
    %5607 = vmatprep.subr.bf16.mxu0 0
    %5608 = vmatpush1.bf16.msra.mxu0 0
    %5609 = vmatprep.subr.bf16.mxu0 0
    %5610 = vmatpush1.bf16.msra.mxu0 0
    %5611 = vmatprep.subr.bf16.mxu0 0
    %5612 = vmatpush1.bf16.msra.mxu0 0
    %5613 = vmatprep.subr.bf16.mxu0 0
    %5614 = vmatpush1.bf16.msra.mxu0 0
    %5615 = vmatprep.subr.bf16.mxu0 0
    %5616 = vmatpush1.bf16.msra.mxu0 0
    %5617 = vmatprep.mubr.bf16.mxu0 0
    %5618 = vmatmul.mubr.bf16.gmra.mrb[0].mxu0 %v5412
    %v5619 = vpop.f32.mrb[0].mxu0
    %v5620 = vadd.f32 0.0, %v5619
    %v5621 = vpop.f32.mrb[0].mxu0
    %v5622 = vadd.f32 0.0, %v5621
    %v5623 = vpop.f32.mrb[0].mxu0
    %v5624 = vpop.f32.mrb[0].mxu0
    %5625 = vdwg.mxu0
    %5626 = vmatprep.subr.bf16.mxu0 %v5442
    %5627 = vmatpush1.bf16.msra.mxu0 %v5439
    %5628 = vmatprep.subr.bf16.mxu0 0
    %5629 = vmatpush1.bf16.msra.mxu0 0
    %5630 = vmatprep.subr.bf16.mxu0 0
    %5631 = vmatpush1.bf16.msra.mxu0 0
    %5632 = vmatprep.subr.bf16.mxu0 0
    %5633 = vmatpush1.bf16.msra.mxu0 0
    %5634 = vmatprep.subr.bf16.mxu0 0
    %5635 = vmatpush1.bf16.msra.mxu0 0
    %5636 = vmatprep.subr.bf16.mxu0 0
    %5637 = vmatpush1.bf16.msra.mxu0 0
    %5638 = vmatprep.subr.bf16.mxu0 0
    %5639 = vmatpush1.bf16.msra.mxu0 0
    %5640 = vmatprep.subr.bf16.mxu0 0
    %5641 = vmatpush1.bf16.msra.mxu0 0
    %5642 = vmatprep.subr.bf16.mxu0 0
    %5643 = vmatpush1.bf16.msra.mxu0 0
    %5644 = vmatprep.subr.bf16.mxu0 0
    %5645 = vmatpush1.bf16.msra.mxu0 0
    %5646 = vmatprep.subr.bf16.mxu0 0
    %5647 = vmatpush1.bf16.msra.mxu0 0
    %5648 = vmatprep.subr.bf16.mxu0 0
    %5649 = vmatpush1.bf16.msra.mxu0 0
    %5650 = vmatprep.subr.bf16.mxu0 0
    %5651 = vmatpush1.bf16.msra.mxu0 0
    %5652 = vmatprep.subr.bf16.mxu0 0
    %5653 = vmatpush1.bf16.msra.mxu0 0
    %5654 = vmatprep.subr.bf16.mxu0 0
    %5655 = vmatpush1.bf16.msra.mxu0 0
    %5656 = vmatprep.subr.bf16.mxu0 0
    %5657 = vmatpush1.bf16.msra.mxu0 0
    %5658 = vmatprep.mubr.bf16.mxu0 0
    %5659 = vmatmul.mubr.bf16.gmra.mrb[0].mxu0 %v5412
    %v5660 = vpop.f32.mrb[0].mxu0
    %v5661 = vadd.f32 0.0, %v5660
    %v5662 = vpop.f32.mrb[0].mxu0
    %v5663 = vadd.f32 0.0, %v5662
    %v5664 = vpop.f32.mrb[0].mxu0
    %v5665 = vpop.f32.mrb[0].mxu0
    %5666 = vdwg.mxu0
    %5667 = vmatprep.subr.bf16.mxu0 %v5448
    %5668 = vmatpush1.bf16.msra.mxu0 %v5445
    %5669 = vmatprep.subr.bf16.mxu0 0
    %5670 = vmatpush1.bf16.msra.mxu0 0
    %5671 = vmatprep.subr.bf16.mxu0 0
    %5672 = vmatpush1.bf16.msra.mxu0 0
    %5673 = vmatprep.subr.bf16.mxu0 0
    %5674 = vmatpush1.bf16.msra.mxu0 0
    %5675 = vmatprep.subr.bf16.mxu0 0
    %5676 = vmatpush1.bf16.msra.mxu0 0
    %5677 = vmatprep.subr.bf16.mxu0 0
    %5678 = vmatpush1.bf16.msra.mxu0 0
    %5679 = vmatprep.subr.bf16.mxu0 0
    %5680 = vmatpush1.bf16.msra.mxu0 0
    %5681 = vmatprep.subr.bf16.mxu0 0
    %5682 = vmatpush1.bf16.msra.mxu0 0
    %5683 = vmatprep.subr.bf16.mxu0 0
    %5684 = vmatpush1.bf16.msra.mxu0 0
    %5685 = vmatprep.subr.bf16.mxu0 0
    %5686 = vmatpush1.bf16.msra.mxu0 0
    %5687 = vmatprep.subr.bf16.mxu0 0
    %5688 = vmatpush1.bf16.msra.mxu0 0
    %5689 = vmatprep.subr.bf16.mxu0 0
    %5690 = vmatpush1.bf16.msra.mxu0 0
    %5691 = vmatprep.subr.bf16.mxu0 0
    %5692 = vmatpush1.bf16.msra.mxu0 0
    %5693 = vmatprep.subr.bf16.mxu0 0
    %5694 = vmatpush1.bf16.msra.mxu0 0
    %5695 = vmatprep.subr.bf16.mxu0 0
    %5696 = vmatpush1.bf16.msra.mxu0 0
    %5697 = vmatprep.subr.bf16.mxu0 0
    %5698 = vmatpush1.bf16.msra.mxu0 0
    %5699 = vmatprep.mubr.bf16.mxu0 0
    %5700 = vmatmul.mubr.bf16.gmra.mrb[0].mxu0 %v5412
    %v5701 = vpop.f32.mrb[0].mxu0
    %v5702 = vadd.f32 0.0, %v5701
    %v5703 = vpop.f32.mrb[0].mxu0
    %v5704 = vadd.f32 0.0, %v5703
    %v5705 = vpop.f32.mrb[0].mxu0
    %v5706 = vpop.f32.mrb[0].mxu0
    %5707 = vdwg.mxu0
    %5708 = vmatprep.subr.bf16.mxu0 %v5454
    %5709 = vmatpush1.bf16.msra.mxu0 %v5451
    %5710 = vmatprep.subr.bf16.mxu0 0
    %5711 = vmatpush1.bf16.msra.mxu0 0
    %5712 = vmatprep.subr.bf16.mxu0 0
    %5713 = vmatpush1.bf16.msra.mxu0 0
    %5714 = vmatprep.subr.bf16.mxu0 0
    %5715 = vmatpush1.bf16.msra.mxu0 0
    %5716 = vmatprep.subr.bf16.mxu0 0
    %5717 = vmatpush1.bf16.msra.mxu0 0
    %5718 = vmatprep.subr.bf16.mxu0 0
    %5719 = vmatpush1.bf16.msra.mxu0 0
    %5720 = vmatprep.subr.bf16.mxu0 0
    %5721 = vmatpush1.bf16.msra.mxu0 0
    %5722 = vmatprep.subr.bf16.mxu0 0
    %5723 = vmatpush1.bf16.msra.mxu0 0
    %5724 = vmatprep.subr.bf16.mxu0 0
    %5725 = vmatpush1.bf16.msra.mxu0 0
    %5726 = vmatprep.subr.bf16.mxu0 0
    %5727 = vmatpush1.bf16.msra.mxu0 0
    %5728 = vmatprep.subr.bf16.mxu0 0
    %5729 = vmatpush1.bf16.msra.mxu0 0
    %5730 = vmatprep.subr.bf16.mxu0 0
    %5731 = vmatpush1.bf16.msra.mxu0 0
    %5732 = vmatprep.subr.bf16.mxu0 0
    %5733 = vmatpush1.bf16.msra.mxu0 0
    %5734 = vmatprep.subr.bf16.mxu0 0
    %5735 = vmatpush1.bf16.msra.mxu0 0
    %5736 = vmatprep.subr.bf16.mxu0 0
    %5737 = vmatpush1.bf16.msra.mxu0 0
    %5738 = vmatprep.subr.bf16.mxu0 0
    %5739 = vmatpush1.bf16.msra.mxu0 0
    %5740 = vmatprep.mubr.bf16.mxu0 0
    %5741 = vmatmul.mubr.bf16.gmra.mrb[0].mxu0 %v5412
    %v5742 = vpop.f32.mrb[0].mxu0
    %v5743 = vadd.f32 0.0, %v5742
    %v5744 = vpop.f32.mrb[0].mxu0
    %v5745 = vadd.f32 0.0, %v5744
    %v5746 = vpop.f32.mrb[0].mxu0
    %v5747 = vpop.f32.mrb[0].mxu0
    %5748 = vdwg.mxu0
    %5749 = vmatprep.subr.bf16.mxu0 %v5460
    %5750 = vmatpush1.bf16.msra.mxu0 %v5457
    %5751 = vmatprep.subr.bf16.mxu0 0
    %5752 = vmatpush1.bf16.msra.mxu0 0
    %5753 = vmatprep.subr.bf16.mxu0 0
    %5754 = vmatpush1.bf16.msra.mxu0 0
    %5755 = vmatprep.subr.bf16.mxu0 0
    %5756 = vmatpush1.bf16.msra.mxu0 0
    %5757 = vmatprep.subr.bf16.mxu0 0
    %5758 = vmatpush1.bf16.msra.mxu0 0
    %5759 = vmatprep.subr.bf16.mxu0 0
    %5760 = vmatpush1.bf16.msra.mxu0 0
    %5761 = vmatprep.subr.bf16.mxu0 0
    %5762 = vmatpush1.bf16.msra.mxu0 0
    %5763 = vmatprep.subr.bf16.mxu0 0
    %5764 = vmatpush1.bf16.msra.mxu0 0
    %5765 = vmatprep.subr.bf16.mxu0 0
    %5766 = vmatpush1.bf16.msra.mxu0 0
    %5767 = vmatprep.subr.bf16.mxu0 0
    %5768 = vmatpush1.bf16.msra.mxu0 0
    %5769 = vmatprep.subr.bf16.mxu0 0
    %5770 = vmatpush1.bf16.msra.mxu0 0
    %5771 = vmatprep.subr.bf16.mxu0 0
    %5772 = vmatpush1.bf16.msra.mxu0 0
    %5773 = vmatprep.subr.bf16.mxu0 0
    %5774 = vmatpush1.bf16.msra.mxu0 0
    %5775 = vmatprep.subr.bf16.mxu0 0
    %5776 = vmatpush1.bf16.msra.mxu0 0
    %5777 = vmatprep.subr.bf16.mxu0 0
    %5778 = vmatpush1.bf16.msra.mxu0 0
    %5779 = vmatprep.subr.bf16.mxu0 0
    %5780 = vmatpush1.bf16.msra.mxu0 0
    %5781 = vmatprep.mubr.bf16.mxu0 0
    %5782 = vmatmul.mubr.bf16.gmra.mrb[0].mxu0 %v5412
    %v5783 = vpop.f32.mrb[0].mxu0
    %v5784 = vadd.f32 0.0, %v5783
    %v5785 = vpop.f32.mrb[0].mxu0
    %v5786 = vadd.f32 0.0, %v5785
    %v5787 = vpop.f32.mrb[0].mxu0
    %v5788 = vpop.f32.mrb[0].mxu0
    %5789 = vdwg.mxu0
    %v5790 = vadd.f32 %v5038, %v5497
    %v5791 = vadd.f32 %v5039, %v5499
    %v5792 = vadd.f32 %v5040, %v5538
    %v5793 = vadd.f32 %v5041, %v5540
    %v5794 = vadd.f32 %v5042, %v5579
    %v5795 = vadd.f32 %v5043, %v5581
    %v5796 = vadd.f32 %v5044, %v5620
    %v5797 = vadd.f32 %v5045, %v5622
    %v5798 = vadd.f32 %v5046, %v5661
    %v5799 = vadd.f32 %v5047, %v5663
    %v5800 = vadd.f32 %v5048, %v5702
    %v5801 = vadd.f32 %v5049, %v5704
    %v5802 = vadd.f32 %v5050, %v5743
    %v5803 = vadd.f32 %v5051, %v5745
    %v5804 = vadd.f32 %v5052, %v5784
    %v5805 = vadd.f32 %v5053, %v5786
    %v5806 = vld [vmem:[#allocation3 + $0x4] sm:$0xff]
    %v5807 = vld [vmem:[#allocation3 + $0xc] sm:$0xff]
    %v5808 = vld [vmem:[#allocation3 + $0x14] sm:$0xff]
    %v5809 = vld [vmem:[#allocation3 + $0x1c] sm:$0xff]
    %v5810 = vld [vmem:[#allocation3 + $0x24] sm:$0xff]
    %v5811 = vld [vmem:[#allocation3 + $0x2c] sm:$0xff]
    %v5812 = vld [vmem:[#allocation3 + $0x34] sm:$0xff]
    %v5813 = vld [vmem:[#allocation3 + $0x3c] sm:$0xff]
    %v5814 = vld [vmem:[#allocation3 + $0x44] sm:$0xf]
    %s5815 = scalar_lea.vmem %s4, 112
    %v5816 = vld [vmem:[%s5815] sm:$0xff]
    %v5817 = vld [vmem:[%s5815 + $0x8] sm:$0xff]
    %v5818 = vunpack.c.l.bf16 %v5816
    %v5819 = vunpack.c.h.bf16 %v5816
    %v5820 = vunpack.c.l.bf16 %v5817
    %v5821 = vunpack.c.h.bf16 %v5817
    %v5826 = vlaneseq
    %v5827 = vshrl.u32 %v5826, 7
    %v5828 = vsub.s32 0, %v5827
    %v5829 = vrot.slane %v5818, %v5828
    %v5830 = vlaneseq
    %v5831 = vshrl.u32 %v5830, 7
    %v5832 = vsub.s32 2, %v5831
    %v5833 = vrot.slane %v5818, %v5832
    %v5834 = vlaneseq
    %v5835 = vshrl.u32 %v5834, 7
    %v5836 = vsub.s32 4, %v5835
    %v5837 = vrot.slane %v5818, %v5836
    %v5838 = vlaneseq
    %v5839 = vshrl.u32 %v5838, 7
    %v5840 = vsub.s32 6, %v5839
    %v5841 = vrot.slane %v5818, %v5840
    %v5842 = vlaneseq
    %v5843 = vshrl.u32 %v5842, 7
    %v5844 = vsub.s32 0, %v5843
    %v5845 = vrot.slane %v5819, %v5844
    %v5846 = vlaneseq
    %v5847 = vshrl.u32 %v5846, 7
    %v5848 = vsub.s32 2, %v5847
    %v5849 = vrot.slane %v5819, %v5848
    %v5850 = vlaneseq
    %v5851 = vshrl.u32 %v5850, 7
    %v5852 = vsub.s32 4, %v5851
    %v5853 = vrot.slane %v5819, %v5852
    %v5854 = vlaneseq
    %v5855 = vshrl.u32 %v5854, 7
    %v5856 = vsub.s32 6, %v5855
    %v5857 = vrot.slane %v5819, %v5856
    %v5858 = vlaneseq
    %v5859 = vshrl.u32 %v5858, 7
    %v5860 = vsub.s32 0, %v5859
    %v5861 = vrot.slane %v5820, %v5860
    %v5862 = vlaneseq
    %v5863 = vshrl.u32 %v5862, 7
    %v5864 = vsub.s32 2, %v5863
    %v5865 = vrot.slane %v5820, %v5864
    %v5866 = vlaneseq
    %v5867 = vshrl.u32 %v5866, 7
    %v5868 = vsub.s32 4, %v5867
    %v5869 = vrot.slane %v5820, %v5868
    %v5870 = vlaneseq
    %v5871 = vshrl.u32 %v5870, 7
    %v5872 = vsub.s32 6, %v5871
    %v5873 = vrot.slane %v5820, %v5872
    %v5874 = vlaneseq
    %v5875 = vshrl.u32 %v5874, 7
    %v5876 = vsub.s32 0, %v5875
    %v5877 = vrot.slane %v5821, %v5876
    %v5878 = vlaneseq
    %v5879 = vshrl.u32 %v5878, 7
    %v5880 = vsub.s32 2, %v5879
    %v5881 = vrot.slane %v5821, %v5880
    %v5882 = vlaneseq
    %v5883 = vshrl.u32 %v5882, 7
    %v5884 = vsub.s32 4, %v5883
    %v5885 = vrot.slane %v5821, %v5884
    %v5886 = vlaneseq
    %v5887 = vshrl.u32 %v5886, 7
    %v5888 = vsub.s32 6, %v5887
    %v5889 = vrot.slane %v5821, %v5888
    %v5906 = vlaneseq
    %v5907 = vshrl.u32 %v5906, 7
    %v5908 = vsub.s32 0, %v5907
    %v5909 = vrot.slane %v5829, %v5908
    %v5910 = vlaneseq
    %v5911 = vshrl.u32 %v5910, 7
    %v5912 = vsub.s32 0, %v5911
    %v5913 = vrot.slane %v5833, %v5912
    %v5914 = vlaneseq
    %v5915 = vshrl.u32 %v5914, 7
    %v5916 = vsub.s32 0, %v5915
    %v5917 = vrot.slane %v5837, %v5916
    %v5918 = vlaneseq
    %v5919 = vshrl.u32 %v5918, 7
    %v5920 = vsub.s32 0, %v5919
    %v5921 = vrot.slane %v5841, %v5920
    %v5922 = vlaneseq
    %v5923 = vshrl.u32 %v5922, 7
    %v5924 = vsub.s32 0, %v5923
    %v5925 = vrot.slane %v5845, %v5924
    %v5926 = vlaneseq
    %v5927 = vshrl.u32 %v5926, 7
    %v5928 = vsub.s32 0, %v5927
    %v5929 = vrot.slane %v5849, %v5928
    %v5930 = vlaneseq
    %v5931 = vshrl.u32 %v5930, 7
    %v5932 = vsub.s32 0, %v5931
    %v5933 = vrot.slane %v5853, %v5932
    %v5934 = vlaneseq
    %v5935 = vshrl.u32 %v5934, 7
    %v5936 = vsub.s32 0, %v5935
    %v5937 = vrot.slane %v5857, %v5936
    %v5938 = vlaneseq
    %v5939 = vshrl.u32 %v5938, 7
    %v5940 = vsub.s32 0, %v5939
    %v5941 = vrot.slane %v5861, %v5940
    %v5942 = vlaneseq
    %v5943 = vshrl.u32 %v5942, 7
    %v5944 = vsub.s32 0, %v5943
    %v5945 = vrot.slane %v5865, %v5944
    %v5946 = vlaneseq
    %v5947 = vshrl.u32 %v5946, 7
    %v5948 = vsub.s32 0, %v5947
    %v5949 = vrot.slane %v5869, %v5948
    %v5950 = vlaneseq
    %v5951 = vshrl.u32 %v5950, 7
    %v5952 = vsub.s32 0, %v5951
    %v5953 = vrot.slane %v5873, %v5952
    %v5954 = vlaneseq
    %v5955 = vshrl.u32 %v5954, 7
    %v5956 = vsub.s32 0, %v5955
    %v5957 = vrot.slane %v5877, %v5956
    %v5958 = vlaneseq
    %v5959 = vshrl.u32 %v5958, 7
    %v5960 = vsub.s32 0, %v5959
    %v5961 = vrot.slane %v5881, %v5960
    %v5962 = vlaneseq
    %v5963 = vshrl.u32 %v5962, 7
    %v5964 = vsub.s32 0, %v5963
    %v5965 = vrot.slane %v5885, %v5964
    %v5966 = vlaneseq
    %v5967 = vshrl.u32 %v5966, 7
    %v5968 = vsub.s32 0, %v5967
    %v5969 = vrot.slane %v5889, %v5968
    %v5986 = vcombine.low %v5909, %v5913
    %v5987 = vcombine.low %v5917, %v5921
    %v5988 = vcombine.low %v5925, %v5929
    %v5989 = vcombine.low %v5933, %v5937
    %v5990 = vcombine.low %v5941, %v5945
    %v5991 = vcombine.low %v5949, %v5953
    %v5992 = vcombine.low %v5957, %v5961
    %v5993 = vcombine.low %v5965, %v5969
    %5994 = vrot.lane.b32.xlu0 %v5986, 32
    %v5995 = vpop.permute.xlu0 %5994
    %5996 = vrot.lane.b32.xlu0 %v5987, 32
    %v5997 = vpop.permute.xlu0 %5996
    %5998 = vrot.lane.b32.xlu0 %v5988, 32
    %v5999 = vpop.permute.xlu0 %5998
    %6000 = vrot.lane.b32.xlu0 %v5989, 32
    %v6001 = vpop.permute.xlu0 %6000
    %6002 = vrot.lane.b32.xlu0 %v5990, 32
    %v6003 = vpop.permute.xlu0 %6002
    %6004 = vrot.lane.b32.xlu0 %v5991, 32
    %v6005 = vpop.permute.xlu0 %6004
    %6006 = vrot.lane.b32.xlu0 %v5992, 32
    %v6007 = vpop.permute.xlu0 %6006
    %6008 = vrot.lane.b32.xlu0 %v5993, 32
    %v6009 = vpop.permute.xlu0 %6008
    %v6010 = vrot.slane %v5995, 4
    %v6011 = vrot.slane %v5997, 4
    %v6012 = vrot.slane %v5999, 4
    %v6013 = vrot.slane %v6001, 4
    %v6014 = vrot.slane %v6003, 4
    %v6015 = vrot.slane %v6005, 4
    %v6016 = vrot.slane %v6007, 4
    %v6017 = vrot.slane %v6009, 4
    %vm6018 = vcmask 261120
    %v6019 = vsel %vm6018, %v6010, %v5995
    %v6020 = vsel %vm1102, %v6010, %v6011
    %v6021 = vsel %vm6018, %v6020, %v5997
    %v6022 = vsel %vm1102, %v6011, %v6012
    %v6023 = vsel %vm6018, %v6022, %v5999
    %v6024 = vsel %vm1102, %v6012, %v6013
    %v6025 = vsel %vm6018, %v6024, %v6001
    %v6026 = vsel %vm1102, %v6013, %v6014
    %v6027 = vsel %vm6018, %v6026, %v6003
    %v6028 = vsel %vm1102, %v6014, %v6015
    %v6029 = vsel %vm6018, %v6028, %v6005
    %v6030 = vsel %vm1102, %v6015, %v6016
    %v6031 = vsel %vm6018, %v6030, %v6007
    %v6032 = vsel %vm1102, %v6016, %v6017
    %v6033 = vsel %vm6018, %v6032, %v6009
    %v6043 = vmul.f32 %v5806, %v6019
    %v6044 = vmul.f32 %v5807, %v6021
    %v6045 = vmul.f32 %v5808, %v6023
    %v6046 = vmul.f32 %v5809, %v6025
    %v6047 = vmul.f32 %v5810, %v6027
    %v6048 = vmul.f32 %v5811, %v6029
    %v6049 = vmul.f32 %v5812, %v6031
    %v6050 = vmul.f32 %v5813, %v6033
    %v6051 = vmul.f32 %v5814, %v6017
    %v6060 = vcombine.high %v6043, %v6043
    %v6061 = vcombine.high %v6044, %v6044
    %v6062 = vcombine.high %v6045, %v6045
    %v6063 = vcombine.high %v6046, %v6046
    %v6064 = vcombine.high %v6047, %v6047
    %v6065 = vcombine.high %v6048, %v6048
    %v6066 = vcombine.high %v6049, %v6049
    %v6067 = vcombine.high %v6050, %v6050
    %v6076 = vpack.c.bf16 %v6043, %v6043
    %v6077 = vpack.c.bf16 %v6060, %v6060
    %v6078 = vpack.c.bf16 %v6044, %v6044
    %v6079 = vpack.c.bf16 %v6061, %v6061
    %v6080 = vpack.c.bf16 %v6045, %v6045
    %v6081 = vpack.c.bf16 %v6062, %v6062
    %v6082 = vpack.c.bf16 %v6046, %v6046
    %v6083 = vpack.c.bf16 %v6063, %v6063
    %v6084 = vpack.c.bf16 %v6047, %v6047
    %v6085 = vpack.c.bf16 %v6064, %v6064
    %v6086 = vpack.c.bf16 %v6048, %v6048
    %v6087 = vpack.c.bf16 %v6065, %v6065
    %v6088 = vpack.c.bf16 %v6049, %v6049
    %v6089 = vpack.c.bf16 %v6066, %v6066
    %v6090 = vpack.c.bf16 %v6050, %v6050
    %v6091 = vpack.c.bf16 %v6067, %v6067
    %v6092 = vpack.c.bf16 %v6051, %v6051
    %s6093 = scalar_lea.vmem %s2, 28
    %v6094 = vld [vmem:[%s6093] sm:$0xf]
    %6112 = vrot.lane.b32.xlu0 %v6076, 96
    %v6113 = vpop.permute.xlu0 %6112
    %6114 = vrot.lane.b32.xlu0 %v6077, 96
    %v6115 = vpop.permute.xlu0 %6114
    %6116 = vrot.lane.b32.xlu0 %v6078, 96
    %v6117 = vpop.permute.xlu0 %6116
    %6118 = vrot.lane.b32.xlu0 %v6079, 96
    %v6119 = vpop.permute.xlu0 %6118
    %6120 = vrot.lane.b32.xlu0 %v6080, 96
    %v6121 = vpop.permute.xlu0 %6120
    %6122 = vrot.lane.b32.xlu0 %v6081, 96
    %v6123 = vpop.permute.xlu0 %6122
    %6124 = vrot.lane.b32.xlu0 %v6082, 96
    %v6125 = vpop.permute.xlu0 %6124
    %6126 = vrot.lane.b32.xlu0 %v6083, 96
    %v6127 = vpop.permute.xlu0 %6126
    %6128 = vrot.lane.b32.xlu0 %v6084, 96
    %v6129 = vpop.permute.xlu0 %6128
    %6130 = vrot.lane.b32.xlu0 %v6085, 96
    %v6131 = vpop.permute.xlu0 %6130
    %6132 = vrot.lane.b32.xlu0 %v6086, 96
    %v6133 = vpop.permute.xlu0 %6132
    %6134 = vrot.lane.b32.xlu0 %v6087, 96
    %v6135 = vpop.permute.xlu0 %6134
    %6136 = vrot.lane.b32.xlu0 %v6088, 96
    %v6137 = vpop.permute.xlu0 %6136
    %6138 = vrot.lane.b32.xlu0 %v6089, 96
    %v6139 = vpop.permute.xlu0 %6138
    %6140 = vrot.lane.b32.xlu0 %v6090, 96
    %v6141 = vpop.permute.xlu0 %6140
    %6142 = vrot.lane.b32.xlu0 %v6091, 96
    %v6143 = vpop.permute.xlu0 %6142
    %6144 = vrot.lane.b32.xlu0 %v6092, 96
    %v6145 = vpop.permute.xlu0 %6144
    %vm6146 = vcmask 785408
    %v6147 = vsel %vm6146, %v6113, %v6115
    %v6148 = vsel %vm6146, %v6115, %v6117
    %v6149 = vsel %vm6146, %v6117, %v6119
    %v6150 = vsel %vm6146, %v6119, %v6121
    %v6151 = vsel %vm6146, %v6121, %v6123
    %v6152 = vsel %vm6146, %v6123, %v6125
    %v6153 = vsel %vm6146, %v6125, %v6127
    %v6154 = vsel %vm6146, %v6127, %v6129
    %v6155 = vsel %vm6146, %v6129, %v6131
    %v6156 = vsel %vm6146, %v6131, %v6133
    %v6157 = vsel %vm6146, %v6133, %v6135
    %v6158 = vsel %vm6146, %v6135, %v6137
    %v6159 = vsel %vm6146, %v6137, %v6139
    %v6160 = vsel %vm6146, %v6139, %v6141
    %v6161 = vsel %vm6146, %v6141, %v6143
    %v6162 = vsel %vm6146, %v6143, %v6145
    %v6164 = vsel %vm1525, %v6094, 0
    %v6167 = vsel %vm1529, %v6147, 0
    %v6170 = vsel %vm1529, %v6148, 0
    %v6173 = vsel %vm1529, %v6149, 0
    %v6176 = vsel %vm1529, %v6150, 0
    %v6179 = vsel %vm1529, %v6151, 0
    %v6182 = vsel %vm1529, %v6152, 0
    %v6185 = vsel %vm1529, %v6153, 0
    %v6188 = vsel %vm1529, %v6154, 0
    %v6191 = vsel %vm1529, %v6155, 0
    %v6194 = vsel %vm1529, %v6156, 0
    %v6197 = vsel %vm1529, %v6157, 0
    %v6200 = vsel %vm1529, %v6158, 0
    %v6203 = vsel %vm1529, %v6159, 0
    %v6206 = vsel %vm1529, %v6160, 0
    %v6209 = vsel %vm1529, %v6161, 0
    %v6212 = vsel %vm1529, %v6162, 0
    %6214 = vmatprep.subr.bf16.mxu0 %v6170
    %6215 = vmatpush1.bf16.msra.mxu0 %v6167
    %6216 = vmatprep.subr.bf16.mxu0 0
    %6217 = vmatpush1.bf16.msra.mxu0 0
    %6218 = vmatprep.subr.bf16.mxu0 0
    %6219 = vmatpush1.bf16.msra.mxu0 0
    %6220 = vmatprep.subr.bf16.mxu0 0
    %6221 = vmatpush1.bf16.msra.mxu0 0
    %6222 = vmatprep.subr.bf16.mxu0 0
    %6223 = vmatpush1.bf16.msra.mxu0 0
    %6224 = vmatprep.subr.bf16.mxu0 0
    %6225 = vmatpush1.bf16.msra.mxu0 0
    %6226 = vmatprep.subr.bf16.mxu0 0
    %6227 = vmatpush1.bf16.msra.mxu0 0
    %6228 = vmatprep.subr.bf16.mxu0 0
    %6229 = vmatpush1.bf16.msra.mxu0 0
    %6230 = vmatprep.subr.bf16.mxu0 0
    %6231 = vmatpush1.bf16.msra.mxu0 0
    %6232 = vmatprep.subr.bf16.mxu0 0
    %6233 = vmatpush1.bf16.msra.mxu0 0
    %6234 = vmatprep.subr.bf16.mxu0 0
    %6235 = vmatpush1.bf16.msra.mxu0 0
    %6236 = vmatprep.subr.bf16.mxu0 0
    %6237 = vmatpush1.bf16.msra.mxu0 0
    %6238 = vmatprep.subr.bf16.mxu0 0
    %6239 = vmatpush1.bf16.msra.mxu0 0
    %6240 = vmatprep.subr.bf16.mxu0 0
    %6241 = vmatpush1.bf16.msra.mxu0 0
    %6242 = vmatprep.subr.bf16.mxu0 0
    %6243 = vmatpush1.bf16.msra.mxu0 0
    %6244 = vmatprep.subr.bf16.mxu0 0
    %6245 = vmatpush1.bf16.msra.mxu0 0
    %6246 = vmatprep.mubr.bf16.mxu0 0
    %6247 = vmatmul.mubr.bf16.gmra.mrb[0].mxu0 %v6164
    %v6248 = vpop.f32.mrb[0].mxu0
    %v6249 = vadd.f32 0.0, %v6248
    %v6250 = vpop.f32.mrb[0].mxu0
    %v6251 = vadd.f32 0.0, %v6250
    %v6252 = vpop.f32.mrb[0].mxu0
    %v6253 = vpop.f32.mrb[0].mxu0
    %6254 = vdwg.mxu0
    %6255 = vmatprep.subr.bf16.mxu0 %v6176
    %6256 = vmatpush1.bf16.msra.mxu0 %v6173
    %6257 = vmatprep.subr.bf16.mxu0 0
    %6258 = vmatpush1.bf16.msra.mxu0 0
    %6259 = vmatprep.subr.bf16.mxu0 0
    %6260 = vmatpush1.bf16.msra.mxu0 0
    %6261 = vmatprep.subr.bf16.mxu0 0
    %6262 = vmatpush1.bf16.msra.mxu0 0
    %6263 = vmatprep.subr.bf16.mxu0 0
    %6264 = vmatpush1.bf16.msra.mxu0 0
    %6265 = vmatprep.subr.bf16.mxu0 0
    %6266 = vmatpush1.bf16.msra.mxu0 0
    %6267 = vmatprep.subr.bf16.mxu0 0
    %6268 = vmatpush1.bf16.msra.mxu0 0
    %6269 = vmatprep.subr.bf16.mxu0 0
    %6270 = vmatpush1.bf16.msra.mxu0 0
    %6271 = vmatprep.subr.bf16.mxu0 0
    %6272 = vmatpush1.bf16.msra.mxu0 0
    %6273 = vmatprep.subr.bf16.mxu0 0
    %6274 = vmatpush1.bf16.msra.mxu0 0
    %6275 = vmatprep.subr.bf16.mxu0 0
    %6276 = vmatpush1.bf16.msra.mxu0 0
    %6277 = vmatprep.subr.bf16.mxu0 0
    %6278 = vmatpush1.bf16.msra.mxu0 0
    %6279 = vmatprep.subr.bf16.mxu0 0
    %6280 = vmatpush1.bf16.msra.mxu0 0
    %6281 = vmatprep.subr.bf16.mxu0 0
    %6282 = vmatpush1.bf16.msra.mxu0 0
    %6283 = vmatprep.subr.bf16.mxu0 0
    %6284 = vmatpush1.bf16.msra.mxu0 0
    %6285 = vmatprep.subr.bf16.mxu0 0
    %6286 = vmatpush1.bf16.msra.mxu0 0
    %6287 = vmatprep.mubr.bf16.mxu0 0
    %6288 = vmatmul.mubr.bf16.gmra.mrb[0].mxu0 %v6164
    %v6289 = vpop.f32.mrb[0].mxu0
    %v6290 = vadd.f32 0.0, %v6289
    %v6291 = vpop.f32.mrb[0].mxu0
    %v6292 = vadd.f32 0.0, %v6291
    %v6293 = vpop.f32.mrb[0].mxu0
    %v6294 = vpop.f32.mrb[0].mxu0
    %6295 = vdwg.mxu0
    %6296 = vmatprep.subr.bf16.mxu0 %v6182
    %6297 = vmatpush1.bf16.msra.mxu0 %v6179
    %6298 = vmatprep.subr.bf16.mxu0 0
    %6299 = vmatpush1.bf16.msra.mxu0 0
    %6300 = vmatprep.subr.bf16.mxu0 0
    %6301 = vmatpush1.bf16.msra.mxu0 0
    %6302 = vmatprep.subr.bf16.mxu0 0
    %6303 = vmatpush1.bf16.msra.mxu0 0
    %6304 = vmatprep.subr.bf16.mxu0 0
    %6305 = vmatpush1.bf16.msra.mxu0 0
    %6306 = vmatprep.subr.bf16.mxu0 0
    %6307 = vmatpush1.bf16.msra.mxu0 0
    %6308 = vmatprep.subr.bf16.mxu0 0
    %6309 = vmatpush1.bf16.msra.mxu0 0
    %6310 = vmatprep.subr.bf16.mxu0 0
    %6311 = vmatpush1.bf16.msra.mxu0 0
    %6312 = vmatprep.subr.bf16.mxu0 0
    %6313 = vmatpush1.bf16.msra.mxu0 0
    %6314 = vmatprep.subr.bf16.mxu0 0
    %6315 = vmatpush1.bf16.msra.mxu0 0
    %6316 = vmatprep.subr.bf16.mxu0 0
    %6317 = vmatpush1.bf16.msra.mxu0 0
    %6318 = vmatprep.subr.bf16.mxu0 0
    %6319 = vmatpush1.bf16.msra.mxu0 0
    %6320 = vmatprep.subr.bf16.mxu0 0
    %6321 = vmatpush1.bf16.msra.mxu0 0
    %6322 = vmatprep.subr.bf16.mxu0 0
    %6323 = vmatpush1.bf16.msra.mxu0 0
    %6324 = vmatprep.subr.bf16.mxu0 0
    %6325 = vmatpush1.bf16.msra.mxu0 0
    %6326 = vmatprep.subr.bf16.mxu0 0
    %6327 = vmatpush1.bf16.msra.mxu0 0
    %6328 = vmatprep.mubr.bf16.mxu0 0
    %6329 = vmatmul.mubr.bf16.gmra.mrb[0].mxu0 %v6164
    %v6330 = vpop.f32.mrb[0].mxu0
    %v6331 = vadd.f32 0.0, %v6330
    %v6332 = vpop.f32.mrb[0].mxu0
    %v6333 = vadd.f32 0.0, %v6332
    %v6334 = vpop.f32.mrb[0].mxu0
    %v6335 = vpop.f32.mrb[0].mxu0
    %6336 = vdwg.mxu0
    %6337 = vmatprep.subr.bf16.mxu0 %v6188
    %6338 = vmatpush1.bf16.msra.mxu0 %v6185
    %6339 = vmatprep.subr.bf16.mxu0 0
    %6340 = vmatpush1.bf16.msra.mxu0 0
    %6341 = vmatprep.subr.bf16.mxu0 0
    %6342 = vmatpush1.bf16.msra.mxu0 0
    %6343 = vmatprep.subr.bf16.mxu0 0
    %6344 = vmatpush1.bf16.msra.mxu0 0
    %6345 = vmatprep.subr.bf16.mxu0 0
    %6346 = vmatpush1.bf16.msra.mxu0 0
    %6347 = vmatprep.subr.bf16.mxu0 0
    %6348 = vmatpush1.bf16.msra.mxu0 0
    %6349 = vmatprep.subr.bf16.mxu0 0
    %6350 = vmatpush1.bf16.msra.mxu0 0
    %6351 = vmatprep.subr.bf16.mxu0 0
    %6352 = vmatpush1.bf16.msra.mxu0 0
    %6353 = vmatprep.subr.bf16.mxu0 0
    %6354 = vmatpush1.bf16.msra.mxu0 0
    %6355 = vmatprep.subr.bf16.mxu0 0
    %6356 = vmatpush1.bf16.msra.mxu0 0
    %6357 = vmatprep.subr.bf16.mxu0 0
    %6358 = vmatpush1.bf16.msra.mxu0 0
    %6359 = vmatprep.subr.bf16.mxu0 0
    %6360 = vmatpush1.bf16.msra.mxu0 0
    %6361 = vmatprep.subr.bf16.mxu0 0
    %6362 = vmatpush1.bf16.msra.mxu0 0
    %6363 = vmatprep.subr.bf16.mxu0 0
    %6364 = vmatpush1.bf16.msra.mxu0 0
    %6365 = vmatprep.subr.bf16.mxu0 0
    %6366 = vmatpush1.bf16.msra.mxu0 0
    %6367 = vmatprep.subr.bf16.mxu0 0
    %6368 = vmatpush1.bf16.msra.mxu0 0
    %6369 = vmatprep.mubr.bf16.mxu0 0
    %6370 = vmatmul.mubr.bf16.gmra.mrb[0].mxu0 %v6164
    %v6371 = vpop.f32.mrb[0].mxu0
    %v6372 = vadd.f32 0.0, %v6371
    %v6373 = vpop.f32.mrb[0].mxu0
    %v6374 = vadd.f32 0.0, %v6373
    %v6375 = vpop.f32.mrb[0].mxu0
    %v6376 = vpop.f32.mrb[0].mxu0
    %6377 = vdwg.mxu0
    %6378 = vmatprep.subr.bf16.mxu0 %v6194
    %6379 = vmatpush1.bf16.msra.mxu0 %v6191
    %6380 = vmatprep.subr.bf16.mxu0 0
    %6381 = vmatpush1.bf16.msra.mxu0 0
    %6382 = vmatprep.subr.bf16.mxu0 0
    %6383 = vmatpush1.bf16.msra.mxu0 0
    %6384 = vmatprep.subr.bf16.mxu0 0
    %6385 = vmatpush1.bf16.msra.mxu0 0
    %6386 = vmatprep.subr.bf16.mxu0 0
    %6387 = vmatpush1.bf16.msra.mxu0 0
    %6388 = vmatprep.subr.bf16.mxu0 0
    %6389 = vmatpush1.bf16.msra.mxu0 0
    %6390 = vmatprep.subr.bf16.mxu0 0
    %6391 = vmatpush1.bf16.msra.mxu0 0
    %6392 = vmatprep.subr.bf16.mxu0 0
    %6393 = vmatpush1.bf16.msra.mxu0 0
    %6394 = vmatprep.subr.bf16.mxu0 0
    %6395 = vmatpush1.bf16.msra.mxu0 0
    %6396 = vmatprep.subr.bf16.mxu0 0
    %6397 = vmatpush1.bf16.msra.mxu0 0
    %6398 = vmatprep.subr.bf16.mxu0 0
    %6399 = vmatpush1.bf16.msra.mxu0 0
    %6400 = vmatprep.subr.bf16.mxu0 0
    %6401 = vmatpush1.bf16.msra.mxu0 0
    %6402 = vmatprep.subr.bf16.mxu0 0
    %6403 = vmatpush1.bf16.msra.mxu0 0
    %6404 = vmatprep.subr.bf16.mxu0 0
    %6405 = vmatpush1.bf16.msra.mxu0 0
    %6406 = vmatprep.subr.bf16.mxu0 0
    %6407 = vmatpush1.bf16.msra.mxu0 0
    %6408 = vmatprep.subr.bf16.mxu0 0
    %6409 = vmatpush1.bf16.msra.mxu0 0
    %6410 = vmatprep.mubr.bf16.mxu0 0
    %6411 = vmatmul.mubr.bf16.gmra.mrb[0].mxu0 %v6164
    %v6412 = vpop.f32.mrb[0].mxu0
    %v6413 = vadd.f32 0.0, %v6412
    %v6414 = vpop.f32.mrb[0].mxu0
    %v6415 = vadd.f32 0.0, %v6414
    %v6416 = vpop.f32.mrb[0].mxu0
    %v6417 = vpop.f32.mrb[0].mxu0
    %6418 = vdwg.mxu0
    %6419 = vmatprep.subr.bf16.mxu0 %v6200
    %6420 = vmatpush1.bf16.msra.mxu0 %v6197
    %6421 = vmatprep.subr.bf16.mxu0 0
    %6422 = vmatpush1.bf16.msra.mxu0 0
    %6423 = vmatprep.subr.bf16.mxu0 0
    %6424 = vmatpush1.bf16.msra.mxu0 0
    %6425 = vmatprep.subr.bf16.mxu0 0
    %6426 = vmatpush1.bf16.msra.mxu0 0
    %6427 = vmatprep.subr.bf16.mxu0 0
    %6428 = vmatpush1.bf16.msra.mxu0 0
    %6429 = vmatprep.subr.bf16.mxu0 0
    %6430 = vmatpush1.bf16.msra.mxu0 0
    %6431 = vmatprep.subr.bf16.mxu0 0
    %6432 = vmatpush1.bf16.msra.mxu0 0
    %6433 = vmatprep.subr.bf16.mxu0 0
    %6434 = vmatpush1.bf16.msra.mxu0 0
    %6435 = vmatprep.subr.bf16.mxu0 0
    %6436 = vmatpush1.bf16.msra.mxu0 0
    %6437 = vmatprep.subr.bf16.mxu0 0
    %6438 = vmatpush1.bf16.msra.mxu0 0
    %6439 = vmatprep.subr.bf16.mxu0 0
    %6440 = vmatpush1.bf16.msra.mxu0 0
    %6441 = vmatprep.subr.bf16.mxu0 0
    %6442 = vmatpush1.bf16.msra.mxu0 0
    %6443 = vmatprep.subr.bf16.mxu0 0
    %6444 = vmatpush1.bf16.msra.mxu0 0
    %6445 = vmatprep.subr.bf16.mxu0 0
    %6446 = vmatpush1.bf16.msra.mxu0 0
    %6447 = vmatprep.subr.bf16.mxu0 0
    %6448 = vmatpush1.bf16.msra.mxu0 0
    %6449 = vmatprep.subr.bf16.mxu0 0
    %6450 = vmatpush1.bf16.msra.mxu0 0
    %6451 = vmatprep.mubr.bf16.mxu0 0
    %6452 = vmatmul.mubr.bf16.gmra.mrb[0].mxu0 %v6164
    %v6453 = vpop.f32.mrb[0].mxu0
    %v6454 = vadd.f32 0.0, %v6453
    %v6455 = vpop.f32.mrb[0].mxu0
    %v6456 = vadd.f32 0.0, %v6455
    %v6457 = vpop.f32.mrb[0].mxu0
    %v6458 = vpop.f32.mrb[0].mxu0
    %6459 = vdwg.mxu0
    %6460 = vmatprep.subr.bf16.mxu0 %v6206
    %6461 = vmatpush1.bf16.msra.mxu0 %v6203
    %6462 = vmatprep.subr.bf16.mxu0 0
    %6463 = vmatpush1.bf16.msra.mxu0 0
    %6464 = vmatprep.subr.bf16.mxu0 0
    %6465 = vmatpush1.bf16.msra.mxu0 0
    %6466 = vmatprep.subr.bf16.mxu0 0
    %6467 = vmatpush1.bf16.msra.mxu0 0
    %6468 = vmatprep.subr.bf16.mxu0 0
    %6469 = vmatpush1.bf16.msra.mxu0 0
    %6470 = vmatprep.subr.bf16.mxu0 0
    %6471 = vmatpush1.bf16.msra.mxu0 0
    %6472 = vmatprep.subr.bf16.mxu0 0
    %6473 = vmatpush1.bf16.msra.mxu0 0
    %6474 = vmatprep.subr.bf16.mxu0 0
    %6475 = vmatpush1.bf16.msra.mxu0 0
    %6476 = vmatprep.subr.bf16.mxu0 0
    %6477 = vmatpush1.bf16.msra.mxu0 0
    %6478 = vmatprep.subr.bf16.mxu0 0
    %6479 = vmatpush1.bf16.msra.mxu0 0
    %6480 = vmatprep.subr.bf16.mxu0 0
    %6481 = vmatpush1.bf16.msra.mxu0 0
    %6482 = vmatprep.subr.bf16.mxu0 0
    %6483 = vmatpush1.bf16.msra.mxu0 0
    %6484 = vmatprep.subr.bf16.mxu0 0
    %6485 = vmatpush1.bf16.msra.mxu0 0
    %6486 = vmatprep.subr.bf16.mxu0 0
    %6487 = vmatpush1.bf16.msra.mxu0 0
    %6488 = vmatprep.subr.bf16.mxu0 0
    %6489 = vmatpush1.bf16.msra.mxu0 0
    %6490 = vmatprep.subr.bf16.mxu0 0
    %6491 = vmatpush1.bf16.msra.mxu0 0
    %6492 = vmatprep.mubr.bf16.mxu0 0
    %6493 = vmatmul.mubr.bf16.gmra.mrb[0].mxu0 %v6164
    %v6494 = vpop.f32.mrb[0].mxu0
    %v6495 = vadd.f32 0.0, %v6494
    %v6496 = vpop.f32.mrb[0].mxu0
    %v6497 = vadd.f32 0.0, %v6496
    %v6498 = vpop.f32.mrb[0].mxu0
    %v6499 = vpop.f32.mrb[0].mxu0
    %6500 = vdwg.mxu0
    %6501 = vmatprep.subr.bf16.mxu0 %v6212
    %6502 = vmatpush1.bf16.msra.mxu0 %v6209
    %6503 = vmatprep.subr.bf16.mxu0 0
    %6504 = vmatpush1.bf16.msra.mxu0 0
    %6505 = vmatprep.subr.bf16.mxu0 0
    %6506 = vmatpush1.bf16.msra.mxu0 0
    %6507 = vmatprep.subr.bf16.mxu0 0
    %6508 = vmatpush1.bf16.msra.mxu0 0
    %6509 = vmatprep.subr.bf16.mxu0 0
    %6510 = vmatpush1.bf16.msra.mxu0 0
    %6511 = vmatprep.subr.bf16.mxu0 0
    %6512 = vmatpush1.bf16.msra.mxu0 0
    %6513 = vmatprep.subr.bf16.mxu0 0
    %6514 = vmatpush1.bf16.msra.mxu0 0
    %6515 = vmatprep.subr.bf16.mxu0 0
    %6516 = vmatpush1.bf16.msra.mxu0 0
    %6517 = vmatprep.subr.bf16.mxu0 0
    %6518 = vmatpush1.bf16.msra.mxu0 0
    %6519 = vmatprep.subr.bf16.mxu0 0
    %6520 = vmatpush1.bf16.msra.mxu0 0
    %6521 = vmatprep.subr.bf16.mxu0 0
    %6522 = vmatpush1.bf16.msra.mxu0 0
    %6523 = vmatprep.subr.bf16.mxu0 0
    %6524 = vmatpush1.bf16.msra.mxu0 0
    %6525 = vmatprep.subr.bf16.mxu0 0
    %6526 = vmatpush1.bf16.msra.mxu0 0
    %6527 = vmatprep.subr.bf16.mxu0 0
    %6528 = vmatpush1.bf16.msra.mxu0 0
    %6529 = vmatprep.subr.bf16.mxu0 0
    %6530 = vmatpush1.bf16.msra.mxu0 0
    %6531 = vmatprep.subr.bf16.mxu0 0
    %6532 = vmatpush1.bf16.msra.mxu0 0
    %6533 = vmatprep.mubr.bf16.mxu0 0
    %6534 = vmatmul.mubr.bf16.gmra.mrb[0].mxu0 %v6164
    %v6535 = vpop.f32.mrb[0].mxu0
    %v6536 = vadd.f32 0.0, %v6535
    %v6537 = vpop.f32.mrb[0].mxu0
    %v6538 = vadd.f32 0.0, %v6537
    %v6539 = vpop.f32.mrb[0].mxu0
    %v6540 = vpop.f32.mrb[0].mxu0
    %6541 = vdwg.mxu0
    %v6542 = vadd.f32 %v5790, %v6249
    %v6543 = vadd.f32 %v5791, %v6251
    %v6544 = vadd.f32 %v5792, %v6290
    %v6545 = vadd.f32 %v5793, %v6292
    %v6546 = vadd.f32 %v5794, %v6331
    %v6547 = vadd.f32 %v5795, %v6333
    %v6548 = vadd.f32 %v5796, %v6372
    %v6549 = vadd.f32 %v5797, %v6374
    %v6550 = vadd.f32 %v5798, %v6413
    %v6551 = vadd.f32 %v5799, %v6415
    %v6552 = vadd.f32 %v5800, %v6454
    %v6553 = vadd.f32 %v5801, %v6456
    %v6554 = vadd.f32 %v5802, %v6495
    %v6555 = vadd.f32 %v5803, %v6497
    %v6556 = vadd.f32 %v5804, %v6536
    %v6557 = vadd.f32 %v5805, %v6538
    %v6558 = vld [vmem:[#allocation3 + $0x4] sm:$0xff]
    %v6559 = vld [vmem:[#allocation3 + $0xc] sm:$0xff]
    %v6560 = vld [vmem:[#allocation3 + $0x14] sm:$0xff]
    %v6561 = vld [vmem:[#allocation3 + $0x1c] sm:$0xff]
    %v6562 = vld [vmem:[#allocation3 + $0x24] sm:$0xff]
    %v6563 = vld [vmem:[#allocation3 + $0x2c] sm:$0xff]
    %v6564 = vld [vmem:[#allocation3 + $0x34] sm:$0xff]
    %v6565 = vld [vmem:[#allocation3 + $0x3c] sm:$0xff]
    %v6566 = vld [vmem:[#allocation3 + $0x44] sm:$0xf]
    %s6567 = scalar_lea.vmem %s4, 128
    %v6568 = vld [vmem:[%s6567] sm:$0xff]
    %v6569 = vld [vmem:[%s6567 + $0x8] sm:$0xff]
    %v6570 = vunpack.c.l.bf16 %v6568
    %v6571 = vunpack.c.h.bf16 %v6568
    %v6572 = vunpack.c.l.bf16 %v6569
    %v6573 = vunpack.c.h.bf16 %v6569
    %v6578 = vlaneseq
    %v6579 = vshrl.u32 %v6578, 7
    %v6580 = vsub.s32 0, %v6579
    %v6581 = vrot.slane %v6570, %v6580
    %v6582 = vlaneseq
    %v6583 = vshrl.u32 %v6582, 7
    %v6584 = vsub.s32 2, %v6583
    %v6585 = vrot.slane %v6570, %v6584
    %v6586 = vlaneseq
    %v6587 = vshrl.u32 %v6586, 7
    %v6588 = vsub.s32 4, %v6587
    %v6589 = vrot.slane %v6570, %v6588
    %v6590 = vlaneseq
    %v6591 = vshrl.u32 %v6590, 7
    %v6592 = vsub.s32 6, %v6591
    %v6593 = vrot.slane %v6570, %v6592
    %v6594 = vlaneseq
    %v6595 = vshrl.u32 %v6594, 7
    %v6596 = vsub.s32 0, %v6595
    %v6597 = vrot.slane %v6571, %v6596
    %v6598 = vlaneseq
    %v6599 = vshrl.u32 %v6598, 7
    %v6600 = vsub.s32 2, %v6599
    %v6601 = vrot.slane %v6571, %v6600
    %v6602 = vlaneseq
    %v6603 = vshrl.u32 %v6602, 7
    %v6604 = vsub.s32 4, %v6603
    %v6605 = vrot.slane %v6571, %v6604
    %v6606 = vlaneseq
    %v6607 = vshrl.u32 %v6606, 7
    %v6608 = vsub.s32 6, %v6607
    %v6609 = vrot.slane %v6571, %v6608
    %v6610 = vlaneseq
    %v6611 = vshrl.u32 %v6610, 7
    %v6612 = vsub.s32 0, %v6611
    %v6613 = vrot.slane %v6572, %v6612
    %v6614 = vlaneseq
    %v6615 = vshrl.u32 %v6614, 7
    %v6616 = vsub.s32 2, %v6615
    %v6617 = vrot.slane %v6572, %v6616
    %v6618 = vlaneseq
    %v6619 = vshrl.u32 %v6618, 7
    %v6620 = vsub.s32 4, %v6619
    %v6621 = vrot.slane %v6572, %v6620
    %v6622 = vlaneseq
    %v6623 = vshrl.u32 %v6622, 7
    %v6624 = vsub.s32 6, %v6623
    %v6625 = vrot.slane %v6572, %v6624
    %v6626 = vlaneseq
    %v6627 = vshrl.u32 %v6626, 7
    %v6628 = vsub.s32 0, %v6627
    %v6629 = vrot.slane %v6573, %v6628
    %v6630 = vlaneseq
    %v6631 = vshrl.u32 %v6630, 7
    %v6632 = vsub.s32 2, %v6631
    %v6633 = vrot.slane %v6573, %v6632
    %v6634 = vlaneseq
    %v6635 = vshrl.u32 %v6634, 7
    %v6636 = vsub.s32 4, %v6635
    %v6637 = vrot.slane %v6573, %v6636
    %v6638 = vlaneseq
    %v6639 = vshrl.u32 %v6638, 7
    %v6640 = vsub.s32 6, %v6639
    %v6641 = vrot.slane %v6573, %v6640
    %v6658 = vlaneseq
    %v6659 = vshrl.u32 %v6658, 7
    %v6660 = vsub.s32 0, %v6659
    %v6661 = vrot.slane %v6581, %v6660
    %v6662 = vlaneseq
    %v6663 = vshrl.u32 %v6662, 7
    %v6664 = vsub.s32 0, %v6663
    %v6665 = vrot.slane %v6585, %v6664
    %v6666 = vlaneseq
    %v6667 = vshrl.u32 %v6666, 7
    %v6668 = vsub.s32 0, %v6667
    %v6669 = vrot.slane %v6589, %v6668
    %v6670 = vlaneseq
    %v6671 = vshrl.u32 %v6670, 7
    %v6672 = vsub.s32 0, %v6671
    %v6673 = vrot.slane %v6593, %v6672
    %v6674 = vlaneseq
    %v6675 = vshrl.u32 %v6674, 7
    %v6676 = vsub.s32 0, %v6675
    %v6677 = vrot.slane %v6597, %v6676
    %v6678 = vlaneseq
    %v6679 = vshrl.u32 %v6678, 7
    %v6680 = vsub.s32 0, %v6679
    %v6681 = vrot.slane %v6601, %v6680
    %v6682 = vlaneseq
    %v6683 = vshrl.u32 %v6682, 7
    %v6684 = vsub.s32 0, %v6683
    %v6685 = vrot.slane %v6605, %v6684
    %v6686 = vlaneseq
    %v6687 = vshrl.u32 %v6686, 7
    %v6688 = vsub.s32 0, %v6687
    %v6689 = vrot.slane %v6609, %v6688
    %v6690 = vlaneseq
    %v6691 = vshrl.u32 %v6690, 7
    %v6692 = vsub.s32 0, %v6691
    %v6693 = vrot.slane %v6613, %v6692
    %v6694 = vlaneseq
    %v6695 = vshrl.u32 %v6694, 7
    %v6696 = vsub.s32 0, %v6695
    %v6697 = vrot.slane %v6617, %v6696
    %v6698 = vlaneseq
    %v6699 = vshrl.u32 %v6698, 7
    %v6700 = vsub.s32 0, %v6699
    %v6701 = vrot.slane %v6621, %v6700
    %v6702 = vlaneseq
    %v6703 = vshrl.u32 %v6702, 7
    %v6704 = vsub.s32 0, %v6703
    %v6705 = vrot.slane %v6625, %v6704
    %v6706 = vlaneseq
    %v6707 = vshrl.u32 %v6706, 7
    %v6708 = vsub.s32 0, %v6707
    %v6709 = vrot.slane %v6629, %v6708
    %v6710 = vlaneseq
    %v6711 = vshrl.u32 %v6710, 7
    %v6712 = vsub.s32 0, %v6711
    %v6713 = vrot.slane %v6633, %v6712
    %v6714 = vlaneseq
    %v6715 = vshrl.u32 %v6714, 7
    %v6716 = vsub.s32 0, %v6715
    %v6717 = vrot.slane %v6637, %v6716
    %v6718 = vlaneseq
    %v6719 = vshrl.u32 %v6718, 7
    %v6720 = vsub.s32 0, %v6719
    %v6721 = vrot.slane %v6641, %v6720
    %v6738 = vcombine.low %v6661, %v6665
    %v6739 = vcombine.low %v6669, %v6673
    %v6740 = vcombine.low %v6677, %v6681
    %v6741 = vcombine.low %v6685, %v6689
    %v6742 = vcombine.low %v6693, %v6697
    %v6743 = vcombine.low %v6701, %v6705
    %v6744 = vcombine.low %v6709, %v6713
    %v6745 = vcombine.low %v6717, %v6721
    %6746 = vrot.lane.b32.xlu0 %v6738, 33
    %v6747 = vpop.permute.xlu0 %6746
    %6748 = vrot.lane.b32.xlu0 %v6739, 33
    %v6749 = vpop.permute.xlu0 %6748
    %6750 = vrot.lane.b32.xlu0 %v6740, 33
    %v6751 = vpop.permute.xlu0 %6750
    %6752 = vrot.lane.b32.xlu0 %v6741, 33
    %v6753 = vpop.permute.xlu0 %6752
    %6754 = vrot.lane.b32.xlu0 %v6742, 33
    %v6755 = vpop.permute.xlu0 %6754
    %6756 = vrot.lane.b32.xlu0 %v6743, 33
    %v6757 = vpop.permute.xlu0 %6756
    %6758 = vrot.lane.b32.xlu0 %v6744, 33
    %v6759 = vpop.permute.xlu0 %6758
    %6760 = vrot.lane.b32.xlu0 %v6745, 33
    %v6761 = vpop.permute.xlu0 %6760
    %v6762 = vrot.slane %v6747, 4
    %v6763 = vrot.slane %v6749, 4
    %v6764 = vrot.slane %v6751, 4
    %v6765 = vrot.slane %v6753, 4
    %v6766 = vrot.slane %v6755, 4
    %v6767 = vrot.slane %v6757, 4
    %v6768 = vrot.slane %v6759, 4
    %v6769 = vrot.slane %v6761, 4
    %vm6770 = vcmask 269312
    %v6771 = vsel %vm6770, %v6762, %v6747
    %v6772 = vsel %vm1102, %v6762, %v6763
    %v6773 = vsel %vm6770, %v6772, %v6749
    %v6774 = vsel %vm1102, %v6763, %v6764
    %v6775 = vsel %vm6770, %v6774, %v6751
    %v6776 = vsel %vm1102, %v6764, %v6765
    %v6777 = vsel %vm6770, %v6776, %v6753
    %v6778 = vsel %vm1102, %v6765, %v6766
    %v6779 = vsel %vm6770, %v6778, %v6755
    %v6780 = vsel %vm1102, %v6766, %v6767
    %v6781 = vsel %vm6770, %v6780, %v6757
    %v6782 = vsel %vm1102, %v6767, %v6768
    %v6783 = vsel %vm6770, %v6782, %v6759
    %v6784 = vsel %vm1102, %v6768, %v6769
    %v6785 = vsel %vm6770, %v6784, %v6761
    %v6795 = vmul.f32 %v6558, %v6771
    %v6796 = vmul.f32 %v6559, %v6773
    %v6797 = vmul.f32 %v6560, %v6775
    %v6798 = vmul.f32 %v6561, %v6777
    %v6799 = vmul.f32 %v6562, %v6779
    %v6800 = vmul.f32 %v6563, %v6781
    %v6801 = vmul.f32 %v6564, %v6783
    %v6802 = vmul.f32 %v6565, %v6785
    %v6803 = vmul.f32 %v6566, %v6769
    %v6812 = vcombine.high %v6795, %v6795
    %v6813 = vcombine.high %v6796, %v6796
    %v6814 = vcombine.high %v6797, %v6797
    %v6815 = vcombine.high %v6798, %v6798
    %v6816 = vcombine.high %v6799, %v6799
    %v6817 = vcombine.high %v6800, %v6800
    %v6818 = vcombine.high %v6801, %v6801
    %v6819 = vcombine.high %v6802, %v6802
    %v6828 = vpack.c.bf16 %v6795, %v6795
    %v6829 = vpack.c.bf16 %v6812, %v6812
    %v6830 = vpack.c.bf16 %v6796, %v6796
    %v6831 = vpack.c.bf16 %v6813, %v6813
    %v6832 = vpack.c.bf16 %v6797, %v6797
    %v6833 = vpack.c.bf16 %v6814, %v6814
    %v6834 = vpack.c.bf16 %v6798, %v6798
    %v6835 = vpack.c.bf16 %v6815, %v6815
    %v6836 = vpack.c.bf16 %v6799, %v6799
    %v6837 = vpack.c.bf16 %v6816, %v6816
    %v6838 = vpack.c.bf16 %v6800, %v6800
    %v6839 = vpack.c.bf16 %v6817, %v6817
    %v6840 = vpack.c.bf16 %v6801, %v6801
    %v6841 = vpack.c.bf16 %v6818, %v6818
    %v6842 = vpack.c.bf16 %v6802, %v6802
    %v6843 = vpack.c.bf16 %v6819, %v6819
    %v6844 = vpack.c.bf16 %v6803, %v6803
    %s6845 = scalar_lea.vmem %s2, 32
    %v6846 = vld [vmem:[%s6845] sm:$0xf]
    %6864 = vrot.lane.b32.xlu0 %v6828, 95
    %v6865 = vpop.permute.xlu0 %6864
    %6866 = vrot.lane.b32.xlu0 %v6829, 95
    %v6867 = vpop.permute.xlu0 %6866
    %6868 = vrot.lane.b32.xlu0 %v6830, 95
    %v6869 = vpop.permute.xlu0 %6868
    %6870 = vrot.lane.b32.xlu0 %v6831, 95
    %v6871 = vpop.permute.xlu0 %6870
    %6872 = vrot.lane.b32.xlu0 %v6832, 95
    %v6873 = vpop.permute.xlu0 %6872
    %6874 = vrot.lane.b32.xlu0 %v6833, 95
    %v6875 = vpop.permute.xlu0 %6874
    %6876 = vrot.lane.b32.xlu0 %v6834, 95
    %v6877 = vpop.permute.xlu0 %6876
    %6878 = vrot.lane.b32.xlu0 %v6835, 95
    %v6879 = vpop.permute.xlu0 %6878
    %6880 = vrot.lane.b32.xlu0 %v6836, 95
    %v6881 = vpop.permute.xlu0 %6880
    %6882 = vrot.lane.b32.xlu0 %v6837, 95
    %v6883 = vpop.permute.xlu0 %6882
    %6884 = vrot.lane.b32.xlu0 %v6838, 95
    %v6885 = vpop.permute.xlu0 %6884
    %6886 = vrot.lane.b32.xlu0 %v6839, 95
    %v6887 = vpop.permute.xlu0 %6886
    %6888 = vrot.lane.b32.xlu0 %v6840, 95
    %v6889 = vpop.permute.xlu0 %6888
    %6890 = vrot.lane.b32.xlu0 %v6841, 95
    %v6891 = vpop.permute.xlu0 %6890
    %6892 = vrot.lane.b32.xlu0 %v6842, 95
    %v6893 = vpop.permute.xlu0 %6892
    %6894 = vrot.lane.b32.xlu0 %v6843, 95
    %v6895 = vpop.permute.xlu0 %6894
    %6896 = vrot.lane.b32.xlu0 %v6844, 95
    %v6897 = vpop.permute.xlu0 %6896
    %vm6898 = vcmask 777216
    %v6899 = vsel %vm6898, %v6865, %v6867
    %v6900 = vsel %vm6898, %v6867, %v6869
    %v6901 = vsel %vm6898, %v6869, %v6871
    %v6902 = vsel %vm6898, %v6871, %v6873
    %v6903 = vsel %vm6898, %v6873, %v6875
    %v6904 = vsel %vm6898, %v6875, %v6877
    %v6905 = vsel %vm6898, %v6877, %v6879
    %v6906 = vsel %vm6898, %v6879, %v6881
    %v6907 = vsel %vm6898, %v6881, %v6883
    %v6908 = vsel %vm6898, %v6883, %v6885
    %v6909 = vsel %vm6898, %v6885, %v6887
    %v6910 = vsel %vm6898, %v6887, %v6889
    %v6911 = vsel %vm6898, %v6889, %v6891
    %v6912 = vsel %vm6898, %v6891, %v6893
    %v6913 = vsel %vm6898, %v6893, %v6895
    %v6914 = vsel %vm6898, %v6895, %v6897
    %v6916 = vsel %vm1525, %v6846, 0
    %v6919 = vsel %vm1529, %v6899, 0
    %v6922 = vsel %vm1529, %v6900, 0
    %v6925 = vsel %vm1529, %v6901, 0
    %v6928 = vsel %vm1529, %v6902, 0
    %v6931 = vsel %vm1529, %v6903, 0
    %v6934 = vsel %vm1529, %v6904, 0
    %v6937 = vsel %vm1529, %v6905, 0
    %v6940 = vsel %vm1529, %v6906, 0
    %v6943 = vsel %vm1529, %v6907, 0
    %v6946 = vsel %vm1529, %v6908, 0
    %v6949 = vsel %vm1529, %v6909, 0
    %v6952 = vsel %vm1529, %v6910, 0
    %v6955 = vsel %vm1529, %v6911, 0
    %v6958 = vsel %vm1529, %v6912, 0
    %v6961 = vsel %vm1529, %v6913, 0
    %v6964 = vsel %vm1529, %v6914, 0
    %6966 = vmatprep.subr.bf16.mxu0 %v6922
    %6967 = vmatpush1.bf16.msra.mxu0 %v6919
    %6968 = vmatprep.subr.bf16.mxu0 0
    %6969 = vmatpush1.bf16.msra.mxu0 0
    %6970 = vmatprep.subr.bf16.mxu0 0
    %6971 = vmatpush1.bf16.msra.mxu0 0
    %6972 = vmatprep.subr.bf16.mxu0 0
    %6973 = vmatpush1.bf16.msra.mxu0 0
    %6974 = vmatprep.subr.bf16.mxu0 0
    %6975 = vmatpush1.bf16.msra.mxu0 0
    %6976 = vmatprep.subr.bf16.mxu0 0
    %6977 = vmatpush1.bf16.msra.mxu0 0
    %6978 = vmatprep.subr.bf16.mxu0 0
    %6979 = vmatpush1.bf16.msra.mxu0 0
    %6980 = vmatprep.subr.bf16.mxu0 0
    %6981 = vmatpush1.bf16.msra.mxu0 0
    %6982 = vmatprep.subr.bf16.mxu0 0
    %6983 = vmatpush1.bf16.msra.mxu0 0
    %6984 = vmatprep.subr.bf16.mxu0 0
    %6985 = vmatpush1.bf16.msra.mxu0 0
    %6986 = vmatprep.subr.bf16.mxu0 0
    %6987 = vmatpush1.bf16.msra.mxu0 0
    %6988 = vmatprep.subr.bf16.mxu0 0
    %6989 = vmatpush1.bf16.msra.mxu0 0
    %6990 = vmatprep.subr.bf16.mxu0 0
    %6991 = vmatpush1.bf16.msra.mxu0 0
    %6992 = vmatprep.subr.bf16.mxu0 0
    %6993 = vmatpush1.bf16.msra.mxu0 0
    %6994 = vmatprep.subr.bf16.mxu0 0
    %6995 = vmatpush1.bf16.msra.mxu0 0
    %6996 = vmatprep.subr.bf16.mxu0 0
    %6997 = vmatpush1.bf16.msra.mxu0 0
    %6998 = vmatprep.mubr.bf16.mxu0 0
    %6999 = vmatmul.mubr.bf16.gmra.mrb[0].mxu0 %v6916
    %v7000 = vpop.f32.mrb[0].mxu0
    %v7001 = vadd.f32 0.0, %v7000
    %v7002 = vpop.f32.mrb[0].mxu0
    %v7003 = vadd.f32 0.0, %v7002
    %v7004 = vpop.f32.mrb[0].mxu0
    %v7005 = vpop.f32.mrb[0].mxu0
    %7006 = vdwg.mxu0
    %7007 = vmatprep.subr.bf16.mxu0 %v6928
    %7008 = vmatpush1.bf16.msra.mxu0 %v6925
    %7009 = vmatprep.subr.bf16.mxu0 0
    %7010 = vmatpush1.bf16.msra.mxu0 0
    %7011 = vmatprep.subr.bf16.mxu0 0
    %7012 = vmatpush1.bf16.msra.mxu0 0
    %7013 = vmatprep.subr.bf16.mxu0 0
    %7014 = vmatpush1.bf16.msra.mxu0 0
    %7015 = vmatprep.subr.bf16.mxu0 0
    %7016 = vmatpush1.bf16.msra.mxu0 0
    %7017 = vmatprep.subr.bf16.mxu0 0
    %7018 = vmatpush1.bf16.msra.mxu0 0
    %7019 = vmatprep.subr.bf16.mxu0 0
    %7020 = vmatpush1.bf16.msra.mxu0 0
    %7021 = vmatprep.subr.bf16.mxu0 0
    %7022 = vmatpush1.bf16.msra.mxu0 0
    %7023 = vmatprep.subr.bf16.mxu0 0
    %7024 = vmatpush1.bf16.msra.mxu0 0
    %7025 = vmatprep.subr.bf16.mxu0 0
    %7026 = vmatpush1.bf16.msra.mxu0 0
    %7027 = vmatprep.subr.bf16.mxu0 0
    %7028 = vmatpush1.bf16.msra.mxu0 0
    %7029 = vmatprep.subr.bf16.mxu0 0
    %7030 = vmatpush1.bf16.msra.mxu0 0
    %7031 = vmatprep.subr.bf16.mxu0 0
    %7032 = vmatpush1.bf16.msra.mxu0 0
    %7033 = vmatprep.subr.bf16.mxu0 0
    %7034 = vmatpush1.bf16.msra.mxu0 0
    %7035 = vmatprep.subr.bf16.mxu0 0
    %7036 = vmatpush1.bf16.msra.mxu0 0
    %7037 = vmatprep.subr.bf16.mxu0 0
    %7038 = vmatpush1.bf16.msra.mxu0 0
    %7039 = vmatprep.mubr.bf16.mxu0 0
    %7040 = vmatmul.mubr.bf16.gmra.mrb[0].mxu0 %v6916
    %v7041 = vpop.f32.mrb[0].mxu0
    %v7042 = vadd.f32 0.0, %v7041
    %v7043 = vpop.f32.mrb[0].mxu0
    %v7044 = vadd.f32 0.0, %v7043
    %v7045 = vpop.f32.mrb[0].mxu0
    %v7046 = vpop.f32.mrb[0].mxu0
    %7047 = vdwg.mxu0
    %7048 = vmatprep.subr.bf16.mxu0 %v6934
    %7049 = vmatpush1.bf16.msra.mxu0 %v6931
    %7050 = vmatprep.subr.bf16.mxu0 0
    %7051 = vmatpush1.bf16.msra.mxu0 0
    %7052 = vmatprep.subr.bf16.mxu0 0
    %7053 = vmatpush1.bf16.msra.mxu0 0
    %7054 = vmatprep.subr.bf16.mxu0 0
    %7055 = vmatpush1.bf16.msra.mxu0 0
    %7056 = vmatprep.subr.bf16.mxu0 0
    %7057 = vmatpush1.bf16.msra.mxu0 0
    %7058 = vmatprep.subr.bf16.mxu0 0
    %7059 = vmatpush1.bf16.msra.mxu0 0
    %7060 = vmatprep.subr.bf16.mxu0 0
    %7061 = vmatpush1.bf16.msra.mxu0 0
    %7062 = vmatprep.subr.bf16.mxu0 0
    %7063 = vmatpush1.bf16.msra.mxu0 0
    %7064 = vmatprep.subr.bf16.mxu0 0
    %7065 = vmatpush1.bf16.msra.mxu0 0
    %7066 = vmatprep.subr.bf16.mxu0 0
    %7067 = vmatpush1.bf16.msra.mxu0 0
    %7068 = vmatprep.subr.bf16.mxu0 0
    %7069 = vmatpush1.bf16.msra.mxu0 0
    %7070 = vmatprep.subr.bf16.mxu0 0
    %7071 = vmatpush1.bf16.msra.mxu0 0
    %7072 = vmatprep.subr.bf16.mxu0 0
    %7073 = vmatpush1.bf16.msra.mxu0 0
    %7074 = vmatprep.subr.bf16.mxu0 0
    %7075 = vmatpush1.bf16.msra.mxu0 0
    %7076 = vmatprep.subr.bf16.mxu0 0
    %7077 = vmatpush1.bf16.msra.mxu0 0
    %7078 = vmatprep.subr.bf16.mxu0 0
    %7079 = vmatpush1.bf16.msra.mxu0 0
    %7080 = vmatprep.mubr.bf16.mxu0 0
    %7081 = vmatmul.mubr.bf16.gmra.mrb[0].mxu0 %v6916
    %v7082 = vpop.f32.mrb[0].mxu0
    %v7083 = vadd.f32 0.0, %v7082
    %v7084 = vpop.f32.mrb[0].mxu0
    %v7085 = vadd.f32 0.0, %v7084
    %v7086 = vpop.f32.mrb[0].mxu0
    %v7087 = vpop.f32.mrb[0].mxu0
    %7088 = vdwg.mxu0
    %7089 = vmatprep.subr.bf16.mxu0 %v6940
    %7090 = vmatpush1.bf16.msra.mxu0 %v6937
    %7091 = vmatprep.subr.bf16.mxu0 0
    %7092 = vmatpush1.bf16.msra.mxu0 0
    %7093 = vmatprep.subr.bf16.mxu0 0
    %7094 = vmatpush1.bf16.msra.mxu0 0
    %7095 = vmatprep.subr.bf16.mxu0 0
    %7096 = vmatpush1.bf16.msra.mxu0 0
    %7097 = vmatprep.subr.bf16.mxu0 0
    %7098 = vmatpush1.bf16.msra.mxu0 0
    %7099 = vmatprep.subr.bf16.mxu0 0
    %7100 = vmatpush1.bf16.msra.mxu0 0
    %7101 = vmatprep.subr.bf16.mxu0 0
    %7102 = vmatpush1.bf16.msra.mxu0 0
    %7103 = vmatprep.subr.bf16.mxu0 0
    %7104 = vmatpush1.bf16.msra.mxu0 0
    %7105 = vmatprep.subr.bf16.mxu0 0
    %7106 = vmatpush1.bf16.msra.mxu0 0
    %7107 = vmatprep.subr.bf16.mxu0 0
    %7108 = vmatpush1.bf16.msra.mxu0 0
    %7109 = vmatprep.subr.bf16.mxu0 0
    %7110 = vmatpush1.bf16.msra.mxu0 0
    %7111 = vmatprep.subr.bf16.mxu0 0
    %7112 = vmatpush1.bf16.msra.mxu0 0
    %7113 = vmatprep.subr.bf16.mxu0 0
    %7114 = vmatpush1.bf16.msra.mxu0 0
    %7115 = vmatprep.subr.bf16.mxu0 0
    %7116 = vmatpush1.bf16.msra.mxu0 0
    %7117 = vmatprep.subr.bf16.mxu0 0
    %7118 = vmatpush1.bf16.msra.mxu0 0
    %7119 = vmatprep.subr.bf16.mxu0 0
    %7120 = vmatpush1.bf16.msra.mxu0 0
    %7121 = vmatprep.mubr.bf16.mxu0 0
    %7122 = vmatmul.mubr.bf16.gmra.mrb[0].mxu0 %v6916
    %v7123 = vpop.f32.mrb[0].mxu0
    %v7124 = vadd.f32 0.0, %v7123
    %v7125 = vpop.f32.mrb[0].mxu0
    %v7126 = vadd.f32 0.0, %v7125
    %v7127 = vpop.f32.mrb[0].mxu0
    %v7128 = vpop.f32.mrb[0].mxu0
    %7129 = vdwg.mxu0
    %7130 = vmatprep.subr.bf16.mxu0 %v6946
    %7131 = vmatpush1.bf16.msra.mxu0 %v6943
    %7132 = vmatprep.subr.bf16.mxu0 0
    %7133 = vmatpush1.bf16.msra.mxu0 0
    %7134 = vmatprep.subr.bf16.mxu0 0
    %7135 = vmatpush1.bf16.msra.mxu0 0
    %7136 = vmatprep.subr.bf16.mxu0 0
    %7137 = vmatpush1.bf16.msra.mxu0 0
    %7138 = vmatprep.subr.bf16.mxu0 0
    %7139 = vmatpush1.bf16.msra.mxu0 0
    %7140 = vmatprep.subr.bf16.mxu0 0
    %7141 = vmatpush1.bf16.msra.mxu0 0
    %7142 = vmatprep.subr.bf16.mxu0 0
    %7143 = vmatpush1.bf16.msra.mxu0 0
    %7144 = vmatprep.subr.bf16.mxu0 0
    %7145 = vmatpush1.bf16.msra.mxu0 0
    %7146 = vmatprep.subr.bf16.mxu0 0
    %7147 = vmatpush1.bf16.msra.mxu0 0
    %7148 = vmatprep.subr.bf16.mxu0 0
    %7149 = vmatpush1.bf16.msra.mxu0 0
    %7150 = vmatprep.subr.bf16.mxu0 0
    %7151 = vmatpush1.bf16.msra.mxu0 0
    %7152 = vmatprep.subr.bf16.mxu0 0
    %7153 = vmatpush1.bf16.msra.mxu0 0
    %7154 = vmatprep.subr.bf16.mxu0 0
    %7155 = vmatpush1.bf16.msra.mxu0 0
    %7156 = vmatprep.subr.bf16.mxu0 0
    %7157 = vmatpush1.bf16.msra.mxu0 0
    %7158 = vmatprep.subr.bf16.mxu0 0
    %7159 = vmatpush1.bf16.msra.mxu0 0
    %7160 = vmatprep.subr.bf16.mxu0 0
    %7161 = vmatpush1.bf16.msra.mxu0 0
    %7162 = vmatprep.mubr.bf16.mxu0 0
    %7163 = vmatmul.mubr.bf16.gmra.mrb[0].mxu0 %v6916
    %v7164 = vpop.f32.mrb[0].mxu0
    %v7165 = vadd.f32 0.0, %v7164
    %v7166 = vpop.f32.mrb[0].mxu0
    %v7167 = vadd.f32 0.0, %v7166
    %v7168 = vpop.f32.mrb[0].mxu0
    %v7169 = vpop.f32.mrb[0].mxu0
    %7170 = vdwg.mxu0
    %7171 = vmatprep.subr.bf16.mxu0 %v6952
    %7172 = vmatpush1.bf16.msra.mxu0 %v6949
    %7173 = vmatprep.subr.bf16.mxu0 0
    %7174 = vmatpush1.bf16.msra.mxu0 0
    %7175 = vmatprep.subr.bf16.mxu0 0
    %7176 = vmatpush1.bf16.msra.mxu0 0
    %7177 = vmatprep.subr.bf16.mxu0 0
    %7178 = vmatpush1.bf16.msra.mxu0 0
    %7179 = vmatprep.subr.bf16.mxu0 0
    %7180 = vmatpush1.bf16.msra.mxu0 0
    %7181 = vmatprep.subr.bf16.mxu0 0
    %7182 = vmatpush1.bf16.msra.mxu0 0
    %7183 = vmatprep.subr.bf16.mxu0 0
    %7184 = vmatpush1.bf16.msra.mxu0 0
    %7185 = vmatprep.subr.bf16.mxu0 0
    %7186 = vmatpush1.bf16.msra.mxu0 0
    %7187 = vmatprep.subr.bf16.mxu0 0
    %7188 = vmatpush1.bf16.msra.mxu0 0
    %7189 = vmatprep.subr.bf16.mxu0 0
    %7190 = vmatpush1.bf16.msra.mxu0 0
    %7191 = vmatprep.subr.bf16.mxu0 0
    %7192 = vmatpush1.bf16.msra.mxu0 0
    %7193 = vmatprep.subr.bf16.mxu0 0
    %7194 = vmatpush1.bf16.msra.mxu0 0
    %7195 = vmatprep.subr.bf16.mxu0 0
    %7196 = vmatpush1.bf16.msra.mxu0 0
    %7197 = vmatprep.subr.bf16.mxu0 0
    %7198 = vmatpush1.bf16.msra.mxu0 0
    %7199 = vmatprep.subr.bf16.mxu0 0
    %7200 = vmatpush1.bf16.msra.mxu0 0
    %7201 = vmatprep.subr.bf16.mxu0 0
    %7202 = vmatpush1.bf16.msra.mxu0 0
    %7203 = vmatprep.mubr.bf16.mxu0 0
    %7204 = vmatmul.mubr.bf16.gmra.mrb[0].mxu0 %v6916
    %v7205 = vpop.f32.mrb[0].mxu0
    %v7206 = vadd.f32 0.0, %v7205
    %v7207 = vpop.f32.mrb[0].mxu0
    %v7208 = vadd.f32 0.0, %v7207
    %v7209 = vpop.f32.mrb[0].mxu0
    %v7210 = vpop.f32.mrb[0].mxu0
    %7211 = vdwg.mxu0
    %7212 = vmatprep.subr.bf16.mxu0 %v6958
    %7213 = vmatpush1.bf16.msra.mxu0 %v6955
    %7214 = vmatprep.subr.bf16.mxu0 0
    %7215 = vmatpush1.bf16.msra.mxu0 0
    %7216 = vmatprep.subr.bf16.mxu0 0
    %7217 = vmatpush1.bf16.msra.mxu0 0
    %7218 = vmatprep.subr.bf16.mxu0 0
    %7219 = vmatpush1.bf16.msra.mxu0 0
    %7220 = vmatprep.subr.bf16.mxu0 0
    %7221 = vmatpush1.bf16.msra.mxu0 0
    %7222 = vmatprep.subr.bf16.mxu0 0
    %7223 = vmatpush1.bf16.msra.mxu0 0
    %7224 = vmatprep.subr.bf16.mxu0 0
    %7225 = vmatpush1.bf16.msra.mxu0 0
    %7226 = vmatprep.subr.bf16.mxu0 0
    %7227 = vmatpush1.bf16.msra.mxu0 0
    %7228 = vmatprep.subr.bf16.mxu0 0
    %7229 = vmatpush1.bf16.msra.mxu0 0
    %7230 = vmatprep.subr.bf16.mxu0 0
    %7231 = vmatpush1.bf16.msra.mxu0 0
    %7232 = vmatprep.subr.bf16.mxu0 0
    %7233 = vmatpush1.bf16.msra.mxu0 0
    %7234 = vmatprep.subr.bf16.mxu0 0
    %7235 = vmatpush1.bf16.msra.mxu0 0
    %7236 = vmatprep.subr.bf16.mxu0 0
    %7237 = vmatpush1.bf16.msra.mxu0 0
    %7238 = vmatprep.subr.bf16.mxu0 0
    %7239 = vmatpush1.bf16.msra.mxu0 0
    %7240 = vmatprep.subr.bf16.mxu0 0
    %7241 = vmatpush1.bf16.msra.mxu0 0
    %7242 = vmatprep.subr.bf16.mxu0 0
    %7243 = vmatpush1.bf16.msra.mxu0 0
    %7244 = vmatprep.mubr.bf16.mxu0 0
    %7245 = vmatmul.mubr.bf16.gmra.mrb[0].mxu0 %v6916
    %v7246 = vpop.f32.mrb[0].mxu0
    %v7247 = vadd.f32 0.0, %v7246
    %v7248 = vpop.f32.mrb[0].mxu0
    %v7249 = vadd.f32 0.0, %v7248
    %v7250 = vpop.f32.mrb[0].mxu0
    %v7251 = vpop.f32.mrb[0].mxu0
    %7252 = vdwg.mxu0
    %7253 = vmatprep.subr.bf16.mxu0 %v6964
    %7254 = vmatpush1.bf16.msra.mxu0 %v6961
    %7255 = vmatprep.subr.bf16.mxu0 0
    %7256 = vmatpush1.bf16.msra.mxu0 0
    %7257 = vmatprep.subr.bf16.mxu0 0
    %7258 = vmatpush1.bf16.msra.mxu0 0
    %7259 = vmatprep.subr.bf16.mxu0 0
    %7260 = vmatpush1.bf16.msra.mxu0 0
    %7261 = vmatprep.subr.bf16.mxu0 0
    %7262 = vmatpush1.bf16.msra.mxu0 0
    %7263 = vmatprep.subr.bf16.mxu0 0
    %7264 = vmatpush1.bf16.msra.mxu0 0
    %7265 = vmatprep.subr.bf16.mxu0 0
    %7266 = vmatpush1.bf16.msra.mxu0 0
    %7267 = vmatprep.subr.bf16.mxu0 0
    %7268 = vmatpush1.bf16.msra.mxu0 0
    %7269 = vmatprep.subr.bf16.mxu0 0
    %7270 = vmatpush1.bf16.msra.mxu0 0
    %7271 = vmatprep.subr.bf16.mxu0 0
    %7272 = vmatpush1.bf16.msra.mxu0 0
    %7273 = vmatprep.subr.bf16.mxu0 0
    %7274 = vmatpush1.bf16.msra.mxu0 0
    %7275 = vmatprep.subr.bf16.mxu0 0
    %7276 = vmatpush1.bf16.msra.mxu0 0
    %7277 = vmatprep.subr.bf16.mxu0 0
    %7278 = vmatpush1.bf16.msra.mxu0 0
    %7279 = vmatprep.subr.bf16.mxu0 0
    %7280 = vmatpush1.bf16.msra.mxu0 0
    %7281 = vmatprep.subr.bf16.mxu0 0
    %7282 = vmatpush1.bf16.msra.mxu0 0
    %7283 = vmatprep.subr.bf16.mxu0 0
    %7284 = vmatpush1.bf16.msra.mxu0 0
    %7285 = vmatprep.mubr.bf16.mxu0 0
    %7286 = vmatmul.mubr.bf16.gmra.mrb[0].mxu0 %v6916
    %v7287 = vpop.f32.mrb[0].mxu0
    %v7288 = vadd.f32 0.0, %v7287
    %v7289 = vpop.f32.mrb[0].mxu0
    %v7290 = vadd.f32 0.0, %v7289
    %v7291 = vpop.f32.mrb[0].mxu0
    %v7292 = vpop.f32.mrb[0].mxu0
    %7293 = vdwg.mxu0
    %v7294 = vadd.f32 %v6542, %v7001
    %v7295 = vadd.f32 %v6543, %v7003
    %v7296 = vadd.f32 %v6544, %v7042
    %v7297 = vadd.f32 %v6545, %v7044
    %v7298 = vadd.f32 %v6546, %v7083
    %v7299 = vadd.f32 %v6547, %v7085
    %v7300 = vadd.f32 %v6548, %v7124
    %v7301 = vadd.f32 %v6549, %v7126
    %v7302 = vadd.f32 %v6550, %v7165
    %v7303 = vadd.f32 %v6551, %v7167
    %v7304 = vadd.f32 %v6552, %v7206
    %v7305 = vadd.f32 %v6553, %v7208
    %v7306 = vadd.f32 %v6554, %v7247
    %v7307 = vadd.f32 %v6555, %v7249
    %v7308 = vadd.f32 %v6556, %v7288
    %v7309 = vadd.f32 %v6557, %v7290
    %v7310 = vld [vmem:[%s3] sm:$0xff]
    %7312 = vset.pattern.permute.xlu0 0
    %7313 = vperm.xlu0 %7312, %v7310
    %v7314 = vpop.permute.xlu0 %7313
    %v7316 = vadd.f32 %v7294, %v7314
    %v7317 = vadd.f32 %v7295, %v7314
    %v7318 = vadd.f32 %v7296, %v7314
    %v7319 = vadd.f32 %v7297, %v7314
    %v7320 = vadd.f32 %v7298, %v7314
    %v7321 = vadd.f32 %v7299, %v7314
    %v7322 = vadd.f32 %v7300, %v7314
    %v7323 = vadd.f32 %v7301, %v7314
    %v7324 = vadd.f32 %v7302, %v7314
    %v7325 = vadd.f32 %v7303, %v7314
    %v7326 = vadd.f32 %v7304, %v7314
    %v7327 = vadd.f32 %v7305, %v7314
    %v7328 = vadd.f32 %v7306, %v7314
    %v7329 = vadd.f32 %v7307, %v7314
    %v7330 = vadd.f32 %v7308, %v7314
    %v7331 = vadd.f32 %v7309, %v7314
    %s7332 = sld [smem:[#allocation4]]
    %vm7333 = vcmp.gt.f32.partialorder %v7316, 0.0
    %vm7334 = vcmp.gt.f32.partialorder %v7317, 0.0
    %vm7335 = vcmp.gt.f32.partialorder %v7318, 0.0
    %vm7336 = vcmp.gt.f32.partialorder %v7319, 0.0
    %vm7337 = vcmp.gt.f32.partialorder %v7320, 0.0
    %vm7338 = vcmp.gt.f32.partialorder %v7321, 0.0
    %vm7339 = vcmp.gt.f32.partialorder %v7322, 0.0
    %vm7340 = vcmp.gt.f32.partialorder %v7323, 0.0
    %vm7341 = vcmp.gt.f32.partialorder %v7324, 0.0
    %vm7342 = vcmp.gt.f32.partialorder %v7325, 0.0
    %vm7343 = vcmp.gt.f32.partialorder %v7326, 0.0
    %vm7344 = vcmp.gt.f32.partialorder %v7327, 0.0
    %vm7345 = vcmp.gt.f32.partialorder %v7328, 0.0
    %vm7346 = vcmp.gt.f32.partialorder %v7329, 0.0
    %vm7347 = vcmp.gt.f32.partialorder %v7330, 0.0
    %vm7348 = vcmp.gt.f32.partialorder %v7331, 0.0
    %v7349 = vstv %s7332
    %v7350 = vmul.f32 %v7349, %v7316
    %v7351 = vmul.f32 %v7349, %v7317
    %v7352 = vmul.f32 %v7349, %v7318
    %v7353 = vmul.f32 %v7349, %v7319
    %v7354 = vmul.f32 %v7349, %v7320
    %v7355 = vmul.f32 %v7349, %v7321
    %v7356 = vmul.f32 %v7349, %v7322
    %v7357 = vmul.f32 %v7349, %v7323
    %v7358 = vmul.f32 %v7349, %v7324
    %v7359 = vmul.f32 %v7349, %v7325
    %v7360 = vmul.f32 %v7349, %v7326
    %v7361 = vmul.f32 %v7349, %v7327
    %v7362 = vmul.f32 %v7349, %v7328
    %v7363 = vmul.f32 %v7349, %v7329
    %v7364 = vmul.f32 %v7349, %v7330
    %v7365 = vmul.f32 %v7349, %v7331
    %v7366 = vsel %vm7333, %v7316, %v7350
    %v7367 = vsel %vm7334, %v7317, %v7351
    %v7368 = vsel %vm7335, %v7318, %v7352
    %v7369 = vsel %vm7336, %v7319, %v7353
    %v7370 = vsel %vm7337, %v7320, %v7354
    %v7371 = vsel %vm7338, %v7321, %v7355
    %v7372 = vsel %vm7339, %v7322, %v7356
    %v7373 = vsel %vm7340, %v7323, %v7357
    %v7374 = vsel %vm7341, %v7324, %v7358
    %v7375 = vsel %vm7342, %v7325, %v7359
    %v7376 = vsel %vm7343, %v7326, %v7360
    %v7377 = vsel %vm7344, %v7327, %v7361
    %v7378 = vsel %vm7345, %v7328, %v7362
    %v7379 = vsel %vm7346, %v7329, %v7363
    %v7380 = vsel %vm7347, %v7330, %v7364
    %v7381 = vsel %vm7348, %v7331, %v7365
    %7382 = vst [vmem:[#allocation5] sm:$0xff] %v7366
    %7383 = vst [vmem:[#allocation5 + $0x8] sm:$0xff] %v7367
    %7384 = vst [vmem:[#allocation5 + $0x10] sm:$0xff] %v7368
    %7385 = vst [vmem:[#allocation5 + $0x18] sm:$0xff] %v7369
    %7386 = vst [vmem:[#allocation5 + $0x20] sm:$0xff] %v7370
    %7387 = vst [vmem:[#allocation5 + $0x28] sm:$0xff] %v7371
    %7388 = vst [vmem:[#allocation5 + $0x30] sm:$0xff] %v7372
    %7389 = vst [vmem:[#allocation5 + $0x38] sm:$0xff] %v7373
    %s7390 = scalar_lea.vmem [#allocation5], 64
    %7391 = vst [vmem:[%s7390] sm:$0xff] %v7374
    %7392 = vst [vmem:[%s7390 + $0x8] sm:$0xff] %v7375
    %7393 = vst [vmem:[%s7390 + $0x10] sm:$0xff] %v7376
    %7394 = vst [vmem:[%s7390 + $0x18] sm:$0xff] %v7377
    %7395 = vst [vmem:[%s7390 + $0x20] sm:$0xff] %v7378
    %7396 = vst [vmem:[%s7390 + $0x28] sm:$0xff] %v7379
    %7397 = vst [vmem:[%s7390 + $0x30] sm:$0xff] %v7380
    %7398 = vst [vmem:[%s7390 + $0x38] sm:$0xff] %v7381
    // Predicated region
    $region26: #{tpu_custom_call.1} parent=1 // pred_check
      _
    $region27: #{tpu_custom_call.1} parent=1 // pred_check_branch
      %7400 = sbr.rel (0) target = $region29
    $region28: #{tpu_custom_call.1} parent=1 // pred_region
      %s7402 = ssub.s32 2048, 2048
      %7403 = vsyncadd [#allocation6], %s7402
      %s7404 = sshll.u32 [#allocation5], 4
      %s7405 = int_to_ptr.vmem [resolvable:$true] %s7404
      %7410 = dma.vmem_to_hbm [thread:$0]  %s7405, 2048, %s6, [#allocation6], 1024, 1024, 64
    $region29: #{tpu_custom_call.1} parent=1 // pred_fallthru
      _
    // Predicated region
    $region30: #{tpu_custom_call.1} parent=1 // pred_check
      _
    $region31: #{tpu_custom_call.1} parent=1 // pred_check_branch
      %7412 = sbr.rel (0) target = $region33
    $region32: #{tpu_custom_call.1} parent=1 // pred_region
      %7413 = dma.done [#allocation6], 2048
    $region33: #{tpu_custom_call.1} parent=1 // pred_fallthru
      _
    %7414 = vsyncpa [#allocation6], 1

</llo_original>
